<compile_context>
chip_gen: v6e
topology: v6e:2x2x1
jax: 0.10.0
libtpu: 0.0.40
codegen_flags: <defaults>
</compile_context>

<pallas_src>
import functools
import math

import jax
import jax.numpy as jnp
from jax.experimental import pallas as pl

LANES = 128      # TPU lane width; channel / class dims are zero-padded to this.
BN_EPS = 1e-5    # PyTorch BatchNorm2d default.


# ---------------------------------------------------------------------------
# Kernels
# ---------------------------------------------------------------------------
def _conv_bn_relu_pool_kernel(p_ref, w_ref, b_ref, g_ref, beta_ref, o_ref, *, eps):
    """Fused: conv (im2col matmul) + bias + BatchNorm(batch stats) + ReLU + 2x2 maxpool.

    p_ref:    (4*R, 9*Cp) bf16  im2col patches, rows ordered (pool_y, pool_x, n, h2, w2)
    w_ref:    (9*Cp, Cp)  bf16  conv weights (HWIO flattened, channel-padded)
    b_ref, g_ref, beta_ref: (1, Cp) f32  conv bias / BN gamma / BN beta (padded cols = 0)
    o_ref:    (R, Cp)     bf16  pooled output, rows ordered (n, h2, w2)
    """
    rows = p_ref.shape[0]
    r = rows // 4

    # 3x3 conv as one MXU matmul, f32 accumulate.
    y = jnp.dot(p_ref[...], w_ref[...], preferred_element_type=jnp.float32)
    y = y + b_ref[...]

    # BatchNorm2d (train-mode forward): biased batch statistics over all (n, h, w).
    mean = jnp.mean(y, axis=0, keepdims=True)
    var = jnp.mean(jnp.square(y - mean), axis=0, keepdims=True)
    y = (y - mean) * jax.lax.rsqrt(var + eps) * g_ref[...] + beta_ref[...]

    # ReLU (f32, VPU).
    y = jnp.maximum(y, 0.0)

    # MaxPool2d(2, 2): elementwise max of the four pooling-position row blocks.
    pooled = jnp.maximum(jnp.maximum(y[0 * r:1 * r, :], y[1 * r:2 * r, :]),
                         jnp.maximum(y[2 * r:3 * r, :], y[3 * r:4 * r, :]))
    o_ref[...] = pooled.astype(o_ref.dtype)


def _linear_kernel(x_ref, w_ref, b_ref, o_ref):
    """y = x @ w + b with f32 accumulation (bf16 operands, lane-dense output)."""
    acc = jnp.dot(x_ref[...], w_ref[...], preferred_element_type=jnp.float32)
    o_ref[...] = (acc + b_ref[...]).astype(o_ref.dtype)


# ---------------------------------------------------------------------------
# Wrappers (layout plumbing in plain jnp; heavy math in the kernels above)
# ---------------------------------------------------------------------------
def _im2col_pool_major(x):
    """x: (N, H, W, C) -> (4*N*(H//2)*(W//2), 9*C) patches.

    Row order is (pool_y, pool_x, n, h2, w2) so that the kernel's 2x2 max-pool
    is an elementwise max of four contiguous row blocks.
    """
    n, h, w, c = x.shape
    xp = jnp.pad(x, ((0, 0), (1, 1), (1, 1), (0, 0)))
    taps = [xp[:, ky:ky + h, kx:kx + w, :] for ky in range(3) for kx in range(3)]
    pats = jnp.stack(taps, axis=3).reshape(n, h, w, 9 * c)
    pats = pats.reshape(n, h // 2, 2, w // 2, 2, 9 * c)
    pats = pats.transpose(2, 4, 0, 1, 3, 5)          # (2, 2, N, H/2, W/2, 9C)
    return pats.reshape(4 * n * (h // 2) * (w // 2), 9 * c)


def conv_block(x, w_p, b_p, g_p, beta_p):
    """One fused conv->BN->ReLU->maxpool stage. x: (N, H, W, LANES) bf16 NHWC."""
    n, h, w, c = x.shape
    patches = _im2col_pool_major(x)
    r = n * (h // 2) * (w // 2)
    out = pl.pallas_call(
        functools.partial(_conv_bn_relu_pool_kernel, eps=BN_EPS),
        out_shape=jax.ShapeDtypeStruct((r, c), jnp.bfloat16),
    )(patches, w_p, b_p, g_p, beta_p)
    return out.reshape(n, h // 2, w // 2, c)


def linear(x, w_p, b_p):
    n = x.shape[0]
    return pl.pallas_call(
        _linear_kernel,
        out_shape=jax.ShapeDtypeStruct((n, w_p.shape[1]), jnp.float32),
    )(x, w_p, b_p)


def toy_conv_forward(padded_params, x_nchw):
    """Forward pass matching ToyConv.forward; returns lane-padded logits (N, 128)."""
    x = jnp.transpose(x_nchw, (0, 2, 3, 1))                                   # NHWC
    x = jnp.pad(x, ((0, 0), (0, 0), (0, 0), (0, LANES - x.shape[-1])))
    x = x.astype(jnp.bfloat16)
    for (w_p, b_p, g_p, beta_p) in padded_params["conv"]:
        x = conv_block(x, w_p, b_p, g_p, beta_p)
    flat = x.reshape(x.shape[0], -1)                  # (N, H2*W2*LANES), (h2, w2, c) order
    fc_w_p, fc_b_p = padded_params["fc"]
    return linear(flat, fc_w_p, fc_b_p)


# ---------------------------------------------------------------------------
# Parameter construction (mirrors the nn.Module's shapes; weights stored bf16)
# ---------------------------------------------------------------------------
def init_toy_conv_params(key, in_ch, hid_ch, num_classes, size):
    conv = []
    c = in_ch
    for out_c in hid_ch:
        key, kw, kb, kg, kbe = jax.random.split(key, 5)
        bound = 1.0 / math.sqrt(c * 9)
        w = jax.random.uniform(kw, (3, 3, c, out_c), jnp.float32, -bound, bound)
        b = jax.random.uniform(kb, (out_c,), jnp.float32, -bound, bound)
        gamma = jax.random.uniform(kg, (out_c,), jnp.float32, 0.5, 1.5)
        beta = jax.random.uniform(kbe, (out_c,), jnp.float32, -0.5, 0.5)
        conv.append((w.astype(jnp.bfloat16), b, gamma, beta))
        c = out_c
    w_h = size // (2 ** len(hid_ch))
    feat = c * w_h * w_h
    key, kw, kb = jax.random.split(key, 3)
    bound = 1.0 / math.sqrt(feat)
    fc_w = jax.random.uniform(kw, (w_h, w_h, c, num_classes), jnp.float32, -bound, bound)
    fc_b = jax.random.uniform(kb, (num_classes,), jnp.float32, -bound, bound)
    return {"conv": conv, "fc": (fc_w.astype(jnp.bfloat16), fc_b)}


def pad_params(params):
    """Zero-pad channel/class dims to LANES so every kernel operand is lane-dense."""
    conv_p = []
    for (w, b, gamma, beta) in params["conv"]:
        _, _, cin, cout = w.shape
        w_p = jnp.zeros((3, 3, LANES, LANES), jnp.bfloat16).at[:, :, :cin, :cout].set(w)
        w_p = w_p.reshape(9 * LANES, LANES)
        b_p = jnp.zeros((1, LANES), jnp.float32).at[0, :cout].set(b)
        g_p = jnp.zeros((1, LANES), jnp.float32).at[0, :cout].set(gamma)
        be_p = jnp.zeros((1, LANES), jnp.float32).at[0, :cout].set(beta)
        conv_p.append((w_p, b_p, g_p, be_p))
    fc_w, fc_b = params["fc"]
    h2, w2, c, cls = fc_w.shape
    cls_p = ((cls + LANES - 1) // LANES) * LANES
    fc_w_p = jnp.zeros((h2, w2, LANES, cls_p), jnp.bfloat16).at[:, :, :c, :cls].set(fc_w)
    fc_w_p = fc_w_p.reshape(h2 * w2 * LANES, cls_p)
    fc_b_p = jnp.zeros((1, cls_p), jnp.float32).at[0, :cls].set(fc_b)
    return {"conv": conv_p, "fc": (fc_w_p, fc_b_p)}


# ---------------------------------------------------------------------------
# Pure-JAX reference (no Pallas): same math at unpadded sizes.
# ---------------------------------------------------------------------------
def reference_forward(params, x_nchw, eps=BN_EPS):
    y = jnp.transpose(x_nchw, (0, 2, 3, 1)).astype(jnp.bfloat16)
    for (w, b, gamma, beta) in params["conv"]:
        y = jax.lax.conv_general_dilated(
            y, w, window_strides=(1, 1), padding="SAME",
            dimension_numbers=("NHWC", "HWIO", "NHWC"),
            preferred_element_type=jnp.float32)
        y = y + b
        mean = jnp.mean(y, axis=(0, 1, 2))
        var = jnp.mean(jnp.square(y - mean), axis=(0, 1, 2))
        y = (y - mean) * jax.lax.rsqrt(var + eps) * gamma + beta
        y = jnp.maximum(y, 0.0)
        n, h, w_, c = y.shape
        y = y.reshape(n, h // 2, 2, w_ // 2, 2, c).max(axis=(2, 4))
        y = y.astype(jnp.bfloat16)
    fc_w, fc_b = params["fc"]
    flat = y.reshape(y.shape[0], -1)
    logits = jnp.dot(flat, fc_w.reshape(-1, fc_w.shape[-1]),
                     preferred_element_type=jnp.float32)
    return logits + fc_b


if __name__ == "__main__":
    key = jax.random.PRNGKey(0)
    batch, in_ch, size = 2, 4, 16
    hid_ch = [8, 16]
    num_classes = 10

    key, kx = jax.random.split(key)
    x = jax.random.normal(kx, (batch, in_ch, size, size), jnp.float32)   # NCHW like PyTorch

    params = init_toy_conv_params(key, in_ch, hid_ch, num_classes, size)
    padded = pad_params(params)

    fwd = jax.jit(toy_conv_forward)
    out_full = fwd(padded, x)                 # (batch, 128) lane-padded logits
    out_full = jax.block_until_ready(out_full)
    out = out_full[:, :num_classes]

    ref = reference_forward(params, x)
    assert out.shape == (batch, num_classes)
    max_diff = float(jnp.max(jnp.abs(out - ref)))
    assert jnp.allclose(out, ref, atol=5e-3, rtol=5e-3), f"max abs diff {max_diff}"

    print("KERNEL_OK")
</pallas_src>

<mosaic_0001>
module attributes {stable_mosaic.version = 11 : i64} {
  func.func @_conv_bn_relu_pool_kernel(%arg0: memref<512x1152xbf16, #tpu.memory_space<vmem>>, %arg1: memref<1152x128xbf16, #tpu.memory_space<vmem>>, %arg2: memref<1x128xf32, #tpu.memory_space<vmem>>, %arg3: memref<1x128xf32, #tpu.memory_space<vmem>>, %arg4: memref<1x128xf32, #tpu.memory_space<vmem>>, %arg5: memref<128x128xbf16, #tpu.memory_space<vmem>>) attributes {dimension_semantics = [], scalar_prefetch = 0 : i64, scratch_operands = 0 : i64, tpu.core_type = #tpu.core_type<tc>} {
    %c0 = arith.constant 0 : index
    %c0_0 = arith.constant 0 : index
    %0 = vector.load %arg0[%c0, %c0_0] : memref<512x1152xbf16, #tpu.memory_space<vmem>>, vector<512x1152xbf16>
    %c0_1 = arith.constant 0 : index
    %c0_2 = arith.constant 0 : index
    %1 = vector.load %arg1[%c0_1, %c0_2] : memref<1152x128xbf16, #tpu.memory_space<vmem>>, vector<1152x128xbf16>
    %cst = arith.constant dense<0.000000e+00> : vector<512x128xf32>
    %2 = tpu.matmul %0, %1, %cst {dimension_numbers = #tpu.dot_dimension_numbers<[1], [0], [0], [1], [0, 0, 1, 1], [], []>} : vector<512x1152xbf16>, vector<1152x128xbf16>, vector<512x128xf32> -> vector<512x128xf32>
    %c0_3 = arith.constant 0 : index
    %c0_4 = arith.constant 0 : index
    %3 = vector.load %arg2[%c0_3, %c0_4] : memref<1x128xf32, #tpu.memory_space<vmem>>, vector<1x128xf32>
    %4 = vector.broadcast %3 : vector<1x128xf32> to vector<512x128xf32>
    %5 = arith.addf %2, %4 : vector<512x128xf32>
    %cst_5 = arith.constant dense<0.000000e+00> : vector<128xf32>
    %6 = vector.multi_reduction <add>, %5, %cst_5 [0] : vector<512x128xf32> to vector<128xf32>
    %7 = vector.shape_cast %6 : vector<128xf32> to vector<1x128xf32>
    %cst_6 = arith.constant 5.120000e+02 : f32
    %8 = vector.broadcast %cst_6 : f32 to vector<1x128xf32>
    %9 = arith.divf %7, %8 : vector<1x128xf32>
    %10 = vector.broadcast %9 : vector<1x128xf32> to vector<512x128xf32>
    %11 = arith.subf %5, %10 : vector<512x128xf32>
    %12 = arith.mulf %11, %11 : vector<512x128xf32>
    %cst_7 = arith.constant dense<0.000000e+00> : vector<128xf32>
    %13 = vector.multi_reduction <add>, %12, %cst_7 [0] : vector<512x128xf32> to vector<128xf32>
    %14 = vector.shape_cast %13 : vector<128xf32> to vector<1x128xf32>
    %cst_8 = arith.constant 5.120000e+02 : f32
    %15 = vector.broadcast %cst_8 : f32 to vector<1x128xf32>
    %16 = arith.divf %14, %15 : vector<1x128xf32>
    %17 = vector.broadcast %9 : vector<1x128xf32> to vector<512x128xf32>
    %18 = arith.subf %5, %17 : vector<512x128xf32>
    %cst_9 = arith.constant 9.99999974E-6 : f32
    %19 = vector.broadcast %cst_9 : f32 to vector<1x128xf32>
    %20 = arith.addf %16, %19 : vector<1x128xf32>
    %21 = math.rsqrt %20 : vector<1x128xf32>
    %22 = vector.broadcast %21 : vector<1x128xf32> to vector<512x128xf32>
    %23 = arith.mulf %18, %22 : vector<512x128xf32>
    %c0_10 = arith.constant 0 : index
    %c0_11 = arith.constant 0 : index
    %24 = vector.load %arg3[%c0_10, %c0_11] : memref<1x128xf32, #tpu.memory_space<vmem>>, vector<1x128xf32>
    %25 = vector.broadcast %24 : vector<1x128xf32> to vector<512x128xf32>
    %26 = arith.mulf %23, %25 : vector<512x128xf32>
    %c0_12 = arith.constant 0 : index
    %c0_13 = arith.constant 0 : index
    %27 = vector.load %arg4[%c0_12, %c0_13] : memref<1x128xf32, #tpu.memory_space<vmem>>, vector<1x128xf32>
    %28 = vector.broadcast %27 : vector<1x128xf32> to vector<512x128xf32>
    %29 = arith.addf %26, %28 : vector<512x128xf32>
    %cst_14 = arith.constant 0.000000e+00 : f32
    %30 = vector.broadcast %cst_14 : f32 to vector<512x128xf32>
    %31 = arith.maximumf %29, %30 : vector<512x128xf32>
    %32 = vector.extract_strided_slice %31 {offsets = [0, 0], sizes = [128, 128], strides = [1, 1]} : vector<512x128xf32> to vector<128x128xf32>
    %33 = vector.extract_strided_slice %31 {offsets = [128, 0], sizes = [128, 128], strides = [1, 1]} : vector<512x128xf32> to vector<128x128xf32>
    %34 = arith.maximumf %32, %33 : vector<128x128xf32>
    %35 = vector.extract_strided_slice %31 {offsets = [256, 0], sizes = [128, 128], strides = [1, 1]} : vector<512x128xf32> to vector<128x128xf32>
    %36 = vector.extract_strided_slice %31 {offsets = [384, 0], sizes = [128, 128], strides = [1, 1]} : vector<512x128xf32> to vector<128x128xf32>
    %37 = arith.maximumf %35, %36 : vector<128x128xf32>
    %38 = arith.maximumf %34, %37 : vector<128x128xf32>
    %39 = arith.truncf %38 : vector<128x128xf32> to vector<128x128xbf16>
    %c0_15 = arith.constant 0 : index
    %c0_16 = arith.constant 0 : index
    %40 = vector.load %arg5[%c0_15, %c0_16] : memref<128x128xbf16, #tpu.memory_space<vmem>>, vector<128x128xbf16>
    tpu.vector_store %arg5[%c0_15, %c0_16], %39 {strides = array<i32>} : memref<128x128xbf16, #tpu.memory_space<vmem>>, vector<128x128xbf16>,
    return
  }
}

module attributes {stable_mosaic.version = 11 : i64} {
  func.func @_conv_bn_relu_pool_kernel(%arg0: memref<128x1152xbf16, #tpu.memory_space<vmem>>, %arg1: memref<1152x128xbf16, #tpu.memory_space<vmem>>, %arg2: memref<1x128xf32, #tpu.memory_space<vmem>>, %arg3: memref<1x128xf32, #tpu.memory_space<vmem>>, %arg4: memref<1x128xf32, #tpu.memory_space<vmem>>, %arg5: memref<32x128xbf16, #tpu.memory_space<vmem>>) attributes {dimension_semantics = [], scalar_prefetch = 0 : i64, scratch_operands = 0 : i64, tpu.core_type = #tpu.core_type<tc>} {
    %c0 = arith.constant 0 : index
    %c0_0 = arith.constant 0 : index
    %0 = vector.load %arg0[%c0, %c0_0] : memref<128x1152xbf16, #tpu.memory_space<vmem>>, vector<128x1152xbf16>
    %c0_1 = arith.constant 0 : index
    %c0_2 = arith.constant 0 : index
    %1 = vector.load %arg1[%c0_1, %c0_2] : memref<1152x128xbf16, #tpu.memory_space<vmem>>, vector<1152x128xbf16>
    %cst = arith.constant dense<0.000000e+00> : vector<128x128xf32>
    %2 = tpu.matmul %0, %1, %cst {dimension_numbers = #tpu.dot_dimension_numbers<[1], [0], [0], [1], [0, 0, 1, 1], [], []>} : vector<128x1152xbf16>, vector<1152x128xbf16>, vector<128x128xf32> -> vector<128x128xf32>
    %c0_3 = arith.constant 0 : index
    %c0_4 = arith.constant 0 : index
    %3 = vector.load %arg2[%c0_3, %c0_4] : memref<1x128xf32, #tpu.memory_space<vmem>>, vector<1x128xf32>
    %4 = vector.broadcast %3 : vector<1x128xf32> to vector<128x128xf32>
    %5 = arith.addf %2, %4 : vector<128x128xf32>
    %cst_5 = arith.constant dense<0.000000e+00> : vector<128xf32>
    %6 = vector.multi_reduction <add>, %5, %cst_5 [0] : vector<128x128xf32> to vector<128xf32>
    %7 = vector.shape_cast %6 : vector<128xf32> to vector<1x128xf32>
    %cst_6 = arith.constant 1.280000e+02 : f32
    %8 = vector.broadcast %cst_6 : f32 to vector<1x128xf32>
    %9 = arith.divf %7, %8 : vector<1x128xf32>
    %10 = vector.broadcast %9 : vector<1x128xf32> to vector<128x128xf32>
    %11 = arith.subf %5, %10 : vector<128x128xf32>
    %12 = arith.mulf %11, %11 : vector<128x128xf32>
    %cst_7 = arith.constant dense<0.000000e+00> : vector<128xf32>
    %13 = vector.multi_reduction <add>, %12, %cst_7 [0] : vector<128x128xf32> to vector<128xf32>
    %14 = vector.shape_cast %13 : vector<128xf32> to vector<1x128xf32>
    %cst_8 = arith.constant 1.280000e+02 : f32
    %15 = vector.broadcast %cst_8 : f32 to vector<1x128xf32>
    %16 = arith.divf %14, %15 : vector<1x128xf32>
    %17 = vector.broadcast %9 : vector<1x128xf32> to vector<128x128xf32>
    %18 = arith.subf %5, %17 : vector<128x128xf32>
    %cst_9 = arith.constant 9.99999974E-6 : f32
    %19 = vector.broadcast %cst_9 : f32 to vector<1x128xf32>
    %20 = arith.addf %16, %19 : vector<1x128xf32>
    %21 = math.rsqrt %20 : vector<1x128xf32>
    %22 = vector.broadcast %21 : vector<1x128xf32> to vector<128x128xf32>
    %23 = arith.mulf %18, %22 : vector<128x128xf32>
    %c0_10 = arith.constant 0 : index
    %c0_11 = arith.constant 0 : index
    %24 = vector.load %arg3[%c0_10, %c0_11] : memref<1x128xf32, #tpu.memory_space<vmem>>, vector<1x128xf32>
    %25 = vector.broadcast %24 : vector<1x128xf32> to vector<128x128xf32>
    %26 = arith.mulf %23, %25 : vector<128x128xf32>
    %c0_12 = arith.constant 0 : index
    %c0_13 = arith.constant 0 : index
    %27 = vector.load %arg4[%c0_12, %c0_13] : memref<1x128xf32, #tpu.memory_space<vmem>>, vector<1x128xf32>
    %28 = vector.broadcast %27 : vector<1x128xf32> to vector<128x128xf32>
    %29 = arith.addf %26, %28 : vector<128x128xf32>
    %cst_14 = arith.constant 0.000000e+00 : f32
    %30 = vector.broadcast %cst_14 : f32 to vector<128x128xf32>
    %31 = arith.maximumf %29, %30 : vector<128x128xf32>
    %32 = vector.extract_strided_slice %31 {offsets = [0, 0], sizes = [32, 128], strides = [1, 1]} : vector<128x128xf32> to vector<32x128xf32>
    %33 = vector.extract_strided_slice %31 {offsets = [32, 0], sizes = [32, 128], strides = [1, 1]} : vector<128x128xf32> to vector<32x128xf32>
    %34 = arith.maximumf %32, %33 : vector<32x128xf32>
    %35 = vector.extract_strided_slice %31 {offsets = [64, 0], sizes = [32, 128], strides = [1, 1]} : vector<128x128xf32> to vector<32x128xf32>
    %36 = vector.extract_strided_slice %31 {offsets = [96, 0], sizes = [32, 128], strides = [1, 1]} : vector<128x128xf32> to vector<32x128xf32>
    %37 = arith.maximumf %35, %36 : vector<32x128xf32>
    %38 = arith.maximumf %34, %37 : vector<32x128xf32>
    %39 = arith.truncf %38 : vector<32x128xf32> to vector<32x128xbf16>
    %c0_15 = arith.constant 0 : index
    %c0_16 = arith.constant 0 : index
    %40 = vector.load %arg5[%c0_15, %c0_16] : memref<32x128xbf16, #tpu.memory_space<vmem>>, vector<32x128xbf16>
    tpu.vector_store %arg5[%c0_15, %c0_16], %39 {strides = array<i32>} : memref<32x128xbf16, #tpu.memory_space<vmem>>, vector<32x128xbf16>,
    return
  }
}

module attributes {stable_mosaic.version = 11 : i64} {
  func.func @_linear_kernel(%arg0: memref<2x2048xbf16, #tpu.memory_space<vmem>>, %arg1: memref<2048x128xbf16, #tpu.memory_space<vmem>>, %arg2: memref<1x128xf32, #tpu.memory_space<vmem>>, %arg3: memref<2x128xf32, #tpu.memory_space<vmem>>) attributes {dimension_semantics = [], scalar_prefetch = 0 : i64, scratch_operands = 0 : i64, tpu.core_type = #tpu.core_type<tc>} {
    %c0 = arith.constant 0 : index
    %c0_0 = arith.constant 0 : index
    %0 = vector.load %arg0[%c0, %c0_0] : memref<2x2048xbf16, #tpu.memory_space<vmem>>, vector<2x2048xbf16>
    %c0_1 = arith.constant 0 : index
    %c0_2 = arith.constant 0 : index
    %1 = vector.load %arg1[%c0_1, %c0_2] : memref<2048x128xbf16, #tpu.memory_space<vmem>>, vector<2048x128xbf16>
    %cst = arith.constant dense<0.000000e+00> : vector<2x128xf32>
    %2 = tpu.matmul %0, %1, %cst {dimension_numbers = #tpu.dot_dimension_numbers<[1], [0], [0], [1], [0, 0, 1, 1], [], []>} : vector<2x2048xbf16>, vector<2048x128xbf16>, vector<2x128xf32> -> vector<2x128xf32>
    %c0_3 = arith.constant 0 : index
    %c0_4 = arith.constant 0 : index
    %3 = vector.load %arg2[%c0_3, %c0_4] : memref<1x128xf32, #tpu.memory_space<vmem>>, vector<1x128xf32>
    %4 = vector.broadcast %3 : vector<1x128xf32> to vector<2x128xf32>
    %5 = arith.addf %2, %4 : vector<2x128xf32>
    %c0_5 = arith.constant 0 : index
    %c0_6 = arith.constant 0 : index
    %6 = vector.load %arg3[%c0_5, %c0_6] : memref<2x128xf32, #tpu.memory_space<vmem>>, vector<2x128xf32>
    tpu.vector_store %arg3[%c0_5, %c0_6], %5 {strides = array<i32>} : memref<2x128xf32, #tpu.memory_space<vmem>>, vector<2x128xf32>,
    return
  }
}

</mosaic_0001>

<llo_original>
// kernel: toy_conv_forward.3
$region0: #{toy_conv_forward.3}
  #allocation0 [shape = 'u32[]', space=smem, size = 0x4, offset = 0x4, fixed_abs, tag = 'smem constant byte address 0x4 - core index']
  #allocation1 [shape = 'u32[144,128]{1,0:T(1,128)}', space=vmem, size = 0x12000, scoped, tag = 'internal scratch']
  %s0 = inlined_call_operand.vmem [shape: bf16[512,1152], index: 0, kind: input, shape index: {}]
  %s1 = inlined_call_operand.vmem [shape: bf16[1152,128], index: 1, kind: input, shape index: {}]
  %s2 = inlined_call_operand.vmem [shape: f32[1,128], index: 2, kind: input, shape index: {}]
  %s3 = inlined_call_operand.vmem [shape: f32[1,128], index: 3, kind: input, shape index: {}]
  %s4 = inlined_call_operand.vmem [shape: f32[1,128], index: 4, kind: input, shape index: {}]
  %s5 = inlined_call_operand.vmem [shape: bf16[128,128], index: 5, kind: output, shape index: {}]
  %s6 = sld [smem:[#allocation0]]
  $region30: #{toy_conv_forward.3} parent=0
    _
  %s8 = ssub.s32 1, %s6
  %s9 = scalar_select 0, %s8, %s6
  // Predicated region
  $region2: #{toy_conv_forward.3} parent=0 // pred_check
    _
  $region3: #{toy_conv_forward.3} parent=0 // pred_check_branch
    %11 = sbr.rel (0) target = $region5
  $region4: #{toy_conv_forward.3} parent=0 // pred_region
    _
  $region5: #{toy_conv_forward.3} parent=0 // pred_fallthru
    _
  // Predicated region
  $region6: #{toy_conv_forward.3} parent=0 // pred_check
    _
  $region7: #{toy_conv_forward.3} parent=0 // pred_check_branch
    %13 = sbr.rel (0) target = $region9
  $region8: #{toy_conv_forward.3} parent=0 // pred_region
    _
  $region9: #{toy_conv_forward.3} parent=0 // pred_fallthru
    _
  // Predicated region
  $region10: #{toy_conv_forward.3} parent=0 // pred_check
    _
  $region11: #{toy_conv_forward.3} parent=0 // pred_check_branch
    %15 = sbr.rel (0) target = $region13
  $region12: #{toy_conv_forward.3} parent=0 // pred_region
    _
  $region13: #{toy_conv_forward.3} parent=0 // pred_fallthru
    _
  // Predicated region
  $region14: #{toy_conv_forward.3} parent=0 // pred_check
    _
  $region15: #{toy_conv_forward.3} parent=0 // pred_check_branch
    %17 = sbr.rel (0) target = $region17
  $region16: #{toy_conv_forward.3} parent=0 // pred_region
    _
  $region17: #{toy_conv_forward.3} parent=0 // pred_fallthru
    _
  // Predicated region
  $region18: #{toy_conv_forward.3} parent=0 // pred_check
    _
  $region19: #{toy_conv_forward.3} parent=0 // pred_check_branch
    %19 = sbr.rel (0) target = $region21
  $region20: #{toy_conv_forward.3} parent=0 // pred_region
    _
  $region21: #{toy_conv_forward.3} parent=0 // pred_fallthru
    _
  %v21 = vld [vmem:[%s0] sm:$0xff]
  %v22 = vld [vmem:[%s0 + $0x8] sm:$0xff]
  %v23 = vld [vmem:[%s0 + $0x10] sm:$0xff]
  %v24 = vld [vmem:[%s0 + $0x18] sm:$0xff]
  %v25 = vld [vmem:[%s0 + $0x20] sm:$0xf]
  %v26 = vld [vmem:[%s0 + $0x24] sm:$0xff]
  %v27 = vld [vmem:[%s0 + $0x2c] sm:$0xff]
  %v28 = vld [vmem:[%s0 + $0x34] sm:$0xff]
  %v29 = vld [vmem:[%s0 + $0x3c] sm:$0xff]
  %v30 = vld [vmem:[%s0 + $0x44] sm:$0xf]
  %v31 = vld [vmem:[%s0 + $0x48] sm:$0xff]
  %v32 = vld [vmem:[%s0 + $0x50] sm:$0xff]
  %v33 = vld [vmem:[%s0 + $0x58] sm:$0xff]
  %v34 = vld [vmem:[%s0 + $0x60] sm:$0xff]
  %v35 = vld [vmem:[%s0 + $0x68] sm:$0xf]
  %v36 = vld [vmem:[%s0 + $0x6c] sm:$0xff]
  %v37 = vld [vmem:[%s0 + $0x74] sm:$0xff]
  %v38 = vld [vmem:[%s0 + $0x7c] sm:$0xff]
  %v39 = vld [vmem:[%s0 + $0x84] sm:$0xff]
  %v40 = vld [vmem:[%s0 + $0x8c] sm:$0xf]
  %v41 = vld [vmem:[%s0 + $0x90] sm:$0xff]
  %v42 = vld [vmem:[%s0 + $0x98] sm:$0xff]
  %v43 = vld [vmem:[%s0 + $0xa0] sm:$0xff]
  %v44 = vld [vmem:[%s0 + $0xa8] sm:$0xff]
  %v45 = vld [vmem:[%s0 + $0xb0] sm:$0xf]
  %v46 = vld [vmem:[%s0 + $0xb4] sm:$0xff]
  %v47 = vld [vmem:[%s0 + $0xbc] sm:$0xff]
  %v48 = vld [vmem:[%s0 + $0xc4] sm:$0xff]
  %v49 = vld [vmem:[%s0 + $0xcc] sm:$0xff]
  %v50 = vld [vmem:[%s0 + $0xd4] sm:$0xf]
  %v51 = vld [vmem:[%s0 + $0xd8] sm:$0xff]
  %v52 = vld [vmem:[%s0 + $0xe0] sm:$0xff]
  %v53 = vld [vmem:[%s0 + $0xe8] sm:$0xff]
  %v54 = vld [vmem:[%s0 + $0xf0] sm:$0xff]
  %v55 = vld [vmem:[%s0 + $0xf8] sm:$0xf]
  %v56 = vld [vmem:[%s0 + $0xfc] sm:$0xff]
  %v57 = vld [vmem:[%s0 + $0x104] sm:$0xff]
  %v58 = vld [vmem:[%s0 + $0x10c] sm:$0xff]
  %v59 = vld [vmem:[%s0 + $0x114] sm:$0xff]
  %v60 = vld [vmem:[%s0 + $0x11c] sm:$0xf]
  %v61 = vld [vmem:[%s0 + $0x120] sm:$0xff]
  %v62 = vld [vmem:[%s0 + $0x128] sm:$0xff]
  %v63 = vld [vmem:[%s0 + $0x130] sm:$0xff]
  %v64 = vld [vmem:[%s0 + $0x138] sm:$0xff]
  %v65 = vld [vmem:[%s0 + $0x140] sm:$0xf]
  %v66 = vld [vmem:[%s0 + $0x144] sm:$0xff]
  %v67 = vld [vmem:[%s0 + $0x14c] sm:$0xff]
  %v68 = vld [vmem:[%s0 + $0x154] sm:$0xff]
  %v69 = vld [vmem:[%s0 + $0x15c] sm:$0xff]
  %v70 = vld [vmem:[%s0 + $0x164] sm:$0xf]
  %v71 = vld [vmem:[%s0 + $0x168] sm:$0xff]
  %v72 = vld [vmem:[%s0 + $0x170] sm:$0xff]
  %v73 = vld [vmem:[%s0 + $0x178] sm:$0xff]
  %v74 = vld [vmem:[%s0 + $0x180] sm:$0xff]
  %v75 = vld [vmem:[%s0 + $0x188] sm:$0xf]
  %v76 = vld [vmem:[%s0 + $0x18c] sm:$0xff]
  %v77 = vld [vmem:[%s0 + $0x194] sm:$0xff]
  %v78 = vld [vmem:[%s0 + $0x19c] sm:$0xff]
  %v79 = vld [vmem:[%s0 + $0x1a4] sm:$0xff]
  %v80 = vld [vmem:[%s0 + $0x1ac] sm:$0xf]
  %v81 = vld [vmem:[%s0 + $0x1b0] sm:$0xff]
  %v82 = vld [vmem:[%s0 + $0x1b8] sm:$0xff]
  %v83 = vld [vmem:[%s0 + $0x1c0] sm:$0xff]
  %v84 = vld [vmem:[%s0 + $0x1c8] sm:$0xff]
  %v85 = vld [vmem:[%s0 + $0x1d0] sm:$0xf]
  %v86 = vld [vmem:[%s0 + $0x1d4] sm:$0xff]
  %v87 = vld [vmem:[%s0 + $0x1dc] sm:$0xff]
  %v88 = vld [vmem:[%s0 + $0x1e4] sm:$0xff]
  %v89 = vld [vmem:[%s0 + $0x1ec] sm:$0xff]
  %v90 = vld [vmem:[%s0 + $0x1f4] sm:$0xf]
  %v91 = vld [vmem:[%s0 + $0x1f8] sm:$0xff]
  %v92 = vld [vmem:[%s0 + $0x200] sm:$0xff]
  %v93 = vld [vmem:[%s0 + $0x208] sm:$0xff]
  %v94 = vld [vmem:[%s0 + $0x210] sm:$0xff]
  %v95 = vld [vmem:[%s0 + $0x218] sm:$0xf]
  %v96 = vld [vmem:[%s0 + $0x21c] sm:$0xff]
  %v97 = vld [vmem:[%s0 + $0x224] sm:$0xff]
  %v98 = vld [vmem:[%s0 + $0x22c] sm:$0xff]
  %v99 = vld [vmem:[%s0 + $0x234] sm:$0xff]
  %v100 = vld [vmem:[%s0 + $0x23c] sm:$0xf]
  %v101 = vld [vmem:[%s0 + $0x240] sm:$0xff]
  %v102 = vld [vmem:[%s0 + $0x248] sm:$0xff]
  %v103 = vld [vmem:[%s0 + $0x250] sm:$0xff]
  %v104 = vld [vmem:[%s0 + $0x258] sm:$0xff]
  %v105 = vld [vmem:[%s0 + $0x260] sm:$0xf]
  %v106 = vld [vmem:[%s0 + $0x264] sm:$0xff]
  %v107 = vld [vmem:[%s0 + $0x26c] sm:$0xff]
  %v108 = vld [vmem:[%s0 + $0x274] sm:$0xff]
  %v109 = vld [vmem:[%s0 + $0x27c] sm:$0xff]
  %v110 = vld [vmem:[%s0 + $0x284] sm:$0xf]
  %v111 = vld [vmem:[%s0 + $0x288] sm:$0xff]
  %v112 = vld [vmem:[%s0 + $0x290] sm:$0xff]
  %v113 = vld [vmem:[%s0 + $0x298] sm:$0xff]
  %v114 = vld [vmem:[%s0 + $0x2a0] sm:$0xff]
  %v115 = vld [vmem:[%s0 + $0x2a8] sm:$0xf]
  %v116 = vld [vmem:[%s0 + $0x2ac] sm:$0xff]
  %v117 = vld [vmem:[%s0 + $0x2b4] sm:$0xff]
  %v118 = vld [vmem:[%s0 + $0x2bc] sm:$0xff]
  %v119 = vld [vmem:[%s0 + $0x2c4] sm:$0xff]
  %v120 = vld [vmem:[%s0 + $0x2cc] sm:$0xf]
  %v121 = vld [vmem:[%s0 + $0x2d0] sm:$0xff]
  %v122 = vld [vmem:[%s0 + $0x2d8] sm:$0xff]
  %v123 = vld [vmem:[%s0 + $0x2e0] sm:$0xff]
  %v124 = vld [vmem:[%s0 + $0x2e8] sm:$0xff]
  %v125 = vld [vmem:[%s0 + $0x2f0] sm:$0xf]
  %v126 = vld [vmem:[%s0 + $0x2f4] sm:$0xff]
  %v127 = vld [vmem:[%s0 + $0x2fc] sm:$0xff]
  %v128 = vld [vmem:[%s0 + $0x304] sm:$0xff]
  %v129 = vld [vmem:[%s0 + $0x30c] sm:$0xff]
  %v130 = vld [vmem:[%s0 + $0x314] sm:$0xf]
  %v131 = vld [vmem:[%s0 + $0x318] sm:$0xff]
  %v132 = vld [vmem:[%s0 + $0x320] sm:$0xff]
  %v133 = vld [vmem:[%s0 + $0x328] sm:$0xff]
  %v134 = vld [vmem:[%s0 + $0x330] sm:$0xff]
  %v135 = vld [vmem:[%s0 + $0x338] sm:$0xf]
  %v136 = vld [vmem:[%s0 + $0x33c] sm:$0xff]
  %v137 = vld [vmem:[%s0 + $0x344] sm:$0xff]
  %v138 = vld [vmem:[%s0 + $0x34c] sm:$0xff]
  %v139 = vld [vmem:[%s0 + $0x354] sm:$0xff]
  %v140 = vld [vmem:[%s0 + $0x35c] sm:$0xf]
  %v141 = vld [vmem:[%s0 + $0x360] sm:$0xff]
  %v142 = vld [vmem:[%s0 + $0x368] sm:$0xff]
  %v143 = vld [vmem:[%s0 + $0x370] sm:$0xff]
  %v144 = vld [vmem:[%s0 + $0x378] sm:$0xff]
  %v145 = vld [vmem:[%s0 + $0x380] sm:$0xf]
  %v146 = vld [vmem:[%s0 + $0x384] sm:$0xff]
  %v147 = vld [vmem:[%s0 + $0x38c] sm:$0xff]
  %v148 = vld [vmem:[%s0 + $0x394] sm:$0xff]
  %v149 = vld [vmem:[%s0 + $0x39c] sm:$0xff]
  %v150 = vld [vmem:[%s0 + $0x3a4] sm:$0xf]
  %v151 = vld [vmem:[%s0 + $0x3a8] sm:$0xff]
  %v152 = vld [vmem:[%s0 + $0x3b0] sm:$0xff]
  %v153 = vld [vmem:[%s0 + $0x3b8] sm:$0xff]
  %v154 = vld [vmem:[%s0 + $0x3c0] sm:$0xff]
  %v155 = vld [vmem:[%s0 + $0x3c8] sm:$0xf]
  %v156 = vld [vmem:[%s0 + $0x3cc] sm:$0xff]
  %v157 = vld [vmem:[%s0 + $0x3d4] sm:$0xff]
  %v158 = vld [vmem:[%s0 + $0x3dc] sm:$0xff]
  %v159 = vld [vmem:[%s0 + $0x3e4] sm:$0xff]
  %v160 = vld [vmem:[%s0 + $0x3ec] sm:$0xf]
  %v161 = vld [vmem:[%s0 + $0x3f0] sm:$0xff]
  %v162 = vld [vmem:[%s0 + $0x3f8] sm:$0xff]
  %v163 = vld [vmem:[%s0 + $0x400] sm:$0xff]
  %v164 = vld [vmem:[%s0 + $0x408] sm:$0xff]
  %v165 = vld [vmem:[%s0 + $0x410] sm:$0xf]
  %v166 = vld [vmem:[%s0 + $0x414] sm:$0xff]
  %v167 = vld [vmem:[%s0 + $0x41c] sm:$0xff]
  %v168 = vld [vmem:[%s0 + $0x424] sm:$0xff]
  %v169 = vld [vmem:[%s0 + $0x42c] sm:$0xff]
  %v170 = vld [vmem:[%s0 + $0x434] sm:$0xf]
  %v171 = vld [vmem:[%s0 + $0x438] sm:$0xff]
  %v172 = vld [vmem:[%s0 + $0x440] sm:$0xff]
  %v173 = vld [vmem:[%s0 + $0x448] sm:$0xff]
  %v174 = vld [vmem:[%s0 + $0x450] sm:$0xff]
  %v175 = vld [vmem:[%s0 + $0x458] sm:$0xf]
  %v176 = vld [vmem:[%s0 + $0x45c] sm:$0xff]
  %v177 = vld [vmem:[%s0 + $0x464] sm:$0xff]
  %v178 = vld [vmem:[%s0 + $0x46c] sm:$0xff]
  %v179 = vld [vmem:[%s0 + $0x474] sm:$0xff]
  %v180 = vld [vmem:[%s0 + $0x47c] sm:$0xf]
  %v181 = vld [vmem:[%s0 + $0x480] sm:$0xff]
  %v182 = vld [vmem:[%s0 + $0x488] sm:$0xff]
  %v183 = vld [vmem:[%s0 + $0x490] sm:$0xff]
  %v184 = vld [vmem:[%s0 + $0x498] sm:$0xff]
  %v185 = vld [vmem:[%s0 + $0x4a0] sm:$0xf]
  %v186 = vld [vmem:[%s0 + $0x4a4] sm:$0xff]
  %v187 = vld [vmem:[%s0 + $0x4ac] sm:$0xff]
  %v188 = vld [vmem:[%s0 + $0x4b4] sm:$0xff]
  %v189 = vld [vmem:[%s0 + $0x4bc] sm:$0xff]
  %v190 = vld [vmem:[%s0 + $0x4c4] sm:$0xf]
  %v191 = vld [vmem:[%s0 + $0x4c8] sm:$0xff]
  %v192 = vld [vmem:[%s0 + $0x4d0] sm:$0xff]
  %v193 = vld [vmem:[%s0 + $0x4d8] sm:$0xff]
  %v194 = vld [vmem:[%s0 + $0x4e0] sm:$0xff]
  %v195 = vld [vmem:[%s0 + $0x4e8] sm:$0xf]
  %v196 = vld [vmem:[%s0 + $0x4ec] sm:$0xff]
  %v197 = vld [vmem:[%s0 + $0x4f4] sm:$0xff]
  %v198 = vld [vmem:[%s0 + $0x4fc] sm:$0xff]
  %v199 = vld [vmem:[%s0 + $0x504] sm:$0xff]
  %v200 = vld [vmem:[%s0 + $0x50c] sm:$0xf]
  %v201 = vld [vmem:[%s0 + $0x510] sm:$0xff]
  %v202 = vld [vmem:[%s0 + $0x518] sm:$0xff]
  %v203 = vld [vmem:[%s0 + $0x520] sm:$0xff]
  %v204 = vld [vmem:[%s0 + $0x528] sm:$0xff]
  %v205 = vld [vmem:[%s0 + $0x530] sm:$0xf]
  %v206 = vld [vmem:[%s0 + $0x534] sm:$0xff]
  %v207 = vld [vmem:[%s0 + $0x53c] sm:$0xff]
  %v208 = vld [vmem:[%s0 + $0x544] sm:$0xff]
  %v209 = vld [vmem:[%s0 + $0x54c] sm:$0xff]
  %v210 = vld [vmem:[%s0 + $0x554] sm:$0xf]
  %v211 = vld [vmem:[%s0 + $0x558] sm:$0xff]
  %v212 = vld [vmem:[%s0 + $0x560] sm:$0xff]
  %v213 = vld [vmem:[%s0 + $0x568] sm:$0xff]
  %v214 = vld [vmem:[%s0 + $0x570] sm:$0xff]
  %v215 = vld [vmem:[%s0 + $0x578] sm:$0xf]
  %v216 = vld [vmem:[%s0 + $0x57c] sm:$0xff]
  %v217 = vld [vmem:[%s0 + $0x584] sm:$0xff]
  %v218 = vld [vmem:[%s0 + $0x58c] sm:$0xff]
  %v219 = vld [vmem:[%s0 + $0x594] sm:$0xff]
  %v220 = vld [vmem:[%s0 + $0x59c] sm:$0xf]
  %v221 = vld [vmem:[%s0 + $0x5a0] sm:$0xff]
  %v222 = vld [vmem:[%s0 + $0x5a8] sm:$0xff]
  %v223 = vld [vmem:[%s0 + $0x5b0] sm:$0xff]
  %v224 = vld [vmem:[%s0 + $0x5b8] sm:$0xff]
  %v225 = vld [vmem:[%s0 + $0x5c0] sm:$0xf]
  %v226 = vld [vmem:[%s0 + $0x5c4] sm:$0xff]
  %v227 = vld [vmem:[%s0 + $0x5cc] sm:$0xff]
  %v228 = vld [vmem:[%s0 + $0x5d4] sm:$0xff]
  %v229 = vld [vmem:[%s0 + $0x5dc] sm:$0xff]
  %v230 = vld [vmem:[%s0 + $0x5e4] sm:$0xf]
  %v231 = vld [vmem:[%s0 + $0x5e8] sm:$0xff]
  %v232 = vld [vmem:[%s0 + $0x5f0] sm:$0xff]
  %v233 = vld [vmem:[%s0 + $0x5f8] sm:$0xff]
  %v234 = vld [vmem:[%s0 + $0x600] sm:$0xff]
  %v235 = vld [vmem:[%s0 + $0x608] sm:$0xf]
  %v236 = vld [vmem:[%s0 + $0x60c] sm:$0xff]
  %v237 = vld [vmem:[%s0 + $0x614] sm:$0xff]
  %v238 = vld [vmem:[%s0 + $0x61c] sm:$0xff]
  %v239 = vld [vmem:[%s0 + $0x624] sm:$0xff]
  %v240 = vld [vmem:[%s0 + $0x62c] sm:$0xf]
  %v241 = vld [vmem:[%s0 + $0x630] sm:$0xff]
  %v242 = vld [vmem:[%s0 + $0x638] sm:$0xff]
  %v243 = vld [vmem:[%s0 + $0x640] sm:$0xff]
  %v244 = vld [vmem:[%s0 + $0x648] sm:$0xff]
  %v245 = vld [vmem:[%s0 + $0x650] sm:$0xf]
  %v246 = vld [vmem:[%s0 + $0x654] sm:$0xff]
  %v247 = vld [vmem:[%s0 + $0x65c] sm:$0xff]
  %v248 = vld [vmem:[%s0 + $0x664] sm:$0xff]
  %v249 = vld [vmem:[%s0 + $0x66c] sm:$0xff]
  %v250 = vld [vmem:[%s0 + $0x674] sm:$0xf]
  %v251 = vld [vmem:[%s0 + $0x678] sm:$0xff]
  %v252 = vld [vmem:[%s0 + $0x680] sm:$0xff]
  %v253 = vld [vmem:[%s0 + $0x688] sm:$0xff]
  %v254 = vld [vmem:[%s0 + $0x690] sm:$0xff]
  %v255 = vld [vmem:[%s0 + $0x698] sm:$0xf]
  %v256 = vld [vmem:[%s0 + $0x69c] sm:$0xff]
  %v257 = vld [vmem:[%s0 + $0x6a4] sm:$0xff]
  %v258 = vld [vmem:[%s0 + $0x6ac] sm:$0xff]
  %v259 = vld [vmem:[%s0 + $0x6b4] sm:$0xff]
  %v260 = vld [vmem:[%s0 + $0x6bc] sm:$0xf]
  %v261 = vld [vmem:[%s0 + $0x6c0] sm:$0xff]
  %v262 = vld [vmem:[%s0 + $0x6c8] sm:$0xff]
  %v263 = vld [vmem:[%s0 + $0x6d0] sm:$0xff]
  %v264 = vld [vmem:[%s0 + $0x6d8] sm:$0xff]
  %v265 = vld [vmem:[%s0 + $0x6e0] sm:$0xf]
  %v266 = vld [vmem:[%s0 + $0x6e4] sm:$0xff]
  %v267 = vld [vmem:[%s0 + $0x6ec] sm:$0xff]
  %v268 = vld [vmem:[%s0 + $0x6f4] sm:$0xff]
  %v269 = vld [vmem:[%s0 + $0x6fc] sm:$0xff]
  %v270 = vld [vmem:[%s0 + $0x704] sm:$0xf]
  %v271 = vld [vmem:[%s0 + $0x708] sm:$0xff]
  %v272 = vld [vmem:[%s0 + $0x710] sm:$0xff]
  %v273 = vld [vmem:[%s0 + $0x718] sm:$0xff]
  %v274 = vld [vmem:[%s0 + $0x720] sm:$0xff]
  %v275 = vld [vmem:[%s0 + $0x728] sm:$0xf]
  %v276 = vld [vmem:[%s0 + $0x72c] sm:$0xff]
  %v277 = vld [vmem:[%s0 + $0x734] sm:$0xff]
  %v278 = vld [vmem:[%s0 + $0x73c] sm:$0xff]
  %v279 = vld [vmem:[%s0 + $0x744] sm:$0xff]
  %v280 = vld [vmem:[%s0 + $0x74c] sm:$0xf]
  %v281 = vld [vmem:[%s0 + $0x750] sm:$0xff]
  %v282 = vld [vmem:[%s0 + $0x758] sm:$0xff]
  %v283 = vld [vmem:[%s0 + $0x760] sm:$0xff]
  %v284 = vld [vmem:[%s0 + $0x768] sm:$0xff]
  %v285 = vld [vmem:[%s0 + $0x770] sm:$0xf]
  %v286 = vld [vmem:[%s0 + $0x774] sm:$0xff]
  %v287 = vld [vmem:[%s0 + $0x77c] sm:$0xff]
  %v288 = vld [vmem:[%s0 + $0x784] sm:$0xff]
  %v289 = vld [vmem:[%s0 + $0x78c] sm:$0xff]
  %v290 = vld [vmem:[%s0 + $0x794] sm:$0xf]
  %v291 = vld [vmem:[%s0 + $0x798] sm:$0xff]
  %v292 = vld [vmem:[%s0 + $0x7a0] sm:$0xff]
  %v293 = vld [vmem:[%s0 + $0x7a8] sm:$0xff]
  %v294 = vld [vmem:[%s0 + $0x7b0] sm:$0xff]
  %v295 = vld [vmem:[%s0 + $0x7b8] sm:$0xf]
  %v296 = vld [vmem:[%s0 + $0x7bc] sm:$0xff]
  %v297 = vld [vmem:[%s0 + $0x7c4] sm:$0xff]
  %v298 = vld [vmem:[%s0 + $0x7cc] sm:$0xff]
  %v299 = vld [vmem:[%s0 + $0x7d4] sm:$0xff]
  %v300 = vld [vmem:[%s0 + $0x7dc] sm:$0xf]
  %v301 = vld [vmem:[%s0 + $0x7e0] sm:$0xff]
  %v302 = vld [vmem:[%s0 + $0x7e8] sm:$0xff]
  %v303 = vld [vmem:[%s0 + $0x7f0] sm:$0xff]
  %v304 = vld [vmem:[%s0 + $0x7f8] sm:$0xff]
  %v305 = vld [vmem:[%s0 + $0x800] sm:$0xf]
  %v306 = vld [vmem:[%s0 + $0x804] sm:$0xff]
  %v307 = vld [vmem:[%s0 + $0x80c] sm:$0xff]
  %v308 = vld [vmem:[%s0 + $0x814] sm:$0xff]
  %v309 = vld [vmem:[%s0 + $0x81c] sm:$0xff]
  %v310 = vld [vmem:[%s0 + $0x824] sm:$0xf]
  %v311 = vld [vmem:[%s0 + $0x828] sm:$0xff]
  %v312 = vld [vmem:[%s0 + $0x830] sm:$0xff]
  %v313 = vld [vmem:[%s0 + $0x838] sm:$0xff]
  %v314 = vld [vmem:[%s0 + $0x840] sm:$0xff]
  %v315 = vld [vmem:[%s0 + $0x848] sm:$0xf]
  %v316 = vld [vmem:[%s0 + $0x84c] sm:$0xff]
  %v317 = vld [vmem:[%s0 + $0x854] sm:$0xff]
  %v318 = vld [vmem:[%s0 + $0x85c] sm:$0xff]
  %v319 = vld [vmem:[%s0 + $0x864] sm:$0xff]
  %v320 = vld [vmem:[%s0 + $0x86c] sm:$0xf]
  %v321 = vld [vmem:[%s0 + $0x870] sm:$0xff]
  %v322 = vld [vmem:[%s0 + $0x878] sm:$0xff]
  %v323 = vld [vmem:[%s0 + $0x880] sm:$0xff]
  %v324 = vld [vmem:[%s0 + $0x888] sm:$0xff]
  %v325 = vld [vmem:[%s0 + $0x890] sm:$0xf]
  %v326 = vld [vmem:[%s0 + $0x894] sm:$0xff]
  %v327 = vld [vmem:[%s0 + $0x89c] sm:$0xff]
  %v328 = vld [vmem:[%s0 + $0x8a4] sm:$0xff]
  %v329 = vld [vmem:[%s0 + $0x8ac] sm:$0xff]
  %v330 = vld [vmem:[%s0 + $0x8b4] sm:$0xf]
  %v331 = vld [vmem:[%s0 + $0x8b8] sm:$0xff]
  %v332 = vld [vmem:[%s0 + $0x8c0] sm:$0xff]
  %v333 = vld [vmem:[%s0 + $0x8c8] sm:$0xff]
  %v334 = vld [vmem:[%s0 + $0x8d0] sm:$0xff]
  %v335 = vld [vmem:[%s0 + $0x8d8] sm:$0xf]
  %v336 = vld [vmem:[%s0 + $0x8dc] sm:$0xff]
  %v337 = vld [vmem:[%s0 + $0x8e4] sm:$0xff]
  %v338 = vld [vmem:[%s0 + $0x8ec] sm:$0xff]
  %v339 = vld [vmem:[%s0 + $0x8f4] sm:$0xff]
  %v340 = vld [vmem:[%s0 + $0x8fc] sm:$0xf]
  %v341 = vld [vmem:[%s1] sm:$0xf]
  %v342 = vld [vmem:[%s1 + $0x4] sm:$0xf]
  %v343 = vld [vmem:[%s1 + $0x8] sm:$0xf]
  %v344 = vld [vmem:[%s1 + $0xc] sm:$0xf]
  %v345 = vld [vmem:[%s1 + $0x10] sm:$0xf]
  %v346 = vld [vmem:[%s1 + $0x14] sm:$0xf]
  %v347 = vld [vmem:[%s1 + $0x18] sm:$0xf]
  %v348 = vld [vmem:[%s1 + $0x1c] sm:$0xf]
  %v349 = vld [vmem:[%s1 + $0x20] sm:$0xf]
  %v350 = vld [vmem:[%s1 + $0x24] sm:$0xf]
  %v351 = vld [vmem:[%s1 + $0x28] sm:$0xf]
  %v352 = vld [vmem:[%s1 + $0x2c] sm:$0xf]
  %v353 = vld [vmem:[%s1 + $0x30] sm:$0xf]
  %v354 = vld [vmem:[%s1 + $0x34] sm:$0xf]
  %v355 = vld [vmem:[%s1 + $0x38] sm:$0xf]
  %v356 = vld [vmem:[%s1 + $0x3c] sm:$0xf]
  %v357 = vld [vmem:[%s1 + $0x40] sm:$0xf]
  %v358 = vld [vmem:[%s1 + $0x44] sm:$0xf]
  %v359 = vld [vmem:[%s1 + $0x48] sm:$0xf]
  %v360 = vld [vmem:[%s1 + $0x4c] sm:$0xf]
  %v361 = vld [vmem:[%s1 + $0x50] sm:$0xf]
  %v362 = vld [vmem:[%s1 + $0x54] sm:$0xf]
  %v363 = vld [vmem:[%s1 + $0x58] sm:$0xf]
  %v364 = vld [vmem:[%s1 + $0x5c] sm:$0xf]
  %v365 = vld [vmem:[%s1 + $0x60] sm:$0xf]
  %v366 = vld [vmem:[%s1 + $0x64] sm:$0xf]
  %v367 = vld [vmem:[%s1 + $0x68] sm:$0xf]
  %v368 = vld [vmem:[%s1 + $0x6c] sm:$0xf]
  %v369 = vld [vmem:[%s1 + $0x70] sm:$0xf]
  %v370 = vld [vmem:[%s1 + $0x74] sm:$0xf]
  %v371 = vld [vmem:[%s1 + $0x78] sm:$0xf]
  %v372 = vld [vmem:[%s1 + $0x7c] sm:$0xf]
  %v373 = vld [vmem:[%s1 + $0x80] sm:$0xf]
  %v374 = vld [vmem:[%s1 + $0x84] sm:$0xf]
  %v375 = vld [vmem:[%s1 + $0x88] sm:$0xf]
  %v376 = vld [vmem:[%s1 + $0x8c] sm:$0xf]
  %v377 = vld [vmem:[%s1 + $0x90] sm:$0xf]
  %v378 = vld [vmem:[%s1 + $0x94] sm:$0xf]
  %v379 = vld [vmem:[%s1 + $0x98] sm:$0xf]
  %v380 = vld [vmem:[%s1 + $0x9c] sm:$0xf]
  %v381 = vld [vmem:[%s1 + $0xa0] sm:$0xf]
  %v382 = vld [vmem:[%s1 + $0xa4] sm:$0xf]
  %v383 = vld [vmem:[%s1 + $0xa8] sm:$0xf]
  %v384 = vld [vmem:[%s1 + $0xac] sm:$0xf]
  %v385 = vld [vmem:[%s1 + $0xb0] sm:$0xf]
  %v386 = vld [vmem:[%s1 + $0xb4] sm:$0xf]
  %v387 = vld [vmem:[%s1 + $0xb8] sm:$0xf]
  %v388 = vld [vmem:[%s1 + $0xbc] sm:$0xf]
  %v389 = vld [vmem:[%s1 + $0xc0] sm:$0xf]
  %v390 = vld [vmem:[%s1 + $0xc4] sm:$0xf]
  %v391 = vld [vmem:[%s1 + $0xc8] sm:$0xf]
  %v392 = vld [vmem:[%s1 + $0xcc] sm:$0xf]
  %v393 = vld [vmem:[%s1 + $0xd0] sm:$0xf]
  %v394 = vld [vmem:[%s1 + $0xd4] sm:$0xf]
  %v395 = vld [vmem:[%s1 + $0xd8] sm:$0xf]
  %v396 = vld [vmem:[%s1 + $0xdc] sm:$0xf]
  %v397 = vld [vmem:[%s1 + $0xe0] sm:$0xf]
  %v398 = vld [vmem:[%s1 + $0xe4] sm:$0xf]
  %v399 = vld [vmem:[%s1 + $0xe8] sm:$0xf]
  %v400 = vld [vmem:[%s1 + $0xec] sm:$0xf]
  %v401 = vld [vmem:[%s1 + $0xf0] sm:$0xf]
  %v402 = vld [vmem:[%s1 + $0xf4] sm:$0xf]
  %v403 = vld [vmem:[%s1 + $0xf8] sm:$0xf]
  %v404 = vld [vmem:[%s1 + $0xfc] sm:$0xf]
  %v405 = vld [vmem:[%s1 + $0x100] sm:$0xf]
  %v406 = vld [vmem:[%s1 + $0x104] sm:$0xf]
  %v407 = vld [vmem:[%s1 + $0x108] sm:$0xf]
  %v408 = vld [vmem:[%s1 + $0x10c] sm:$0xf]
  %v409 = vld [vmem:[%s1 + $0x110] sm:$0xf]
  %v410 = vld [vmem:[%s1 + $0x114] sm:$0xf]
  %v411 = vld [vmem:[%s1 + $0x118] sm:$0xf]
  %v412 = vld [vmem:[%s1 + $0x11c] sm:$0xf]
  %v413 = vld [vmem:[%s1 + $0x120] sm:$0xf]
  %v414 = vld [vmem:[%s1 + $0x124] sm:$0xf]
  %v415 = vld [vmem:[%s1 + $0x128] sm:$0xf]
  %v416 = vld [vmem:[%s1 + $0x12c] sm:$0xf]
  %v417 = vld [vmem:[%s1 + $0x130] sm:$0xf]
  %v418 = vld [vmem:[%s1 + $0x134] sm:$0xf]
  %v419 = vld [vmem:[%s1 + $0x138] sm:$0xf]
  %v420 = vld [vmem:[%s1 + $0x13c] sm:$0xf]
  %v421 = vld [vmem:[%s1 + $0x140] sm:$0xf]
  %v422 = vld [vmem:[%s1 + $0x144] sm:$0xf]
  %v423 = vld [vmem:[%s1 + $0x148] sm:$0xf]
  %v424 = vld [vmem:[%s1 + $0x14c] sm:$0xf]
  %v425 = vld [vmem:[%s1 + $0x150] sm:$0xf]
  %v426 = vld [vmem:[%s1 + $0x154] sm:$0xf]
  %v427 = vld [vmem:[%s1 + $0x158] sm:$0xf]
  %v428 = vld [vmem:[%s1 + $0x15c] sm:$0xf]
  %v429 = vld [vmem:[%s1 + $0x160] sm:$0xf]
  %v430 = vld [vmem:[%s1 + $0x164] sm:$0xf]
  %v431 = vld [vmem:[%s1 + $0x168] sm:$0xf]
  %v432 = vld [vmem:[%s1 + $0x16c] sm:$0xf]
  %v433 = vld [vmem:[%s1 + $0x170] sm:$0xf]
  %v434 = vld [vmem:[%s1 + $0x174] sm:$0xf]
  %v435 = vld [vmem:[%s1 + $0x178] sm:$0xf]
  %v436 = vld [vmem:[%s1 + $0x17c] sm:$0xf]
  %v437 = vld [vmem:[%s1 + $0x180] sm:$0xf]
  %v438 = vld [vmem:[%s1 + $0x184] sm:$0xf]
  %v439 = vld [vmem:[%s1 + $0x188] sm:$0xf]
  %v440 = vld [vmem:[%s1 + $0x18c] sm:$0xf]
  %v441 = vld [vmem:[%s1 + $0x190] sm:$0xf]
  %v442 = vld [vmem:[%s1 + $0x194] sm:$0xf]
  %v443 = vld [vmem:[%s1 + $0x198] sm:$0xf]
  %v444 = vld [vmem:[%s1 + $0x19c] sm:$0xf]
  %v445 = vld [vmem:[%s1 + $0x1a0] sm:$0xf]
  %v446 = vld [vmem:[%s1 + $0x1a4] sm:$0xf]
  %v447 = vld [vmem:[%s1 + $0x1a8] sm:$0xf]
  %v448 = vld [vmem:[%s1 + $0x1ac] sm:$0xf]
  %v449 = vld [vmem:[%s1 + $0x1b0] sm:$0xf]
  %v450 = vld [vmem:[%s1 + $0x1b4] sm:$0xf]
  %v451 = vld [vmem:[%s1 + $0x1b8] sm:$0xf]
  %v452 = vld [vmem:[%s1 + $0x1bc] sm:$0xf]
  %v453 = vld [vmem:[%s1 + $0x1c0] sm:$0xf]
  %v454 = vld [vmem:[%s1 + $0x1c4] sm:$0xf]
  %v455 = vld [vmem:[%s1 + $0x1c8] sm:$0xf]
  %v456 = vld [vmem:[%s1 + $0x1cc] sm:$0xf]
  %v457 = vld [vmem:[%s1 + $0x1d0] sm:$0xf]
  %v458 = vld [vmem:[%s1 + $0x1d4] sm:$0xf]
  %v459 = vld [vmem:[%s1 + $0x1d8] sm:$0xf]
  %v460 = vld [vmem:[%s1 + $0x1dc] sm:$0xf]
  %v461 = vld [vmem:[%s1 + $0x1e0] sm:$0xf]
  %v462 = vld [vmem:[%s1 + $0x1e4] sm:$0xf]
  %v463 = vld [vmem:[%s1 + $0x1e8] sm:$0xf]
  %v464 = vld [vmem:[%s1 + $0x1ec] sm:$0xf]
  %v465 = vld [vmem:[%s1 + $0x1f0] sm:$0xf]
  %v466 = vld [vmem:[%s1 + $0x1f4] sm:$0xf]
  %v467 = vld [vmem:[%s1 + $0x1f8] sm:$0xf]
  %v468 = vld [vmem:[%s1 + $0x1fc] sm:$0xf]
  %v469 = vld [vmem:[%s1 + $0x200] sm:$0xf]
  %v470 = vld [vmem:[%s1 + $0x204] sm:$0xf]
  %v471 = vld [vmem:[%s1 + $0x208] sm:$0xf]
  %v472 = vld [vmem:[%s1 + $0x20c] sm:$0xf]
  %v473 = vld [vmem:[%s1 + $0x210] sm:$0xf]
  %v474 = vld [vmem:[%s1 + $0x214] sm:$0xf]
  %v475 = vld [vmem:[%s1 + $0x218] sm:$0xf]
  %v476 = vld [vmem:[%s1 + $0x21c] sm:$0xf]
  %v477 = vld [vmem:[%s1 + $0x220] sm:$0xf]
  %v478 = vld [vmem:[%s1 + $0x224] sm:$0xf]
  %v479 = vld [vmem:[%s1 + $0x228] sm:$0xf]
  %v480 = vld [vmem:[%s1 + $0x22c] sm:$0xf]
  %v481 = vld [vmem:[%s1 + $0x230] sm:$0xf]
  %v482 = vld [vmem:[%s1 + $0x234] sm:$0xf]
  %v483 = vld [vmem:[%s1 + $0x238] sm:$0xf]
  %v484 = vld [vmem:[%s1 + $0x23c] sm:$0xf]
  %v485 = vld [vmem:[%s2] sm:$0x1]
  %v487 = vlaneseq
  %v488 = vshrl.u32 %v487, 7
  %v489 = vsub.s32 0, %v488
  %v490 = vrot.slane %v485, %v489
  %v812 = vunpack.c.l.b16 %v21
  %v813 = vunpack.c.h.b16 %v21
  %v814 = vunpack.c.l.b16 %v22
  %v815 = vunpack.c.h.b16 %v22
  %v816 = vunpack.c.l.b16 %v23
  %v817 = vunpack.c.h.b16 %v23
  %v818 = vunpack.c.l.b16 %v24
  %v819 = vunpack.c.h.b16 %v24
  %v820 = vunpack.c.l.b16 %v25
  %v821 = vunpack.c.l.b16 %v26
  %v822 = vunpack.c.h.b16 %v26
  %v823 = vunpack.c.l.b16 %v27
  %v824 = vunpack.c.h.b16 %v27
  %v825 = vunpack.c.l.b16 %v28
  %v826 = vunpack.c.h.b16 %v28
  %v827 = vunpack.c.l.b16 %v29
  %v828 = vunpack.c.h.b16 %v29
  %v829 = vunpack.c.l.b16 %v30
  %v830 = vunpack.c.l.b16 %v31
  %v831 = vunpack.c.h.b16 %v31
  %v832 = vunpack.c.l.b16 %v32
  %v833 = vunpack.c.h.b16 %v32
  %v834 = vunpack.c.l.b16 %v33
  %v835 = vunpack.c.h.b16 %v33
  %v836 = vunpack.c.l.b16 %v34
  %v837 = vunpack.c.h.b16 %v34
  %v838 = vunpack.c.l.b16 %v35
  %v839 = vunpack.c.l.b16 %v36
  %v840 = vunpack.c.h.b16 %v36
  %v841 = vunpack.c.l.b16 %v37
  %v842 = vunpack.c.h.b16 %v37
  %v843 = vunpack.c.l.b16 %v38
  %v844 = vunpack.c.h.b16 %v38
  %v845 = vunpack.c.l.b16 %v39
  %v846 = vunpack.c.h.b16 %v39
  %v847 = vunpack.c.l.b16 %v40
  %v848 = vunpack.c.l.b16 %v41
  %v849 = vunpack.c.h.b16 %v41
  %v850 = vunpack.c.l.b16 %v42
  %v851 = vunpack.c.h.b16 %v42
  %v852 = vunpack.c.l.b16 %v43
  %v853 = vunpack.c.h.b16 %v43
  %v854 = vunpack.c.l.b16 %v44
  %v855 = vunpack.c.h.b16 %v44
  %v856 = vunpack.c.l.b16 %v45
  %v857 = vunpack.c.l.b16 %v46
  %v858 = vunpack.c.h.b16 %v46
  %v859 = vunpack.c.l.b16 %v47
  %v860 = vunpack.c.h.b16 %v47
  %v861 = vunpack.c.l.b16 %v48
  %v862 = vunpack.c.h.b16 %v48
  %v863 = vunpack.c.l.b16 %v49
  %v864 = vunpack.c.h.b16 %v49
  %v865 = vunpack.c.l.b16 %v50
  %v866 = vunpack.c.l.b16 %v51
  %v867 = vunpack.c.h.b16 %v51
  %v868 = vunpack.c.l.b16 %v52
  %v869 = vunpack.c.h.b16 %v52
  %v870 = vunpack.c.l.b16 %v53
  %v871 = vunpack.c.h.b16 %v53
  %v872 = vunpack.c.l.b16 %v54
  %v873 = vunpack.c.h.b16 %v54
  %v874 = vunpack.c.l.b16 %v55
  %v875 = vunpack.c.l.b16 %v56
  %v876 = vunpack.c.h.b16 %v56
  %v877 = vunpack.c.l.b16 %v57
  %v878 = vunpack.c.h.b16 %v57
  %v879 = vunpack.c.l.b16 %v58
  %v880 = vunpack.c.h.b16 %v58
  %v881 = vunpack.c.l.b16 %v59
  %v882 = vunpack.c.h.b16 %v59
  %v883 = vunpack.c.l.b16 %v60
  %v884 = vunpack.c.l.b16 %v61
  %v885 = vunpack.c.h.b16 %v61
  %v886 = vunpack.c.l.b16 %v62
  %v887 = vunpack.c.h.b16 %v62
  %v888 = vunpack.c.l.b16 %v63
  %v889 = vunpack.c.h.b16 %v63
  %v890 = vunpack.c.l.b16 %v64
  %v891 = vunpack.c.h.b16 %v64
  %v892 = vunpack.c.l.b16 %v65
  %v893 = vunpack.c.l.b16 %v66
  %v894 = vunpack.c.h.b16 %v66
  %v895 = vunpack.c.l.b16 %v67
  %v896 = vunpack.c.h.b16 %v67
  %v897 = vunpack.c.l.b16 %v68
  %v898 = vunpack.c.h.b16 %v68
  %v899 = vunpack.c.l.b16 %v69
  %v900 = vunpack.c.h.b16 %v69
  %v901 = vunpack.c.l.b16 %v70
  %v902 = vunpack.c.l.b16 %v71
  %v903 = vunpack.c.h.b16 %v71
  %v904 = vunpack.c.l.b16 %v72
  %v905 = vunpack.c.h.b16 %v72
  %v906 = vunpack.c.l.b16 %v73
  %v907 = vunpack.c.h.b16 %v73
  %v908 = vunpack.c.l.b16 %v74
  %v909 = vunpack.c.h.b16 %v74
  %v910 = vunpack.c.l.b16 %v75
  %v911 = vunpack.c.l.b16 %v76
  %v912 = vunpack.c.h.b16 %v76
  %v913 = vunpack.c.l.b16 %v77
  %v914 = vunpack.c.h.b16 %v77
  %v915 = vunpack.c.l.b16 %v78
  %v916 = vunpack.c.h.b16 %v78
  %v917 = vunpack.c.l.b16 %v79
  %v918 = vunpack.c.h.b16 %v79
  %v919 = vunpack.c.l.b16 %v80
  %v920 = vunpack.c.l.b16 %v81
  %v921 = vunpack.c.h.b16 %v81
  %v922 = vunpack.c.l.b16 %v82
  %v923 = vunpack.c.h.b16 %v82
  %v924 = vunpack.c.l.b16 %v83
  %v925 = vunpack.c.h.b16 %v83
  %v926 = vunpack.c.l.b16 %v84
  %v927 = vunpack.c.h.b16 %v84
  %v928 = vunpack.c.l.b16 %v85
  %v929 = vunpack.c.l.b16 %v86
  %v930 = vunpack.c.h.b16 %v86
  %v931 = vunpack.c.l.b16 %v87
  %v932 = vunpack.c.h.b16 %v87
  %v933 = vunpack.c.l.b16 %v88
  %v934 = vunpack.c.h.b16 %v88
  %v935 = vunpack.c.l.b16 %v89
  %v936 = vunpack.c.h.b16 %v89
  %v937 = vunpack.c.l.b16 %v90
  %v938 = vunpack.c.l.b16 %v91
  %v939 = vunpack.c.h.b16 %v91
  %v940 = vunpack.c.l.b16 %v92
  %v941 = vunpack.c.h.b16 %v92
  %v942 = vunpack.c.l.b16 %v93
  %v943 = vunpack.c.h.b16 %v93
  %v944 = vunpack.c.l.b16 %v94
  %v945 = vunpack.c.h.b16 %v94
  %v946 = vunpack.c.l.b16 %v95
  %v947 = vunpack.c.l.b16 %v96
  %v948 = vunpack.c.h.b16 %v96
  %v949 = vunpack.c.l.b16 %v97
  %v950 = vunpack.c.h.b16 %v97
  %v951 = vunpack.c.l.b16 %v98
  %v952 = vunpack.c.h.b16 %v98
  %v953 = vunpack.c.l.b16 %v99
  %v954 = vunpack.c.h.b16 %v99
  %v955 = vunpack.c.l.b16 %v100
  %v956 = vunpack.c.l.b16 %v101
  %v957 = vunpack.c.h.b16 %v101
  %v958 = vunpack.c.l.b16 %v102
  %v959 = vunpack.c.h.b16 %v102
  %v960 = vunpack.c.l.b16 %v103
  %v961 = vunpack.c.h.b16 %v103
  %v962 = vunpack.c.l.b16 %v104
  %v963 = vunpack.c.h.b16 %v104
  %v964 = vunpack.c.l.b16 %v105
  %v965 = vunpack.c.l.b16 %v106
  %v966 = vunpack.c.h.b16 %v106
  %v967 = vunpack.c.l.b16 %v107
  %v968 = vunpack.c.h.b16 %v107
  %v969 = vunpack.c.l.b16 %v108
  %v970 = vunpack.c.h.b16 %v108
  %v971 = vunpack.c.l.b16 %v109
  %v972 = vunpack.c.h.b16 %v109
  %v973 = vunpack.c.l.b16 %v110
  %v974 = vunpack.c.l.b16 %v111
  %v975 = vunpack.c.h.b16 %v111
  %v976 = vunpack.c.l.b16 %v112
  %v977 = vunpack.c.h.b16 %v112
  %v978 = vunpack.c.l.b16 %v113
  %v979 = vunpack.c.h.b16 %v113
  %v980 = vunpack.c.l.b16 %v114
  %v981 = vunpack.c.h.b16 %v114
  %v982 = vunpack.c.l.b16 %v115
  %v983 = vunpack.c.l.b16 %v116
  %v984 = vunpack.c.h.b16 %v116
  %v985 = vunpack.c.l.b16 %v117
  %v986 = vunpack.c.h.b16 %v117
  %v987 = vunpack.c.l.b16 %v118
  %v988 = vunpack.c.h.b16 %v118
  %v989 = vunpack.c.l.b16 %v119
  %v990 = vunpack.c.h.b16 %v119
  %v991 = vunpack.c.l.b16 %v120
  %v992 = vunpack.c.l.b16 %v121
  %v993 = vunpack.c.h.b16 %v121
  %v994 = vunpack.c.l.b16 %v122
  %v995 = vunpack.c.h.b16 %v122
  %v996 = vunpack.c.l.b16 %v123
  %v997 = vunpack.c.h.b16 %v123
  %v998 = vunpack.c.l.b16 %v124
  %v999 = vunpack.c.h.b16 %v124
  %v1000 = vunpack.c.l.b16 %v125
  %v1001 = vunpack.c.l.b16 %v126
  %v1002 = vunpack.c.h.b16 %v126
  %v1003 = vunpack.c.l.b16 %v127
  %v1004 = vunpack.c.h.b16 %v127
  %v1005 = vunpack.c.l.b16 %v128
  %v1006 = vunpack.c.h.b16 %v128
  %v1007 = vunpack.c.l.b16 %v129
  %v1008 = vunpack.c.h.b16 %v129
  %v1009 = vunpack.c.l.b16 %v130
  %v1010 = vunpack.c.l.b16 %v131
  %v1011 = vunpack.c.h.b16 %v131
  %v1012 = vunpack.c.l.b16 %v132
  %v1013 = vunpack.c.h.b16 %v132
  %v1014 = vunpack.c.l.b16 %v133
  %v1015 = vunpack.c.h.b16 %v133
  %v1016 = vunpack.c.l.b16 %v134
  %v1017 = vunpack.c.h.b16 %v134
  %v1018 = vunpack.c.l.b16 %v135
  %v1019 = vunpack.c.l.b16 %v136
  %v1020 = vunpack.c.h.b16 %v136
  %v1021 = vunpack.c.l.b16 %v137
  %v1022 = vunpack.c.h.b16 %v137
  %v1023 = vunpack.c.l.b16 %v138
  %v1024 = vunpack.c.h.b16 %v138
  %v1025 = vunpack.c.l.b16 %v139
  %v1026 = vunpack.c.h.b16 %v139
  %v1027 = vunpack.c.l.b16 %v140
  %v1028 = vunpack.c.l.b16 %v141
  %v1029 = vunpack.c.h.b16 %v141
  %v1030 = vunpack.c.l.b16 %v142
  %v1031 = vunpack.c.h.b16 %v142
  %v1032 = vunpack.c.l.b16 %v143
  %v1033 = vunpack.c.h.b16 %v143
  %v1034 = vunpack.c.l.b16 %v144
  %v1035 = vunpack.c.h.b16 %v144
  %v1036 = vunpack.c.l.b16 %v145
  %v1037 = vunpack.c.l.b16 %v146
  %v1038 = vunpack.c.h.b16 %v146
  %v1039 = vunpack.c.l.b16 %v147
  %v1040 = vunpack.c.h.b16 %v147
  %v1041 = vunpack.c.l.b16 %v148
  %v1042 = vunpack.c.h.b16 %v148
  %v1043 = vunpack.c.l.b16 %v149
  %v1044 = vunpack.c.h.b16 %v149
  %v1045 = vunpack.c.l.b16 %v150
  %v1046 = vunpack.c.l.b16 %v151
  %v1047 = vunpack.c.h.b16 %v151
  %v1048 = vunpack.c.l.b16 %v152
  %v1049 = vunpack.c.h.b16 %v152
  %v1050 = vunpack.c.l.b16 %v153
  %v1051 = vunpack.c.h.b16 %v153
  %v1052 = vunpack.c.l.b16 %v154
  %v1053 = vunpack.c.h.b16 %v154
  %v1054 = vunpack.c.l.b16 %v155
  %v1055 = vunpack.c.l.b16 %v156
  %v1056 = vunpack.c.h.b16 %v156
  %v1057 = vunpack.c.l.b16 %v157
  %v1058 = vunpack.c.h.b16 %v157
  %v1059 = vunpack.c.l.b16 %v158
  %v1060 = vunpack.c.h.b16 %v158
  %v1061 = vunpack.c.l.b16 %v159
  %v1062 = vunpack.c.h.b16 %v159
  %v1063 = vunpack.c.l.b16 %v160
  %v1064 = vunpack.c.l.b16 %v161
  %v1065 = vunpack.c.h.b16 %v161
  %v1066 = vunpack.c.l.b16 %v162
  %v1067 = vunpack.c.h.b16 %v162
  %v1068 = vunpack.c.l.b16 %v163
  %v1069 = vunpack.c.h.b16 %v163
  %v1070 = vunpack.c.l.b16 %v164
  %v1071 = vunpack.c.h.b16 %v164
  %v1072 = vunpack.c.l.b16 %v165
  %v1073 = vunpack.c.l.b16 %v166
  %v1074 = vunpack.c.h.b16 %v166
  %v1075 = vunpack.c.l.b16 %v167
  %v1076 = vunpack.c.h.b16 %v167
  %v1077 = vunpack.c.l.b16 %v168
  %v1078 = vunpack.c.h.b16 %v168
  %v1079 = vunpack.c.l.b16 %v169
  %v1080 = vunpack.c.h.b16 %v169
  %v1081 = vunpack.c.l.b16 %v170
  %v1082 = vunpack.c.l.b16 %v171
  %v1083 = vunpack.c.h.b16 %v171
  %v1084 = vunpack.c.l.b16 %v172
  %v1085 = vunpack.c.h.b16 %v172
  %v1086 = vunpack.c.l.b16 %v173
  %v1087 = vunpack.c.h.b16 %v173
  %v1088 = vunpack.c.l.b16 %v174
  %v1089 = vunpack.c.h.b16 %v174
  %v1090 = vunpack.c.l.b16 %v175
  %v1091 = vunpack.c.l.b16 %v176
  %v1092 = vunpack.c.h.b16 %v176
  %v1093 = vunpack.c.l.b16 %v177
  %v1094 = vunpack.c.h.b16 %v177
  %v1095 = vunpack.c.l.b16 %v178
  %v1096 = vunpack.c.h.b16 %v178
  %v1097 = vunpack.c.l.b16 %v179
  %v1098 = vunpack.c.h.b16 %v179
  %v1099 = vunpack.c.l.b16 %v180
  %v1100 = vunpack.c.l.b16 %v181
  %v1101 = vunpack.c.h.b16 %v181
  %v1102 = vunpack.c.l.b16 %v182
  %v1103 = vunpack.c.h.b16 %v182
  %v1104 = vunpack.c.l.b16 %v183
  %v1105 = vunpack.c.h.b16 %v183
  %v1106 = vunpack.c.l.b16 %v184
  %v1107 = vunpack.c.h.b16 %v184
  %v1108 = vunpack.c.l.b16 %v185
  %v1109 = vunpack.c.l.b16 %v186
  %v1110 = vunpack.c.h.b16 %v186
  %v1111 = vunpack.c.l.b16 %v187
  %v1112 = vunpack.c.h.b16 %v187
  %v1113 = vunpack.c.l.b16 %v188
  %v1114 = vunpack.c.h.b16 %v188
  %v1115 = vunpack.c.l.b16 %v189
  %v1116 = vunpack.c.h.b16 %v189
  %v1117 = vunpack.c.l.b16 %v190
  %v1118 = vunpack.c.l.b16 %v191
  %v1119 = vunpack.c.h.b16 %v191
  %v1120 = vunpack.c.l.b16 %v192
  %v1121 = vunpack.c.h.b16 %v192
  %v1122 = vunpack.c.l.b16 %v193
  %v1123 = vunpack.c.h.b16 %v193
  %v1124 = vunpack.c.l.b16 %v194
  %v1125 = vunpack.c.h.b16 %v194
  %v1126 = vunpack.c.l.b16 %v195
  %v1127 = vunpack.c.l.b16 %v196
  %v1128 = vunpack.c.h.b16 %v196
  %v1129 = vunpack.c.l.b16 %v197
  %v1130 = vunpack.c.h.b16 %v197
  %v1131 = vunpack.c.l.b16 %v198
  %v1132 = vunpack.c.h.b16 %v198
  %v1133 = vunpack.c.l.b16 %v199
  %v1134 = vunpack.c.h.b16 %v199
  %v1135 = vunpack.c.l.b16 %v200
  %v1136 = vunpack.c.l.b16 %v201
  %v1137 = vunpack.c.h.b16 %v201
  %v1138 = vunpack.c.l.b16 %v202
  %v1139 = vunpack.c.h.b16 %v202
  %v1140 = vunpack.c.l.b16 %v203
  %v1141 = vunpack.c.h.b16 %v203
  %v1142 = vunpack.c.l.b16 %v204
  %v1143 = vunpack.c.h.b16 %v204
  %v1144 = vunpack.c.l.b16 %v205
  %v1145 = vunpack.c.l.b16 %v206
  %v1146 = vunpack.c.h.b16 %v206
  %v1147 = vunpack.c.l.b16 %v207
  %v1148 = vunpack.c.h.b16 %v207
  %v1149 = vunpack.c.l.b16 %v208
  %v1150 = vunpack.c.h.b16 %v208
  %v1151 = vunpack.c.l.b16 %v209
  %v1152 = vunpack.c.h.b16 %v209
  %v1153 = vunpack.c.l.b16 %v210
  %v1154 = vunpack.c.l.b16 %v211
  %v1155 = vunpack.c.h.b16 %v211
  %v1156 = vunpack.c.l.b16 %v212
  %v1157 = vunpack.c.h.b16 %v212
  %v1158 = vunpack.c.l.b16 %v213
  %v1159 = vunpack.c.h.b16 %v213
  %v1160 = vunpack.c.l.b16 %v214
  %v1161 = vunpack.c.h.b16 %v214
  %v1162 = vunpack.c.l.b16 %v215
  %v1163 = vunpack.c.l.b16 %v216
  %v1164 = vunpack.c.h.b16 %v216
  %v1165 = vunpack.c.l.b16 %v217
  %v1166 = vunpack.c.h.b16 %v217
  %v1167 = vunpack.c.l.b16 %v218
  %v1168 = vunpack.c.h.b16 %v218
  %v1169 = vunpack.c.l.b16 %v219
  %v1170 = vunpack.c.h.b16 %v219
  %v1171 = vunpack.c.l.b16 %v220
  %v1172 = vunpack.c.l.b16 %v221
  %v1173 = vunpack.c.h.b16 %v221
  %v1174 = vunpack.c.l.b16 %v222
  %v1175 = vunpack.c.h.b16 %v222
  %v1176 = vunpack.c.l.b16 %v223
  %v1177 = vunpack.c.h.b16 %v223
  %v1178 = vunpack.c.l.b16 %v224
  %v1179 = vunpack.c.h.b16 %v224
  %v1180 = vunpack.c.l.b16 %v225
  %v1181 = vunpack.c.l.b16 %v226
  %v1182 = vunpack.c.h.b16 %v226
  %v1183 = vunpack.c.l.b16 %v227
  %v1184 = vunpack.c.h.b16 %v227
  %v1185 = vunpack.c.l.b16 %v228
  %v1186 = vunpack.c.h.b16 %v228
  %v1187 = vunpack.c.l.b16 %v229
  %v1188 = vunpack.c.h.b16 %v229
  %v1189 = vunpack.c.l.b16 %v230
  %v1190 = vunpack.c.l.b16 %v231
  %v1191 = vunpack.c.h.b16 %v231
  %v1192 = vunpack.c.l.b16 %v232
  %v1193 = vunpack.c.h.b16 %v232
  %v1194 = vunpack.c.l.b16 %v233
  %v1195 = vunpack.c.h.b16 %v233
  %v1196 = vunpack.c.l.b16 %v234
  %v1197 = vunpack.c.h.b16 %v234
  %v1198 = vunpack.c.l.b16 %v235
  %v1199 = vunpack.c.l.b16 %v236
  %v1200 = vunpack.c.h.b16 %v236
  %v1201 = vunpack.c.l.b16 %v237
  %v1202 = vunpack.c.h.b16 %v237
  %v1203 = vunpack.c.l.b16 %v238
  %v1204 = vunpack.c.h.b16 %v238
  %v1205 = vunpack.c.l.b16 %v239
  %v1206 = vunpack.c.h.b16 %v239
  %v1207 = vunpack.c.l.b16 %v240
  %v1208 = vunpack.c.l.b16 %v241
  %v1209 = vunpack.c.h.b16 %v241
  %v1210 = vunpack.c.l.b16 %v242
  %v1211 = vunpack.c.h.b16 %v242
  %v1212 = vunpack.c.l.b16 %v243
  %v1213 = vunpack.c.h.b16 %v243
  %v1214 = vunpack.c.l.b16 %v244
  %v1215 = vunpack.c.h.b16 %v244
  %v1216 = vunpack.c.l.b16 %v245
  %v1217 = vunpack.c.l.b16 %v246
  %v1218 = vunpack.c.h.b16 %v246
  %v1219 = vunpack.c.l.b16 %v247
  %v1220 = vunpack.c.h.b16 %v247
  %v1221 = vunpack.c.l.b16 %v248
  %v1222 = vunpack.c.h.b16 %v248
  %v1223 = vunpack.c.l.b16 %v249
  %v1224 = vunpack.c.h.b16 %v249
  %v1225 = vunpack.c.l.b16 %v250
  %v1226 = vunpack.c.l.b16 %v251
  %v1227 = vunpack.c.h.b16 %v251
  %v1228 = vunpack.c.l.b16 %v252
  %v1229 = vunpack.c.h.b16 %v252
  %v1230 = vunpack.c.l.b16 %v253
  %v1231 = vunpack.c.h.b16 %v253
  %v1232 = vunpack.c.l.b16 %v254
  %v1233 = vunpack.c.h.b16 %v254
  %v1234 = vunpack.c.l.b16 %v255
  %v1235 = vunpack.c.l.b16 %v256
  %v1236 = vunpack.c.h.b16 %v256
  %v1237 = vunpack.c.l.b16 %v257
  %v1238 = vunpack.c.h.b16 %v257
  %v1239 = vunpack.c.l.b16 %v258
  %v1240 = vunpack.c.h.b16 %v258
  %v1241 = vunpack.c.l.b16 %v259
  %v1242 = vunpack.c.h.b16 %v259
  %v1243 = vunpack.c.l.b16 %v260
  %v1244 = vunpack.c.l.b16 %v261
  %v1245 = vunpack.c.h.b16 %v261
  %v1246 = vunpack.c.l.b16 %v262
  %v1247 = vunpack.c.h.b16 %v262
  %v1248 = vunpack.c.l.b16 %v263
  %v1249 = vunpack.c.h.b16 %v263
  %v1250 = vunpack.c.l.b16 %v264
  %v1251 = vunpack.c.h.b16 %v264
  %v1252 = vunpack.c.l.b16 %v265
  %v1253 = vunpack.c.l.b16 %v266
  %v1254 = vunpack.c.h.b16 %v266
  %v1255 = vunpack.c.l.b16 %v267
  %v1256 = vunpack.c.h.b16 %v267
  %v1257 = vunpack.c.l.b16 %v268
  %v1258 = vunpack.c.h.b16 %v268
  %v1259 = vunpack.c.l.b16 %v269
  %v1260 = vunpack.c.h.b16 %v269
  %v1261 = vunpack.c.l.b16 %v270
  %v1262 = vunpack.c.l.b16 %v271
  %v1263 = vunpack.c.h.b16 %v271
  %v1264 = vunpack.c.l.b16 %v272
  %v1265 = vunpack.c.h.b16 %v272
  %v1266 = vunpack.c.l.b16 %v273
  %v1267 = vunpack.c.h.b16 %v273
  %v1268 = vunpack.c.l.b16 %v274
  %v1269 = vunpack.c.h.b16 %v274
  %v1270 = vunpack.c.l.b16 %v275
  %v1271 = vunpack.c.l.b16 %v276
  %v1272 = vunpack.c.h.b16 %v276
  %v1273 = vunpack.c.l.b16 %v277
  %v1274 = vunpack.c.h.b16 %v277
  %v1275 = vunpack.c.l.b16 %v278
  %v1276 = vunpack.c.h.b16 %v278
  %v1277 = vunpack.c.l.b16 %v279
  %v1278 = vunpack.c.h.b16 %v279
  %v1279 = vunpack.c.l.b16 %v280
  %v1280 = vunpack.c.l.b16 %v281
  %v1281 = vunpack.c.h.b16 %v281
  %v1282 = vunpack.c.l.b16 %v282
  %v1283 = vunpack.c.h.b16 %v282
  %v1284 = vunpack.c.l.b16 %v283
  %v1285 = vunpack.c.h.b16 %v283
  %v1286 = vunpack.c.l.b16 %v284
  %v1287 = vunpack.c.h.b16 %v284
  %v1288 = vunpack.c.l.b16 %v285
  %v1289 = vunpack.c.l.b16 %v286
  %v1290 = vunpack.c.h.b16 %v286
  %v1291 = vunpack.c.l.b16 %v287
  %v1292 = vunpack.c.h.b16 %v287
  %v1293 = vunpack.c.l.b16 %v288
  %v1294 = vunpack.c.h.b16 %v288
  %v1295 = vunpack.c.l.b16 %v289
  %v1296 = vunpack.c.h.b16 %v289
  %v1297 = vunpack.c.l.b16 %v290
  %v1298 = vunpack.c.l.b16 %v291
  %v1299 = vunpack.c.h.b16 %v291
  %v1300 = vunpack.c.l.b16 %v292
  %v1301 = vunpack.c.h.b16 %v292
  %v1302 = vunpack.c.l.b16 %v293
  %v1303 = vunpack.c.h.b16 %v293
  %v1304 = vunpack.c.l.b16 %v294
  %v1305 = vunpack.c.h.b16 %v294
  %v1306 = vunpack.c.l.b16 %v295
  %v1307 = vunpack.c.l.b16 %v296
  %v1308 = vunpack.c.h.b16 %v296
  %v1309 = vunpack.c.l.b16 %v297
  %v1310 = vunpack.c.h.b16 %v297
  %v1311 = vunpack.c.l.b16 %v298
  %v1312 = vunpack.c.h.b16 %v298
  %v1313 = vunpack.c.l.b16 %v299
  %v1314 = vunpack.c.h.b16 %v299
  %v1315 = vunpack.c.l.b16 %v300
  %v1316 = vunpack.c.l.b16 %v301
  %v1317 = vunpack.c.h.b16 %v301
  %v1318 = vunpack.c.l.b16 %v302
  %v1319 = vunpack.c.h.b16 %v302
  %v1320 = vunpack.c.l.b16 %v303
  %v1321 = vunpack.c.h.b16 %v303
  %v1322 = vunpack.c.l.b16 %v304
  %v1323 = vunpack.c.h.b16 %v304
  %v1324 = vunpack.c.l.b16 %v305
  %v1325 = vunpack.c.l.b16 %v306
  %v1326 = vunpack.c.h.b16 %v306
  %v1327 = vunpack.c.l.b16 %v307
  %v1328 = vunpack.c.h.b16 %v307
  %v1329 = vunpack.c.l.b16 %v308
  %v1330 = vunpack.c.h.b16 %v308
  %v1331 = vunpack.c.l.b16 %v309
  %v1332 = vunpack.c.h.b16 %v309
  %v1333 = vunpack.c.l.b16 %v310
  %v1334 = vunpack.c.l.b16 %v311
  %v1335 = vunpack.c.h.b16 %v311
  %v1336 = vunpack.c.l.b16 %v312
  %v1337 = vunpack.c.h.b16 %v312
  %v1338 = vunpack.c.l.b16 %v313
  %v1339 = vunpack.c.h.b16 %v313
  %v1340 = vunpack.c.l.b16 %v314
  %v1341 = vunpack.c.h.b16 %v314
  %v1342 = vunpack.c.l.b16 %v315
  %v1343 = vunpack.c.l.b16 %v316
  %v1344 = vunpack.c.h.b16 %v316
  %v1345 = vunpack.c.l.b16 %v317
  %v1346 = vunpack.c.h.b16 %v317
  %v1347 = vunpack.c.l.b16 %v318
  %v1348 = vunpack.c.h.b16 %v318
  %v1349 = vunpack.c.l.b16 %v319
  %v1350 = vunpack.c.h.b16 %v319
  %v1351 = vunpack.c.l.b16 %v320
  %v1352 = vunpack.c.l.b16 %v321
  %v1353 = vunpack.c.h.b16 %v321
  %v1354 = vunpack.c.l.b16 %v322
  %v1355 = vunpack.c.h.b16 %v322
  %v1356 = vunpack.c.l.b16 %v323
  %v1357 = vunpack.c.h.b16 %v323
  %v1358 = vunpack.c.l.b16 %v324
  %v1359 = vunpack.c.h.b16 %v324
  %v1360 = vunpack.c.l.b16 %v325
  %v1361 = vunpack.c.l.b16 %v326
  %v1362 = vunpack.c.h.b16 %v326
  %v1363 = vunpack.c.l.b16 %v327
  %v1364 = vunpack.c.h.b16 %v327
  %v1365 = vunpack.c.l.b16 %v328
  %v1366 = vunpack.c.h.b16 %v328
  %v1367 = vunpack.c.l.b16 %v329
  %v1368 = vunpack.c.h.b16 %v329
  %v1369 = vunpack.c.l.b16 %v330
  %v1370 = vunpack.c.l.b16 %v331
  %v1371 = vunpack.c.h.b16 %v331
  %v1372 = vunpack.c.l.b16 %v332
  %v1373 = vunpack.c.h.b16 %v332
  %v1374 = vunpack.c.l.b16 %v333
  %v1375 = vunpack.c.h.b16 %v333
  %v1376 = vunpack.c.l.b16 %v334
  %v1377 = vunpack.c.h.b16 %v334
  %v1378 = vunpack.c.l.b16 %v335
  %v1379 = vunpack.c.l.b16 %v336
  %v1380 = vunpack.c.h.b16 %v336
  %v1381 = vunpack.c.l.b16 %v337
  %v1382 = vunpack.c.h.b16 %v337
  %v1383 = vunpack.c.l.b16 %v338
  %v1384 = vunpack.c.h.b16 %v338
  %v1385 = vunpack.c.l.b16 %v339
  %v1386 = vunpack.c.h.b16 %v339
  %v1387 = vunpack.c.l.b16 %v340
  %v1388 = vpack.c.b16 %v821, %v812
  %v1389 = vpack.c.b16 %v822, %v813
  %v1390 = vpack.c.b16 %v823, %v814
  %v1391 = vpack.c.b16 %v824, %v815
  %v1392 = vpack.c.b16 %v825, %v816
  %v1393 = vpack.c.b16 %v826, %v817
  %v1394 = vpack.c.b16 %v827, %v818
  %v1395 = vpack.c.b16 %v828, %v819
  %v1396 = vpack.c.b16 %v829, %v820
  %v1397 = vpack.c.b16 %v839, %v830
  %v1398 = vpack.c.b16 %v840, %v831
  %v1399 = vpack.c.b16 %v841, %v832
  %v1400 = vpack.c.b16 %v842, %v833
  %v1401 = vpack.c.b16 %v843, %v834
  %v1402 = vpack.c.b16 %v844, %v835
  %v1403 = vpack.c.b16 %v845, %v836
  %v1404 = vpack.c.b16 %v846, %v837
  %v1405 = vpack.c.b16 %v847, %v838
  %v1406 = vpack.c.b16 %v857, %v848
  %v1407 = vpack.c.b16 %v858, %v849
  %v1408 = vpack.c.b16 %v859, %v850
  %v1409 = vpack.c.b16 %v860, %v851
  %v1410 = vpack.c.b16 %v861, %v852
  %v1411 = vpack.c.b16 %v862, %v853
  %v1412 = vpack.c.b16 %v863, %v854
  %v1413 = vpack.c.b16 %v864, %v855
  %v1414 = vpack.c.b16 %v865, %v856
  %v1415 = vpack.c.b16 %v875, %v866
  %v1416 = vpack.c.b16 %v876, %v867
  %v1417 = vpack.c.b16 %v877, %v868
  %v1418 = vpack.c.b16 %v878, %v869
  %v1419 = vpack.c.b16 %v879, %v870
  %v1420 = vpack.c.b16 %v880, %v871
  %v1421 = vpack.c.b16 %v881, %v872
  %v1422 = vpack.c.b16 %v882, %v873
  %v1423 = vpack.c.b16 %v883, %v874
  %v1424 = vpack.c.b16 %v893, %v884
  %v1425 = vpack.c.b16 %v894, %v885
  %v1426 = vpack.c.b16 %v895, %v886
  %v1427 = vpack.c.b16 %v896, %v887
  %v1428 = vpack.c.b16 %v897, %v888
  %v1429 = vpack.c.b16 %v898, %v889
  %v1430 = vpack.c.b16 %v899, %v890
  %v1431 = vpack.c.b16 %v900, %v891
  %v1432 = vpack.c.b16 %v901, %v892
  %v1433 = vpack.c.b16 %v911, %v902
  %v1434 = vpack.c.b16 %v912, %v903
  %v1435 = vpack.c.b16 %v913, %v904
  %v1436 = vpack.c.b16 %v914, %v905
  %v1437 = vpack.c.b16 %v915, %v906
  %v1438 = vpack.c.b16 %v916, %v907
  %v1439 = vpack.c.b16 %v917, %v908
  %v1440 = vpack.c.b16 %v918, %v909
  %v1441 = vpack.c.b16 %v919, %v910
  %v1442 = vpack.c.b16 %v929, %v920
  %v1443 = vpack.c.b16 %v930, %v921
  %v1444 = vpack.c.b16 %v931, %v922
  %v1445 = vpack.c.b16 %v932, %v923
  %v1446 = vpack.c.b16 %v933, %v924
  %v1447 = vpack.c.b16 %v934, %v925
  %v1448 = vpack.c.b16 %v935, %v926
  %v1449 = vpack.c.b16 %v936, %v927
  %v1450 = vpack.c.b16 %v937, %v928
  %v1451 = vpack.c.b16 %v947, %v938
  %v1452 = vpack.c.b16 %v948, %v939
  %v1453 = vpack.c.b16 %v949, %v940
  %v1454 = vpack.c.b16 %v950, %v941
  %v1455 = vpack.c.b16 %v951, %v942
  %v1456 = vpack.c.b16 %v952, %v943
  %v1457 = vpack.c.b16 %v953, %v944
  %v1458 = vpack.c.b16 %v954, %v945
  %v1459 = vpack.c.b16 %v955, %v946
  %v1460 = vpack.c.b16 %v965, %v956
  %v1461 = vpack.c.b16 %v966, %v957
  %v1462 = vpack.c.b16 %v967, %v958
  %v1463 = vpack.c.b16 %v968, %v959
  %v1464 = vpack.c.b16 %v969, %v960
  %v1465 = vpack.c.b16 %v970, %v961
  %v1466 = vpack.c.b16 %v971, %v962
  %v1467 = vpack.c.b16 %v972, %v963
  %v1468 = vpack.c.b16 %v973, %v964
  %v1469 = vpack.c.b16 %v983, %v974
  %v1470 = vpack.c.b16 %v984, %v975
  %v1471 = vpack.c.b16 %v985, %v976
  %v1472 = vpack.c.b16 %v986, %v977
  %v1473 = vpack.c.b16 %v987, %v978
  %v1474 = vpack.c.b16 %v988, %v979
  %v1475 = vpack.c.b16 %v989, %v980
  %v1476 = vpack.c.b16 %v990, %v981
  %v1477 = vpack.c.b16 %v991, %v982
  %v1478 = vpack.c.b16 %v1001, %v992
  %v1479 = vpack.c.b16 %v1002, %v993
  %v1480 = vpack.c.b16 %v1003, %v994
  %v1481 = vpack.c.b16 %v1004, %v995
  %v1482 = vpack.c.b16 %v1005, %v996
  %v1483 = vpack.c.b16 %v1006, %v997
  %v1484 = vpack.c.b16 %v1007, %v998
  %v1485 = vpack.c.b16 %v1008, %v999
  %v1486 = vpack.c.b16 %v1009, %v1000
  %v1487 = vpack.c.b16 %v1019, %v1010
  %v1488 = vpack.c.b16 %v1020, %v1011
  %v1489 = vpack.c.b16 %v1021, %v1012
  %v1490 = vpack.c.b16 %v1022, %v1013
  %v1491 = vpack.c.b16 %v1023, %v1014
  %v1492 = vpack.c.b16 %v1024, %v1015
  %v1493 = vpack.c.b16 %v1025, %v1016
  %v1494 = vpack.c.b16 %v1026, %v1017
  %v1495 = vpack.c.b16 %v1027, %v1018
  %v1496 = vpack.c.b16 %v1037, %v1028
  %v1497 = vpack.c.b16 %v1038, %v1029
  %v1498 = vpack.c.b16 %v1039, %v1030
  %v1499 = vpack.c.b16 %v1040, %v1031
  %v1500 = vpack.c.b16 %v1041, %v1032
  %v1501 = vpack.c.b16 %v1042, %v1033
  %v1502 = vpack.c.b16 %v1043, %v1034
  %v1503 = vpack.c.b16 %v1044, %v1035
  %v1504 = vpack.c.b16 %v1045, %v1036
  %v1505 = vpack.c.b16 %v1055, %v1046
  %v1506 = vpack.c.b16 %v1056, %v1047
  %v1507 = vpack.c.b16 %v1057, %v1048
  %v1508 = vpack.c.b16 %v1058, %v1049
  %v1509 = vpack.c.b16 %v1059, %v1050
  %v1510 = vpack.c.b16 %v1060, %v1051
  %v1511 = vpack.c.b16 %v1061, %v1052
  %v1512 = vpack.c.b16 %v1062, %v1053
  %v1513 = vpack.c.b16 %v1063, %v1054
  %v1514 = vpack.c.b16 %v1073, %v1064
  %v1515 = vpack.c.b16 %v1074, %v1065
  %v1516 = vpack.c.b16 %v1075, %v1066
  %v1517 = vpack.c.b16 %v1076, %v1067
  %v1518 = vpack.c.b16 %v1077, %v1068
  %v1519 = vpack.c.b16 %v1078, %v1069
  %v1520 = vpack.c.b16 %v1079, %v1070
  %v1521 = vpack.c.b16 %v1080, %v1071
  %v1522 = vpack.c.b16 %v1081, %v1072
  %v1523 = vpack.c.b16 %v1091, %v1082
  %v1524 = vpack.c.b16 %v1092, %v1083
  %v1525 = vpack.c.b16 %v1093, %v1084
  %v1526 = vpack.c.b16 %v1094, %v1085
  %v1527 = vpack.c.b16 %v1095, %v1086
  %v1528 = vpack.c.b16 %v1096, %v1087
  %v1529 = vpack.c.b16 %v1097, %v1088
  %v1530 = vpack.c.b16 %v1098, %v1089
  %v1531 = vpack.c.b16 %v1099, %v1090
  %v1532 = vpack.c.b16 %v1109, %v1100
  %v1533 = vpack.c.b16 %v1110, %v1101
  %v1534 = vpack.c.b16 %v1111, %v1102
  %v1535 = vpack.c.b16 %v1112, %v1103
  %v1536 = vpack.c.b16 %v1113, %v1104
  %v1537 = vpack.c.b16 %v1114, %v1105
  %v1538 = vpack.c.b16 %v1115, %v1106
  %v1539 = vpack.c.b16 %v1116, %v1107
  %v1540 = vpack.c.b16 %v1117, %v1108
  %v1541 = vpack.c.b16 %v1127, %v1118
  %v1542 = vpack.c.b16 %v1128, %v1119
  %v1543 = vpack.c.b16 %v1129, %v1120
  %v1544 = vpack.c.b16 %v1130, %v1121
  %v1545 = vpack.c.b16 %v1131, %v1122
  %v1546 = vpack.c.b16 %v1132, %v1123
  %v1547 = vpack.c.b16 %v1133, %v1124
  %v1548 = vpack.c.b16 %v1134, %v1125
  %v1549 = vpack.c.b16 %v1135, %v1126
  %v1550 = vpack.c.b16 %v1145, %v1136
  %v1551 = vpack.c.b16 %v1146, %v1137
  %v1552 = vpack.c.b16 %v1147, %v1138
  %v1553 = vpack.c.b16 %v1148, %v1139
  %v1554 = vpack.c.b16 %v1149, %v1140
  %v1555 = vpack.c.b16 %v1150, %v1141
  %v1556 = vpack.c.b16 %v1151, %v1142
  %v1557 = vpack.c.b16 %v1152, %v1143
  %v1558 = vpack.c.b16 %v1153, %v1144
  %v1559 = vpack.c.b16 %v1163, %v1154
  %v1560 = vpack.c.b16 %v1164, %v1155
  %v1561 = vpack.c.b16 %v1165, %v1156
  %v1562 = vpack.c.b16 %v1166, %v1157
  %v1563 = vpack.c.b16 %v1167, %v1158
  %v1564 = vpack.c.b16 %v1168, %v1159
  %v1565 = vpack.c.b16 %v1169, %v1160
  %v1566 = vpack.c.b16 %v1170, %v1161
  %v1567 = vpack.c.b16 %v1171, %v1162
  %v1568 = vpack.c.b16 %v1181, %v1172
  %v1569 = vpack.c.b16 %v1182, %v1173
  %v1570 = vpack.c.b16 %v1183, %v1174
  %v1571 = vpack.c.b16 %v1184, %v1175
  %v1572 = vpack.c.b16 %v1185, %v1176
  %v1573 = vpack.c.b16 %v1186, %v1177
  %v1574 = vpack.c.b16 %v1187, %v1178
  %v1575 = vpack.c.b16 %v1188, %v1179
  %v1576 = vpack.c.b16 %v1189, %v1180
  %v1577 = vpack.c.b16 %v1199, %v1190
  %v1578 = vpack.c.b16 %v1200, %v1191
  %v1579 = vpack.c.b16 %v1201, %v1192
  %v1580 = vpack.c.b16 %v1202, %v1193
  %v1581 = vpack.c.b16 %v1203, %v1194
  %v1582 = vpack.c.b16 %v1204, %v1195
  %v1583 = vpack.c.b16 %v1205, %v1196
  %v1584 = vpack.c.b16 %v1206, %v1197
  %v1585 = vpack.c.b16 %v1207, %v1198
  %v1586 = vpack.c.b16 %v1217, %v1208
  %v1587 = vpack.c.b16 %v1218, %v1209
  %v1588 = vpack.c.b16 %v1219, %v1210
  %v1589 = vpack.c.b16 %v1220, %v1211
  %v1590 = vpack.c.b16 %v1221, %v1212
  %v1591 = vpack.c.b16 %v1222, %v1213
  %v1592 = vpack.c.b16 %v1223, %v1214
  %v1593 = vpack.c.b16 %v1224, %v1215
  %v1594 = vpack.c.b16 %v1225, %v1216
  %v1595 = vpack.c.b16 %v1235, %v1226
  %v1596 = vpack.c.b16 %v1236, %v1227
  %v1597 = vpack.c.b16 %v1237, %v1228
  %v1598 = vpack.c.b16 %v1238, %v1229
  %v1599 = vpack.c.b16 %v1239, %v1230
  %v1600 = vpack.c.b16 %v1240, %v1231
  %v1601 = vpack.c.b16 %v1241, %v1232
  %v1602 = vpack.c.b16 %v1242, %v1233
  %v1603 = vpack.c.b16 %v1243, %v1234
  %v1604 = vpack.c.b16 %v1253, %v1244
  %v1605 = vpack.c.b16 %v1254, %v1245
  %v1606 = vpack.c.b16 %v1255, %v1246
  %v1607 = vpack.c.b16 %v1256, %v1247
  %v1608 = vpack.c.b16 %v1257, %v1248
  %v1609 = vpack.c.b16 %v1258, %v1249
  %v1610 = vpack.c.b16 %v1259, %v1250
  %v1611 = vpack.c.b16 %v1260, %v1251
  %v1612 = vpack.c.b16 %v1261, %v1252
  %v1613 = vpack.c.b16 %v1271, %v1262
  %v1614 = vpack.c.b16 %v1272, %v1263
  %v1615 = vpack.c.b16 %v1273, %v1264
  %v1616 = vpack.c.b16 %v1274, %v1265
  %v1617 = vpack.c.b16 %v1275, %v1266
  %v1618 = vpack.c.b16 %v1276, %v1267
  %v1619 = vpack.c.b16 %v1277, %v1268
  %v1620 = vpack.c.b16 %v1278, %v1269
  %v1621 = vpack.c.b16 %v1279, %v1270
  %v1622 = vpack.c.b16 %v1289, %v1280
  %v1623 = vpack.c.b16 %v1290, %v1281
  %v1624 = vpack.c.b16 %v1291, %v1282
  %v1625 = vpack.c.b16 %v1292, %v1283
  %v1626 = vpack.c.b16 %v1293, %v1284
  %v1627 = vpack.c.b16 %v1294, %v1285
  %v1628 = vpack.c.b16 %v1295, %v1286
  %v1629 = vpack.c.b16 %v1296, %v1287
  %v1630 = vpack.c.b16 %v1297, %v1288
  %v1631 = vpack.c.b16 %v1307, %v1298
  %v1632 = vpack.c.b16 %v1308, %v1299
  %v1633 = vpack.c.b16 %v1309, %v1300
  %v1634 = vpack.c.b16 %v1310, %v1301
  %v1635 = vpack.c.b16 %v1311, %v1302
  %v1636 = vpack.c.b16 %v1312, %v1303
  %v1637 = vpack.c.b16 %v1313, %v1304
  %v1638 = vpack.c.b16 %v1314, %v1305
  %v1639 = vpack.c.b16 %v1315, %v1306
  %v1640 = vpack.c.b16 %v1325, %v1316
  %v1641 = vpack.c.b16 %v1326, %v1317
  %v1642 = vpack.c.b16 %v1327, %v1318
  %v1643 = vpack.c.b16 %v1328, %v1319
  %v1644 = vpack.c.b16 %v1329, %v1320
  %v1645 = vpack.c.b16 %v1330, %v1321
  %v1646 = vpack.c.b16 %v1331, %v1322
  %v1647 = vpack.c.b16 %v1332, %v1323
  %v1648 = vpack.c.b16 %v1333, %v1324
  %v1649 = vpack.c.b16 %v1343, %v1334
  %v1650 = vpack.c.b16 %v1344, %v1335
  %v1651 = vpack.c.b16 %v1345, %v1336
  %v1652 = vpack.c.b16 %v1346, %v1337
  %v1653 = vpack.c.b16 %v1347, %v1338
  %v1654 = vpack.c.b16 %v1348, %v1339
  %v1655 = vpack.c.b16 %v1349, %v1340
  %v1656 = vpack.c.b16 %v1350, %v1341
  %v1657 = vpack.c.b16 %v1351, %v1342
  %v1658 = vpack.c.b16 %v1361, %v1352
  %v1659 = vpack.c.b16 %v1362, %v1353
  %v1660 = vpack.c.b16 %v1363, %v1354
  %v1661 = vpack.c.b16 %v1364, %v1355
  %v1662 = vpack.c.b16 %v1365, %v1356
  %v1663 = vpack.c.b16 %v1366, %v1357
  %v1664 = vpack.c.b16 %v1367, %v1358
  %v1665 = vpack.c.b16 %v1368, %v1359
  %v1666 = vpack.c.b16 %v1369, %v1360
  %v1667 = vpack.c.b16 %v1379, %v1370
  %v1668 = vpack.c.b16 %v1380, %v1371
  %v1669 = vpack.c.b16 %v1381, %v1372
  %v1670 = vpack.c.b16 %v1382, %v1373
  %v1671 = vpack.c.b16 %v1383, %v1374
  %v1672 = vpack.c.b16 %v1384, %v1375
  %v1673 = vpack.c.b16 %v1385, %v1376
  %v1674 = vpack.c.b16 %v1386, %v1377
  %v1675 = vpack.c.b16 %v1387, %v1378
  %v2108 = vunpack.c.l.b16 %v341
  %v2109 = vunpack.c.l.b16 %v342
  %v2110 = vunpack.c.l.b16 %v343
  %v2111 = vunpack.c.l.b16 %v344
  %v2112 = vunpack.c.l.b16 %v345
  %v2113 = vunpack.c.l.b16 %v346
  %v2114 = vunpack.c.l.b16 %v347
  %v2115 = vunpack.c.l.b16 %v348
  %v2116 = vunpack.c.l.b16 %v349
  %v2117 = vunpack.c.l.b16 %v350
  %v2118 = vunpack.c.l.b16 %v351
  %v2119 = vunpack.c.l.b16 %v352
  %v2120 = vunpack.c.l.b16 %v353
  %v2121 = vunpack.c.l.b16 %v354
  %v2122 = vunpack.c.l.b16 %v355
  %v2123 = vunpack.c.l.b16 %v356
  %v2124 = vunpack.c.l.b16 %v357
  %v2125 = vunpack.c.l.b16 %v358
  %v2126 = vunpack.c.l.b16 %v359
  %v2127 = vunpack.c.l.b16 %v360
  %v2128 = vunpack.c.l.b16 %v361
  %v2129 = vunpack.c.l.b16 %v362
  %v2130 = vunpack.c.l.b16 %v363
  %v2131 = vunpack.c.l.b16 %v364
  %v2132 = vunpack.c.l.b16 %v365
  %v2133 = vunpack.c.l.b16 %v366
  %v2134 = vunpack.c.l.b16 %v367
  %v2135 = vunpack.c.l.b16 %v368
  %v2136 = vunpack.c.l.b16 %v369
  %v2137 = vunpack.c.l.b16 %v370
  %v2138 = vunpack.c.l.b16 %v371
  %v2139 = vunpack.c.l.b16 %v372
  %v2140 = vunpack.c.l.b16 %v373
  %v2141 = vunpack.c.l.b16 %v374
  %v2142 = vunpack.c.l.b16 %v375
  %v2143 = vunpack.c.l.b16 %v376
  %v2144 = vunpack.c.l.b16 %v377
  %v2145 = vunpack.c.l.b16 %v378
  %v2146 = vunpack.c.l.b16 %v379
  %v2147 = vunpack.c.l.b16 %v380
  %v2148 = vunpack.c.l.b16 %v381
  %v2149 = vunpack.c.l.b16 %v382
  %v2150 = vunpack.c.l.b16 %v383
  %v2151 = vunpack.c.l.b16 %v384
  %v2152 = vunpack.c.l.b16 %v385
  %v2153 = vunpack.c.l.b16 %v386
  %v2154 = vunpack.c.l.b16 %v387
  %v2155 = vunpack.c.l.b16 %v388
  %v2156 = vunpack.c.l.b16 %v389
  %v2157 = vunpack.c.l.b16 %v390
  %v2158 = vunpack.c.l.b16 %v391
  %v2159 = vunpack.c.l.b16 %v392
  %v2160 = vunpack.c.l.b16 %v393
  %v2161 = vunpack.c.l.b16 %v394
  %v2162 = vunpack.c.l.b16 %v395
  %v2163 = vunpack.c.l.b16 %v396
  %v2164 = vunpack.c.l.b16 %v397
  %v2165 = vunpack.c.l.b16 %v398
  %v2166 = vunpack.c.l.b16 %v399
  %v2167 = vunpack.c.l.b16 %v400
  %v2168 = vunpack.c.l.b16 %v401
  %v2169 = vunpack.c.l.b16 %v402
  %v2170 = vunpack.c.l.b16 %v403
  %v2171 = vunpack.c.l.b16 %v404
  %v2172 = vunpack.c.l.b16 %v405
  %v2173 = vunpack.c.l.b16 %v406
  %v2174 = vunpack.c.l.b16 %v407
  %v2175 = vunpack.c.l.b16 %v408
  %v2176 = vunpack.c.l.b16 %v409
  %v2177 = vunpack.c.l.b16 %v410
  %v2178 = vunpack.c.l.b16 %v411
  %v2179 = vunpack.c.l.b16 %v412
  %v2180 = vunpack.c.l.b16 %v413
  %v2181 = vunpack.c.l.b16 %v414
  %v2182 = vunpack.c.l.b16 %v415
  %v2183 = vunpack.c.l.b16 %v416
  %v2184 = vunpack.c.l.b16 %v417
  %v2185 = vunpack.c.l.b16 %v418
  %v2186 = vunpack.c.l.b16 %v419
  %v2187 = vunpack.c.l.b16 %v420
  %v2188 = vunpack.c.l.b16 %v421
  %v2189 = vunpack.c.l.b16 %v422
  %v2190 = vunpack.c.l.b16 %v423
  %v2191 = vunpack.c.l.b16 %v424
  %v2192 = vunpack.c.l.b16 %v425
  %v2193 = vunpack.c.l.b16 %v426
  %v2194 = vunpack.c.l.b16 %v427
  %v2195 = vunpack.c.l.b16 %v428
  %v2196 = vunpack.c.l.b16 %v429
  %v2197 = vunpack.c.l.b16 %v430
  %v2198 = vunpack.c.l.b16 %v431
  %v2199 = vunpack.c.l.b16 %v432
  %v2200 = vunpack.c.l.b16 %v433
  %v2201 = vunpack.c.l.b16 %v434
  %v2202 = vunpack.c.l.b16 %v435
  %v2203 = vunpack.c.l.b16 %v436
  %v2204 = vunpack.c.l.b16 %v437
  %v2205 = vunpack.c.l.b16 %v438
  %v2206 = vunpack.c.l.b16 %v439
  %v2207 = vunpack.c.l.b16 %v440
  %v2208 = vunpack.c.l.b16 %v441
  %v2209 = vunpack.c.l.b16 %v442
  %v2210 = vunpack.c.l.b16 %v443
  %v2211 = vunpack.c.l.b16 %v444
  %v2212 = vunpack.c.l.b16 %v445
  %v2213 = vunpack.c.l.b16 %v446
  %v2214 = vunpack.c.l.b16 %v447
  %v2215 = vunpack.c.l.b16 %v448
  %v2216 = vunpack.c.l.b16 %v449
  %v2217 = vunpack.c.l.b16 %v450
  %v2218 = vunpack.c.l.b16 %v451
  %v2219 = vunpack.c.l.b16 %v452
  %v2220 = vunpack.c.l.b16 %v453
  %v2221 = vunpack.c.l.b16 %v454
  %v2222 = vunpack.c.l.b16 %v455
  %v2223 = vunpack.c.l.b16 %v456
  %v2224 = vunpack.c.l.b16 %v457
  %v2225 = vunpack.c.l.b16 %v458
  %v2226 = vunpack.c.l.b16 %v459
  %v2227 = vunpack.c.l.b16 %v460
  %v2228 = vunpack.c.l.b16 %v461
  %v2229 = vunpack.c.l.b16 %v462
  %v2230 = vunpack.c.l.b16 %v463
  %v2231 = vunpack.c.l.b16 %v464
  %v2232 = vunpack.c.l.b16 %v465
  %v2233 = vunpack.c.l.b16 %v466
  %v2234 = vunpack.c.l.b16 %v467
  %v2235 = vunpack.c.l.b16 %v468
  %v2236 = vunpack.c.l.b16 %v469
  %v2237 = vunpack.c.l.b16 %v470
  %v2238 = vunpack.c.l.b16 %v471
  %v2239 = vunpack.c.l.b16 %v472
  %v2240 = vunpack.c.l.b16 %v473
  %v2241 = vunpack.c.l.b16 %v474
  %v2242 = vunpack.c.l.b16 %v475
  %v2243 = vunpack.c.l.b16 %v476
  %v2244 = vunpack.c.l.b16 %v477
  %v2245 = vunpack.c.l.b16 %v478
  %v2246 = vunpack.c.l.b16 %v479
  %v2247 = vunpack.c.l.b16 %v480
  %v2248 = vunpack.c.l.b16 %v481
  %v2249 = vunpack.c.l.b16 %v482
  %v2250 = vunpack.c.l.b16 %v483
  %v2251 = vunpack.c.l.b16 %v484
  %v2252 = vpack.c.b16 %v2109, %v2108
  %v2253 = vpack.c.b16 %v2111, %v2110
  %v2254 = vpack.c.b16 %v2113, %v2112
  %v2255 = vpack.c.b16 %v2115, %v2114
  %v2256 = vpack.c.b16 %v2117, %v2116
  %v2257 = vpack.c.b16 %v2119, %v2118
  %v2258 = vpack.c.b16 %v2121, %v2120
  %v2259 = vpack.c.b16 %v2123, %v2122
  %v2260 = vpack.c.b16 %v2125, %v2124
  %v2261 = vpack.c.b16 %v2127, %v2126
  %v2262 = vpack.c.b16 %v2129, %v2128
  %v2263 = vpack.c.b16 %v2131, %v2130
  %v2264 = vpack.c.b16 %v2133, %v2132
  %v2265 = vpack.c.b16 %v2135, %v2134
  %v2266 = vpack.c.b16 %v2137, %v2136
  %v2267 = vpack.c.b16 %v2139, %v2138
  %v2268 = vpack.c.b16 %v2141, %v2140
  %v2269 = vpack.c.b16 %v2143, %v2142
  %v2270 = vpack.c.b16 %v2145, %v2144
  %v2271 = vpack.c.b16 %v2147, %v2146
  %v2272 = vpack.c.b16 %v2149, %v2148
  %v2273 = vpack.c.b16 %v2151, %v2150
  %v2274 = vpack.c.b16 %v2153, %v2152
  %v2275 = vpack.c.b16 %v2155, %v2154
  %v2276 = vpack.c.b16 %v2157, %v2156
  %v2277 = vpack.c.b16 %v2159, %v2158
  %v2278 = vpack.c.b16 %v2161, %v2160
  %v2279 = vpack.c.b16 %v2163, %v2162
  %v2280 = vpack.c.b16 %v2165, %v2164
  %v2281 = vpack.c.b16 %v2167, %v2166
  %v2282 = vpack.c.b16 %v2169, %v2168
  %v2283 = vpack.c.b16 %v2171, %v2170
  %v2284 = vpack.c.b16 %v2173, %v2172
  %v2285 = vpack.c.b16 %v2175, %v2174
  %v2286 = vpack.c.b16 %v2177, %v2176
  %v2287 = vpack.c.b16 %v2179, %v2178
  %v2288 = vpack.c.b16 %v2181, %v2180
  %v2289 = vpack.c.b16 %v2183, %v2182
  %v2290 = vpack.c.b16 %v2185, %v2184
  %v2291 = vpack.c.b16 %v2187, %v2186
  %v2292 = vpack.c.b16 %v2189, %v2188
  %v2293 = vpack.c.b16 %v2191, %v2190
  %v2294 = vpack.c.b16 %v2193, %v2192
  %v2295 = vpack.c.b16 %v2195, %v2194
  %v2296 = vpack.c.b16 %v2197, %v2196
  %v2297 = vpack.c.b16 %v2199, %v2198
  %v2298 = vpack.c.b16 %v2201, %v2200
  %v2299 = vpack.c.b16 %v2203, %v2202
  %v2300 = vpack.c.b16 %v2205, %v2204
  %v2301 = vpack.c.b16 %v2207, %v2206
  %v2302 = vpack.c.b16 %v2209, %v2208
  %v2303 = vpack.c.b16 %v2211, %v2210
  %v2304 = vpack.c.b16 %v2213, %v2212
  %v2305 = vpack.c.b16 %v2215, %v2214
  %v2306 = vpack.c.b16 %v2217, %v2216
  %v2307 = vpack.c.b16 %v2219, %v2218
  %v2308 = vpack.c.b16 %v2221, %v2220
  %v2309 = vpack.c.b16 %v2223, %v2222
  %v2310 = vpack.c.b16 %v2225, %v2224
  %v2311 = vpack.c.b16 %v2227, %v2226
  %v2312 = vpack.c.b16 %v2229, %v2228
  %v2313 = vpack.c.b16 %v2231, %v2230
  %v2314 = vpack.c.b16 %v2233, %v2232
  %v2315 = vpack.c.b16 %v2235, %v2234
  %v2316 = vpack.c.b16 %v2237, %v2236
  %v2317 = vpack.c.b16 %v2239, %v2238
  %v2318 = vpack.c.b16 %v2241, %v2240
  %v2319 = vpack.c.b16 %v2243, %v2242
  %v2320 = vpack.c.b16 %v2245, %v2244
  %v2321 = vpack.c.b16 %v2247, %v2246
  %v2322 = vpack.c.b16 %v2249, %v2248
  %v2323 = vpack.c.b16 %v2251, %v2250
  %2396 = vmatprep.subr.bf16.mxu0 0
  %2397 = vmatpush1.bf16.msra.mxu0 %v2259
  %2398 = vmatprep.subr.bf16.mxu0 0
  %2399 = vmatpush1.bf16.msra.mxu0 %v2258
  %2400 = vmatprep.subr.bf16.mxu0 0
  %2401 = vmatpush1.bf16.msra.mxu0 %v2257
  %2402 = vmatprep.subr.bf16.mxu0 0
  %2403 = vmatpush1.bf16.msra.mxu0 %v2256
  %2404 = vmatprep.subr.bf16.mxu0 0
  %2405 = vmatpush1.bf16.msra.mxu0 %v2255
  %2406 = vmatprep.subr.bf16.mxu0 0
  %2407 = vmatpush1.bf16.msra.mxu0 %v2254
  %2408 = vmatprep.subr.bf16.mxu0 0
  %2409 = vmatpush1.bf16.msra.mxu0 %v2253
  %2410 = vmatprep.subr.bf16.mxu0 0
  %2411 = vmatpush1.bf16.msra.mxu0 %v2252
  %2412 = vmatprep.subr.bf16.mxu0 0
  %2413 = vmatpush2.bf16.msra.mxu0 %v2267
  %2414 = vmatprep.subr.bf16.mxu0 0
  %2415 = vmatpush2.bf16.msra.mxu0 %v2266
  %2416 = vmatprep.subr.bf16.mxu0 0
  %2417 = vmatpush2.bf16.msra.mxu0 %v2265
  %2418 = vmatprep.subr.bf16.mxu0 0
  %2419 = vmatpush2.bf16.msra.mxu0 %v2264
  %2420 = vmatprep.subr.bf16.mxu0 0
  %2421 = vmatpush2.bf16.msra.mxu0 %v2263
  %2422 = vmatprep.subr.bf16.mxu0 0
  %2423 = vmatpush2.bf16.msra.mxu0 %v2262
  %2424 = vmatprep.subr.bf16.mxu0 0
  %2425 = vmatpush2.bf16.msra.mxu0 %v2261
  %2426 = vmatprep.subr.bf16.mxu0 0
  %2427 = vmatpush2.bf16.msra.mxu0 %v2260
  %2428 = vmatprep.mubr.bf16.mxu0 %v1389
  %2429 = vmatmul.mubr.bf16.gmra.mxu0 %v1388
  %v2430 = vpop.f32.mrf.mxu0
  %v2431 = vadd.f32 %v490, %v2430
  %v2432 = vpop.f32.mrf.mxu0
  %v2433 = vpop.f32.mrf.mxu0
  %v2434 = vadd.f32 %v490, %v2433
  %v2435 = vpop.f32.mrf.mxu0
  %2436 = vmatprep.mubr.bf16.mxu0 %v1398
  %2437 = vmatmul.mubr.bf16.gmra.mxu0 %v1397
  %v2438 = vpop.f32.mrf.mxu0
  %v2439 = vadd.f32 %v490, %v2438
  %v2440 = vpop.f32.mrf.mxu0
  %v2441 = vpop.f32.mrf.mxu0
  %v2442 = vadd.f32 %v490, %v2441
  %v2443 = vpop.f32.mrf.mxu0
  %2444 = vmatprep.mubr.bf16.mxu0 %v1407
  %2445 = vmatmul.mubr.bf16.gmra.mxu0 %v1406
  %v2446 = vpop.f32.mrf.mxu0
  %v2447 = vadd.f32 %v490, %v2446
  %v2448 = vpop.f32.mrf.mxu0
  %v2449 = vpop.f32.mrf.mxu0
  %v2450 = vadd.f32 %v490, %v2449
  %v2451 = vpop.f32.mrf.mxu0
  %2452 = vmatprep.mubr.bf16.mxu0 %v1416
  %2453 = vmatmul.mubr.bf16.gmra.mxu0 %v1415
  %v2454 = vpop.f32.mrf.mxu0
  %v2455 = vadd.f32 %v490, %v2454
  %v2456 = vpop.f32.mrf.mxu0
  %v2457 = vpop.f32.mrf.mxu0
  %v2458 = vadd.f32 %v490, %v2457
  %v2459 = vpop.f32.mrf.mxu0
  %2460 = vmatprep.mubr.bf16.mxu0 %v1425
  %2461 = vmatmul.mubr.bf16.gmra.mxu0 %v1424
  %v2462 = vpop.f32.mrf.mxu0
  %v2463 = vadd.f32 %v490, %v2462
  %v2464 = vpop.f32.mrf.mxu0
  %v2465 = vpop.f32.mrf.mxu0
  %v2466 = vadd.f32 %v490, %v2465
  %v2467 = vpop.f32.mrf.mxu0
  %2468 = vmatprep.mubr.bf16.mxu0 %v1434
  %2469 = vmatmul.mubr.bf16.gmra.mxu0 %v1433
  %v2470 = vpop.f32.mrf.mxu0
  %v2471 = vadd.f32 %v490, %v2470
  %v2472 = vpop.f32.mrf.mxu0
  %v2473 = vpop.f32.mrf.mxu0
  %v2474 = vadd.f32 %v490, %v2473
  %v2475 = vpop.f32.mrf.mxu0
  %2476 = vmatprep.mubr.bf16.mxu0 %v1443
  %2477 = vmatmul.mubr.bf16.gmra.mxu0 %v1442
  %v2478 = vpop.f32.mrf.mxu0
  %v2479 = vadd.f32 %v490, %v2478
  %v2480 = vpop.f32.mrf.mxu0
  %v2481 = vpop.f32.mrf.mxu0
  %v2482 = vadd.f32 %v490, %v2481
  %v2483 = vpop.f32.mrf.mxu0
  %2484 = vmatprep.mubr.bf16.mxu0 %v1452
  %2485 = vmatmul.mubr.bf16.gmra.mxu0 %v1451
  %v2486 = vpop.f32.mrf.mxu0
  %v2487 = vadd.f32 %v490, %v2486
  %v2488 = vpop.f32.mrf.mxu0
  %v2489 = vpop.f32.mrf.mxu0
  %v2490 = vadd.f32 %v490, %v2489
  %v2491 = vpop.f32.mrf.mxu0
  %2492 = vmatprep.mubr.bf16.mxu0 %v1461
  %2493 = vmatmul.mubr.bf16.gmra.mxu0 %v1460
  %v2494 = vpop.f32.mrf.mxu0
  %v2495 = vadd.f32 %v490, %v2494
  %v2496 = vpop.f32.mrf.mxu0
  %v2497 = vpop.f32.mrf.mxu0
  %v2498 = vadd.f32 %v490, %v2497
  %v2499 = vpop.f32.mrf.mxu0
  %2500 = vmatprep.mubr.bf16.mxu0 %v1470
  %2501 = vmatmul.mubr.bf16.gmra.mxu0 %v1469
  %v2502 = vpop.f32.mrf.mxu0
  %v2503 = vadd.f32 %v490, %v2502
  %v2504 = vpop.f32.mrf.mxu0
  %v2505 = vpop.f32.mrf.mxu0
  %v2506 = vadd.f32 %v490, %v2505
  %v2507 = vpop.f32.mrf.mxu0
  %2508 = vmatprep.mubr.bf16.mxu0 %v1479
  %2509 = vmatmul.mubr.bf16.gmra.mxu0 %v1478
  %v2510 = vpop.f32.mrf.mxu0
  %v2511 = vadd.f32 %v490, %v2510
  %v2512 = vpop.f32.mrf.mxu0
  %v2513 = vpop.f32.mrf.mxu0
  %v2514 = vadd.f32 %v490, %v2513
  %v2515 = vpop.f32.mrf.mxu0
  %2516 = vmatprep.mubr.bf16.mxu0 %v1488
  %2517 = vmatmul.mubr.bf16.gmra.mxu0 %v1487
  %v2518 = vpop.f32.mrf.mxu0
  %v2519 = vadd.f32 %v490, %v2518
  %v2520 = vpop.f32.mrf.mxu0
  %v2521 = vpop.f32.mrf.mxu0
  %v2522 = vadd.f32 %v490, %v2521
  %v2523 = vpop.f32.mrf.mxu0
  %2524 = vmatprep.mubr.bf16.mxu0 %v1497
  %2525 = vmatmul.mubr.bf16.gmra.mxu0 %v1496
  %v2526 = vpop.f32.mrf.mxu0
  %v2527 = vadd.f32 %v490, %v2526
  %v2528 = vpop.f32.mrf.mxu0
  %v2529 = vpop.f32.mrf.mxu0
  %v2530 = vadd.f32 %v490, %v2529
  %v2531 = vpop.f32.mrf.mxu0
  %2532 = vmatprep.mubr.bf16.mxu0 %v1506
  %2533 = vmatmul.mubr.bf16.gmra.mxu0 %v1505
  %v2534 = vpop.f32.mrf.mxu0
  %v2535 = vadd.f32 %v490, %v2534
  %v2536 = vpop.f32.mrf.mxu0
  %v2537 = vpop.f32.mrf.mxu0
  %v2538 = vadd.f32 %v490, %v2537
  %v2539 = vpop.f32.mrf.mxu0
  %2540 = vmatprep.mubr.bf16.mxu0 %v1515
  %2541 = vmatmul.mubr.bf16.gmra.mxu0 %v1514
  %v2542 = vpop.f32.mrf.mxu0
  %v2543 = vadd.f32 %v490, %v2542
  %v2544 = vpop.f32.mrf.mxu0
  %v2545 = vpop.f32.mrf.mxu0
  %v2546 = vadd.f32 %v490, %v2545
  %v2547 = vpop.f32.mrf.mxu0
  %2548 = vmatprep.mubr.bf16.mxu0 %v1524
  %2549 = vmatmul.mubr.bf16.gmra.mxu0 %v1523
  %v2550 = vpop.f32.mrf.mxu0
  %v2551 = vadd.f32 %v490, %v2550
  %v2552 = vpop.f32.mrf.mxu0
  %v2553 = vpop.f32.mrf.mxu0
  %v2554 = vadd.f32 %v490, %v2553
  %v2555 = vpop.f32.mrf.mxu0
  %2556 = vmatprep.mubr.bf16.mxu0 %v1533
  %2557 = vmatmul.mubr.bf16.gmra.mxu0 %v1532
  %v2558 = vpop.f32.mrf.mxu0
  %v2559 = vadd.f32 %v490, %v2558
  %v2560 = vpop.f32.mrf.mxu0
  %v2561 = vpop.f32.mrf.mxu0
  %v2562 = vadd.f32 %v490, %v2561
  %v2563 = vpop.f32.mrf.mxu0
  %2564 = vmatprep.mubr.bf16.mxu0 %v1542
  %2565 = vmatmul.mubr.bf16.gmra.mxu0 %v1541
  %v2566 = vpop.f32.mrf.mxu0
  %v2567 = vadd.f32 %v490, %v2566
  %v2568 = vpop.f32.mrf.mxu0
  %v2569 = vpop.f32.mrf.mxu0
  %v2570 = vadd.f32 %v490, %v2569
  %v2571 = vpop.f32.mrf.mxu0
  %2572 = vmatprep.mubr.bf16.mxu0 %v1551
  %2573 = vmatmul.mubr.bf16.gmra.mxu0 %v1550
  %v2574 = vpop.f32.mrf.mxu0
  %v2575 = vadd.f32 %v490, %v2574
  %v2576 = vpop.f32.mrf.mxu0
  %v2577 = vpop.f32.mrf.mxu0
  %v2578 = vadd.f32 %v490, %v2577
  %v2579 = vpop.f32.mrf.mxu0
  %2580 = vmatprep.mubr.bf16.mxu0 %v1560
  %2581 = vmatmul.mubr.bf16.gmra.mxu0 %v1559
  %v2582 = vpop.f32.mrf.mxu0
  %v2583 = vadd.f32 %v490, %v2582
  %v2584 = vpop.f32.mrf.mxu0
  %v2585 = vpop.f32.mrf.mxu0
  %v2586 = vadd.f32 %v490, %v2585
  %v2587 = vpop.f32.mrf.mxu0
  %2588 = vmatprep.mubr.bf16.mxu0 %v1569
  %2589 = vmatmul.mubr.bf16.gmra.mxu0 %v1568
  %v2590 = vpop.f32.mrf.mxu0
  %v2591 = vadd.f32 %v490, %v2590
  %v2592 = vpop.f32.mrf.mxu0
  %v2593 = vpop.f32.mrf.mxu0
  %v2594 = vadd.f32 %v490, %v2593
  %v2595 = vpop.f32.mrf.mxu0
  %2596 = vmatprep.mubr.bf16.mxu0 %v1578
  %2597 = vmatmul.mubr.bf16.gmra.mxu0 %v1577
  %v2598 = vpop.f32.mrf.mxu0
  %v2599 = vadd.f32 %v490, %v2598
  %v2600 = vpop.f32.mrf.mxu0
  %v2601 = vpop.f32.mrf.mxu0
  %v2602 = vadd.f32 %v490, %v2601
  %v2603 = vpop.f32.mrf.mxu0
  %2604 = vmatprep.mubr.bf16.mxu0 %v1587
  %2605 = vmatmul.mubr.bf16.gmra.mxu0 %v1586
  %v2606 = vpop.f32.mrf.mxu0
  %v2607 = vadd.f32 %v490, %v2606
  %v2608 = vpop.f32.mrf.mxu0
  %v2609 = vpop.f32.mrf.mxu0
  %v2610 = vadd.f32 %v490, %v2609
  %v2611 = vpop.f32.mrf.mxu0
  %2612 = vmatprep.mubr.bf16.mxu0 %v1596
  %2613 = vmatmul.mubr.bf16.gmra.mxu0 %v1595
  %v2614 = vpop.f32.mrf.mxu0
  %v2615 = vadd.f32 %v490, %v2614
  %v2616 = vpop.f32.mrf.mxu0
  %v2617 = vpop.f32.mrf.mxu0
  %v2618 = vadd.f32 %v490, %v2617
  %v2619 = vpop.f32.mrf.mxu0
  %2620 = vmatprep.mubr.bf16.mxu0 %v1605
  %2621 = vmatmul.mubr.bf16.gmra.mxu0 %v1604
  %v2622 = vpop.f32.mrf.mxu0
  %v2623 = vadd.f32 %v490, %v2622
  %v2624 = vpop.f32.mrf.mxu0
  %v2625 = vpop.f32.mrf.mxu0
  %v2626 = vadd.f32 %v490, %v2625
  %v2627 = vpop.f32.mrf.mxu0
  %2628 = vmatprep.mubr.bf16.mxu0 %v1614
  %2629 = vmatmul.mubr.bf16.gmra.mxu0 %v1613
  %v2630 = vpop.f32.mrf.mxu0
  %v2631 = vadd.f32 %v490, %v2630
  %v2632 = vpop.f32.mrf.mxu0
  %v2633 = vpop.f32.mrf.mxu0
  %v2634 = vadd.f32 %v490, %v2633
  %v2635 = vpop.f32.mrf.mxu0
  %2636 = vmatprep.mubr.bf16.mxu0 %v1623
  %2637 = vmatmul.mubr.bf16.gmra.mxu0 %v1622
  %v2638 = vpop.f32.mrf.mxu0
  %v2639 = vadd.f32 %v490, %v2638
  %v2640 = vpop.f32.mrf.mxu0
  %v2641 = vpop.f32.mrf.mxu0
  %v2642 = vadd.f32 %v490, %v2641
  %v2643 = vpop.f32.mrf.mxu0
  %2644 = vmatprep.mubr.bf16.mxu0 %v1632
  %2645 = vmatmul.mubr.bf16.gmra.mxu0 %v1631
  %v2646 = vpop.f32.mrf.mxu0
  %v2647 = vadd.f32 %v490, %v2646
  %v2648 = vpop.f32.mrf.mxu0
  %v2649 = vpop.f32.mrf.mxu0
  %v2650 = vadd.f32 %v490, %v2649
  %v2651 = vpop.f32.mrf.mxu0
  %2652 = vmatprep.mubr.bf16.mxu0 %v1641
  %2653 = vmatmul.mubr.bf16.gmra.mxu0 %v1640
  %v2654 = vpop.f32.mrf.mxu0
  %v2655 = vadd.f32 %v490, %v2654
  %v2656 = vpop.f32.mrf.mxu0
  %v2657 = vpop.f32.mrf.mxu0
  %v2658 = vadd.f32 %v490, %v2657
  %v2659 = vpop.f32.mrf.mxu0
  %2660 = vmatprep.mubr.bf16.mxu0 %v1650
  %2661 = vmatmul.mubr.bf16.gmra.mxu0 %v1649
  %v2662 = vpop.f32.mrf.mxu0
  %v2663 = vadd.f32 %v490, %v2662
  %v2664 = vpop.f32.mrf.mxu0
  %v2665 = vpop.f32.mrf.mxu0
  %v2666 = vadd.f32 %v490, %v2665
  %v2667 = vpop.f32.mrf.mxu0
  %2668 = vmatprep.mubr.bf16.mxu0 %v1659
  %2669 = vmatmul.mubr.bf16.gmra.mxu0 %v1658
  %v2670 = vpop.f32.mrf.mxu0
  %v2671 = vadd.f32 %v490, %v2670
  %v2672 = vpop.f32.mrf.mxu0
  %v2673 = vpop.f32.mrf.mxu0
  %v2674 = vadd.f32 %v490, %v2673
  %v2675 = vpop.f32.mrf.mxu0
  %2676 = vmatprep.mubr.bf16.mxu0 %v1668
  %2677 = vmatmul.mubr.bf16.gmra.mxu0 %v1667
  %v2678 = vpop.f32.mrf.mxu0
  %v2679 = vadd.f32 %v490, %v2678
  %v2680 = vpop.f32.mrf.mxu0
  %v2681 = vpop.f32.mrf.mxu0
  %v2682 = vadd.f32 %v490, %v2681
  %v2683 = vpop.f32.mrf.mxu0
  %2684 = vdwg.mxu0
  %2685 = vmatprep.subr.bf16.mxu0 0
  %2686 = vmatpush1.bf16.msra.mxu0 %v2275
  %2687 = vmatprep.subr.bf16.mxu0 0
  %2688 = vmatpush1.bf16.msra.mxu0 %v2274
  %2689 = vmatprep.subr.bf16.mxu0 0
  %2690 = vmatpush1.bf16.msra.mxu0 %v2273
  %2691 = vmatprep.subr.bf16.mxu0 0
  %2692 = vmatpush1.bf16.msra.mxu0 %v2272
  %2693 = vmatprep.subr.bf16.mxu0 0
  %2694 = vmatpush1.bf16.msra.mxu0 %v2271
  %2695 = vmatprep.subr.bf16.mxu0 0
  %2696 = vmatpush1.bf16.msra.mxu0 %v2270
  %2697 = vmatprep.subr.bf16.mxu0 0
  %2698 = vmatpush1.bf16.msra.mxu0 %v2269
  %2699 = vmatprep.subr.bf16.mxu0 0
  %2700 = vmatpush1.bf16.msra.mxu0 %v2268
  %2701 = vmatprep.subr.bf16.mxu0 0
  %2702 = vmatpush2.bf16.msra.mxu0 %v2283
  %2703 = vmatprep.subr.bf16.mxu0 0
  %2704 = vmatpush2.bf16.msra.mxu0 %v2282
  %2705 = vmatprep.subr.bf16.mxu0 0
  %2706 = vmatpush2.bf16.msra.mxu0 %v2281
  %2707 = vmatprep.subr.bf16.mxu0 0
  %2708 = vmatpush2.bf16.msra.mxu0 %v2280
  %2709 = vmatprep.subr.bf16.mxu0 0
  %2710 = vmatpush2.bf16.msra.mxu0 %v2279
  %2711 = vmatprep.subr.bf16.mxu0 0
  %2712 = vmatpush2.bf16.msra.mxu0 %v2278
  %2713 = vmatprep.subr.bf16.mxu0 0
  %2714 = vmatpush2.bf16.msra.mxu0 %v2277
  %2715 = vmatprep.subr.bf16.mxu0 0
  %2716 = vmatpush2.bf16.msra.mxu0 %v2276
  %2717 = vmatprep.mubr.bf16.mxu0 %v1391
  %2718 = vmatmul.mubr.bf16.gmra.mxu0 %v1390
  %v2719 = vpop.f32.mrf.mxu0
  %v2720 = vadd.f32 %v2431, %v2719
  %v2721 = vpop.f32.mrf.mxu0
  %v2722 = vpop.f32.mrf.mxu0
  %v2723 = vadd.f32 %v2434, %v2722
  %v2724 = vpop.f32.mrf.mxu0
  %2725 = vmatprep.mubr.bf16.mxu0 %v1400
  %2726 = vmatmul.mubr.bf16.gmra.mxu0 %v1399
  %v2727 = vpop.f32.mrf.mxu0
  %v2728 = vadd.f32 %v2439, %v2727
  %v2729 = vpop.f32.mrf.mxu0
  %v2730 = vpop.f32.mrf.mxu0
  %v2731 = vadd.f32 %v2442, %v2730
  %v2732 = vpop.f32.mrf.mxu0
  %2733 = vmatprep.mubr.bf16.mxu0 %v1409
  %2734 = vmatmul.mubr.bf16.gmra.mxu0 %v1408
  %v2735 = vpop.f32.mrf.mxu0
  %v2736 = vadd.f32 %v2447, %v2735
  %v2737 = vpop.f32.mrf.mxu0
  %v2738 = vpop.f32.mrf.mxu0
  %v2739 = vadd.f32 %v2450, %v2738
  %v2740 = vpop.f32.mrf.mxu0
  %2741 = vmatprep.mubr.bf16.mxu0 %v1418
  %2742 = vmatmul.mubr.bf16.gmra.mxu0 %v1417
  %v2743 = vpop.f32.mrf.mxu0
  %v2744 = vadd.f32 %v2455, %v2743
  %v2745 = vpop.f32.mrf.mxu0
  %v2746 = vpop.f32.mrf.mxu0
  %v2747 = vadd.f32 %v2458, %v2746
  %v2748 = vpop.f32.mrf.mxu0
  %2749 = vmatprep.mubr.bf16.mxu0 %v1427
  %2750 = vmatmul.mubr.bf16.gmra.mxu0 %v1426
  %v2751 = vpop.f32.mrf.mxu0
  %v2752 = vadd.f32 %v2463, %v2751
  %v2753 = vpop.f32.mrf.mxu0
  %v2754 = vpop.f32.mrf.mxu0
  %v2755 = vadd.f32 %v2466, %v2754
  %v2756 = vpop.f32.mrf.mxu0
  %2757 = vmatprep.mubr.bf16.mxu0 %v1436
  %2758 = vmatmul.mubr.bf16.gmra.mxu0 %v1435
  %v2759 = vpop.f32.mrf.mxu0
  %v2760 = vadd.f32 %v2471, %v2759
  %v2761 = vpop.f32.mrf.mxu0
  %v2762 = vpop.f32.mrf.mxu0
  %v2763 = vadd.f32 %v2474, %v2762
  %v2764 = vpop.f32.mrf.mxu0
  %2765 = vmatprep.mubr.bf16.mxu0 %v1445
  %2766 = vmatmul.mubr.bf16.gmra.mxu0 %v1444
  %v2767 = vpop.f32.mrf.mxu0
  %v2768 = vadd.f32 %v2479, %v2767
  %v2769 = vpop.f32.mrf.mxu0
  %v2770 = vpop.f32.mrf.mxu0
  %v2771 = vadd.f32 %v2482, %v2770
  %v2772 = vpop.f32.mrf.mxu0
  %2773 = vmatprep.mubr.bf16.mxu0 %v1454
  %2774 = vmatmul.mubr.bf16.gmra.mxu0 %v1453
  %v2775 = vpop.f32.mrf.mxu0
  %v2776 = vadd.f32 %v2487, %v2775
  %v2777 = vpop.f32.mrf.mxu0
  %v2778 = vpop.f32.mrf.mxu0
  %v2779 = vadd.f32 %v2490, %v2778
  %v2780 = vpop.f32.mrf.mxu0
  %2781 = vmatprep.mubr.bf16.mxu0 %v1463
  %2782 = vmatmul.mubr.bf16.gmra.mxu0 %v1462
  %v2783 = vpop.f32.mrf.mxu0
  %v2784 = vadd.f32 %v2495, %v2783
  %v2785 = vpop.f32.mrf.mxu0
  %v2786 = vpop.f32.mrf.mxu0
  %v2787 = vadd.f32 %v2498, %v2786
  %v2788 = vpop.f32.mrf.mxu0
  %2789 = vmatprep.mubr.bf16.mxu0 %v1472
  %2790 = vmatmul.mubr.bf16.gmra.mxu0 %v1471
  %v2791 = vpop.f32.mrf.mxu0
  %v2792 = vadd.f32 %v2503, %v2791
  %v2793 = vpop.f32.mrf.mxu0
  %v2794 = vpop.f32.mrf.mxu0
  %v2795 = vadd.f32 %v2506, %v2794
  %v2796 = vpop.f32.mrf.mxu0
  %2797 = vmatprep.mubr.bf16.mxu0 %v1481
  %2798 = vmatmul.mubr.bf16.gmra.mxu0 %v1480
  %v2799 = vpop.f32.mrf.mxu0
  %v2800 = vadd.f32 %v2511, %v2799
  %v2801 = vpop.f32.mrf.mxu0
  %v2802 = vpop.f32.mrf.mxu0
  %v2803 = vadd.f32 %v2514, %v2802
  %v2804 = vpop.f32.mrf.mxu0
  %2805 = vmatprep.mubr.bf16.mxu0 %v1490
  %2806 = vmatmul.mubr.bf16.gmra.mxu0 %v1489
  %v2807 = vpop.f32.mrf.mxu0
  %v2808 = vadd.f32 %v2519, %v2807
  %v2809 = vpop.f32.mrf.mxu0
  %v2810 = vpop.f32.mrf.mxu0
  %v2811 = vadd.f32 %v2522, %v2810
  %v2812 = vpop.f32.mrf.mxu0
  %2813 = vmatprep.mubr.bf16.mxu0 %v1499
  %2814 = vmatmul.mubr.bf16.gmra.mxu0 %v1498
  %v2815 = vpop.f32.mrf.mxu0
  %v2816 = vadd.f32 %v2527, %v2815
  %v2817 = vpop.f32.mrf.mxu0
  %v2818 = vpop.f32.mrf.mxu0
  %v2819 = vadd.f32 %v2530, %v2818
  %v2820 = vpop.f32.mrf.mxu0
  %2821 = vmatprep.mubr.bf16.mxu0 %v1508
  %2822 = vmatmul.mubr.bf16.gmra.mxu0 %v1507
  %v2823 = vpop.f32.mrf.mxu0
  %v2824 = vadd.f32 %v2535, %v2823
  %v2825 = vpop.f32.mrf.mxu0
  %v2826 = vpop.f32.mrf.mxu0
  %v2827 = vadd.f32 %v2538, %v2826
  %v2828 = vpop.f32.mrf.mxu0
  %2829 = vmatprep.mubr.bf16.mxu0 %v1517
  %2830 = vmatmul.mubr.bf16.gmra.mxu0 %v1516
  %v2831 = vpop.f32.mrf.mxu0
  %v2832 = vadd.f32 %v2543, %v2831
  %v2833 = vpop.f32.mrf.mxu0
  %v2834 = vpop.f32.mrf.mxu0
  %v2835 = vadd.f32 %v2546, %v2834
  %v2836 = vpop.f32.mrf.mxu0
  %2837 = vmatprep.mubr.bf16.mxu0 %v1526
  %2838 = vmatmul.mubr.bf16.gmra.mxu0 %v1525
  %v2839 = vpop.f32.mrf.mxu0
  %v2840 = vadd.f32 %v2551, %v2839
  %v2841 = vpop.f32.mrf.mxu0
  %v2842 = vpop.f32.mrf.mxu0
  %v2843 = vadd.f32 %v2554, %v2842
  %v2844 = vpop.f32.mrf.mxu0
  %2845 = vmatprep.mubr.bf16.mxu0 %v1535
  %2846 = vmatmul.mubr.bf16.gmra.mxu0 %v1534
  %v2847 = vpop.f32.mrf.mxu0
  %v2848 = vadd.f32 %v2559, %v2847
  %v2849 = vpop.f32.mrf.mxu0
  %v2850 = vpop.f32.mrf.mxu0
  %v2851 = vadd.f32 %v2562, %v2850
  %v2852 = vpop.f32.mrf.mxu0
  %2853 = vmatprep.mubr.bf16.mxu0 %v1544
  %2854 = vmatmul.mubr.bf16.gmra.mxu0 %v1543
  %v2855 = vpop.f32.mrf.mxu0
  %v2856 = vadd.f32 %v2567, %v2855
  %v2857 = vpop.f32.mrf.mxu0
  %v2858 = vpop.f32.mrf.mxu0
  %v2859 = vadd.f32 %v2570, %v2858
  %v2860 = vpop.f32.mrf.mxu0
  %2861 = vmatprep.mubr.bf16.mxu0 %v1553
  %2862 = vmatmul.mubr.bf16.gmra.mxu0 %v1552
  %v2863 = vpop.f32.mrf.mxu0
  %v2864 = vadd.f32 %v2575, %v2863
  %v2865 = vpop.f32.mrf.mxu0
  %v2866 = vpop.f32.mrf.mxu0
  %v2867 = vadd.f32 %v2578, %v2866
  %v2868 = vpop.f32.mrf.mxu0
  %2869 = vmatprep.mubr.bf16.mxu0 %v1562
  %2870 = vmatmul.mubr.bf16.gmra.mxu0 %v1561
  %v2871 = vpop.f32.mrf.mxu0
  %v2872 = vadd.f32 %v2583, %v2871
  %v2873 = vpop.f32.mrf.mxu0
  %v2874 = vpop.f32.mrf.mxu0
  %v2875 = vadd.f32 %v2586, %v2874
  %v2876 = vpop.f32.mrf.mxu0
  %2877 = vmatprep.mubr.bf16.mxu0 %v1571
  %2878 = vmatmul.mubr.bf16.gmra.mxu0 %v1570
  %v2879 = vpop.f32.mrf.mxu0
  %v2880 = vadd.f32 %v2591, %v2879
  %v2881 = vpop.f32.mrf.mxu0
  %v2882 = vpop.f32.mrf.mxu0
  %v2883 = vadd.f32 %v2594, %v2882
  %v2884 = vpop.f32.mrf.mxu0
  %2885 = vmatprep.mubr.bf16.mxu0 %v1580
  %2886 = vmatmul.mubr.bf16.gmra.mxu0 %v1579
  %v2887 = vpop.f32.mrf.mxu0
  %v2888 = vadd.f32 %v2599, %v2887
  %v2889 = vpop.f32.mrf.mxu0
  %v2890 = vpop.f32.mrf.mxu0
  %v2891 = vadd.f32 %v2602, %v2890
  %v2892 = vpop.f32.mrf.mxu0
  %2893 = vmatprep.mubr.bf16.mxu0 %v1589
  %2894 = vmatmul.mubr.bf16.gmra.mxu0 %v1588
  %v2895 = vpop.f32.mrf.mxu0
  %v2896 = vadd.f32 %v2607, %v2895
  %v2897 = vpop.f32.mrf.mxu0
  %v2898 = vpop.f32.mrf.mxu0
  %v2899 = vadd.f32 %v2610, %v2898
  %v2900 = vpop.f32.mrf.mxu0
  %2901 = vmatprep.mubr.bf16.mxu0 %v1598
  %2902 = vmatmul.mubr.bf16.gmra.mxu0 %v1597
  %v2903 = vpop.f32.mrf.mxu0
  %v2904 = vadd.f32 %v2615, %v2903
  %v2905 = vpop.f32.mrf.mxu0
  %v2906 = vpop.f32.mrf.mxu0
  %v2907 = vadd.f32 %v2618, %v2906
  %v2908 = vpop.f32.mrf.mxu0
  %2909 = vmatprep.mubr.bf16.mxu0 %v1607
  %2910 = vmatmul.mubr.bf16.gmra.mxu0 %v1606
  %v2911 = vpop.f32.mrf.mxu0
  %v2912 = vadd.f32 %v2623, %v2911
  %v2913 = vpop.f32.mrf.mxu0
  %v2914 = vpop.f32.mrf.mxu0
  %v2915 = vadd.f32 %v2626, %v2914
  %v2916 = vpop.f32.mrf.mxu0
  %2917 = vmatprep.mubr.bf16.mxu0 %v1616
  %2918 = vmatmul.mubr.bf16.gmra.mxu0 %v1615
  %v2919 = vpop.f32.mrf.mxu0
  %v2920 = vadd.f32 %v2631, %v2919
  %v2921 = vpop.f32.mrf.mxu0
  %v2922 = vpop.f32.mrf.mxu0
  %v2923 = vadd.f32 %v2634, %v2922
  %v2924 = vpop.f32.mrf.mxu0
  %2925 = vmatprep.mubr.bf16.mxu0 %v1625
  %2926 = vmatmul.mubr.bf16.gmra.mxu0 %v1624
  %v2927 = vpop.f32.mrf.mxu0
  %v2928 = vadd.f32 %v2639, %v2927
  %v2929 = vpop.f32.mrf.mxu0
  %v2930 = vpop.f32.mrf.mxu0
  %v2931 = vadd.f32 %v2642, %v2930
  %v2932 = vpop.f32.mrf.mxu0
  %2933 = vmatprep.mubr.bf16.mxu0 %v1634
  %2934 = vmatmul.mubr.bf16.gmra.mxu0 %v1633
  %v2935 = vpop.f32.mrf.mxu0
  %v2936 = vadd.f32 %v2647, %v2935
  %v2937 = vpop.f32.mrf.mxu0
  %v2938 = vpop.f32.mrf.mxu0
  %v2939 = vadd.f32 %v2650, %v2938
  %v2940 = vpop.f32.mrf.mxu0
  %2941 = vmatprep.mubr.bf16.mxu0 %v1643
  %2942 = vmatmul.mubr.bf16.gmra.mxu0 %v1642
  %v2943 = vpop.f32.mrf.mxu0
  %v2944 = vadd.f32 %v2655, %v2943
  %v2945 = vpop.f32.mrf.mxu0
  %v2946 = vpop.f32.mrf.mxu0
  %v2947 = vadd.f32 %v2658, %v2946
  %v2948 = vpop.f32.mrf.mxu0
  %2949 = vmatprep.mubr.bf16.mxu0 %v1652
  %2950 = vmatmul.mubr.bf16.gmra.mxu0 %v1651
  %v2951 = vpop.f32.mrf.mxu0
  %v2952 = vadd.f32 %v2663, %v2951
  %v2953 = vpop.f32.mrf.mxu0
  %v2954 = vpop.f32.mrf.mxu0
  %v2955 = vadd.f32 %v2666, %v2954
  %v2956 = vpop.f32.mrf.mxu0
  %2957 = vmatprep.mubr.bf16.mxu0 %v1661
  %2958 = vmatmul.mubr.bf16.gmra.mxu0 %v1660
  %v2959 = vpop.f32.mrf.mxu0
  %v2960 = vadd.f32 %v2671, %v2959
  %v2961 = vpop.f32.mrf.mxu0
  %v2962 = vpop.f32.mrf.mxu0
  %v2963 = vadd.f32 %v2674, %v2962
  %v2964 = vpop.f32.mrf.mxu0
  %2965 = vmatprep.mubr.bf16.mxu0 %v1670
  %2966 = vmatmul.mubr.bf16.gmra.mxu0 %v1669
  %v2967 = vpop.f32.mrf.mxu0
  %v2968 = vadd.f32 %v2679, %v2967
  %v2969 = vpop.f32.mrf.mxu0
  %v2970 = vpop.f32.mrf.mxu0
  %v2971 = vadd.f32 %v2682, %v2970
  %v2972 = vpop.f32.mrf.mxu0
  %2973 = vdwg.mxu0
  %2974 = vmatprep.subr.bf16.mxu0 0
  %2975 = vmatpush1.bf16.msra.mxu0 %v2291
  %2976 = vmatprep.subr.bf16.mxu0 0
  %2977 = vmatpush1.bf16.msra.mxu0 %v2290
  %2978 = vmatprep.subr.bf16.mxu0 0
  %2979 = vmatpush1.bf16.msra.mxu0 %v2289
  %2980 = vmatprep.subr.bf16.mxu0 0
  %2981 = vmatpush1.bf16.msra.mxu0 %v2288
  %2982 = vmatprep.subr.bf16.mxu0 0
  %2983 = vmatpush1.bf16.msra.mxu0 %v2287
  %2984 = vmatprep.subr.bf16.mxu0 0
  %2985 = vmatpush1.bf16.msra.mxu0 %v2286
  %2986 = vmatprep.subr.bf16.mxu0 0
  %2987 = vmatpush1.bf16.msra.mxu0 %v2285
  %2988 = vmatprep.subr.bf16.mxu0 0
  %2989 = vmatpush1.bf16.msra.mxu0 %v2284
  %2990 = vmatprep.subr.bf16.mxu0 0
  %2991 = vmatpush2.bf16.msra.mxu0 %v2299
  %2992 = vmatprep.subr.bf16.mxu0 0
  %2993 = vmatpush2.bf16.msra.mxu0 %v2298
  %2994 = vmatprep.subr.bf16.mxu0 0
  %2995 = vmatpush2.bf16.msra.mxu0 %v2297
  %2996 = vmatprep.subr.bf16.mxu0 0
  %2997 = vmatpush2.bf16.msra.mxu0 %v2296
  %2998 = vmatprep.subr.bf16.mxu0 0
  %2999 = vmatpush2.bf16.msra.mxu0 %v2295
  %3000 = vmatprep.subr.bf16.mxu0 0
  %3001 = vmatpush2.bf16.msra.mxu0 %v2294
  %3002 = vmatprep.subr.bf16.mxu0 0
  %3003 = vmatpush2.bf16.msra.mxu0 %v2293
  %3004 = vmatprep.subr.bf16.mxu0 0
  %3005 = vmatpush2.bf16.msra.mxu0 %v2292
  %3006 = vmatprep.mubr.bf16.mxu0 %v1393
  %3007 = vmatmul.mubr.bf16.gmra.mxu0 %v1392
  %v3008 = vpop.f32.mrf.mxu0
  %v3009 = vadd.f32 %v2720, %v3008
  %v3010 = vpop.f32.mrf.mxu0
  %v3011 = vpop.f32.mrf.mxu0
  %v3012 = vadd.f32 %v2723, %v3011
  %v3013 = vpop.f32.mrf.mxu0
  %3014 = vmatprep.mubr.bf16.mxu0 %v1402
  %3015 = vmatmul.mubr.bf16.gmra.mxu0 %v1401
  %v3016 = vpop.f32.mrf.mxu0
  %v3017 = vadd.f32 %v2728, %v3016
  %v3018 = vpop.f32.mrf.mxu0
  %v3019 = vpop.f32.mrf.mxu0
  %v3020 = vadd.f32 %v2731, %v3019
  %v3021 = vpop.f32.mrf.mxu0
  %3022 = vmatprep.mubr.bf16.mxu0 %v1411
  %3023 = vmatmul.mubr.bf16.gmra.mxu0 %v1410
  %v3024 = vpop.f32.mrf.mxu0
  %v3025 = vadd.f32 %v2736, %v3024
  %v3026 = vpop.f32.mrf.mxu0
  %v3027 = vpop.f32.mrf.mxu0
  %v3028 = vadd.f32 %v2739, %v3027
  %v3029 = vpop.f32.mrf.mxu0
  %3030 = vmatprep.mubr.bf16.mxu0 %v1420
  %3031 = vmatmul.mubr.bf16.gmra.mxu0 %v1419
  %v3032 = vpop.f32.mrf.mxu0
  %v3033 = vadd.f32 %v2744, %v3032
  %v3034 = vpop.f32.mrf.mxu0
  %v3035 = vpop.f32.mrf.mxu0
  %v3036 = vadd.f32 %v2747, %v3035
  %v3037 = vpop.f32.mrf.mxu0
  %3038 = vmatprep.mubr.bf16.mxu0 %v1429
  %3039 = vmatmul.mubr.bf16.gmra.mxu0 %v1428
  %v3040 = vpop.f32.mrf.mxu0
  %v3041 = vadd.f32 %v2752, %v3040
  %v3042 = vpop.f32.mrf.mxu0
  %v3043 = vpop.f32.mrf.mxu0
  %v3044 = vadd.f32 %v2755, %v3043
  %v3045 = vpop.f32.mrf.mxu0
  %3046 = vmatprep.mubr.bf16.mxu0 %v1438
  %3047 = vmatmul.mubr.bf16.gmra.mxu0 %v1437
  %v3048 = vpop.f32.mrf.mxu0
  %v3049 = vadd.f32 %v2760, %v3048
  %v3050 = vpop.f32.mrf.mxu0
  %v3051 = vpop.f32.mrf.mxu0
  %v3052 = vadd.f32 %v2763, %v3051
  %v3053 = vpop.f32.mrf.mxu0
  %3054 = vmatprep.mubr.bf16.mxu0 %v1447
  %3055 = vmatmul.mubr.bf16.gmra.mxu0 %v1446
  %v3056 = vpop.f32.mrf.mxu0
  %v3057 = vadd.f32 %v2768, %v3056
  %v3058 = vpop.f32.mrf.mxu0
  %v3059 = vpop.f32.mrf.mxu0
  %v3060 = vadd.f32 %v2771, %v3059
  %v3061 = vpop.f32.mrf.mxu0
  %3062 = vmatprep.mubr.bf16.mxu0 %v1456
  %3063 = vmatmul.mubr.bf16.gmra.mxu0 %v1455
  %v3064 = vpop.f32.mrf.mxu0
  %v3065 = vadd.f32 %v2776, %v3064
  %v3066 = vpop.f32.mrf.mxu0
  %v3067 = vpop.f32.mrf.mxu0
  %v3068 = vadd.f32 %v2779, %v3067
  %v3069 = vpop.f32.mrf.mxu0
  %3070 = vmatprep.mubr.bf16.mxu0 %v1465
  %3071 = vmatmul.mubr.bf16.gmra.mxu0 %v1464
  %v3072 = vpop.f32.mrf.mxu0
  %v3073 = vadd.f32 %v2784, %v3072
  %v3074 = vpop.f32.mrf.mxu0
  %v3075 = vpop.f32.mrf.mxu0
  %v3076 = vadd.f32 %v2787, %v3075
  %v3077 = vpop.f32.mrf.mxu0
  %3078 = vmatprep.mubr.bf16.mxu0 %v1474
  %3079 = vmatmul.mubr.bf16.gmra.mxu0 %v1473
  %v3080 = vpop.f32.mrf.mxu0
  %v3081 = vadd.f32 %v2792, %v3080
  %v3082 = vpop.f32.mrf.mxu0
  %v3083 = vpop.f32.mrf.mxu0
  %v3084 = vadd.f32 %v2795, %v3083
  %v3085 = vpop.f32.mrf.mxu0
  %3086 = vmatprep.mubr.bf16.mxu0 %v1483
  %3087 = vmatmul.mubr.bf16.gmra.mxu0 %v1482
  %v3088 = vpop.f32.mrf.mxu0
  %v3089 = vadd.f32 %v2800, %v3088
  %v3090 = vpop.f32.mrf.mxu0
  %v3091 = vpop.f32.mrf.mxu0
  %v3092 = vadd.f32 %v2803, %v3091
  %v3093 = vpop.f32.mrf.mxu0
  %3094 = vmatprep.mubr.bf16.mxu0 %v1492
  %3095 = vmatmul.mubr.bf16.gmra.mxu0 %v1491
  %v3096 = vpop.f32.mrf.mxu0
  %v3097 = vadd.f32 %v2808, %v3096
  %v3098 = vpop.f32.mrf.mxu0
  %v3099 = vpop.f32.mrf.mxu0
  %v3100 = vadd.f32 %v2811, %v3099
  %v3101 = vpop.f32.mrf.mxu0
  %3102 = vmatprep.mubr.bf16.mxu0 %v1501
  %3103 = vmatmul.mubr.bf16.gmra.mxu0 %v1500
  %v3104 = vpop.f32.mrf.mxu0
  %v3105 = vadd.f32 %v2816, %v3104
  %v3106 = vpop.f32.mrf.mxu0
  %v3107 = vpop.f32.mrf.mxu0
  %v3108 = vadd.f32 %v2819, %v3107
  %v3109 = vpop.f32.mrf.mxu0
  %3110 = vmatprep.mubr.bf16.mxu0 %v1510
  %3111 = vmatmul.mubr.bf16.gmra.mxu0 %v1509
  %v3112 = vpop.f32.mrf.mxu0
  %v3113 = vadd.f32 %v2824, %v3112
  %v3114 = vpop.f32.mrf.mxu0
  %v3115 = vpop.f32.mrf.mxu0
  %v3116 = vadd.f32 %v2827, %v3115
  %v3117 = vpop.f32.mrf.mxu0
  %3118 = vmatprep.mubr.bf16.mxu0 %v1519
  %3119 = vmatmul.mubr.bf16.gmra.mxu0 %v1518
  %v3120 = vpop.f32.mrf.mxu0
  %v3121 = vadd.f32 %v2832, %v3120
  %v3122 = vpop.f32.mrf.mxu0
  %v3123 = vpop.f32.mrf.mxu0
  %v3124 = vadd.f32 %v2835, %v3123
  %v3125 = vpop.f32.mrf.mxu0
  %3126 = vmatprep.mubr.bf16.mxu0 %v1528
  %3127 = vmatmul.mubr.bf16.gmra.mxu0 %v1527
  %v3128 = vpop.f32.mrf.mxu0
  %v3129 = vadd.f32 %v2840, %v3128
  %v3130 = vpop.f32.mrf.mxu0
  %v3131 = vpop.f32.mrf.mxu0
  %v3132 = vadd.f32 %v2843, %v3131
  %v3133 = vpop.f32.mrf.mxu0
  %3134 = vmatprep.mubr.bf16.mxu0 %v1537
  %3135 = vmatmul.mubr.bf16.gmra.mxu0 %v1536
  %v3136 = vpop.f32.mrf.mxu0
  %v3137 = vadd.f32 %v2848, %v3136
  %v3138 = vpop.f32.mrf.mxu0
  %v3139 = vpop.f32.mrf.mxu0
  %v3140 = vadd.f32 %v2851, %v3139
  %v3141 = vpop.f32.mrf.mxu0
  %3142 = vmatprep.mubr.bf16.mxu0 %v1546
  %3143 = vmatmul.mubr.bf16.gmra.mxu0 %v1545
  %v3144 = vpop.f32.mrf.mxu0
  %v3145 = vadd.f32 %v2856, %v3144
  %v3146 = vpop.f32.mrf.mxu0
  %v3147 = vpop.f32.mrf.mxu0
  %v3148 = vadd.f32 %v2859, %v3147
  %v3149 = vpop.f32.mrf.mxu0
  %3150 = vmatprep.mubr.bf16.mxu0 %v1555
  %3151 = vmatmul.mubr.bf16.gmra.mxu0 %v1554
  %v3152 = vpop.f32.mrf.mxu0
  %v3153 = vadd.f32 %v2864, %v3152
  %v3154 = vpop.f32.mrf.mxu0
  %v3155 = vpop.f32.mrf.mxu0
  %v3156 = vadd.f32 %v2867, %v3155
  %v3157 = vpop.f32.mrf.mxu0
  %3158 = vmatprep.mubr.bf16.mxu0 %v1564
  %3159 = vmatmul.mubr.bf16.gmra.mxu0 %v1563
  %v3160 = vpop.f32.mrf.mxu0
  %v3161 = vadd.f32 %v2872, %v3160
  %v3162 = vpop.f32.mrf.mxu0
  %v3163 = vpop.f32.mrf.mxu0
  %v3164 = vadd.f32 %v2875, %v3163
  %v3165 = vpop.f32.mrf.mxu0
  %3166 = vmatprep.mubr.bf16.mxu0 %v1573
  %3167 = vmatmul.mubr.bf16.gmra.mxu0 %v1572
  %v3168 = vpop.f32.mrf.mxu0
  %v3169 = vadd.f32 %v2880, %v3168
  %v3170 = vpop.f32.mrf.mxu0
  %v3171 = vpop.f32.mrf.mxu0
  %v3172 = vadd.f32 %v2883, %v3171
  %v3173 = vpop.f32.mrf.mxu0
  %3174 = vmatprep.mubr.bf16.mxu0 %v1582
  %3175 = vmatmul.mubr.bf16.gmra.mxu0 %v1581
  %v3176 = vpop.f32.mrf.mxu0
  %v3177 = vadd.f32 %v2888, %v3176
  %v3178 = vpop.f32.mrf.mxu0
  %v3179 = vpop.f32.mrf.mxu0
  %v3180 = vadd.f32 %v2891, %v3179
  %v3181 = vpop.f32.mrf.mxu0
  %3182 = vmatprep.mubr.bf16.mxu0 %v1591
  %3183 = vmatmul.mubr.bf16.gmra.mxu0 %v1590
  %v3184 = vpop.f32.mrf.mxu0
  %v3185 = vadd.f32 %v2896, %v3184
  %v3186 = vpop.f32.mrf.mxu0
  %v3187 = vpop.f32.mrf.mxu0
  %v3188 = vadd.f32 %v2899, %v3187
  %v3189 = vpop.f32.mrf.mxu0
  %3190 = vmatprep.mubr.bf16.mxu0 %v1600
  %3191 = vmatmul.mubr.bf16.gmra.mxu0 %v1599
  %v3192 = vpop.f32.mrf.mxu0
  %v3193 = vadd.f32 %v2904, %v3192
  %v3194 = vpop.f32.mrf.mxu0
  %v3195 = vpop.f32.mrf.mxu0
  %v3196 = vadd.f32 %v2907, %v3195
  %v3197 = vpop.f32.mrf.mxu0
  %3198 = vmatprep.mubr.bf16.mxu0 %v1609
  %3199 = vmatmul.mubr.bf16.gmra.mxu0 %v1608
  %v3200 = vpop.f32.mrf.mxu0
  %v3201 = vadd.f32 %v2912, %v3200
  %v3202 = vpop.f32.mrf.mxu0
  %v3203 = vpop.f32.mrf.mxu0
  %v3204 = vadd.f32 %v2915, %v3203
  %v3205 = vpop.f32.mrf.mxu0
  %3206 = vmatprep.mubr.bf16.mxu0 %v1618
  %3207 = vmatmul.mubr.bf16.gmra.mxu0 %v1617
  %v3208 = vpop.f32.mrf.mxu0
  %v3209 = vadd.f32 %v2920, %v3208
  %v3210 = vpop.f32.mrf.mxu0
  %v3211 = vpop.f32.mrf.mxu0
  %v3212 = vadd.f32 %v2923, %v3211
  %v3213 = vpop.f32.mrf.mxu0
  %3214 = vmatprep.mubr.bf16.mxu0 %v1627
  %3215 = vmatmul.mubr.bf16.gmra.mxu0 %v1626
  %v3216 = vpop.f32.mrf.mxu0
  %v3217 = vadd.f32 %v2928, %v3216
  %v3218 = vpop.f32.mrf.mxu0
  %v3219 = vpop.f32.mrf.mxu0
  %v3220 = vadd.f32 %v2931, %v3219
  %v3221 = vpop.f32.mrf.mxu0
  %3222 = vmatprep.mubr.bf16.mxu0 %v1636
  %3223 = vmatmul.mubr.bf16.gmra.mxu0 %v1635
  %v3224 = vpop.f32.mrf.mxu0
  %v3225 = vadd.f32 %v2936, %v3224
  %v3226 = vpop.f32.mrf.mxu0
  %v3227 = vpop.f32.mrf.mxu0
  %v3228 = vadd.f32 %v2939, %v3227
  %v3229 = vpop.f32.mrf.mxu0
  %3230 = vmatprep.mubr.bf16.mxu0 %v1645
  %3231 = vmatmul.mubr.bf16.gmra.mxu0 %v1644
  %v3232 = vpop.f32.mrf.mxu0
  %v3233 = vadd.f32 %v2944, %v3232
  %v3234 = vpop.f32.mrf.mxu0
  %v3235 = vpop.f32.mrf.mxu0
  %v3236 = vadd.f32 %v2947, %v3235
  %v3237 = vpop.f32.mrf.mxu0
  %3238 = vmatprep.mubr.bf16.mxu0 %v1654
  %3239 = vmatmul.mubr.bf16.gmra.mxu0 %v1653
  %v3240 = vpop.f32.mrf.mxu0
  %v3241 = vadd.f32 %v2952, %v3240
  %v3242 = vpop.f32.mrf.mxu0
  %v3243 = vpop.f32.mrf.mxu0
  %v3244 = vadd.f32 %v2955, %v3243
  %v3245 = vpop.f32.mrf.mxu0
  %3246 = vmatprep.mubr.bf16.mxu0 %v1663
  %3247 = vmatmul.mubr.bf16.gmra.mxu0 %v1662
  %v3248 = vpop.f32.mrf.mxu0
  %v3249 = vadd.f32 %v2960, %v3248
  %v3250 = vpop.f32.mrf.mxu0
  %v3251 = vpop.f32.mrf.mxu0
  %v3252 = vadd.f32 %v2963, %v3251
  %v3253 = vpop.f32.mrf.mxu0
  %3254 = vmatprep.mubr.bf16.mxu0 %v1672
  %3255 = vmatmul.mubr.bf16.gmra.mxu0 %v1671
  %v3256 = vpop.f32.mrf.mxu0
  %v3257 = vadd.f32 %v2968, %v3256
  %v3258 = vpop.f32.mrf.mxu0
  %v3259 = vpop.f32.mrf.mxu0
  %v3260 = vadd.f32 %v2971, %v3259
  %v3261 = vpop.f32.mrf.mxu0
  %3262 = vdwg.mxu0
  %3263 = vmatprep.subr.bf16.mxu0 0
  %3264 = vmatpush1.bf16.msra.mxu0 %v2307
  %3265 = vmatprep.subr.bf16.mxu0 0
  %3266 = vmatpush1.bf16.msra.mxu0 %v2306
  %3267 = vmatprep.subr.bf16.mxu0 0
  %3268 = vmatpush1.bf16.msra.mxu0 %v2305
  %3269 = vmatprep.subr.bf16.mxu0 0
  %3270 = vmatpush1.bf16.msra.mxu0 %v2304
  %3271 = vmatprep.subr.bf16.mxu0 0
  %3272 = vmatpush1.bf16.msra.mxu0 %v2303
  %3273 = vmatprep.subr.bf16.mxu0 0
  %3274 = vmatpush1.bf16.msra.mxu0 %v2302
  %3275 = vmatprep.subr.bf16.mxu0 0
  %3276 = vmatpush1.bf16.msra.mxu0 %v2301
  %3277 = vmatprep.subr.bf16.mxu0 0
  %3278 = vmatpush1.bf16.msra.mxu0 %v2300
  %3279 = vmatprep.subr.bf16.mxu0 0
  %3280 = vmatpush2.bf16.msra.mxu0 %v2315
  %3281 = vmatprep.subr.bf16.mxu0 0
  %3282 = vmatpush2.bf16.msra.mxu0 %v2314
  %3283 = vmatprep.subr.bf16.mxu0 0
  %3284 = vmatpush2.bf16.msra.mxu0 %v2313
  %3285 = vmatprep.subr.bf16.mxu0 0
  %3286 = vmatpush2.bf16.msra.mxu0 %v2312
  %3287 = vmatprep.subr.bf16.mxu0 0
  %3288 = vmatpush2.bf16.msra.mxu0 %v2311
  %3289 = vmatprep.subr.bf16.mxu0 0
  %3290 = vmatpush2.bf16.msra.mxu0 %v2310
  %3291 = vmatprep.subr.bf16.mxu0 0
  %3292 = vmatpush2.bf16.msra.mxu0 %v2309
  %3293 = vmatprep.subr.bf16.mxu0 0
  %3294 = vmatpush2.bf16.msra.mxu0 %v2308
  %3295 = vmatprep.mubr.bf16.mxu0 %v1395
  %3296 = vmatmul.mubr.bf16.gmra.mxu0 %v1394
  %v3297 = vpop.f32.mrf.mxu0
  %v3298 = vadd.f32 %v3009, %v3297
  %v3299 = vpop.f32.mrf.mxu0
  %v3300 = vpop.f32.mrf.mxu0
  %v3301 = vadd.f32 %v3012, %v3300
  %v3302 = vpop.f32.mrf.mxu0
  %3303 = vmatprep.mubr.bf16.mxu0 %v1404
  %3304 = vmatmul.mubr.bf16.gmra.mxu0 %v1403
  %v3305 = vpop.f32.mrf.mxu0
  %v3306 = vadd.f32 %v3017, %v3305
  %v3307 = vpop.f32.mrf.mxu0
  %v3308 = vpop.f32.mrf.mxu0
  %v3309 = vadd.f32 %v3020, %v3308
  %v3310 = vpop.f32.mrf.mxu0
  %3311 = vmatprep.mubr.bf16.mxu0 %v1413
  %3312 = vmatmul.mubr.bf16.gmra.mxu0 %v1412
  %v3313 = vpop.f32.mrf.mxu0
  %v3314 = vadd.f32 %v3025, %v3313
  %v3315 = vpop.f32.mrf.mxu0
  %v3316 = vpop.f32.mrf.mxu0
  %v3317 = vadd.f32 %v3028, %v3316
  %v3318 = vpop.f32.mrf.mxu0
  %3319 = vmatprep.mubr.bf16.mxu0 %v1422
  %3320 = vmatmul.mubr.bf16.gmra.mxu0 %v1421
  %v3321 = vpop.f32.mrf.mxu0
  %v3322 = vadd.f32 %v3033, %v3321
  %v3323 = vpop.f32.mrf.mxu0
  %v3324 = vpop.f32.mrf.mxu0
  %v3325 = vadd.f32 %v3036, %v3324
  %v3326 = vpop.f32.mrf.mxu0
  %3327 = vmatprep.mubr.bf16.mxu0 %v1431
  %3328 = vmatmul.mubr.bf16.gmra.mxu0 %v1430
  %v3329 = vpop.f32.mrf.mxu0
  %v3330 = vadd.f32 %v3041, %v3329
  %v3331 = vpop.f32.mrf.mxu0
  %v3332 = vpop.f32.mrf.mxu0
  %v3333 = vadd.f32 %v3044, %v3332
  %v3334 = vpop.f32.mrf.mxu0
  %3335 = vmatprep.mubr.bf16.mxu0 %v1440
  %3336 = vmatmul.mubr.bf16.gmra.mxu0 %v1439
  %v3337 = vpop.f32.mrf.mxu0
  %v3338 = vadd.f32 %v3049, %v3337
  %v3339 = vpop.f32.mrf.mxu0
  %v3340 = vpop.f32.mrf.mxu0
  %v3341 = vadd.f32 %v3052, %v3340
  %v3342 = vpop.f32.mrf.mxu0
  %3343 = vmatprep.mubr.bf16.mxu0 %v1449
  %3344 = vmatmul.mubr.bf16.gmra.mxu0 %v1448
  %v3345 = vpop.f32.mrf.mxu0
  %v3346 = vadd.f32 %v3057, %v3345
  %v3347 = vpop.f32.mrf.mxu0
  %v3348 = vpop.f32.mrf.mxu0
  %v3349 = vadd.f32 %v3060, %v3348
  %v3350 = vpop.f32.mrf.mxu0
  %3351 = vmatprep.mubr.bf16.mxu0 %v1458
  %3352 = vmatmul.mubr.bf16.gmra.mxu0 %v1457
  %v3353 = vpop.f32.mrf.mxu0
  %v3354 = vadd.f32 %v3065, %v3353
  %v3355 = vpop.f32.mrf.mxu0
  %v3356 = vpop.f32.mrf.mxu0
  %v3357 = vadd.f32 %v3068, %v3356
  %v3358 = vpop.f32.mrf.mxu0
  %3359 = vmatprep.mubr.bf16.mxu0 %v1467
  %3360 = vmatmul.mubr.bf16.gmra.mxu0 %v1466
  %v3361 = vpop.f32.mrf.mxu0
  %v3362 = vadd.f32 %v3073, %v3361
  %v3363 = vpop.f32.mrf.mxu0
  %v3364 = vpop.f32.mrf.mxu0
  %v3365 = vadd.f32 %v3076, %v3364
  %v3366 = vpop.f32.mrf.mxu0
  %3367 = vmatprep.mubr.bf16.mxu0 %v1476
  %3368 = vmatmul.mubr.bf16.gmra.mxu0 %v1475
  %v3369 = vpop.f32.mrf.mxu0
  %v3370 = vadd.f32 %v3081, %v3369
  %v3371 = vpop.f32.mrf.mxu0
  %v3372 = vpop.f32.mrf.mxu0
  %v3373 = vadd.f32 %v3084, %v3372
  %v3374 = vpop.f32.mrf.mxu0
  %3375 = vmatprep.mubr.bf16.mxu0 %v1485
  %3376 = vmatmul.mubr.bf16.gmra.mxu0 %v1484
  %v3377 = vpop.f32.mrf.mxu0
  %v3378 = vadd.f32 %v3089, %v3377
  %v3379 = vpop.f32.mrf.mxu0
  %v3380 = vpop.f32.mrf.mxu0
  %v3381 = vadd.f32 %v3092, %v3380
  %v3382 = vpop.f32.mrf.mxu0
  %3383 = vmatprep.mubr.bf16.mxu0 %v1494
  %3384 = vmatmul.mubr.bf16.gmra.mxu0 %v1493
  %v3385 = vpop.f32.mrf.mxu0
  %v3386 = vadd.f32 %v3097, %v3385
  %v3387 = vpop.f32.mrf.mxu0
  %v3388 = vpop.f32.mrf.mxu0
  %v3389 = vadd.f32 %v3100, %v3388
  %v3390 = vpop.f32.mrf.mxu0
  %3391 = vmatprep.mubr.bf16.mxu0 %v1503
  %3392 = vmatmul.mubr.bf16.gmra.mxu0 %v1502
  %v3393 = vpop.f32.mrf.mxu0
  %v3394 = vadd.f32 %v3105, %v3393
  %v3395 = vpop.f32.mrf.mxu0
  %v3396 = vpop.f32.mrf.mxu0
  %v3397 = vadd.f32 %v3108, %v3396
  %v3398 = vpop.f32.mrf.mxu0
  %3399 = vmatprep.mubr.bf16.mxu0 %v1512
  %3400 = vmatmul.mubr.bf16.gmra.mxu0 %v1511
  %v3401 = vpop.f32.mrf.mxu0
  %v3402 = vadd.f32 %v3113, %v3401
  %v3403 = vpop.f32.mrf.mxu0
  %v3404 = vpop.f32.mrf.mxu0
  %v3405 = vadd.f32 %v3116, %v3404
  %v3406 = vpop.f32.mrf.mxu0
  %3407 = vmatprep.mubr.bf16.mxu0 %v1521
  %3408 = vmatmul.mubr.bf16.gmra.mxu0 %v1520
  %v3409 = vpop.f32.mrf.mxu0
  %v3410 = vadd.f32 %v3121, %v3409
  %v3411 = vpop.f32.mrf.mxu0
  %v3412 = vpop.f32.mrf.mxu0
  %v3413 = vadd.f32 %v3124, %v3412
  %v3414 = vpop.f32.mrf.mxu0
  %3415 = vmatprep.mubr.bf16.mxu0 %v1530
  %3416 = vmatmul.mubr.bf16.gmra.mxu0 %v1529
  %v3417 = vpop.f32.mrf.mxu0
  %v3418 = vadd.f32 %v3129, %v3417
  %v3419 = vpop.f32.mrf.mxu0
  %v3420 = vpop.f32.mrf.mxu0
  %v3421 = vadd.f32 %v3132, %v3420
  %v3422 = vpop.f32.mrf.mxu0
  %3423 = vmatprep.mubr.bf16.mxu0 %v1539
  %3424 = vmatmul.mubr.bf16.gmra.mxu0 %v1538
  %v3425 = vpop.f32.mrf.mxu0
  %v3426 = vadd.f32 %v3137, %v3425
  %v3427 = vpop.f32.mrf.mxu0
  %v3428 = vpop.f32.mrf.mxu0
  %v3429 = vadd.f32 %v3140, %v3428
  %v3430 = vpop.f32.mrf.mxu0
  %3431 = vmatprep.mubr.bf16.mxu0 %v1548
  %3432 = vmatmul.mubr.bf16.gmra.mxu0 %v1547
  %v3433 = vpop.f32.mrf.mxu0
  %v3434 = vadd.f32 %v3145, %v3433
  %v3435 = vpop.f32.mrf.mxu0
  %v3436 = vpop.f32.mrf.mxu0
  %v3437 = vadd.f32 %v3148, %v3436
  %v3438 = vpop.f32.mrf.mxu0
  %3439 = vmatprep.mubr.bf16.mxu0 %v1557
  %3440 = vmatmul.mubr.bf16.gmra.mxu0 %v1556
  %v3441 = vpop.f32.mrf.mxu0
  %v3442 = vadd.f32 %v3153, %v3441
  %v3443 = vpop.f32.mrf.mxu0
  %v3444 = vpop.f32.mrf.mxu0
  %v3445 = vadd.f32 %v3156, %v3444
  %v3446 = vpop.f32.mrf.mxu0
  %3447 = vmatprep.mubr.bf16.mxu0 %v1566
  %3448 = vmatmul.mubr.bf16.gmra.mxu0 %v1565
  %v3449 = vpop.f32.mrf.mxu0
  %v3450 = vadd.f32 %v3161, %v3449
  %v3451 = vpop.f32.mrf.mxu0
  %v3452 = vpop.f32.mrf.mxu0
  %v3453 = vadd.f32 %v3164, %v3452
  %v3454 = vpop.f32.mrf.mxu0
  %3455 = vmatprep.mubr.bf16.mxu0 %v1575
  %3456 = vmatmul.mubr.bf16.gmra.mxu0 %v1574
  %v3457 = vpop.f32.mrf.mxu0
  %v3458 = vadd.f32 %v3169, %v3457
  %v3459 = vpop.f32.mrf.mxu0
  %v3460 = vpop.f32.mrf.mxu0
  %v3461 = vadd.f32 %v3172, %v3460
  %v3462 = vpop.f32.mrf.mxu0
  %3463 = vmatprep.mubr.bf16.mxu0 %v1584
  %3464 = vmatmul.mubr.bf16.gmra.mxu0 %v1583
  %v3465 = vpop.f32.mrf.mxu0
  %v3466 = vadd.f32 %v3177, %v3465
  %v3467 = vpop.f32.mrf.mxu0
  %v3468 = vpop.f32.mrf.mxu0
  %v3469 = vadd.f32 %v3180, %v3468
  %v3470 = vpop.f32.mrf.mxu0
  %3471 = vmatprep.mubr.bf16.mxu0 %v1593
  %3472 = vmatmul.mubr.bf16.gmra.mxu0 %v1592
  %v3473 = vpop.f32.mrf.mxu0
  %v3474 = vadd.f32 %v3185, %v3473
  %v3475 = vpop.f32.mrf.mxu0
  %v3476 = vpop.f32.mrf.mxu0
  %v3477 = vadd.f32 %v3188, %v3476
  %v3478 = vpop.f32.mrf.mxu0
  %3479 = vmatprep.mubr.bf16.mxu0 %v1602
  %3480 = vmatmul.mubr.bf16.gmra.mxu0 %v1601
  %v3481 = vpop.f32.mrf.mxu0
  %v3482 = vadd.f32 %v3193, %v3481
  %v3483 = vpop.f32.mrf.mxu0
  %v3484 = vpop.f32.mrf.mxu0
  %v3485 = vadd.f32 %v3196, %v3484
  %v3486 = vpop.f32.mrf.mxu0
  %3487 = vmatprep.mubr.bf16.mxu0 %v1611
  %3488 = vmatmul.mubr.bf16.gmra.mxu0 %v1610
  %v3489 = vpop.f32.mrf.mxu0
  %v3490 = vadd.f32 %v3201, %v3489
  %v3491 = vpop.f32.mrf.mxu0
  %v3492 = vpop.f32.mrf.mxu0
  %v3493 = vadd.f32 %v3204, %v3492
  %v3494 = vpop.f32.mrf.mxu0
  %3495 = vmatprep.mubr.bf16.mxu0 %v1620
  %3496 = vmatmul.mubr.bf16.gmra.mxu0 %v1619
  %v3497 = vpop.f32.mrf.mxu0
  %v3498 = vadd.f32 %v3209, %v3497
  %v3499 = vpop.f32.mrf.mxu0
  %v3500 = vpop.f32.mrf.mxu0
  %v3501 = vadd.f32 %v3212, %v3500
  %v3502 = vpop.f32.mrf.mxu0
  %3503 = vmatprep.mubr.bf16.mxu0 %v1629
  %3504 = vmatmul.mubr.bf16.gmra.mxu0 %v1628
  %v3505 = vpop.f32.mrf.mxu0
  %v3506 = vadd.f32 %v3217, %v3505
  %v3507 = vpop.f32.mrf.mxu0
  %v3508 = vpop.f32.mrf.mxu0
  %v3509 = vadd.f32 %v3220, %v3508
  %v3510 = vpop.f32.mrf.mxu0
  %3511 = vmatprep.mubr.bf16.mxu0 %v1638
  %3512 = vmatmul.mubr.bf16.gmra.mxu0 %v1637
  %v3513 = vpop.f32.mrf.mxu0
  %v3514 = vadd.f32 %v3225, %v3513
  %v3515 = vpop.f32.mrf.mxu0
  %v3516 = vpop.f32.mrf.mxu0
  %v3517 = vadd.f32 %v3228, %v3516
  %v3518 = vpop.f32.mrf.mxu0
  %3519 = vmatprep.mubr.bf16.mxu0 %v1647
  %3520 = vmatmul.mubr.bf16.gmra.mxu0 %v1646
  %v3521 = vpop.f32.mrf.mxu0
  %v3522 = vadd.f32 %v3233, %v3521
  %v3523 = vpop.f32.mrf.mxu0
  %v3524 = vpop.f32.mrf.mxu0
  %v3525 = vadd.f32 %v3236, %v3524
  %v3526 = vpop.f32.mrf.mxu0
  %3527 = vmatprep.mubr.bf16.mxu0 %v1656
  %3528 = vmatmul.mubr.bf16.gmra.mxu0 %v1655
  %v3529 = vpop.f32.mrf.mxu0
  %v3530 = vadd.f32 %v3241, %v3529
  %v3531 = vpop.f32.mrf.mxu0
  %v3532 = vpop.f32.mrf.mxu0
  %v3533 = vadd.f32 %v3244, %v3532
  %v3534 = vpop.f32.mrf.mxu0
  %3535 = vmatprep.mubr.bf16.mxu0 %v1665
  %3536 = vmatmul.mubr.bf16.gmra.mxu0 %v1664
  %v3537 = vpop.f32.mrf.mxu0
  %v3538 = vadd.f32 %v3249, %v3537
  %v3539 = vpop.f32.mrf.mxu0
  %v3540 = vpop.f32.mrf.mxu0
  %v3541 = vadd.f32 %v3252, %v3540
  %v3542 = vpop.f32.mrf.mxu0
  %3543 = vmatprep.mubr.bf16.mxu0 %v1674
  %3544 = vmatmul.mubr.bf16.gmra.mxu0 %v1673
  %v3545 = vpop.f32.mrf.mxu0
  %v3546 = vadd.f32 %v3257, %v3545
  %v3547 = vpop.f32.mrf.mxu0
  %v3548 = vpop.f32.mrf.mxu0
  %v3549 = vadd.f32 %v3260, %v3548
  %v3550 = vpop.f32.mrf.mxu0
  %3551 = vdwg.mxu0
  %3552 = vmatprep.subr.bf16.mxu0 0
  %3553 = vmatpush1.bf16.msra.mxu0 %v2323
  %3554 = vmatprep.subr.bf16.mxu0 0
  %3555 = vmatpush1.bf16.msra.mxu0 %v2322
  %3556 = vmatprep.subr.bf16.mxu0 0
  %3557 = vmatpush1.bf16.msra.mxu0 %v2321
  %3558 = vmatprep.subr.bf16.mxu0 0
  %3559 = vmatpush1.bf16.msra.mxu0 %v2320
  %3560 = vmatprep.subr.bf16.mxu0 0
  %3561 = vmatpush1.bf16.msra.mxu0 %v2319
  %3562 = vmatprep.subr.bf16.mxu0 0
  %3563 = vmatpush1.bf16.msra.mxu0 %v2318
  %3564 = vmatprep.subr.bf16.mxu0 0
  %3565 = vmatpush1.bf16.msra.mxu0 %v2317
  %3566 = vmatprep.subr.bf16.mxu0 0
  %3567 = vmatpush1.bf16.msra.mxu0 %v2316
  %3568 = vmatprep.subr.bf16.mxu0 0
  %3569 = vmatpush2.bf16.msra.mxu0 0
  %3570 = vmatprep.subr.bf16.mxu0 0
  %3571 = vmatpush2.bf16.msra.mxu0 0
  %3572 = vmatprep.subr.bf16.mxu0 0
  %3573 = vmatpush2.bf16.msra.mxu0 0
  %3574 = vmatprep.subr.bf16.mxu0 0
  %3575 = vmatpush2.bf16.msra.mxu0 0
  %3576 = vmatprep.subr.bf16.mxu0 0
  %3577 = vmatpush2.bf16.msra.mxu0 0
  %3578 = vmatprep.subr.bf16.mxu0 0
  %3579 = vmatpush2.bf16.msra.mxu0 0
  %3580 = vmatprep.subr.bf16.mxu0 0
  %3581 = vmatpush2.bf16.msra.mxu0 0
  %3582 = vmatprep.subr.bf16.mxu0 0
  %3583 = vmatpush2.bf16.msra.mxu0 0
  %3584 = vmatprep.mubr.bf16.mxu0 0
  %3585 = vmatmul.mubr.bf16.gmra.mxu0 %v1396
  %v3586 = vpop.f32.mrf.mxu0
  %v3587 = vadd.f32 %v3298, %v3586
  %v3588 = vpop.f32.mrf.mxu0
  %v3589 = vpop.f32.mrf.mxu0
  %v3590 = vadd.f32 %v3301, %v3589
  %v3591 = vpop.f32.mrf.mxu0
  %3592 = vmatprep.mubr.bf16.mxu0 0
  %3593 = vmatmul.mubr.bf16.gmra.mxu0 %v1405
  %v3594 = vpop.f32.mrf.mxu0
  %v3595 = vadd.f32 %v3306, %v3594
  %v3596 = vpop.f32.mrf.mxu0
  %v3597 = vpop.f32.mrf.mxu0
  %v3598 = vadd.f32 %v3309, %v3597
  %v3599 = vpop.f32.mrf.mxu0
  %3600 = vmatprep.mubr.bf16.mxu0 0
  %3601 = vmatmul.mubr.bf16.gmra.mxu0 %v1414
  %v3602 = vpop.f32.mrf.mxu0
  %v3603 = vadd.f32 %v3314, %v3602
  %v3604 = vpop.f32.mrf.mxu0
  %v3605 = vpop.f32.mrf.mxu0
  %v3606 = vadd.f32 %v3317, %v3605
  %v3607 = vpop.f32.mrf.mxu0
  %3608 = vmatprep.mubr.bf16.mxu0 0
  %3609 = vmatmul.mubr.bf16.gmra.mxu0 %v1423
  %v3610 = vpop.f32.mrf.mxu0
  %v3611 = vadd.f32 %v3322, %v3610
  %v3612 = vpop.f32.mrf.mxu0
  %v3613 = vpop.f32.mrf.mxu0
  %v3614 = vadd.f32 %v3325, %v3613
  %v3615 = vpop.f32.mrf.mxu0
  %3616 = vmatprep.mubr.bf16.mxu0 0
  %3617 = vmatmul.mubr.bf16.gmra.mxu0 %v1432
  %v3618 = vpop.f32.mrf.mxu0
  %v3619 = vadd.f32 %v3330, %v3618
  %v3620 = vpop.f32.mrf.mxu0
  %v3621 = vpop.f32.mrf.mxu0
  %v3622 = vadd.f32 %v3333, %v3621
  %v3623 = vpop.f32.mrf.mxu0
  %3624 = vmatprep.mubr.bf16.mxu0 0
  %3625 = vmatmul.mubr.bf16.gmra.mxu0 %v1441
  %v3626 = vpop.f32.mrf.mxu0
  %v3627 = vadd.f32 %v3338, %v3626
  %v3628 = vpop.f32.mrf.mxu0
  %v3629 = vpop.f32.mrf.mxu0
  %v3630 = vadd.f32 %v3341, %v3629
  %v3631 = vpop.f32.mrf.mxu0
  %3632 = vmatprep.mubr.bf16.mxu0 0
  %3633 = vmatmul.mubr.bf16.gmra.mxu0 %v1450
  %v3634 = vpop.f32.mrf.mxu0
  %v3635 = vadd.f32 %v3346, %v3634
  %v3636 = vpop.f32.mrf.mxu0
  %v3637 = vpop.f32.mrf.mxu0
  %v3638 = vadd.f32 %v3349, %v3637
  %v3639 = vpop.f32.mrf.mxu0
  %3640 = vmatprep.mubr.bf16.mxu0 0
  %3641 = vmatmul.mubr.bf16.gmra.mxu0 %v1459
  %v3642 = vpop.f32.mrf.mxu0
  %v3643 = vadd.f32 %v3354, %v3642
  %v3644 = vpop.f32.mrf.mxu0
  %v3645 = vpop.f32.mrf.mxu0
  %v3646 = vadd.f32 %v3357, %v3645
  %v3647 = vpop.f32.mrf.mxu0
  %3648 = vmatprep.mubr.bf16.mxu0 0
  %3649 = vmatmul.mubr.bf16.gmra.mxu0 %v1468
  %v3650 = vpop.f32.mrf.mxu0
  %v3651 = vadd.f32 %v3362, %v3650
  %v3652 = vpop.f32.mrf.mxu0
  %v3653 = vpop.f32.mrf.mxu0
  %v3654 = vadd.f32 %v3365, %v3653
  %v3655 = vpop.f32.mrf.mxu0
  %3656 = vmatprep.mubr.bf16.mxu0 0
  %3657 = vmatmul.mubr.bf16.gmra.mxu0 %v1477
  %v3658 = vpop.f32.mrf.mxu0
  %v3659 = vadd.f32 %v3370, %v3658
  %v3660 = vpop.f32.mrf.mxu0
  %v3661 = vpop.f32.mrf.mxu0
  %v3662 = vadd.f32 %v3373, %v3661
  %v3663 = vpop.f32.mrf.mxu0
  %3664 = vmatprep.mubr.bf16.mxu0 0
  %3665 = vmatmul.mubr.bf16.gmra.mxu0 %v1486
  %v3666 = vpop.f32.mrf.mxu0
  %v3667 = vadd.f32 %v3378, %v3666
  %v3668 = vpop.f32.mrf.mxu0
  %v3669 = vpop.f32.mrf.mxu0
  %v3670 = vadd.f32 %v3381, %v3669
  %v3671 = vpop.f32.mrf.mxu0
  %3672 = vmatprep.mubr.bf16.mxu0 0
  %3673 = vmatmul.mubr.bf16.gmra.mxu0 %v1495
  %v3674 = vpop.f32.mrf.mxu0
  %v3675 = vadd.f32 %v3386, %v3674
  %v3676 = vpop.f32.mrf.mxu0
  %v3677 = vpop.f32.mrf.mxu0
  %v3678 = vadd.f32 %v3389, %v3677
  %v3679 = vpop.f32.mrf.mxu0
  %3680 = vmatprep.mubr.bf16.mxu0 0
  %3681 = vmatmul.mubr.bf16.gmra.mxu0 %v1504
  %v3682 = vpop.f32.mrf.mxu0
  %v3683 = vadd.f32 %v3394, %v3682
  %v3684 = vpop.f32.mrf.mxu0
  %v3685 = vpop.f32.mrf.mxu0
  %v3686 = vadd.f32 %v3397, %v3685
  %v3687 = vpop.f32.mrf.mxu0
  %3688 = vmatprep.mubr.bf16.mxu0 0
  %3689 = vmatmul.mubr.bf16.gmra.mxu0 %v1513
  %v3690 = vpop.f32.mrf.mxu0
  %v3691 = vadd.f32 %v3402, %v3690
  %v3692 = vpop.f32.mrf.mxu0
  %v3693 = vpop.f32.mrf.mxu0
  %v3694 = vadd.f32 %v3405, %v3693
  %v3695 = vpop.f32.mrf.mxu0
  %3696 = vmatprep.mubr.bf16.mxu0 0
  %3697 = vmatmul.mubr.bf16.gmra.mxu0 %v1522
  %v3698 = vpop.f32.mrf.mxu0
  %v3699 = vadd.f32 %v3410, %v3698
  %v3700 = vpop.f32.mrf.mxu0
  %v3701 = vpop.f32.mrf.mxu0
  %v3702 = vadd.f32 %v3413, %v3701
  %v3703 = vpop.f32.mrf.mxu0
  %3704 = vmatprep.mubr.bf16.mxu0 0
  %3705 = vmatmul.mubr.bf16.gmra.mxu0 %v1531
  %v3706 = vpop.f32.mrf.mxu0
  %v3707 = vadd.f32 %v3418, %v3706
  %v3708 = vpop.f32.mrf.mxu0
  %v3709 = vpop.f32.mrf.mxu0
  %v3710 = vadd.f32 %v3421, %v3709
  %v3711 = vpop.f32.mrf.mxu0
  %3712 = vmatprep.mubr.bf16.mxu0 0
  %3713 = vmatmul.mubr.bf16.gmra.mxu0 %v1540
  %v3714 = vpop.f32.mrf.mxu0
  %v3715 = vadd.f32 %v3426, %v3714
  %v3716 = vpop.f32.mrf.mxu0
  %v3717 = vpop.f32.mrf.mxu0
  %v3718 = vadd.f32 %v3429, %v3717
  %v3719 = vpop.f32.mrf.mxu0
  %3720 = vmatprep.mubr.bf16.mxu0 0
  %3721 = vmatmul.mubr.bf16.gmra.mxu0 %v1549
  %v3722 = vpop.f32.mrf.mxu0
  %v3723 = vadd.f32 %v3434, %v3722
  %v3724 = vpop.f32.mrf.mxu0
  %v3725 = vpop.f32.mrf.mxu0
  %v3726 = vadd.f32 %v3437, %v3725
  %v3727 = vpop.f32.mrf.mxu0
  %3728 = vmatprep.mubr.bf16.mxu0 0
  %3729 = vmatmul.mubr.bf16.gmra.mxu0 %v1558
  %v3730 = vpop.f32.mrf.mxu0
  %v3731 = vadd.f32 %v3442, %v3730
  %v3732 = vpop.f32.mrf.mxu0
  %v3733 = vpop.f32.mrf.mxu0
  %v3734 = vadd.f32 %v3445, %v3733
  %v3735 = vpop.f32.mrf.mxu0
  %3736 = vmatprep.mubr.bf16.mxu0 0
  %3737 = vmatmul.mubr.bf16.gmra.mxu0 %v1567
  %v3738 = vpop.f32.mrf.mxu0
  %v3739 = vadd.f32 %v3450, %v3738
  %v3740 = vpop.f32.mrf.mxu0
  %v3741 = vpop.f32.mrf.mxu0
  %v3742 = vadd.f32 %v3453, %v3741
  %v3743 = vpop.f32.mrf.mxu0
  %3744 = vmatprep.mubr.bf16.mxu0 0
  %3745 = vmatmul.mubr.bf16.gmra.mxu0 %v1576
  %v3746 = vpop.f32.mrf.mxu0
  %v3747 = vadd.f32 %v3458, %v3746
  %v3748 = vpop.f32.mrf.mxu0
  %v3749 = vpop.f32.mrf.mxu0
  %v3750 = vadd.f32 %v3461, %v3749
  %v3751 = vpop.f32.mrf.mxu0
  %3752 = vmatprep.mubr.bf16.mxu0 0
  %3753 = vmatmul.mubr.bf16.gmra.mxu0 %v1585
  %v3754 = vpop.f32.mrf.mxu0
  %v3755 = vadd.f32 %v3466, %v3754
  %v3756 = vpop.f32.mrf.mxu0
  %v3757 = vpop.f32.mrf.mxu0
  %v3758 = vadd.f32 %v3469, %v3757
  %v3759 = vpop.f32.mrf.mxu0
  %3760 = vmatprep.mubr.bf16.mxu0 0
  %3761 = vmatmul.mubr.bf16.gmra.mxu0 %v1594
  %v3762 = vpop.f32.mrf.mxu0
  %v3763 = vadd.f32 %v3474, %v3762
  %v3764 = vpop.f32.mrf.mxu0
  %v3765 = vpop.f32.mrf.mxu0
  %v3766 = vadd.f32 %v3477, %v3765
  %v3767 = vpop.f32.mrf.mxu0
  %3768 = vmatprep.mubr.bf16.mxu0 0
  %3769 = vmatmul.mubr.bf16.gmra.mxu0 %v1603
  %v3770 = vpop.f32.mrf.mxu0
  %v3771 = vadd.f32 %v3482, %v3770
  %v3772 = vpop.f32.mrf.mxu0
  %v3773 = vpop.f32.mrf.mxu0
  %v3774 = vadd.f32 %v3485, %v3773
  %v3775 = vpop.f32.mrf.mxu0
  %3776 = vmatprep.mubr.bf16.mxu0 0
  %3777 = vmatmul.mubr.bf16.gmra.mxu0 %v1612
  %v3778 = vpop.f32.mrf.mxu0
  %v3779 = vadd.f32 %v3490, %v3778
  %v3780 = vpop.f32.mrf.mxu0
  %v3781 = vpop.f32.mrf.mxu0
  %v3782 = vadd.f32 %v3493, %v3781
  %v3783 = vpop.f32.mrf.mxu0
  %3784 = vmatprep.mubr.bf16.mxu0 0
  %3785 = vmatmul.mubr.bf16.gmra.mxu0 %v1621
  %v3786 = vpop.f32.mrf.mxu0
  %v3787 = vadd.f32 %v3498, %v3786
  %v3788 = vpop.f32.mrf.mxu0
  %v3789 = vpop.f32.mrf.mxu0
  %v3790 = vadd.f32 %v3501, %v3789
  %v3791 = vpop.f32.mrf.mxu0
  %3792 = vmatprep.mubr.bf16.mxu0 0
  %3793 = vmatmul.mubr.bf16.gmra.mxu0 %v1630
  %v3794 = vpop.f32.mrf.mxu0
  %v3795 = vadd.f32 %v3506, %v3794
  %v3796 = vpop.f32.mrf.mxu0
  %v3797 = vpop.f32.mrf.mxu0
  %v3798 = vadd.f32 %v3509, %v3797
  %v3799 = vpop.f32.mrf.mxu0
  %3800 = vmatprep.mubr.bf16.mxu0 0
  %3801 = vmatmul.mubr.bf16.gmra.mxu0 %v1639
  %v3802 = vpop.f32.mrf.mxu0
  %v3803 = vadd.f32 %v3514, %v3802
  %v3804 = vpop.f32.mrf.mxu0
  %v3805 = vpop.f32.mrf.mxu0
  %v3806 = vadd.f32 %v3517, %v3805
  %v3807 = vpop.f32.mrf.mxu0
  %3808 = vmatprep.mubr.bf16.mxu0 0
  %3809 = vmatmul.mubr.bf16.gmra.mxu0 %v1648
  %v3810 = vpop.f32.mrf.mxu0
  %v3811 = vadd.f32 %v3522, %v3810
  %v3812 = vpop.f32.mrf.mxu0
  %v3813 = vpop.f32.mrf.mxu0
  %v3814 = vadd.f32 %v3525, %v3813
  %v3815 = vpop.f32.mrf.mxu0
  %3816 = vmatprep.mubr.bf16.mxu0 0
  %3817 = vmatmul.mubr.bf16.gmra.mxu0 %v1657
  %v3818 = vpop.f32.mrf.mxu0
  %v3819 = vadd.f32 %v3530, %v3818
  %v3820 = vpop.f32.mrf.mxu0
  %v3821 = vpop.f32.mrf.mxu0
  %v3822 = vadd.f32 %v3533, %v3821
  %v3823 = vpop.f32.mrf.mxu0
  %3824 = vmatprep.mubr.bf16.mxu0 0
  %3825 = vmatmul.mubr.bf16.gmra.mxu0 %v1666
  %v3826 = vpop.f32.mrf.mxu0
  %v3827 = vadd.f32 %v3538, %v3826
  %v3828 = vpop.f32.mrf.mxu0
  %v3829 = vpop.f32.mrf.mxu0
  %v3830 = vadd.f32 %v3541, %v3829
  %v3831 = vpop.f32.mrf.mxu0
  %3832 = vmatprep.mubr.bf16.mxu0 0
  %3833 = vmatmul.mubr.bf16.gmra.mxu0 %v1675
  %v3834 = vpop.f32.mrf.mxu0
  %v3835 = vadd.f32 %v3546, %v3834
  %v3836 = vpop.f32.mrf.mxu0
  %v3837 = vpop.f32.mrf.mxu0
  %v3838 = vadd.f32 %v3549, %v3837
  %v3839 = vpop.f32.mrf.mxu0
  %3840 = vdwg.mxu0
  %v3841 = vadd.f32 %v3587, %v3590
  %v3842 = vadd.f32 %v3841, %v3595
  %v3843 = vadd.f32 %v3842, %v3598
  %v3844 = vadd.f32 %v3843, %v3603
  %v3845 = vadd.f32 %v3844, %v3606
  %v3846 = vadd.f32 %v3845, %v3611
  %v3847 = vadd.f32 %v3846, %v3614
  %v3848 = vadd.f32 %v3847, %v3619
  %v3849 = vadd.f32 %v3848, %v3622
  %v3850 = vadd.f32 %v3849, %v3627
  %v3851 = vadd.f32 %v3850, %v3630
  %v3852 = vadd.f32 %v3851, %v3635
  %v3853 = vadd.f32 %v3852, %v3638
  %v3854 = vadd.f32 %v3853, %v3643
  %v3855 = vadd.f32 %v3854, %v3646
  %v3856 = vadd.f32 %v3855, %v3651
  %v3857 = vadd.f32 %v3856, %v3654
  %v3858 = vadd.f32 %v3857, %v3659
  %v3859 = vadd.f32 %v3858, %v3662
  %v3860 = vadd.f32 %v3859, %v3667
  %v3861 = vadd.f32 %v3860, %v3670
  %v3862 = vadd.f32 %v3861, %v3675
  %v3863 = vadd.f32 %v3862, %v3678
  %v3864 = vadd.f32 %v3863, %v3683
  %v3865 = vadd.f32 %v3864, %v3686
  %v3866 = vadd.f32 %v3865, %v3691
  %v3867 = vadd.f32 %v3866, %v3694
  %v3868 = vadd.f32 %v3867, %v3699
  %v3869 = vadd.f32 %v3868, %v3702
  %v3870 = vadd.f32 %v3869, %v3707
  %v3871 = vadd.f32 %v3870, %v3710
  %v3872 = vadd.f32 %v3871, %v3715
  %v3873 = vadd.f32 %v3872, %v3718
  %v3874 = vadd.f32 %v3873, %v3723
  %v3875 = vadd.f32 %v3874, %v3726
  %v3876 = vadd.f32 %v3875, %v3731
  %v3877 = vadd.f32 %v3876, %v3734
  %v3878 = vadd.f32 %v3877, %v3739
  %v3879 = vadd.f32 %v3878, %v3742
  %v3880 = vadd.f32 %v3879, %v3747
  %v3881 = vadd.f32 %v3880, %v3750
  %v3882 = vadd.f32 %v3881, %v3755
  %v3883 = vadd.f32 %v3882, %v3758
  %v3884 = vadd.f32 %v3883, %v3763
  %v3885 = vadd.f32 %v3884, %v3766
  %v3886 = vadd.f32 %v3885, %v3771
  %v3887 = vadd.f32 %v3886, %v3774
  %v3888 = vadd.f32 %v3887, %v3779
  %v3889 = vadd.f32 %v3888, %v3782
  %v3890 = vadd.f32 %v3889, %v3787
  %v3891 = vadd.f32 %v3890, %v3790
  %v3892 = vadd.f32 %v3891, %v3795
  %v3893 = vadd.f32 %v3892, %v3798
  %v3894 = vadd.f32 %v3893, %v3803
  %v3895 = vadd.f32 %v3894, %v3806
  %v3896 = vadd.f32 %v3895, %v3811
  %v3897 = vadd.f32 %v3896, %v3814
  %v3898 = vadd.f32 %v3897, %v3819
  %v3899 = vadd.f32 %v3898, %v3822
  %v3900 = vadd.f32 %v3899, %v3827
  %v3901 = vadd.f32 %v3900, %v3830
  %v3902 = vadd.f32 %v3901, %v3835
  %v3903 = vadd.f32 %v3902, %v3838
  %v3904 = vrot.slane %v3903, 4
  %v3905 = vadd.f32 %v3903, %v3904
  %v3906 = vrot.slane %v3905, 2
  %v3907 = vadd.f32 %v3905, %v3906
  %v3908 = vrot.slane %v3907, 1
  %v3909 = vadd.f32 %v3907, %v3908
  %v3910 = vrcp.pop 512.0
  %v3911 = vmul.f32 %v3909, %v3910
  %v3912 = vsub.f32 %v3587, %v3911
  %v3913 = vsub.f32 %v3590, %v3911
  %v3914 = vsub.f32 %v3595, %v3911
  %v3915 = vsub.f32 %v3598, %v3911
  %v3916 = vsub.f32 %v3603, %v3911
  %v3917 = vsub.f32 %v3606, %v3911
  %v3918 = vsub.f32 %v3611, %v3911
  %v3919 = vsub.f32 %v3614, %v3911
  %v3920 = vsub.f32 %v3619, %v3911
  %v3921 = vsub.f32 %v3622, %v3911
  %v3922 = vsub.f32 %v3627, %v3911
  %v3923 = vsub.f32 %v3630, %v3911
  %v3924 = vsub.f32 %v3635, %v3911
  %v3925 = vsub.f32 %v3638, %v3911
  %v3926 = vsub.f32 %v3643, %v3911
  %v3927 = vsub.f32 %v3646, %v3911
  %v3928 = vsub.f32 %v3651, %v3911
  %v3929 = vsub.f32 %v3654, %v3911
  %v3930 = vsub.f32 %v3659, %v3911
  %v3931 = vsub.f32 %v3662, %v3911
  %v3932 = vsub.f32 %v3667, %v3911
  %v3933 = vsub.f32 %v3670, %v3911
  %v3934 = vsub.f32 %v3675, %v3911
  %v3935 = vsub.f32 %v3678, %v3911
  %v3936 = vsub.f32 %v3683, %v3911
  %v3937 = vsub.f32 %v3686, %v3911
  %v3938 = vsub.f32 %v3691, %v3911
  %v3939 = vsub.f32 %v3694, %v3911
  %v3940 = vsub.f32 %v3699, %v3911
  %v3941 = vsub.f32 %v3702, %v3911
  %v3942 = vsub.f32 %v3707, %v3911
  %v3943 = vsub.f32 %v3710, %v3911
  %v3944 = vsub.f32 %v3715, %v3911
  %v3945 = vsub.f32 %v3718, %v3911
  %v3946 = vsub.f32 %v3723, %v3911
  %v3947 = vsub.f32 %v3726, %v3911
  %v3948 = vsub.f32 %v3731, %v3911
  %v3949 = vsub.f32 %v3734, %v3911
  %v3950 = vsub.f32 %v3739, %v3911
  %v3951 = vsub.f32 %v3742, %v3911
  %v3952 = vsub.f32 %v3747, %v3911
  %v3953 = vsub.f32 %v3750, %v3911
  %v3954 = vsub.f32 %v3755, %v3911
  %v3955 = vsub.f32 %v3758, %v3911
  %v3956 = vsub.f32 %v3763, %v3911
  %v3957 = vsub.f32 %v3766, %v3911
  %v3958 = vsub.f32 %v3771, %v3911
  %v3959 = vsub.f32 %v3774, %v3911
  %v3960 = vsub.f32 %v3779, %v3911
  %v3961 = vsub.f32 %v3782, %v3911
  %v3962 = vsub.f32 %v3787, %v3911
  %v3963 = vsub.f32 %v3790, %v3911
  %v3964 = vsub.f32 %v3795, %v3911
  %v3965 = vsub.f32 %v3798, %v3911
  %v3966 = vsub.f32 %v3803, %v3911
  %v3967 = vsub.f32 %v3806, %v3911
  %v3968 = vsub.f32 %v3811, %v3911
  %v3969 = vsub.f32 %v3814, %v3911
  %v3970 = vsub.f32 %v3819, %v3911
  %v3971 = vsub.f32 %v3822, %v3911
  %v3972 = vsub.f32 %v3827, %v3911
  %v3973 = vsub.f32 %v3830, %v3911
  %v3974 = vsub.f32 %v3835, %v3911
  %v3975 = vsub.f32 %v3838, %v3911
  %v3976 = vmul.f32 %v3912, %v3912
  %v3977 = vmul.f32 %v3913, %v3913
  %v3978 = vmul.f32 %v3914, %v3914
  %v3979 = vmul.f32 %v3915, %v3915
  %v3980 = vmul.f32 %v3916, %v3916
  %v3981 = vmul.f32 %v3917, %v3917
  %v3982 = vmul.f32 %v3918, %v3918
  %v3983 = vmul.f32 %v3919, %v3919
  %v3984 = vmul.f32 %v3920, %v3920
  %v3985 = vmul.f32 %v3921, %v3921
  %v3986 = vmul.f32 %v3922, %v3922
  %v3987 = vmul.f32 %v3923, %v3923
  %v3988 = vmul.f32 %v3924, %v3924
  %v3989 = vmul.f32 %v3925, %v3925
  %v3990 = vmul.f32 %v3926, %v3926
  %v3991 = vmul.f32 %v3927, %v3927
  %v3992 = vmul.f32 %v3928, %v3928
  %v3993 = vmul.f32 %v3929, %v3929
  %v3994 = vmul.f32 %v3930, %v3930
  %v3995 = vmul.f32 %v3931, %v3931
  %v3996 = vmul.f32 %v3932, %v3932
  %v3997 = vmul.f32 %v3933, %v3933
  %v3998 = vmul.f32 %v3934, %v3934
  %v3999 = vmul.f32 %v3935, %v3935
  %v4000 = vmul.f32 %v3936, %v3936
  %v4001 = vmul.f32 %v3937, %v3937
  %v4002 = vmul.f32 %v3938, %v3938
  %v4003 = vmul.f32 %v3939, %v3939
  %v4004 = vmul.f32 %v3940, %v3940
  %v4005 = vmul.f32 %v3941, %v3941
  %v4006 = vmul.f32 %v3942, %v3942
  %v4007 = vmul.f32 %v3943, %v3943
  %v4008 = vmul.f32 %v3944, %v3944
  %v4009 = vmul.f32 %v3945, %v3945
  %v4010 = vmul.f32 %v3946, %v3946
  %v4011 = vmul.f32 %v3947, %v3947
  %v4012 = vmul.f32 %v3948, %v3948
  %v4013 = vmul.f32 %v3949, %v3949
  %v4014 = vmul.f32 %v3950, %v3950
  %v4015 = vmul.f32 %v3951, %v3951
  %v4016 = vmul.f32 %v3952, %v3952
  %v4017 = vmul.f32 %v3953, %v3953
  %v4018 = vmul.f32 %v3954, %v3954
  %v4019 = vmul.f32 %v3955, %v3955
  %v4020 = vmul.f32 %v3956, %v3956
  %v4021 = vmul.f32 %v3957, %v3957
  %v4022 = vmul.f32 %v3958, %v3958
  %v4023 = vmul.f32 %v3959, %v3959
  %v4024 = vmul.f32 %v3960, %v3960
  %v4025 = vmul.f32 %v3961, %v3961
  %v4026 = vmul.f32 %v3962, %v3962
  %v4027 = vmul.f32 %v3963, %v3963
  %v4028 = vmul.f32 %v3964, %v3964
  %v4029 = vmul.f32 %v3965, %v3965
  %v4030 = vmul.f32 %v3966, %v3966
  %v4031 = vmul.f32 %v3967, %v3967
  %v4032 = vmul.f32 %v3968, %v3968
  %v4033 = vmul.f32 %v3969, %v3969
  %v4034 = vmul.f32 %v3970, %v3970
  %v4035 = vmul.f32 %v3971, %v3971
  %v4036 = vmul.f32 %v3972, %v3972
  %v4037 = vmul.f32 %v3973, %v3973
  %v4038 = vmul.f32 %v3974, %v3974
  %v4039 = vmul.f32 %v3975, %v3975
  %v4040 = vadd.f32 %v3976, %v3977
  %v4041 = vadd.f32 %v4040, %v3978
  %v4042 = vadd.f32 %v4041, %v3979
  %v4043 = vadd.f32 %v4042, %v3980
  %v4044 = vadd.f32 %v4043, %v3981
  %v4045 = vadd.f32 %v4044, %v3982
  %v4046 = vadd.f32 %v4045, %v3983
  %v4047 = vadd.f32 %v4046, %v3984
  %v4048 = vadd.f32 %v4047, %v3985
  %v4049 = vadd.f32 %v4048, %v3986
  %v4050 = vadd.f32 %v4049, %v3987
  %v4051 = vadd.f32 %v4050, %v3988
  %v4052 = vadd.f32 %v4051, %v3989
  %v4053 = vadd.f32 %v4052, %v3990
  %v4054 = vadd.f32 %v4053, %v3991
  %v4055 = vadd.f32 %v4054, %v3992
  %v4056 = vadd.f32 %v4055, %v3993
  %v4057 = vadd.f32 %v4056, %v3994
  %v4058 = vadd.f32 %v4057, %v3995
  %v4059 = vadd.f32 %v4058, %v3996
  %v4060 = vadd.f32 %v4059, %v3997
  %v4061 = vadd.f32 %v4060, %v3998
  %v4062 = vadd.f32 %v4061, %v3999
  %v4063 = vadd.f32 %v4062, %v4000
  %v4064 = vadd.f32 %v4063, %v4001
  %v4065 = vadd.f32 %v4064, %v4002
  %v4066 = vadd.f32 %v4065, %v4003
  %v4067 = vadd.f32 %v4066, %v4004
  %v4068 = vadd.f32 %v4067, %v4005
  %v4069 = vadd.f32 %v4068, %v4006
  %v4070 = vadd.f32 %v4069, %v4007
  %v4071 = vadd.f32 %v4070, %v4008
  %v4072 = vadd.f32 %v4071, %v4009
  %v4073 = vadd.f32 %v4072, %v4010
  %v4074 = vadd.f32 %v4073, %v4011
  %v4075 = vadd.f32 %v4074, %v4012
  %v4076 = vadd.f32 %v4075, %v4013
  %v4077 = vadd.f32 %v4076, %v4014
  %v4078 = vadd.f32 %v4077, %v4015
  %v4079 = vadd.f32 %v4078, %v4016
  %v4080 = vadd.f32 %v4079, %v4017
  %v4081 = vadd.f32 %v4080, %v4018
  %v4082 = vadd.f32 %v4081, %v4019
  %v4083 = vadd.f32 %v4082, %v4020
  %v4084 = vadd.f32 %v4083, %v4021
  %v4085 = vadd.f32 %v4084, %v4022
  %v4086 = vadd.f32 %v4085, %v4023
  %v4087 = vadd.f32 %v4086, %v4024
  %v4088 = vadd.f32 %v4087, %v4025
  %v4089 = vadd.f32 %v4088, %v4026
  %v4090 = vadd.f32 %v4089, %v4027
  %v4091 = vadd.f32 %v4090, %v4028
  %v4092 = vadd.f32 %v4091, %v4029
  %v4093 = vadd.f32 %v4092, %v4030
  %v4094 = vadd.f32 %v4093, %v4031
  %v4095 = vadd.f32 %v4094, %v4032
  %v4096 = vadd.f32 %v4095, %v4033
  %v4097 = vadd.f32 %v4096, %v4034
  %v4098 = vadd.f32 %v4097, %v4035
  %v4099 = vadd.f32 %v4098, %v4036
  %v4100 = vadd.f32 %v4099, %v4037
  %v4101 = vadd.f32 %v4100, %v4038
  %v4102 = vadd.f32 %v4101, %v4039
  %v4103 = vrot.slane %v4102, 4
  %v4104 = vadd.f32 %v4102, %v4103
  %v4105 = vrot.slane %v4104, 2
  %v4106 = vadd.f32 %v4104, %v4105
  %v4107 = vrot.slane %v4106, 1
  %v4108 = vadd.f32 %v4106, %v4107
  %v4109 = vmul.f32 %v4108, %v3910
  %v4110 = vadd.f32 %v4109, 1e-05
  %v4111 = vrsqrt.pop %v4110
  %v4112 = vmul.f32 %v3912, %v4111
  %v4113 = vmul.f32 %v3913, %v4111
  %v4114 = vmul.f32 %v3914, %v4111
  %v4115 = vmul.f32 %v3915, %v4111
  %v4116 = vmul.f32 %v3916, %v4111
  %v4117 = vmul.f32 %v3917, %v4111
  %v4118 = vmul.f32 %v3918, %v4111
  %v4119 = vmul.f32 %v3919, %v4111
  %v4120 = vmul.f32 %v3920, %v4111
  %v4121 = vmul.f32 %v3921, %v4111
  %v4122 = vmul.f32 %v3922, %v4111
  %v4123 = vmul.f32 %v3923, %v4111
  %v4124 = vmul.f32 %v3924, %v4111
  %v4125 = vmul.f32 %v3925, %v4111
  %v4126 = vmul.f32 %v3926, %v4111
  %v4127 = vmul.f32 %v3927, %v4111
  %v4128 = vmul.f32 %v3928, %v4111
  %v4129 = vmul.f32 %v3929, %v4111
  %v4130 = vmul.f32 %v3930, %v4111
  %v4131 = vmul.f32 %v3931, %v4111
  %v4132 = vmul.f32 %v3932, %v4111
  %v4133 = vmul.f32 %v3933, %v4111
  %v4134 = vmul.f32 %v3934, %v4111
  %v4135 = vmul.f32 %v3935, %v4111
  %v4136 = vmul.f32 %v3936, %v4111
  %v4137 = vmul.f32 %v3937, %v4111
  %v4138 = vmul.f32 %v3938, %v4111
  %v4139 = vmul.f32 %v3939, %v4111
  %v4140 = vmul.f32 %v3940, %v4111
  %v4141 = vmul.f32 %v3941, %v4111
  %v4142 = vmul.f32 %v3942, %v4111
  %v4143 = vmul.f32 %v3943, %v4111
  %v4144 = vmul.f32 %v3944, %v4111
  %v4145 = vmul.f32 %v3945, %v4111
  %v4146 = vmul.f32 %v3946, %v4111
  %v4147 = vmul.f32 %v3947, %v4111
  %v4148 = vmul.f32 %v3948, %v4111
  %v4149 = vmul.f32 %v3949, %v4111
  %v4150 = vmul.f32 %v3950, %v4111
  %v4151 = vmul.f32 %v3951, %v4111
  %v4152 = vmul.f32 %v3952, %v4111
  %v4153 = vmul.f32 %v3953, %v4111
  %v4154 = vmul.f32 %v3954, %v4111
  %v4155 = vmul.f32 %v3955, %v4111
  %v4156 = vmul.f32 %v3956, %v4111
  %v4157 = vmul.f32 %v3957, %v4111
  %v4158 = vmul.f32 %v3958, %v4111
  %v4159 = vmul.f32 %v3959, %v4111
  %v4160 = vmul.f32 %v3960, %v4111
  %v4161 = vmul.f32 %v3961, %v4111
  %v4162 = vmul.f32 %v3962, %v4111
  %v4163 = vmul.f32 %v3963, %v4111
  %v4164 = vmul.f32 %v3964, %v4111
  %v4165 = vmul.f32 %v3965, %v4111
  %v4166 = vmul.f32 %v3966, %v4111
  %v4167 = vmul.f32 %v3967, %v4111
  %v4168 = vmul.f32 %v3968, %v4111
  %v4169 = vmul.f32 %v3969, %v4111
  %v4170 = vmul.f32 %v3970, %v4111
  %v4171 = vmul.f32 %v3971, %v4111
  %v4172 = vmul.f32 %v3972, %v4111
  %v4173 = vmul.f32 %v3973, %v4111
  %v4174 = vmul.f32 %v3974, %v4111
  %v4175 = vmul.f32 %v3975, %v4111
  %v4176 = vld [vmem:[%s3] sm:$0x1]
  %v4178 = vlaneseq
  %v4179 = vshrl.u32 %v4178, 7
  %v4180 = vsub.s32 0, %v4179
  %v4181 = vrot.slane %v4176, %v4180
  %v4183 = vmul.f32 %v4112, %v4181
  %v4184 = vmul.f32 %v4113, %v4181
  %v4185 = vmul.f32 %v4114, %v4181
  %v4186 = vmul.f32 %v4115, %v4181
  %v4187 = vmul.f32 %v4116, %v4181
  %v4188 = vmul.f32 %v4117, %v4181
  %v4189 = vmul.f32 %v4118, %v4181
  %v4190 = vmul.f32 %v4119, %v4181
  %v4191 = vmul.f32 %v4120, %v4181
  %v4192 = vmul.f32 %v4121, %v4181
  %v4193 = vmul.f32 %v4122, %v4181
  %v4194 = vmul.f32 %v4123, %v4181
  %v4195 = vmul.f32 %v4124, %v4181
  %v4196 = vmul.f32 %v4125, %v4181
  %v4197 = vmul.f32 %v4126, %v4181
  %v4198 = vmul.f32 %v4127, %v4181
  %v4199 = vmul.f32 %v4128, %v4181
  %v4200 = vmul.f32 %v4129, %v4181
  %v4201 = vmul.f32 %v4130, %v4181
  %v4202 = vmul.f32 %v4131, %v4181
  %v4203 = vmul.f32 %v4132, %v4181
  %v4204 = vmul.f32 %v4133, %v4181
  %v4205 = vmul.f32 %v4134, %v4181
  %v4206 = vmul.f32 %v4135, %v4181
  %v4207 = vmul.f32 %v4136, %v4181
  %v4208 = vmul.f32 %v4137, %v4181
  %v4209 = vmul.f32 %v4138, %v4181
  %v4210 = vmul.f32 %v4139, %v4181
  %v4211 = vmul.f32 %v4140, %v4181
  %v4212 = vmul.f32 %v4141, %v4181
  %v4213 = vmul.f32 %v4142, %v4181
  %v4214 = vmul.f32 %v4143, %v4181
  %v4215 = vmul.f32 %v4144, %v4181
  %v4216 = vmul.f32 %v4145, %v4181
  %v4217 = vmul.f32 %v4146, %v4181
  %v4218 = vmul.f32 %v4147, %v4181
  %v4219 = vmul.f32 %v4148, %v4181
  %v4220 = vmul.f32 %v4149, %v4181
  %v4221 = vmul.f32 %v4150, %v4181
  %v4222 = vmul.f32 %v4151, %v4181
  %v4223 = vmul.f32 %v4152, %v4181
  %v4224 = vmul.f32 %v4153, %v4181
  %v4225 = vmul.f32 %v4154, %v4181
  %v4226 = vmul.f32 %v4155, %v4181
  %v4227 = vmul.f32 %v4156, %v4181
  %v4228 = vmul.f32 %v4157, %v4181
  %v4229 = vmul.f32 %v4158, %v4181
  %v4230 = vmul.f32 %v4159, %v4181
  %v4231 = vmul.f32 %v4160, %v4181
  %v4232 = vmul.f32 %v4161, %v4181
  %v4233 = vmul.f32 %v4162, %v4181
  %v4234 = vmul.f32 %v4163, %v4181
  %v4235 = vmul.f32 %v4164, %v4181
  %v4236 = vmul.f32 %v4165, %v4181
  %v4237 = vmul.f32 %v4166, %v4181
  %v4238 = vmul.f32 %v4167, %v4181
  %v4239 = vmul.f32 %v4168, %v4181
  %v4240 = vmul.f32 %v4169, %v4181
  %v4241 = vmul.f32 %v4170, %v4181
  %v4242 = vmul.f32 %v4171, %v4181
  %v4243 = vmul.f32 %v4172, %v4181
  %v4244 = vmul.f32 %v4173, %v4181
  %v4245 = vmul.f32 %v4174, %v4181
  %v4246 = vmul.f32 %v4175, %v4181
  %v4247 = vld [vmem:[%s4] sm:$0x1]
  %v4249 = vlaneseq
  %v4250 = vshrl.u32 %v4249, 7
  %v4251 = vsub.s32 0, %v4250
  %v4252 = vrot.slane %v4247, %v4251
  %v4254 = vadd.f32 %v4183, %v4252
  %v4255 = vadd.f32 %v4184, %v4252
  %v4256 = vadd.f32 %v4185, %v4252
  %v4257 = vadd.f32 %v4186, %v4252
  %v4258 = vadd.f32 %v4187, %v4252
  %v4259 = vadd.f32 %v4188, %v4252
  %v4260 = vadd.f32 %v4189, %v4252
  %v4261 = vadd.f32 %v4190, %v4252
  %v4262 = vadd.f32 %v4191, %v4252
  %v4263 = vadd.f32 %v4192, %v4252
  %v4264 = vadd.f32 %v4193, %v4252
  %v4265 = vadd.f32 %v4194, %v4252
  %v4266 = vadd.f32 %v4195, %v4252
  %v4267 = vadd.f32 %v4196, %v4252
  %v4268 = vadd.f32 %v4197, %v4252
  %v4269 = vadd.f32 %v4198, %v4252
  %v4270 = vadd.f32 %v4199, %v4252
  %v4271 = vadd.f32 %v4200, %v4252
  %v4272 = vadd.f32 %v4201, %v4252
  %v4273 = vadd.f32 %v4202, %v4252
  %v4274 = vadd.f32 %v4203, %v4252
  %v4275 = vadd.f32 %v4204, %v4252
  %v4276 = vadd.f32 %v4205, %v4252
  %v4277 = vadd.f32 %v4206, %v4252
  %v4278 = vadd.f32 %v4207, %v4252
  %v4279 = vadd.f32 %v4208, %v4252
  %v4280 = vadd.f32 %v4209, %v4252
  %v4281 = vadd.f32 %v4210, %v4252
  %v4282 = vadd.f32 %v4211, %v4252
  %v4283 = vadd.f32 %v4212, %v4252
  %v4284 = vadd.f32 %v4213, %v4252
  %v4285 = vadd.f32 %v4214, %v4252
  %v4286 = vadd.f32 %v4215, %v4252
  %v4287 = vadd.f32 %v4216, %v4252
  %v4288 = vadd.f32 %v4217, %v4252
  %v4289 = vadd.f32 %v4218, %v4252
  %v4290 = vadd.f32 %v4219, %v4252
  %v4291 = vadd.f32 %v4220, %v4252
  %v4292 = vadd.f32 %v4221, %v4252
  %v4293 = vadd.f32 %v4222, %v4252
  %v4294 = vadd.f32 %v4223, %v4252
  %v4295 = vadd.f32 %v4224, %v4252
  %v4296 = vadd.f32 %v4225, %v4252
  %v4297 = vadd.f32 %v4226, %v4252
  %v4298 = vadd.f32 %v4227, %v4252
  %v4299 = vadd.f32 %v4228, %v4252
  %v4300 = vadd.f32 %v4229, %v4252
  %v4301 = vadd.f32 %v4230, %v4252
  %v4302 = vadd.f32 %v4231, %v4252
  %v4303 = vadd.f32 %v4232, %v4252
  %v4304 = vadd.f32 %v4233, %v4252
  %v4305 = vadd.f32 %v4234, %v4252
  %v4306 = vadd.f32 %v4235, %v4252
  %v4307 = vadd.f32 %v4236, %v4252
  %v4308 = vadd.f32 %v4237, %v4252
  %v4309 = vadd.f32 %v4238, %v4252
  %v4310 = vadd.f32 %v4239, %v4252
  %v4311 = vadd.f32 %v4240, %v4252
  %v4312 = vadd.f32 %v4241, %v4252
  %v4313 = vadd.f32 %v4242, %v4252
  %v4314 = vadd.f32 %v4243, %v4252
  %v4315 = vadd.f32 %v4244, %v4252
  %v4316 = vadd.f32 %v4245, %v4252
  %v4317 = vadd.f32 %v4246, %v4252
  %v4318 = vmax.f32 %v4254, 0.0
  %v4319 = vmax.f32 %v4255, 0.0
  %v4320 = vmax.f32 %v4256, 0.0
  %v4321 = vmax.f32 %v4257, 0.0
  %v4322 = vmax.f32 %v4258, 0.0
  %v4323 = vmax.f32 %v4259, 0.0
  %v4324 = vmax.f32 %v4260, 0.0
  %v4325 = vmax.f32 %v4261, 0.0
  %v4326 = vmax.f32 %v4262, 0.0
  %v4327 = vmax.f32 %v4263, 0.0
  %v4328 = vmax.f32 %v4264, 0.0
  %v4329 = vmax.f32 %v4265, 0.0
  %v4330 = vmax.f32 %v4266, 0.0
  %v4331 = vmax.f32 %v4267, 0.0
  %v4332 = vmax.f32 %v4268, 0.0
  %v4333 = vmax.f32 %v4269, 0.0
  %v4334 = vmax.f32 %v4270, 0.0
  %v4335 = vmax.f32 %v4271, 0.0
  %v4336 = vmax.f32 %v4272, 0.0
  %v4337 = vmax.f32 %v4273, 0.0
  %v4338 = vmax.f32 %v4274, 0.0
  %v4339 = vmax.f32 %v4275, 0.0
  %v4340 = vmax.f32 %v4276, 0.0
  %v4341 = vmax.f32 %v4277, 0.0
  %v4342 = vmax.f32 %v4278, 0.0
  %v4343 = vmax.f32 %v4279, 0.0
  %v4344 = vmax.f32 %v4280, 0.0
  %v4345 = vmax.f32 %v4281, 0.0
  %v4346 = vmax.f32 %v4282, 0.0
  %v4347 = vmax.f32 %v4283, 0.0
  %v4348 = vmax.f32 %v4284, 0.0
  %v4349 = vmax.f32 %v4285, 0.0
  %v4350 = vmax.f32 %v4286, 0.0
  %v4351 = vmax.f32 %v4287, 0.0
  %v4352 = vmax.f32 %v4288, 0.0
  %v4353 = vmax.f32 %v4289, 0.0
  %v4354 = vmax.f32 %v4290, 0.0
  %v4355 = vmax.f32 %v4291, 0.0
  %v4356 = vmax.f32 %v4292, 0.0
  %v4357 = vmax.f32 %v4293, 0.0
  %v4358 = vmax.f32 %v4294, 0.0
  %v4359 = vmax.f32 %v4295, 0.0
  %v4360 = vmax.f32 %v4296, 0.0
  %v4361 = vmax.f32 %v4297, 0.0
  %v4362 = vmax.f32 %v4298, 0.0
  %v4363 = vmax.f32 %v4299, 0.0
  %v4364 = vmax.f32 %v4300, 0.0
  %v4365 = vmax.f32 %v4301, 0.0
  %v4366 = vmax.f32 %v4302, 0.0
  %v4367 = vmax.f32 %v4303, 0.0
  %v4368 = vmax.f32 %v4304, 0.0
  %v4369 = vmax.f32 %v4305, 0.0
  %v4370 = vmax.f32 %v4306, 0.0
  %v4371 = vmax.f32 %v4307, 0.0
  %v4372 = vmax.f32 %v4308, 0.0
  %v4373 = vmax.f32 %v4309, 0.0
  %v4374 = vmax.f32 %v4310, 0.0
  %v4375 = vmax.f32 %v4311, 0.0
  %v4376 = vmax.f32 %v4312, 0.0
  %v4377 = vmax.f32 %v4313, 0.0
  %v4378 = vmax.f32 %v4314, 0.0
  %v4379 = vmax.f32 %v4315, 0.0
  %v4380 = vmax.f32 %v4316, 0.0
  %v4381 = vmax.f32 %v4317, 0.0
  %v4382 = vmax.f32 %v4318, %v4334
  %v4383 = vmax.f32 %v4319, %v4335
  %v4384 = vmax.f32 %v4320, %v4336
  %v4385 = vmax.f32 %v4321, %v4337
  %v4386 = vmax.f32 %v4322, %v4338
  %v4387 = vmax.f32 %v4323, %v4339
  %v4388 = vmax.f32 %v4324, %v4340
  %v4389 = vmax.f32 %v4325, %v4341
  %v4390 = vmax.f32 %v4326, %v4342
  %v4391 = vmax.f32 %v4327, %v4343
  %v4392 = vmax.f32 %v4328, %v4344
  %v4393 = vmax.f32 %v4329, %v4345
  %v4394 = vmax.f32 %v4330, %v4346
  %v4395 = vmax.f32 %v4331, %v4347
  %v4396 = vmax.f32 %v4332, %v4348
  %v4397 = vmax.f32 %v4333, %v4349
  %v4398 = vmax.f32 %v4350, %v4366
  %v4399 = vmax.f32 %v4351, %v4367
  %v4400 = vmax.f32 %v4352, %v4368
  %v4401 = vmax.f32 %v4353, %v4369
  %v4402 = vmax.f32 %v4354, %v4370
  %v4403 = vmax.f32 %v4355, %v4371
  %v4404 = vmax.f32 %v4356, %v4372
  %v4405 = vmax.f32 %v4357, %v4373
  %v4406 = vmax.f32 %v4358, %v4374
  %v4407 = vmax.f32 %v4359, %v4375
  %v4408 = vmax.f32 %v4360, %v4376
  %v4409 = vmax.f32 %v4361, %v4377
  %v4410 = vmax.f32 %v4362, %v4378
  %v4411 = vmax.f32 %v4363, %v4379
  %v4412 = vmax.f32 %v4364, %v4380
  %v4413 = vmax.f32 %v4365, %v4381
  %v4414 = vmax.f32 %v4382, %v4398
  %v4415 = vmax.f32 %v4383, %v4399
  %v4416 = vmax.f32 %v4384, %v4400
  %v4417 = vmax.f32 %v4385, %v4401
  %v4418 = vmax.f32 %v4386, %v4402
  %v4419 = vmax.f32 %v4387, %v4403
  %v4420 = vmax.f32 %v4388, %v4404
  %v4421 = vmax.f32 %v4389, %v4405
  %v4422 = vmax.f32 %v4390, %v4406
  %v4423 = vmax.f32 %v4391, %v4407
  %v4424 = vmax.f32 %v4392, %v4408
  %v4425 = vmax.f32 %v4393, %v4409
  %v4426 = vmax.f32 %v4394, %v4410
  %v4427 = vmax.f32 %v4395, %v4411
  %v4428 = vmax.f32 %v4396, %v4412
  %v4429 = vmax.f32 %v4397, %v4413
  %v4430 = vpack.c.bf16 %v4415, %v4414
  %v4431 = vpack.c.bf16 %v4417, %v4416
  %v4432 = vpack.c.bf16 %v4419, %v4418
  %v4433 = vpack.c.bf16 %v4421, %v4420
  %v4434 = vpack.c.bf16 %v4423, %v4422
  %v4435 = vpack.c.bf16 %v4425, %v4424
  %v4436 = vpack.c.bf16 %v4427, %v4426
  %v4437 = vpack.c.bf16 %v4429, %v4428
  %v4446 = vunpack.c.l.b16 %v4430
  %v4447 = vunpack.c.h.b16 %v4430
  %v4448 = vunpack.c.l.b16 %v4431
  %v4449 = vunpack.c.h.b16 %v4431
  %v4450 = vunpack.c.l.b16 %v4432
  %v4451 = vunpack.c.h.b16 %v4432
  %v4452 = vunpack.c.l.b16 %v4433
  %v4453 = vunpack.c.h.b16 %v4433
  %v4454 = vunpack.c.l.b16 %v4434
  %v4455 = vunpack.c.h.b16 %v4434
  %v4456 = vunpack.c.l.b16 %v4435
  %v4457 = vunpack.c.h.b16 %v4435
  %v4458 = vunpack.c.l.b16 %v4436
  %v4459 = vunpack.c.h.b16 %v4436
  %v4460 = vunpack.c.l.b16 %v4437
  %v4461 = vunpack.c.h.b16 %v4437
  %v4462 = vpack.c.b16 %v4446, %v4446
  %v4463 = vpack.c.b16 %v4447, %v4447
  %v4464 = vpack.c.b16 %v4448, %v4448
  %v4465 = vpack.c.b16 %v4449, %v4449
  %v4466 = vpack.c.b16 %v4450, %v4450
  %v4467 = vpack.c.b16 %v4451, %v4451
  %v4468 = vpack.c.b16 %v4452, %v4452
  %v4469 = vpack.c.b16 %v4453, %v4453
  %v4470 = vpack.c.b16 %v4454, %v4454
  %v4471 = vpack.c.b16 %v4455, %v4455
  %v4472 = vpack.c.b16 %v4456, %v4456
  %v4473 = vpack.c.b16 %v4457, %v4457
  %v4474 = vpack.c.b16 %v4458, %v4458
  %v4475 = vpack.c.b16 %v4459, %v4459
  %v4476 = vpack.c.b16 %v4460, %v4460
  %v4477 = vpack.c.b16 %v4461, %v4461
  %4494 = vst [vmem:[%s5] sm:$0xf] %v4462
  %4495 = vst [vmem:[%s5 + $0x4] sm:$0xf] %v4463
  %4496 = vst [vmem:[%s5 + $0x8] sm:$0xf] %v4464
  %4497 = vst [vmem:[%s5 + $0xc] sm:$0xf] %v4465
  %4498 = vst [vmem:[%s5 + $0x10] sm:$0xf] %v4466
  %4499 = vst [vmem:[%s5 + $0x14] sm:$0xf] %v4467
  %4500 = vst [vmem:[%s5 + $0x18] sm:$0xf] %v4468
  %4501 = vst [vmem:[%s5 + $0x1c] sm:$0xf] %v4469
  %4502 = vst [vmem:[%s5 + $0x20] sm:$0xf] %v4470
  %4503 = vst [vmem:[%s5 + $0x24] sm:$0xf] %v4471
  %4504 = vst [vmem:[%s5 + $0x28] sm:$0xf] %v4472
  %4505 = vst [vmem:[%s5 + $0x2c] sm:$0xf] %v4473
  %4506 = vst [vmem:[%s5 + $0x30] sm:$0xf] %v4474
  %4507 = vst [vmem:[%s5 + $0x34] sm:$0xf] %v4475
  %4508 = vst [vmem:[%s5 + $0x38] sm:$0xf] %v4476
  %4509 = vst [vmem:[%s5 + $0x3c] sm:$0xf] %v4477
  // Predicated region
  $region22: #{toy_conv_forward.3} parent=0 // pred_check
    _
  $region23: #{toy_conv_forward.3} parent=0 // pred_check_branch
    %4511 = sbr.rel (0) target = $region25
  $region24: #{toy_conv_forward.3} parent=0 // pred_region
    _
  $region25: #{toy_conv_forward.3} parent=0 // pred_fallthru
    _
  // Predicated region
  $region26: #{toy_conv_forward.3} parent=0 // pred_check
    _
  $region27: #{toy_conv_forward.3} parent=0 // pred_check_branch
    %4513 = sbr.rel (0) target = $region29
  $region28: #{toy_conv_forward.3} parent=0 // pred_region
    _
  $region29: #{toy_conv_forward.3} parent=0 // pred_fallthru
    _

// kernel: toy_conv_forward.4
$region0: #{toy_conv_forward.4}
  #allocation0 [shape = 'u32[]', space=smem, size = 0x4, offset = 0x4, fixed_abs, tag = 'smem constant byte address 0x4 - core index']
  #allocation1 [shape = 'u32[144,128]{1,0:T(1,128)}', space=vmem, size = 0x12000, scoped, tag = 'internal scratch']
  %s0 = inlined_call_operand.vmem [shape: bf16[128,1152], index: 0, kind: input, shape index: {}]
  %s1 = inlined_call_operand.vmem [shape: bf16[1152,128], index: 1, kind: input, shape index: {}]
  %s2 = inlined_call_operand.vmem [shape: f32[1,128], index: 2, kind: input, shape index: {}]
  %s3 = inlined_call_operand.vmem [shape: f32[1,128], index: 3, kind: input, shape index: {}]
  %s4 = inlined_call_operand.vmem [shape: f32[1,128], index: 4, kind: input, shape index: {}]
  %s5 = inlined_call_operand.vmem [shape: bf16[32,128], index: 5, kind: output, shape index: {}]
  %s6 = sld [smem:[#allocation0]]
  $region30: #{toy_conv_forward.4} parent=0
    _
  %s8 = ssub.s32 1, %s6
  %s9 = scalar_select 0, %s8, %s6
  // Predicated region
  $region2: #{toy_conv_forward.4} parent=0 // pred_check
    _
  $region3: #{toy_conv_forward.4} parent=0 // pred_check_branch
    %11 = sbr.rel (0) target = $region5
  $region4: #{toy_conv_forward.4} parent=0 // pred_region
    _
  $region5: #{toy_conv_forward.4} parent=0 // pred_fallthru
    _
  // Predicated region
  $region6: #{toy_conv_forward.4} parent=0 // pred_check
    _
  $region7: #{toy_conv_forward.4} parent=0 // pred_check_branch
    %13 = sbr.rel (0) target = $region9
  $region8: #{toy_conv_forward.4} parent=0 // pred_region
    _
  $region9: #{toy_conv_forward.4} parent=0 // pred_fallthru
    _
  // Predicated region
  $region10: #{toy_conv_forward.4} parent=0 // pred_check
    _
  $region11: #{toy_conv_forward.4} parent=0 // pred_check_branch
    %15 = sbr.rel (0) target = $region13
  $region12: #{toy_conv_forward.4} parent=0 // pred_region
    _
  $region13: #{toy_conv_forward.4} parent=0 // pred_fallthru
    _
  // Predicated region
  $region14: #{toy_conv_forward.4} parent=0 // pred_check
    _
  $region15: #{toy_conv_forward.4} parent=0 // pred_check_branch
    %17 = sbr.rel (0) target = $region17
  $region16: #{toy_conv_forward.4} parent=0 // pred_region
    _
  $region17: #{toy_conv_forward.4} parent=0 // pred_fallthru
    _
  // Predicated region
  $region18: #{toy_conv_forward.4} parent=0 // pred_check
    _
  $region19: #{toy_conv_forward.4} parent=0 // pred_check_branch
    %19 = sbr.rel (0) target = $region21
  $region20: #{toy_conv_forward.4} parent=0 // pred_region
    _
  $region21: #{toy_conv_forward.4} parent=0 // pred_fallthru
    _
  %v21 = vld [vmem:[%s0] sm:$0xff]
  %v22 = vld [vmem:[%s0 + $0x8] sm:$0xff]
  %v23 = vld [vmem:[%s0 + $0x10] sm:$0xff]
  %v24 = vld [vmem:[%s0 + $0x18] sm:$0xff]
  %v25 = vld [vmem:[%s0 + $0x20] sm:$0xf]
  %v26 = vld [vmem:[%s0 + $0x24] sm:$0xff]
  %v27 = vld [vmem:[%s0 + $0x2c] sm:$0xff]
  %v28 = vld [vmem:[%s0 + $0x34] sm:$0xff]
  %v29 = vld [vmem:[%s0 + $0x3c] sm:$0xff]
  %v30 = vld [vmem:[%s0 + $0x44] sm:$0xf]
  %v31 = vld [vmem:[%s0 + $0x48] sm:$0xff]
  %v32 = vld [vmem:[%s0 + $0x50] sm:$0xff]
  %v33 = vld [vmem:[%s0 + $0x58] sm:$0xff]
  %v34 = vld [vmem:[%s0 + $0x60] sm:$0xff]
  %v35 = vld [vmem:[%s0 + $0x68] sm:$0xf]
  %v36 = vld [vmem:[%s0 + $0x6c] sm:$0xff]
  %v37 = vld [vmem:[%s0 + $0x74] sm:$0xff]
  %v38 = vld [vmem:[%s0 + $0x7c] sm:$0xff]
  %v39 = vld [vmem:[%s0 + $0x84] sm:$0xff]
  %v40 = vld [vmem:[%s0 + $0x8c] sm:$0xf]
  %v41 = vld [vmem:[%s0 + $0x90] sm:$0xff]
  %v42 = vld [vmem:[%s0 + $0x98] sm:$0xff]
  %v43 = vld [vmem:[%s0 + $0xa0] sm:$0xff]
  %v44 = vld [vmem:[%s0 + $0xa8] sm:$0xff]
  %v45 = vld [vmem:[%s0 + $0xb0] sm:$0xf]
  %v46 = vld [vmem:[%s0 + $0xb4] sm:$0xff]
  %v47 = vld [vmem:[%s0 + $0xbc] sm:$0xff]
  %v48 = vld [vmem:[%s0 + $0xc4] sm:$0xff]
  %v49 = vld [vmem:[%s0 + $0xcc] sm:$0xff]
  %v50 = vld [vmem:[%s0 + $0xd4] sm:$0xf]
  %v51 = vld [vmem:[%s0 + $0xd8] sm:$0xff]
  %v52 = vld [vmem:[%s0 + $0xe0] sm:$0xff]
  %v53 = vld [vmem:[%s0 + $0xe8] sm:$0xff]
  %v54 = vld [vmem:[%s0 + $0xf0] sm:$0xff]
  %v55 = vld [vmem:[%s0 + $0xf8] sm:$0xf]
  %v56 = vld [vmem:[%s0 + $0xfc] sm:$0xff]
  %v57 = vld [vmem:[%s0 + $0x104] sm:$0xff]
  %v58 = vld [vmem:[%s0 + $0x10c] sm:$0xff]
  %v59 = vld [vmem:[%s0 + $0x114] sm:$0xff]
  %v60 = vld [vmem:[%s0 + $0x11c] sm:$0xf]
  %v61 = vld [vmem:[%s0 + $0x120] sm:$0xff]
  %v62 = vld [vmem:[%s0 + $0x128] sm:$0xff]
  %v63 = vld [vmem:[%s0 + $0x130] sm:$0xff]
  %v64 = vld [vmem:[%s0 + $0x138] sm:$0xff]
  %v65 = vld [vmem:[%s0 + $0x140] sm:$0xf]
  %v66 = vld [vmem:[%s0 + $0x144] sm:$0xff]
  %v67 = vld [vmem:[%s0 + $0x14c] sm:$0xff]
  %v68 = vld [vmem:[%s0 + $0x154] sm:$0xff]
  %v69 = vld [vmem:[%s0 + $0x15c] sm:$0xff]
  %v70 = vld [vmem:[%s0 + $0x164] sm:$0xf]
  %v71 = vld [vmem:[%s0 + $0x168] sm:$0xff]
  %v72 = vld [vmem:[%s0 + $0x170] sm:$0xff]
  %v73 = vld [vmem:[%s0 + $0x178] sm:$0xff]
  %v74 = vld [vmem:[%s0 + $0x180] sm:$0xff]
  %v75 = vld [vmem:[%s0 + $0x188] sm:$0xf]
  %v76 = vld [vmem:[%s0 + $0x18c] sm:$0xff]
  %v77 = vld [vmem:[%s0 + $0x194] sm:$0xff]
  %v78 = vld [vmem:[%s0 + $0x19c] sm:$0xff]
  %v79 = vld [vmem:[%s0 + $0x1a4] sm:$0xff]
  %v80 = vld [vmem:[%s0 + $0x1ac] sm:$0xf]
  %v81 = vld [vmem:[%s0 + $0x1b0] sm:$0xff]
  %v82 = vld [vmem:[%s0 + $0x1b8] sm:$0xff]
  %v83 = vld [vmem:[%s0 + $0x1c0] sm:$0xff]
  %v84 = vld [vmem:[%s0 + $0x1c8] sm:$0xff]
  %v85 = vld [vmem:[%s0 + $0x1d0] sm:$0xf]
  %v86 = vld [vmem:[%s0 + $0x1d4] sm:$0xff]
  %v87 = vld [vmem:[%s0 + $0x1dc] sm:$0xff]
  %v88 = vld [vmem:[%s0 + $0x1e4] sm:$0xff]
  %v89 = vld [vmem:[%s0 + $0x1ec] sm:$0xff]
  %v90 = vld [vmem:[%s0 + $0x1f4] sm:$0xf]
  %v91 = vld [vmem:[%s0 + $0x1f8] sm:$0xff]
  %v92 = vld [vmem:[%s0 + $0x200] sm:$0xff]
  %v93 = vld [vmem:[%s0 + $0x208] sm:$0xff]
  %v94 = vld [vmem:[%s0 + $0x210] sm:$0xff]
  %v95 = vld [vmem:[%s0 + $0x218] sm:$0xf]
  %v96 = vld [vmem:[%s0 + $0x21c] sm:$0xff]
  %v97 = vld [vmem:[%s0 + $0x224] sm:$0xff]
  %v98 = vld [vmem:[%s0 + $0x22c] sm:$0xff]
  %v99 = vld [vmem:[%s0 + $0x234] sm:$0xff]
  %v100 = vld [vmem:[%s0 + $0x23c] sm:$0xf]
  %v101 = vld [vmem:[%s1] sm:$0xf]
  %v102 = vld [vmem:[%s1 + $0x4] sm:$0xf]
  %v103 = vld [vmem:[%s1 + $0x8] sm:$0xf]
  %v104 = vld [vmem:[%s1 + $0xc] sm:$0xf]
  %v105 = vld [vmem:[%s1 + $0x10] sm:$0xf]
  %v106 = vld [vmem:[%s1 + $0x14] sm:$0xf]
  %v107 = vld [vmem:[%s1 + $0x18] sm:$0xf]
  %v108 = vld [vmem:[%s1 + $0x1c] sm:$0xf]
  %v109 = vld [vmem:[%s1 + $0x20] sm:$0xf]
  %v110 = vld [vmem:[%s1 + $0x24] sm:$0xf]
  %v111 = vld [vmem:[%s1 + $0x28] sm:$0xf]
  %v112 = vld [vmem:[%s1 + $0x2c] sm:$0xf]
  %v113 = vld [vmem:[%s1 + $0x30] sm:$0xf]
  %v114 = vld [vmem:[%s1 + $0x34] sm:$0xf]
  %v115 = vld [vmem:[%s1 + $0x38] sm:$0xf]
  %v116 = vld [vmem:[%s1 + $0x3c] sm:$0xf]
  %v117 = vld [vmem:[%s1 + $0x40] sm:$0xf]
  %v118 = vld [vmem:[%s1 + $0x44] sm:$0xf]
  %v119 = vld [vmem:[%s1 + $0x48] sm:$0xf]
  %v120 = vld [vmem:[%s1 + $0x4c] sm:$0xf]
  %v121 = vld [vmem:[%s1 + $0x50] sm:$0xf]
  %v122 = vld [vmem:[%s1 + $0x54] sm:$0xf]
  %v123 = vld [vmem:[%s1 + $0x58] sm:$0xf]
  %v124 = vld [vmem:[%s1 + $0x5c] sm:$0xf]
  %v125 = vld [vmem:[%s1 + $0x60] sm:$0xf]
  %v126 = vld [vmem:[%s1 + $0x64] sm:$0xf]
  %v127 = vld [vmem:[%s1 + $0x68] sm:$0xf]
  %v128 = vld [vmem:[%s1 + $0x6c] sm:$0xf]
  %v129 = vld [vmem:[%s1 + $0x70] sm:$0xf]
  %v130 = vld [vmem:[%s1 + $0x74] sm:$0xf]
  %v131 = vld [vmem:[%s1 + $0x78] sm:$0xf]
  %v132 = vld [vmem:[%s1 + $0x7c] sm:$0xf]
  %v133 = vld [vmem:[%s1 + $0x80] sm:$0xf]
  %v134 = vld [vmem:[%s1 + $0x84] sm:$0xf]
  %v135 = vld [vmem:[%s1 + $0x88] sm:$0xf]
  %v136 = vld [vmem:[%s1 + $0x8c] sm:$0xf]
  %v137 = vld [vmem:[%s1 + $0x90] sm:$0xf]
  %v138 = vld [vmem:[%s1 + $0x94] sm:$0xf]
  %v139 = vld [vmem:[%s1 + $0x98] sm:$0xf]
  %v140 = vld [vmem:[%s1 + $0x9c] sm:$0xf]
  %v141 = vld [vmem:[%s1 + $0xa0] sm:$0xf]
  %v142 = vld [vmem:[%s1 + $0xa4] sm:$0xf]
  %v143 = vld [vmem:[%s1 + $0xa8] sm:$0xf]
  %v144 = vld [vmem:[%s1 + $0xac] sm:$0xf]
  %v145 = vld [vmem:[%s1 + $0xb0] sm:$0xf]
  %v146 = vld [vmem:[%s1 + $0xb4] sm:$0xf]
  %v147 = vld [vmem:[%s1 + $0xb8] sm:$0xf]
  %v148 = vld [vmem:[%s1 + $0xbc] sm:$0xf]
  %v149 = vld [vmem:[%s1 + $0xc0] sm:$0xf]
  %v150 = vld [vmem:[%s1 + $0xc4] sm:$0xf]
  %v151 = vld [vmem:[%s1 + $0xc8] sm:$0xf]
  %v152 = vld [vmem:[%s1 + $0xcc] sm:$0xf]
  %v153 = vld [vmem:[%s1 + $0xd0] sm:$0xf]
  %v154 = vld [vmem:[%s1 + $0xd4] sm:$0xf]
  %v155 = vld [vmem:[%s1 + $0xd8] sm:$0xf]
  %v156 = vld [vmem:[%s1 + $0xdc] sm:$0xf]
  %v157 = vld [vmem:[%s1 + $0xe0] sm:$0xf]
  %v158 = vld [vmem:[%s1 + $0xe4] sm:$0xf]
  %v159 = vld [vmem:[%s1 + $0xe8] sm:$0xf]
  %v160 = vld [vmem:[%s1 + $0xec] sm:$0xf]
  %v161 = vld [vmem:[%s1 + $0xf0] sm:$0xf]
  %v162 = vld [vmem:[%s1 + $0xf4] sm:$0xf]
  %v163 = vld [vmem:[%s1 + $0xf8] sm:$0xf]
  %v164 = vld [vmem:[%s1 + $0xfc] sm:$0xf]
  %v165 = vld [vmem:[%s1 + $0x100] sm:$0xf]
  %v166 = vld [vmem:[%s1 + $0x104] sm:$0xf]
  %v167 = vld [vmem:[%s1 + $0x108] sm:$0xf]
  %v168 = vld [vmem:[%s1 + $0x10c] sm:$0xf]
  %v169 = vld [vmem:[%s1 + $0x110] sm:$0xf]
  %v170 = vld [vmem:[%s1 + $0x114] sm:$0xf]
  %v171 = vld [vmem:[%s1 + $0x118] sm:$0xf]
  %v172 = vld [vmem:[%s1 + $0x11c] sm:$0xf]
  %v173 = vld [vmem:[%s1 + $0x120] sm:$0xf]
  %v174 = vld [vmem:[%s1 + $0x124] sm:$0xf]
  %v175 = vld [vmem:[%s1 + $0x128] sm:$0xf]
  %v176 = vld [vmem:[%s1 + $0x12c] sm:$0xf]
  %v177 = vld [vmem:[%s1 + $0x130] sm:$0xf]
  %v178 = vld [vmem:[%s1 + $0x134] sm:$0xf]
  %v179 = vld [vmem:[%s1 + $0x138] sm:$0xf]
  %v180 = vld [vmem:[%s1 + $0x13c] sm:$0xf]
  %v181 = vld [vmem:[%s1 + $0x140] sm:$0xf]
  %v182 = vld [vmem:[%s1 + $0x144] sm:$0xf]
  %v183 = vld [vmem:[%s1 + $0x148] sm:$0xf]
  %v184 = vld [vmem:[%s1 + $0x14c] sm:$0xf]
  %v185 = vld [vmem:[%s1 + $0x150] sm:$0xf]
  %v186 = vld [vmem:[%s1 + $0x154] sm:$0xf]
  %v187 = vld [vmem:[%s1 + $0x158] sm:$0xf]
  %v188 = vld [vmem:[%s1 + $0x15c] sm:$0xf]
  %v189 = vld [vmem:[%s1 + $0x160] sm:$0xf]
  %v190 = vld [vmem:[%s1 + $0x164] sm:$0xf]
  %v191 = vld [vmem:[%s1 + $0x168] sm:$0xf]
  %v192 = vld [vmem:[%s1 + $0x16c] sm:$0xf]
  %v193 = vld [vmem:[%s1 + $0x170] sm:$0xf]
  %v194 = vld [vmem:[%s1 + $0x174] sm:$0xf]
  %v195 = vld [vmem:[%s1 + $0x178] sm:$0xf]
  %v196 = vld [vmem:[%s1 + $0x17c] sm:$0xf]
  %v197 = vld [vmem:[%s1 + $0x180] sm:$0xf]
  %v198 = vld [vmem:[%s1 + $0x184] sm:$0xf]
  %v199 = vld [vmem:[%s1 + $0x188] sm:$0xf]
  %v200 = vld [vmem:[%s1 + $0x18c] sm:$0xf]
  %v201 = vld [vmem:[%s1 + $0x190] sm:$0xf]
  %v202 = vld [vmem:[%s1 + $0x194] sm:$0xf]
  %v203 = vld [vmem:[%s1 + $0x198] sm:$0xf]
  %v204 = vld [vmem:[%s1 + $0x19c] sm:$0xf]
  %v205 = vld [vmem:[%s1 + $0x1a0] sm:$0xf]
  %v206 = vld [vmem:[%s1 + $0x1a4] sm:$0xf]
  %v207 = vld [vmem:[%s1 + $0x1a8] sm:$0xf]
  %v208 = vld [vmem:[%s1 + $0x1ac] sm:$0xf]
  %v209 = vld [vmem:[%s1 + $0x1b0] sm:$0xf]
  %v210 = vld [vmem:[%s1 + $0x1b4] sm:$0xf]
  %v211 = vld [vmem:[%s1 + $0x1b8] sm:$0xf]
  %v212 = vld [vmem:[%s1 + $0x1bc] sm:$0xf]
  %v213 = vld [vmem:[%s1 + $0x1c0] sm:$0xf]
  %v214 = vld [vmem:[%s1 + $0x1c4] sm:$0xf]
  %v215 = vld [vmem:[%s1 + $0x1c8] sm:$0xf]
  %v216 = vld [vmem:[%s1 + $0x1cc] sm:$0xf]
  %v217 = vld [vmem:[%s1 + $0x1d0] sm:$0xf]
  %v218 = vld [vmem:[%s1 + $0x1d4] sm:$0xf]
  %v219 = vld [vmem:[%s1 + $0x1d8] sm:$0xf]
  %v220 = vld [vmem:[%s1 + $0x1dc] sm:$0xf]
  %v221 = vld [vmem:[%s1 + $0x1e0] sm:$0xf]
  %v222 = vld [vmem:[%s1 + $0x1e4] sm:$0xf]
  %v223 = vld [vmem:[%s1 + $0x1e8] sm:$0xf]
  %v224 = vld [vmem:[%s1 + $0x1ec] sm:$0xf]
  %v225 = vld [vmem:[%s1 + $0x1f0] sm:$0xf]
  %v226 = vld [vmem:[%s1 + $0x1f4] sm:$0xf]
  %v227 = vld [vmem:[%s1 + $0x1f8] sm:$0xf]
  %v228 = vld [vmem:[%s1 + $0x1fc] sm:$0xf]
  %v229 = vld [vmem:[%s1 + $0x200] sm:$0xf]
  %v230 = vld [vmem:[%s1 + $0x204] sm:$0xf]
  %v231 = vld [vmem:[%s1 + $0x208] sm:$0xf]
  %v232 = vld [vmem:[%s1 + $0x20c] sm:$0xf]
  %v233 = vld [vmem:[%s1 + $0x210] sm:$0xf]
  %v234 = vld [vmem:[%s1 + $0x214] sm:$0xf]
  %v235 = vld [vmem:[%s1 + $0x218] sm:$0xf]
  %v236 = vld [vmem:[%s1 + $0x21c] sm:$0xf]
  %v237 = vld [vmem:[%s1 + $0x220] sm:$0xf]
  %v238 = vld [vmem:[%s1 + $0x224] sm:$0xf]
  %v239 = vld [vmem:[%s1 + $0x228] sm:$0xf]
  %v240 = vld [vmem:[%s1 + $0x22c] sm:$0xf]
  %v241 = vld [vmem:[%s1 + $0x230] sm:$0xf]
  %v242 = vld [vmem:[%s1 + $0x234] sm:$0xf]
  %v243 = vld [vmem:[%s1 + $0x238] sm:$0xf]
  %v244 = vld [vmem:[%s1 + $0x23c] sm:$0xf]
  %v245 = vld [vmem:[%s2] sm:$0x1]
  %v247 = vlaneseq
  %v248 = vshrl.u32 %v247, 7
  %v249 = vsub.s32 0, %v248
  %v250 = vrot.slane %v245, %v249
  %v332 = vunpack.c.l.b16 %v21
  %v333 = vunpack.c.h.b16 %v21
  %v334 = vunpack.c.l.b16 %v22
  %v335 = vunpack.c.h.b16 %v22
  %v336 = vunpack.c.l.b16 %v23
  %v337 = vunpack.c.h.b16 %v23
  %v338 = vunpack.c.l.b16 %v24
  %v339 = vunpack.c.h.b16 %v24
  %v340 = vunpack.c.l.b16 %v25
  %v341 = vunpack.c.l.b16 %v26
  %v342 = vunpack.c.h.b16 %v26
  %v343 = vunpack.c.l.b16 %v27
  %v344 = vunpack.c.h.b16 %v27
  %v345 = vunpack.c.l.b16 %v28
  %v346 = vunpack.c.h.b16 %v28
  %v347 = vunpack.c.l.b16 %v29
  %v348 = vunpack.c.h.b16 %v29
  %v349 = vunpack.c.l.b16 %v30
  %v350 = vunpack.c.l.b16 %v31
  %v351 = vunpack.c.h.b16 %v31
  %v352 = vunpack.c.l.b16 %v32
  %v353 = vunpack.c.h.b16 %v32
  %v354 = vunpack.c.l.b16 %v33
  %v355 = vunpack.c.h.b16 %v33
  %v356 = vunpack.c.l.b16 %v34
  %v357 = vunpack.c.h.b16 %v34
  %v358 = vunpack.c.l.b16 %v35
  %v359 = vunpack.c.l.b16 %v36
  %v360 = vunpack.c.h.b16 %v36
  %v361 = vunpack.c.l.b16 %v37
  %v362 = vunpack.c.h.b16 %v37
  %v363 = vunpack.c.l.b16 %v38
  %v364 = vunpack.c.h.b16 %v38
  %v365 = vunpack.c.l.b16 %v39
  %v366 = vunpack.c.h.b16 %v39
  %v367 = vunpack.c.l.b16 %v40
  %v368 = vunpack.c.l.b16 %v41
  %v369 = vunpack.c.h.b16 %v41
  %v370 = vunpack.c.l.b16 %v42
  %v371 = vunpack.c.h.b16 %v42
  %v372 = vunpack.c.l.b16 %v43
  %v373 = vunpack.c.h.b16 %v43
  %v374 = vunpack.c.l.b16 %v44
  %v375 = vunpack.c.h.b16 %v44
  %v376 = vunpack.c.l.b16 %v45
  %v377 = vunpack.c.l.b16 %v46
  %v378 = vunpack.c.h.b16 %v46
  %v379 = vunpack.c.l.b16 %v47
  %v380 = vunpack.c.h.b16 %v47
  %v381 = vunpack.c.l.b16 %v48
  %v382 = vunpack.c.h.b16 %v48
  %v383 = vunpack.c.l.b16 %v49
  %v384 = vunpack.c.h.b16 %v49
  %v385 = vunpack.c.l.b16 %v50
  %v386 = vunpack.c.l.b16 %v51
  %v387 = vunpack.c.h.b16 %v51
  %v388 = vunpack.c.l.b16 %v52
  %v389 = vunpack.c.h.b16 %v52
  %v390 = vunpack.c.l.b16 %v53
  %v391 = vunpack.c.h.b16 %v53
  %v392 = vunpack.c.l.b16 %v54
  %v393 = vunpack.c.h.b16 %v54
  %v394 = vunpack.c.l.b16 %v55
  %v395 = vunpack.c.l.b16 %v56
  %v396 = vunpack.c.h.b16 %v56
  %v397 = vunpack.c.l.b16 %v57
  %v398 = vunpack.c.h.b16 %v57
  %v399 = vunpack.c.l.b16 %v58
  %v400 = vunpack.c.h.b16 %v58
  %v401 = vunpack.c.l.b16 %v59
  %v402 = vunpack.c.h.b16 %v59
  %v403 = vunpack.c.l.b16 %v60
  %v404 = vunpack.c.l.b16 %v61
  %v405 = vunpack.c.h.b16 %v61
  %v406 = vunpack.c.l.b16 %v62
  %v407 = vunpack.c.h.b16 %v62
  %v408 = vunpack.c.l.b16 %v63
  %v409 = vunpack.c.h.b16 %v63
  %v410 = vunpack.c.l.b16 %v64
  %v411 = vunpack.c.h.b16 %v64
  %v412 = vunpack.c.l.b16 %v65
  %v413 = vunpack.c.l.b16 %v66
  %v414 = vunpack.c.h.b16 %v66
  %v415 = vunpack.c.l.b16 %v67
  %v416 = vunpack.c.h.b16 %v67
  %v417 = vunpack.c.l.b16 %v68
  %v418 = vunpack.c.h.b16 %v68
  %v419 = vunpack.c.l.b16 %v69
  %v420 = vunpack.c.h.b16 %v69
  %v421 = vunpack.c.l.b16 %v70
  %v422 = vunpack.c.l.b16 %v71
  %v423 = vunpack.c.h.b16 %v71
  %v424 = vunpack.c.l.b16 %v72
  %v425 = vunpack.c.h.b16 %v72
  %v426 = vunpack.c.l.b16 %v73
  %v427 = vunpack.c.h.b16 %v73
  %v428 = vunpack.c.l.b16 %v74
  %v429 = vunpack.c.h.b16 %v74
  %v430 = vunpack.c.l.b16 %v75
  %v431 = vunpack.c.l.b16 %v76
  %v432 = vunpack.c.h.b16 %v76
  %v433 = vunpack.c.l.b16 %v77
  %v434 = vunpack.c.h.b16 %v77
  %v435 = vunpack.c.l.b16 %v78
  %v436 = vunpack.c.h.b16 %v78
  %v437 = vunpack.c.l.b16 %v79
  %v438 = vunpack.c.h.b16 %v79
  %v439 = vunpack.c.l.b16 %v80
  %v440 = vunpack.c.l.b16 %v81
  %v441 = vunpack.c.h.b16 %v81
  %v442 = vunpack.c.l.b16 %v82
  %v443 = vunpack.c.h.b16 %v82
  %v444 = vunpack.c.l.b16 %v83
  %v445 = vunpack.c.h.b16 %v83
  %v446 = vunpack.c.l.b16 %v84
  %v447 = vunpack.c.h.b16 %v84
  %v448 = vunpack.c.l.b16 %v85
  %v449 = vunpack.c.l.b16 %v86
  %v450 = vunpack.c.h.b16 %v86
  %v451 = vunpack.c.l.b16 %v87
  %v452 = vunpack.c.h.b16 %v87
  %v453 = vunpack.c.l.b16 %v88
  %v454 = vunpack.c.h.b16 %v88
  %v455 = vunpack.c.l.b16 %v89
  %v456 = vunpack.c.h.b16 %v89
  %v457 = vunpack.c.l.b16 %v90
  %v458 = vunpack.c.l.b16 %v91
  %v459 = vunpack.c.h.b16 %v91
  %v460 = vunpack.c.l.b16 %v92
  %v461 = vunpack.c.h.b16 %v92
  %v462 = vunpack.c.l.b16 %v93
  %v463 = vunpack.c.h.b16 %v93
  %v464 = vunpack.c.l.b16 %v94
  %v465 = vunpack.c.h.b16 %v94
  %v466 = vunpack.c.l.b16 %v95
  %v467 = vunpack.c.l.b16 %v96
  %v468 = vunpack.c.h.b16 %v96
  %v469 = vunpack.c.l.b16 %v97
  %v470 = vunpack.c.h.b16 %v97
  %v471 = vunpack.c.l.b16 %v98
  %v472 = vunpack.c.h.b16 %v98
  %v473 = vunpack.c.l.b16 %v99
  %v474 = vunpack.c.h.b16 %v99
  %v475 = vunpack.c.l.b16 %v100
  %v476 = vpack.c.b16 %v341, %v332
  %v477 = vpack.c.b16 %v342, %v333
  %v478 = vpack.c.b16 %v343, %v334
  %v479 = vpack.c.b16 %v344, %v335
  %v480 = vpack.c.b16 %v345, %v336
  %v481 = vpack.c.b16 %v346, %v337
  %v482 = vpack.c.b16 %v347, %v338
  %v483 = vpack.c.b16 %v348, %v339
  %v484 = vpack.c.b16 %v349, %v340
  %v485 = vpack.c.b16 %v359, %v350
  %v486 = vpack.c.b16 %v360, %v351
  %v487 = vpack.c.b16 %v361, %v352
  %v488 = vpack.c.b16 %v362, %v353
  %v489 = vpack.c.b16 %v363, %v354
  %v490 = vpack.c.b16 %v364, %v355
  %v491 = vpack.c.b16 %v365, %v356
  %v492 = vpack.c.b16 %v366, %v357
  %v493 = vpack.c.b16 %v367, %v358
  %v494 = vpack.c.b16 %v377, %v368
  %v495 = vpack.c.b16 %v378, %v369
  %v496 = vpack.c.b16 %v379, %v370
  %v497 = vpack.c.b16 %v380, %v371
  %v498 = vpack.c.b16 %v381, %v372
  %v499 = vpack.c.b16 %v382, %v373
  %v500 = vpack.c.b16 %v383, %v374
  %v501 = vpack.c.b16 %v384, %v375
  %v502 = vpack.c.b16 %v385, %v376
  %v503 = vpack.c.b16 %v395, %v386
  %v504 = vpack.c.b16 %v396, %v387
  %v505 = vpack.c.b16 %v397, %v388
  %v506 = vpack.c.b16 %v398, %v389
  %v507 = vpack.c.b16 %v399, %v390
  %v508 = vpack.c.b16 %v400, %v391
  %v509 = vpack.c.b16 %v401, %v392
  %v510 = vpack.c.b16 %v402, %v393
  %v511 = vpack.c.b16 %v403, %v394
  %v512 = vpack.c.b16 %v413, %v404
  %v513 = vpack.c.b16 %v414, %v405
  %v514 = vpack.c.b16 %v415, %v406
  %v515 = vpack.c.b16 %v416, %v407
  %v516 = vpack.c.b16 %v417, %v408
  %v517 = vpack.c.b16 %v418, %v409
  %v518 = vpack.c.b16 %v419, %v410
  %v519 = vpack.c.b16 %v420, %v411
  %v520 = vpack.c.b16 %v421, %v412
  %v521 = vpack.c.b16 %v431, %v422
  %v522 = vpack.c.b16 %v432, %v423
  %v523 = vpack.c.b16 %v433, %v424
  %v524 = vpack.c.b16 %v434, %v425
  %v525 = vpack.c.b16 %v435, %v426
  %v526 = vpack.c.b16 %v436, %v427
  %v527 = vpack.c.b16 %v437, %v428
  %v528 = vpack.c.b16 %v438, %v429
  %v529 = vpack.c.b16 %v439, %v430
  %v530 = vpack.c.b16 %v449, %v440
  %v531 = vpack.c.b16 %v450, %v441
  %v532 = vpack.c.b16 %v451, %v442
  %v533 = vpack.c.b16 %v452, %v443
  %v534 = vpack.c.b16 %v453, %v444
  %v535 = vpack.c.b16 %v454, %v445
  %v536 = vpack.c.b16 %v455, %v446
  %v537 = vpack.c.b16 %v456, %v447
  %v538 = vpack.c.b16 %v457, %v448
  %v539 = vpack.c.b16 %v467, %v458
  %v540 = vpack.c.b16 %v468, %v459
  %v541 = vpack.c.b16 %v469, %v460
  %v542 = vpack.c.b16 %v470, %v461
  %v543 = vpack.c.b16 %v471, %v462
  %v544 = vpack.c.b16 %v472, %v463
  %v545 = vpack.c.b16 %v473, %v464
  %v546 = vpack.c.b16 %v474, %v465
  %v547 = vpack.c.b16 %v475, %v466
  %v764 = vunpack.c.l.b16 %v101
  %v765 = vunpack.c.l.b16 %v102
  %v766 = vunpack.c.l.b16 %v103
  %v767 = vunpack.c.l.b16 %v104
  %v768 = vunpack.c.l.b16 %v105
  %v769 = vunpack.c.l.b16 %v106
  %v770 = vunpack.c.l.b16 %v107
  %v771 = vunpack.c.l.b16 %v108
  %v772 = vunpack.c.l.b16 %v109
  %v773 = vunpack.c.l.b16 %v110
  %v774 = vunpack.c.l.b16 %v111
  %v775 = vunpack.c.l.b16 %v112
  %v776 = vunpack.c.l.b16 %v113
  %v777 = vunpack.c.l.b16 %v114
  %v778 = vunpack.c.l.b16 %v115
  %v779 = vunpack.c.l.b16 %v116
  %v780 = vunpack.c.l.b16 %v117
  %v781 = vunpack.c.l.b16 %v118
  %v782 = vunpack.c.l.b16 %v119
  %v783 = vunpack.c.l.b16 %v120
  %v784 = vunpack.c.l.b16 %v121
  %v785 = vunpack.c.l.b16 %v122
  %v786 = vunpack.c.l.b16 %v123
  %v787 = vunpack.c.l.b16 %v124
  %v788 = vunpack.c.l.b16 %v125
  %v789 = vunpack.c.l.b16 %v126
  %v790 = vunpack.c.l.b16 %v127
  %v791 = vunpack.c.l.b16 %v128
  %v792 = vunpack.c.l.b16 %v129
  %v793 = vunpack.c.l.b16 %v130
  %v794 = vunpack.c.l.b16 %v131
  %v795 = vunpack.c.l.b16 %v132
  %v796 = vunpack.c.l.b16 %v133
  %v797 = vunpack.c.l.b16 %v134
  %v798 = vunpack.c.l.b16 %v135
  %v799 = vunpack.c.l.b16 %v136
  %v800 = vunpack.c.l.b16 %v137
  %v801 = vunpack.c.l.b16 %v138
  %v802 = vunpack.c.l.b16 %v139
  %v803 = vunpack.c.l.b16 %v140
  %v804 = vunpack.c.l.b16 %v141
  %v805 = vunpack.c.l.b16 %v142
  %v806 = vunpack.c.l.b16 %v143
  %v807 = vunpack.c.l.b16 %v144
  %v808 = vunpack.c.l.b16 %v145
  %v809 = vunpack.c.l.b16 %v146
  %v810 = vunpack.c.l.b16 %v147
  %v811 = vunpack.c.l.b16 %v148
  %v812 = vunpack.c.l.b16 %v149
  %v813 = vunpack.c.l.b16 %v150
  %v814 = vunpack.c.l.b16 %v151
  %v815 = vunpack.c.l.b16 %v152
  %v816 = vunpack.c.l.b16 %v153
  %v817 = vunpack.c.l.b16 %v154
  %v818 = vunpack.c.l.b16 %v155
  %v819 = vunpack.c.l.b16 %v156
  %v820 = vunpack.c.l.b16 %v157
  %v821 = vunpack.c.l.b16 %v158
  %v822 = vunpack.c.l.b16 %v159
  %v823 = vunpack.c.l.b16 %v160
  %v824 = vunpack.c.l.b16 %v161
  %v825 = vunpack.c.l.b16 %v162
  %v826 = vunpack.c.l.b16 %v163
  %v827 = vunpack.c.l.b16 %v164
  %v828 = vunpack.c.l.b16 %v165
  %v829 = vunpack.c.l.b16 %v166
  %v830 = vunpack.c.l.b16 %v167
  %v831 = vunpack.c.l.b16 %v168
  %v832 = vunpack.c.l.b16 %v169
  %v833 = vunpack.c.l.b16 %v170
  %v834 = vunpack.c.l.b16 %v171
  %v835 = vunpack.c.l.b16 %v172
  %v836 = vunpack.c.l.b16 %v173
  %v837 = vunpack.c.l.b16 %v174
  %v838 = vunpack.c.l.b16 %v175
  %v839 = vunpack.c.l.b16 %v176
  %v840 = vunpack.c.l.b16 %v177
  %v841 = vunpack.c.l.b16 %v178
  %v842 = vunpack.c.l.b16 %v179
  %v843 = vunpack.c.l.b16 %v180
  %v844 = vunpack.c.l.b16 %v181
  %v845 = vunpack.c.l.b16 %v182
  %v846 = vunpack.c.l.b16 %v183
  %v847 = vunpack.c.l.b16 %v184
  %v848 = vunpack.c.l.b16 %v185
  %v849 = vunpack.c.l.b16 %v186
  %v850 = vunpack.c.l.b16 %v187
  %v851 = vunpack.c.l.b16 %v188
  %v852 = vunpack.c.l.b16 %v189
  %v853 = vunpack.c.l.b16 %v190
  %v854 = vunpack.c.l.b16 %v191
  %v855 = vunpack.c.l.b16 %v192
  %v856 = vunpack.c.l.b16 %v193
  %v857 = vunpack.c.l.b16 %v194
  %v858 = vunpack.c.l.b16 %v195
  %v859 = vunpack.c.l.b16 %v196
  %v860 = vunpack.c.l.b16 %v197
  %v861 = vunpack.c.l.b16 %v198
  %v862 = vunpack.c.l.b16 %v199
  %v863 = vunpack.c.l.b16 %v200
  %v864 = vunpack.c.l.b16 %v201
  %v865 = vunpack.c.l.b16 %v202
  %v866 = vunpack.c.l.b16 %v203
  %v867 = vunpack.c.l.b16 %v204
  %v868 = vunpack.c.l.b16 %v205
  %v869 = vunpack.c.l.b16 %v206
  %v870 = vunpack.c.l.b16 %v207
  %v871 = vunpack.c.l.b16 %v208
  %v872 = vunpack.c.l.b16 %v209
  %v873 = vunpack.c.l.b16 %v210
  %v874 = vunpack.c.l.b16 %v211
  %v875 = vunpack.c.l.b16 %v212
  %v876 = vunpack.c.l.b16 %v213
  %v877 = vunpack.c.l.b16 %v214
  %v878 = vunpack.c.l.b16 %v215
  %v879 = vunpack.c.l.b16 %v216
  %v880 = vunpack.c.l.b16 %v217
  %v881 = vunpack.c.l.b16 %v218
  %v882 = vunpack.c.l.b16 %v219
  %v883 = vunpack.c.l.b16 %v220
  %v884 = vunpack.c.l.b16 %v221
  %v885 = vunpack.c.l.b16 %v222
  %v886 = vunpack.c.l.b16 %v223
  %v887 = vunpack.c.l.b16 %v224
  %v888 = vunpack.c.l.b16 %v225
  %v889 = vunpack.c.l.b16 %v226
  %v890 = vunpack.c.l.b16 %v227
  %v891 = vunpack.c.l.b16 %v228
  %v892 = vunpack.c.l.b16 %v229
  %v893 = vunpack.c.l.b16 %v230
  %v894 = vunpack.c.l.b16 %v231
  %v895 = vunpack.c.l.b16 %v232
  %v896 = vunpack.c.l.b16 %v233
  %v897 = vunpack.c.l.b16 %v234
  %v898 = vunpack.c.l.b16 %v235
  %v899 = vunpack.c.l.b16 %v236
  %v900 = vunpack.c.l.b16 %v237
  %v901 = vunpack.c.l.b16 %v238
  %v902 = vunpack.c.l.b16 %v239
  %v903 = vunpack.c.l.b16 %v240
  %v904 = vunpack.c.l.b16 %v241
  %v905 = vunpack.c.l.b16 %v242
  %v906 = vunpack.c.l.b16 %v243
  %v907 = vunpack.c.l.b16 %v244
  %v908 = vpack.c.b16 %v765, %v764
  %v909 = vpack.c.b16 %v767, %v766
  %v910 = vpack.c.b16 %v769, %v768
  %v911 = vpack.c.b16 %v771, %v770
  %v912 = vpack.c.b16 %v773, %v772
  %v913 = vpack.c.b16 %v775, %v774
  %v914 = vpack.c.b16 %v777, %v776
  %v915 = vpack.c.b16 %v779, %v778
  %v916 = vpack.c.b16 %v781, %v780
  %v917 = vpack.c.b16 %v783, %v782
  %v918 = vpack.c.b16 %v785, %v784
  %v919 = vpack.c.b16 %v787, %v786
  %v920 = vpack.c.b16 %v789, %v788
  %v921 = vpack.c.b16 %v791, %v790
  %v922 = vpack.c.b16 %v793, %v792
  %v923 = vpack.c.b16 %v795, %v794
  %v924 = vpack.c.b16 %v797, %v796
  %v925 = vpack.c.b16 %v799, %v798
  %v926 = vpack.c.b16 %v801, %v800
  %v927 = vpack.c.b16 %v803, %v802
  %v928 = vpack.c.b16 %v805, %v804
  %v929 = vpack.c.b16 %v807, %v806
  %v930 = vpack.c.b16 %v809, %v808
  %v931 = vpack.c.b16 %v811, %v810
  %v932 = vpack.c.b16 %v813, %v812
  %v933 = vpack.c.b16 %v815, %v814
  %v934 = vpack.c.b16 %v817, %v816
  %v935 = vpack.c.b16 %v819, %v818
  %v936 = vpack.c.b16 %v821, %v820
  %v937 = vpack.c.b16 %v823, %v822
  %v938 = vpack.c.b16 %v825, %v824
  %v939 = vpack.c.b16 %v827, %v826
  %v940 = vpack.c.b16 %v829, %v828
  %v941 = vpack.c.b16 %v831, %v830
  %v942 = vpack.c.b16 %v833, %v832
  %v943 = vpack.c.b16 %v835, %v834
  %v944 = vpack.c.b16 %v837, %v836
  %v945 = vpack.c.b16 %v839, %v838
  %v946 = vpack.c.b16 %v841, %v840
  %v947 = vpack.c.b16 %v843, %v842
  %v948 = vpack.c.b16 %v845, %v844
  %v949 = vpack.c.b16 %v847, %v846
  %v950 = vpack.c.b16 %v849, %v848
  %v951 = vpack.c.b16 %v851, %v850
  %v952 = vpack.c.b16 %v853, %v852
  %v953 = vpack.c.b16 %v855, %v854
  %v954 = vpack.c.b16 %v857, %v856
  %v955 = vpack.c.b16 %v859, %v858
  %v956 = vpack.c.b16 %v861, %v860
  %v957 = vpack.c.b16 %v863, %v862
  %v958 = vpack.c.b16 %v865, %v864
  %v959 = vpack.c.b16 %v867, %v866
  %v960 = vpack.c.b16 %v869, %v868
  %v961 = vpack.c.b16 %v871, %v870
  %v962 = vpack.c.b16 %v873, %v872
  %v963 = vpack.c.b16 %v875, %v874
  %v964 = vpack.c.b16 %v877, %v876
  %v965 = vpack.c.b16 %v879, %v878
  %v966 = vpack.c.b16 %v881, %v880
  %v967 = vpack.c.b16 %v883, %v882
  %v968 = vpack.c.b16 %v885, %v884
  %v969 = vpack.c.b16 %v887, %v886
  %v970 = vpack.c.b16 %v889, %v888
  %v971 = vpack.c.b16 %v891, %v890
  %v972 = vpack.c.b16 %v893, %v892
  %v973 = vpack.c.b16 %v895, %v894
  %v974 = vpack.c.b16 %v897, %v896
  %v975 = vpack.c.b16 %v899, %v898
  %v976 = vpack.c.b16 %v901, %v900
  %v977 = vpack.c.b16 %v903, %v902
  %v978 = vpack.c.b16 %v905, %v904
  %v979 = vpack.c.b16 %v907, %v906
  %1052 = vmatprep.subr.bf16.mxu0 0
  %1053 = vmatpush1.bf16.msra.mxu0 %v915
  %1054 = vmatprep.subr.bf16.mxu0 0
  %1055 = vmatpush1.bf16.msra.mxu0 %v914
  %1056 = vmatprep.subr.bf16.mxu0 0
  %1057 = vmatpush1.bf16.msra.mxu0 %v913
  %1058 = vmatprep.subr.bf16.mxu0 0
  %1059 = vmatpush1.bf16.msra.mxu0 %v912
  %1060 = vmatprep.subr.bf16.mxu0 0
  %1061 = vmatpush1.bf16.msra.mxu0 %v911
  %1062 = vmatprep.subr.bf16.mxu0 0
  %1063 = vmatpush1.bf16.msra.mxu0 %v910
  %1064 = vmatprep.subr.bf16.mxu0 0
  %1065 = vmatpush1.bf16.msra.mxu0 %v909
  %1066 = vmatprep.subr.bf16.mxu0 0
  %1067 = vmatpush1.bf16.msra.mxu0 %v908
  %1068 = vmatprep.subr.bf16.mxu0 0
  %1069 = vmatpush2.bf16.msra.mxu0 %v923
  %1070 = vmatprep.subr.bf16.mxu0 0
  %1071 = vmatpush2.bf16.msra.mxu0 %v922
  %1072 = vmatprep.subr.bf16.mxu0 0
  %1073 = vmatpush2.bf16.msra.mxu0 %v921
  %1074 = vmatprep.subr.bf16.mxu0 0
  %1075 = vmatpush2.bf16.msra.mxu0 %v920
  %1076 = vmatprep.subr.bf16.mxu0 0
  %1077 = vmatpush2.bf16.msra.mxu0 %v919
  %1078 = vmatprep.subr.bf16.mxu0 0
  %1079 = vmatpush2.bf16.msra.mxu0 %v918
  %1080 = vmatprep.subr.bf16.mxu0 0
  %1081 = vmatpush2.bf16.msra.mxu0 %v917
  %1082 = vmatprep.subr.bf16.mxu0 0
  %1083 = vmatpush2.bf16.msra.mxu0 %v916
  %1084 = vmatprep.mubr.bf16.mxu0 %v477
  %1085 = vmatmul.mubr.bf16.gmra.mxu0 %v476
  %v1086 = vpop.f32.mrf.mxu0
  %v1087 = vadd.f32 %v250, %v1086
  %v1088 = vpop.f32.mrf.mxu0
  %v1089 = vpop.f32.mrf.mxu0
  %v1090 = vadd.f32 %v250, %v1089
  %v1091 = vpop.f32.mrf.mxu0
  %1092 = vmatprep.mubr.bf16.mxu0 %v486
  %1093 = vmatmul.mubr.bf16.gmra.mxu0 %v485
  %v1094 = vpop.f32.mrf.mxu0
  %v1095 = vadd.f32 %v250, %v1094
  %v1096 = vpop.f32.mrf.mxu0
  %v1097 = vpop.f32.mrf.mxu0
  %v1098 = vadd.f32 %v250, %v1097
  %v1099 = vpop.f32.mrf.mxu0
  %1100 = vmatprep.mubr.bf16.mxu0 %v495
  %1101 = vmatmul.mubr.bf16.gmra.mxu0 %v494
  %v1102 = vpop.f32.mrf.mxu0
  %v1103 = vadd.f32 %v250, %v1102
  %v1104 = vpop.f32.mrf.mxu0
  %v1105 = vpop.f32.mrf.mxu0
  %v1106 = vadd.f32 %v250, %v1105
  %v1107 = vpop.f32.mrf.mxu0
  %1108 = vmatprep.mubr.bf16.mxu0 %v504
  %1109 = vmatmul.mubr.bf16.gmra.mxu0 %v503
  %v1110 = vpop.f32.mrf.mxu0
  %v1111 = vadd.f32 %v250, %v1110
  %v1112 = vpop.f32.mrf.mxu0
  %v1113 = vpop.f32.mrf.mxu0
  %v1114 = vadd.f32 %v250, %v1113
  %v1115 = vpop.f32.mrf.mxu0
  %1116 = vmatprep.mubr.bf16.mxu0 %v513
  %1117 = vmatmul.mubr.bf16.gmra.mxu0 %v512
  %v1118 = vpop.f32.mrf.mxu0
  %v1119 = vadd.f32 %v250, %v1118
  %v1120 = vpop.f32.mrf.mxu0
  %v1121 = vpop.f32.mrf.mxu0
  %v1122 = vadd.f32 %v250, %v1121
  %v1123 = vpop.f32.mrf.mxu0
  %1124 = vmatprep.mubr.bf16.mxu0 %v522
  %1125 = vmatmul.mubr.bf16.gmra.mxu0 %v521
  %v1126 = vpop.f32.mrf.mxu0
  %v1127 = vadd.f32 %v250, %v1126
  %v1128 = vpop.f32.mrf.mxu0
  %v1129 = vpop.f32.mrf.mxu0
  %v1130 = vadd.f32 %v250, %v1129
  %v1131 = vpop.f32.mrf.mxu0
  %1132 = vmatprep.mubr.bf16.mxu0 %v531
  %1133 = vmatmul.mubr.bf16.gmra.mxu0 %v530
  %v1134 = vpop.f32.mrf.mxu0
  %v1135 = vadd.f32 %v250, %v1134
  %v1136 = vpop.f32.mrf.mxu0
  %v1137 = vpop.f32.mrf.mxu0
  %v1138 = vadd.f32 %v250, %v1137
  %v1139 = vpop.f32.mrf.mxu0
  %1140 = vmatprep.mubr.bf16.mxu0 %v540
  %1141 = vmatmul.mubr.bf16.gmra.mxu0 %v539
  %v1142 = vpop.f32.mrf.mxu0
  %v1143 = vadd.f32 %v250, %v1142
  %v1144 = vpop.f32.mrf.mxu0
  %v1145 = vpop.f32.mrf.mxu0
  %v1146 = vadd.f32 %v250, %v1145
  %v1147 = vpop.f32.mrf.mxu0
  %1148 = vdwg.mxu0
  %1149 = vmatprep.subr.bf16.mxu0 0
  %1150 = vmatpush1.bf16.msra.mxu0 %v931
  %1151 = vmatprep.subr.bf16.mxu0 0
  %1152 = vmatpush1.bf16.msra.mxu0 %v930
  %1153 = vmatprep.subr.bf16.mxu0 0
  %1154 = vmatpush1.bf16.msra.mxu0 %v929
  %1155 = vmatprep.subr.bf16.mxu0 0
  %1156 = vmatpush1.bf16.msra.mxu0 %v928
  %1157 = vmatprep.subr.bf16.mxu0 0
  %1158 = vmatpush1.bf16.msra.mxu0 %v927
  %1159 = vmatprep.subr.bf16.mxu0 0
  %1160 = vmatpush1.bf16.msra.mxu0 %v926
  %1161 = vmatprep.subr.bf16.mxu0 0
  %1162 = vmatpush1.bf16.msra.mxu0 %v925
  %1163 = vmatprep.subr.bf16.mxu0 0
  %1164 = vmatpush1.bf16.msra.mxu0 %v924
  %1165 = vmatprep.subr.bf16.mxu0 0
  %1166 = vmatpush2.bf16.msra.mxu0 %v939
  %1167 = vmatprep.subr.bf16.mxu0 0
  %1168 = vmatpush2.bf16.msra.mxu0 %v938
  %1169 = vmatprep.subr.bf16.mxu0 0
  %1170 = vmatpush2.bf16.msra.mxu0 %v937
  %1171 = vmatprep.subr.bf16.mxu0 0
  %1172 = vmatpush2.bf16.msra.mxu0 %v936
  %1173 = vmatprep.subr.bf16.mxu0 0
  %1174 = vmatpush2.bf16.msra.mxu0 %v935
  %1175 = vmatprep.subr.bf16.mxu0 0
  %1176 = vmatpush2.bf16.msra.mxu0 %v934
  %1177 = vmatprep.subr.bf16.mxu0 0
  %1178 = vmatpush2.bf16.msra.mxu0 %v933
  %1179 = vmatprep.subr.bf16.mxu0 0
  %1180 = vmatpush2.bf16.msra.mxu0 %v932
  %1181 = vmatprep.mubr.bf16.mxu0 %v479
  %1182 = vmatmul.mubr.bf16.gmra.mxu0 %v478
  %v1183 = vpop.f32.mrf.mxu0
  %v1184 = vadd.f32 %v1087, %v1183
  %v1185 = vpop.f32.mrf.mxu0
  %v1186 = vpop.f32.mrf.mxu0
  %v1187 = vadd.f32 %v1090, %v1186
  %v1188 = vpop.f32.mrf.mxu0
  %1189 = vmatprep.mubr.bf16.mxu0 %v488
  %1190 = vmatmul.mubr.bf16.gmra.mxu0 %v487
  %v1191 = vpop.f32.mrf.mxu0
  %v1192 = vadd.f32 %v1095, %v1191
  %v1193 = vpop.f32.mrf.mxu0
  %v1194 = vpop.f32.mrf.mxu0
  %v1195 = vadd.f32 %v1098, %v1194
  %v1196 = vpop.f32.mrf.mxu0
  %1197 = vmatprep.mubr.bf16.mxu0 %v497
  %1198 = vmatmul.mubr.bf16.gmra.mxu0 %v496
  %v1199 = vpop.f32.mrf.mxu0
  %v1200 = vadd.f32 %v1103, %v1199
  %v1201 = vpop.f32.mrf.mxu0
  %v1202 = vpop.f32.mrf.mxu0
  %v1203 = vadd.f32 %v1106, %v1202
  %v1204 = vpop.f32.mrf.mxu0
  %1205 = vmatprep.mubr.bf16.mxu0 %v506
  %1206 = vmatmul.mubr.bf16.gmra.mxu0 %v505
  %v1207 = vpop.f32.mrf.mxu0
  %v1208 = vadd.f32 %v1111, %v1207
  %v1209 = vpop.f32.mrf.mxu0
  %v1210 = vpop.f32.mrf.mxu0
  %v1211 = vadd.f32 %v1114, %v1210
  %v1212 = vpop.f32.mrf.mxu0
  %1213 = vmatprep.mubr.bf16.mxu0 %v515
  %1214 = vmatmul.mubr.bf16.gmra.mxu0 %v514
  %v1215 = vpop.f32.mrf.mxu0
  %v1216 = vadd.f32 %v1119, %v1215
  %v1217 = vpop.f32.mrf.mxu0
  %v1218 = vpop.f32.mrf.mxu0
  %v1219 = vadd.f32 %v1122, %v1218
  %v1220 = vpop.f32.mrf.mxu0
  %1221 = vmatprep.mubr.bf16.mxu0 %v524
  %1222 = vmatmul.mubr.bf16.gmra.mxu0 %v523
  %v1223 = vpop.f32.mrf.mxu0
  %v1224 = vadd.f32 %v1127, %v1223
  %v1225 = vpop.f32.mrf.mxu0
  %v1226 = vpop.f32.mrf.mxu0
  %v1227 = vadd.f32 %v1130, %v1226
  %v1228 = vpop.f32.mrf.mxu0
  %1229 = vmatprep.mubr.bf16.mxu0 %v533
  %1230 = vmatmul.mubr.bf16.gmra.mxu0 %v532
  %v1231 = vpop.f32.mrf.mxu0
  %v1232 = vadd.f32 %v1135, %v1231
  %v1233 = vpop.f32.mrf.mxu0
  %v1234 = vpop.f32.mrf.mxu0
  %v1235 = vadd.f32 %v1138, %v1234
  %v1236 = vpop.f32.mrf.mxu0
  %1237 = vmatprep.mubr.bf16.mxu0 %v542
  %1238 = vmatmul.mubr.bf16.gmra.mxu0 %v541
  %v1239 = vpop.f32.mrf.mxu0
  %v1240 = vadd.f32 %v1143, %v1239
  %v1241 = vpop.f32.mrf.mxu0
  %v1242 = vpop.f32.mrf.mxu0
  %v1243 = vadd.f32 %v1146, %v1242
  %v1244 = vpop.f32.mrf.mxu0
  %1245 = vdwg.mxu0
  %1246 = vmatprep.subr.bf16.mxu0 0
  %1247 = vmatpush1.bf16.msra.mxu0 %v947
  %1248 = vmatprep.subr.bf16.mxu0 0
  %1249 = vmatpush1.bf16.msra.mxu0 %v946
  %1250 = vmatprep.subr.bf16.mxu0 0
  %1251 = vmatpush1.bf16.msra.mxu0 %v945
  %1252 = vmatprep.subr.bf16.mxu0 0
  %1253 = vmatpush1.bf16.msra.mxu0 %v944
  %1254 = vmatprep.subr.bf16.mxu0 0
  %1255 = vmatpush1.bf16.msra.mxu0 %v943
  %1256 = vmatprep.subr.bf16.mxu0 0
  %1257 = vmatpush1.bf16.msra.mxu0 %v942
  %1258 = vmatprep.subr.bf16.mxu0 0
  %1259 = vmatpush1.bf16.msra.mxu0 %v941
  %1260 = vmatprep.subr.bf16.mxu0 0
  %1261 = vmatpush1.bf16.msra.mxu0 %v940
  %1262 = vmatprep.subr.bf16.mxu0 0
  %1263 = vmatpush2.bf16.msra.mxu0 %v955
  %1264 = vmatprep.subr.bf16.mxu0 0
  %1265 = vmatpush2.bf16.msra.mxu0 %v954
  %1266 = vmatprep.subr.bf16.mxu0 0
  %1267 = vmatpush2.bf16.msra.mxu0 %v953
  %1268 = vmatprep.subr.bf16.mxu0 0
  %1269 = vmatpush2.bf16.msra.mxu0 %v952
  %1270 = vmatprep.subr.bf16.mxu0 0
  %1271 = vmatpush2.bf16.msra.mxu0 %v951
  %1272 = vmatprep.subr.bf16.mxu0 0
  %1273 = vmatpush2.bf16.msra.mxu0 %v950
  %1274 = vmatprep.subr.bf16.mxu0 0
  %1275 = vmatpush2.bf16.msra.mxu0 %v949
  %1276 = vmatprep.subr.bf16.mxu0 0
  %1277 = vmatpush2.bf16.msra.mxu0 %v948
  %1278 = vmatprep.mubr.bf16.mxu0 %v481
  %1279 = vmatmul.mubr.bf16.gmra.mxu0 %v480
  %v1280 = vpop.f32.mrf.mxu0
  %v1281 = vadd.f32 %v1184, %v1280
  %v1282 = vpop.f32.mrf.mxu0
  %v1283 = vpop.f32.mrf.mxu0
  %v1284 = vadd.f32 %v1187, %v1283
  %v1285 = vpop.f32.mrf.mxu0
  %1286 = vmatprep.mubr.bf16.mxu0 %v490
  %1287 = vmatmul.mubr.bf16.gmra.mxu0 %v489
  %v1288 = vpop.f32.mrf.mxu0
  %v1289 = vadd.f32 %v1192, %v1288
  %v1290 = vpop.f32.mrf.mxu0
  %v1291 = vpop.f32.mrf.mxu0
  %v1292 = vadd.f32 %v1195, %v1291
  %v1293 = vpop.f32.mrf.mxu0
  %1294 = vmatprep.mubr.bf16.mxu0 %v499
  %1295 = vmatmul.mubr.bf16.gmra.mxu0 %v498
  %v1296 = vpop.f32.mrf.mxu0
  %v1297 = vadd.f32 %v1200, %v1296
  %v1298 = vpop.f32.mrf.mxu0
  %v1299 = vpop.f32.mrf.mxu0
  %v1300 = vadd.f32 %v1203, %v1299
  %v1301 = vpop.f32.mrf.mxu0
  %1302 = vmatprep.mubr.bf16.mxu0 %v508
  %1303 = vmatmul.mubr.bf16.gmra.mxu0 %v507
  %v1304 = vpop.f32.mrf.mxu0
  %v1305 = vadd.f32 %v1208, %v1304
  %v1306 = vpop.f32.mrf.mxu0
  %v1307 = vpop.f32.mrf.mxu0
  %v1308 = vadd.f32 %v1211, %v1307
  %v1309 = vpop.f32.mrf.mxu0
  %1310 = vmatprep.mubr.bf16.mxu0 %v517
  %1311 = vmatmul.mubr.bf16.gmra.mxu0 %v516
  %v1312 = vpop.f32.mrf.mxu0
  %v1313 = vadd.f32 %v1216, %v1312
  %v1314 = vpop.f32.mrf.mxu0
  %v1315 = vpop.f32.mrf.mxu0
  %v1316 = vadd.f32 %v1219, %v1315
  %v1317 = vpop.f32.mrf.mxu0
  %1318 = vmatprep.mubr.bf16.mxu0 %v526
  %1319 = vmatmul.mubr.bf16.gmra.mxu0 %v525
  %v1320 = vpop.f32.mrf.mxu0
  %v1321 = vadd.f32 %v1224, %v1320
  %v1322 = vpop.f32.mrf.mxu0
  %v1323 = vpop.f32.mrf.mxu0
  %v1324 = vadd.f32 %v1227, %v1323
  %v1325 = vpop.f32.mrf.mxu0
  %1326 = vmatprep.mubr.bf16.mxu0 %v535
  %1327 = vmatmul.mubr.bf16.gmra.mxu0 %v534
  %v1328 = vpop.f32.mrf.mxu0
  %v1329 = vadd.f32 %v1232, %v1328
  %v1330 = vpop.f32.mrf.mxu0
  %v1331 = vpop.f32.mrf.mxu0
  %v1332 = vadd.f32 %v1235, %v1331
  %v1333 = vpop.f32.mrf.mxu0
  %1334 = vmatprep.mubr.bf16.mxu0 %v544
  %1335 = vmatmul.mubr.bf16.gmra.mxu0 %v543
  %v1336 = vpop.f32.mrf.mxu0
  %v1337 = vadd.f32 %v1240, %v1336
  %v1338 = vpop.f32.mrf.mxu0
  %v1339 = vpop.f32.mrf.mxu0
  %v1340 = vadd.f32 %v1243, %v1339
  %v1341 = vpop.f32.mrf.mxu0
  %1342 = vdwg.mxu0
  %1343 = vmatprep.subr.bf16.mxu0 0
  %1344 = vmatpush1.bf16.msra.mxu0 %v963
  %1345 = vmatprep.subr.bf16.mxu0 0
  %1346 = vmatpush1.bf16.msra.mxu0 %v962
  %1347 = vmatprep.subr.bf16.mxu0 0
  %1348 = vmatpush1.bf16.msra.mxu0 %v961
  %1349 = vmatprep.subr.bf16.mxu0 0
  %1350 = vmatpush1.bf16.msra.mxu0 %v960
  %1351 = vmatprep.subr.bf16.mxu0 0
  %1352 = vmatpush1.bf16.msra.mxu0 %v959
  %1353 = vmatprep.subr.bf16.mxu0 0
  %1354 = vmatpush1.bf16.msra.mxu0 %v958
  %1355 = vmatprep.subr.bf16.mxu0 0
  %1356 = vmatpush1.bf16.msra.mxu0 %v957
  %1357 = vmatprep.subr.bf16.mxu0 0
  %1358 = vmatpush1.bf16.msra.mxu0 %v956
  %1359 = vmatprep.subr.bf16.mxu0 0
  %1360 = vmatpush2.bf16.msra.mxu0 %v971
  %1361 = vmatprep.subr.bf16.mxu0 0
  %1362 = vmatpush2.bf16.msra.mxu0 %v970
  %1363 = vmatprep.subr.bf16.mxu0 0
  %1364 = vmatpush2.bf16.msra.mxu0 %v969
  %1365 = vmatprep.subr.bf16.mxu0 0
  %1366 = vmatpush2.bf16.msra.mxu0 %v968
  %1367 = vmatprep.subr.bf16.mxu0 0
  %1368 = vmatpush2.bf16.msra.mxu0 %v967
  %1369 = vmatprep.subr.bf16.mxu0 0
  %1370 = vmatpush2.bf16.msra.mxu0 %v966
  %1371 = vmatprep.subr.bf16.mxu0 0
  %1372 = vmatpush2.bf16.msra.mxu0 %v965
  %1373 = vmatprep.subr.bf16.mxu0 0
  %1374 = vmatpush2.bf16.msra.mxu0 %v964
  %1375 = vmatprep.mubr.bf16.mxu0 %v483
  %1376 = vmatmul.mubr.bf16.gmra.mxu0 %v482
  %v1377 = vpop.f32.mrf.mxu0
  %v1378 = vadd.f32 %v1281, %v1377
  %v1379 = vpop.f32.mrf.mxu0
  %v1380 = vpop.f32.mrf.mxu0
  %v1381 = vadd.f32 %v1284, %v1380
  %v1382 = vpop.f32.mrf.mxu0
  %1383 = vmatprep.mubr.bf16.mxu0 %v492
  %1384 = vmatmul.mubr.bf16.gmra.mxu0 %v491
  %v1385 = vpop.f32.mrf.mxu0
  %v1386 = vadd.f32 %v1289, %v1385
  %v1387 = vpop.f32.mrf.mxu0
  %v1388 = vpop.f32.mrf.mxu0
  %v1389 = vadd.f32 %v1292, %v1388
  %v1390 = vpop.f32.mrf.mxu0
  %1391 = vmatprep.mubr.bf16.mxu0 %v501
  %1392 = vmatmul.mubr.bf16.gmra.mxu0 %v500
  %v1393 = vpop.f32.mrf.mxu0
  %v1394 = vadd.f32 %v1297, %v1393
  %v1395 = vpop.f32.mrf.mxu0
  %v1396 = vpop.f32.mrf.mxu0
  %v1397 = vadd.f32 %v1300, %v1396
  %v1398 = vpop.f32.mrf.mxu0
  %1399 = vmatprep.mubr.bf16.mxu0 %v510
  %1400 = vmatmul.mubr.bf16.gmra.mxu0 %v509
  %v1401 = vpop.f32.mrf.mxu0
  %v1402 = vadd.f32 %v1305, %v1401
  %v1403 = vpop.f32.mrf.mxu0
  %v1404 = vpop.f32.mrf.mxu0
  %v1405 = vadd.f32 %v1308, %v1404
  %v1406 = vpop.f32.mrf.mxu0
  %1407 = vmatprep.mubr.bf16.mxu0 %v519
  %1408 = vmatmul.mubr.bf16.gmra.mxu0 %v518
  %v1409 = vpop.f32.mrf.mxu0
  %v1410 = vadd.f32 %v1313, %v1409
  %v1411 = vpop.f32.mrf.mxu0
  %v1412 = vpop.f32.mrf.mxu0
  %v1413 = vadd.f32 %v1316, %v1412
  %v1414 = vpop.f32.mrf.mxu0
  %1415 = vmatprep.mubr.bf16.mxu0 %v528
  %1416 = vmatmul.mubr.bf16.gmra.mxu0 %v527
  %v1417 = vpop.f32.mrf.mxu0
  %v1418 = vadd.f32 %v1321, %v1417
  %v1419 = vpop.f32.mrf.mxu0
  %v1420 = vpop.f32.mrf.mxu0
  %v1421 = vadd.f32 %v1324, %v1420
  %v1422 = vpop.f32.mrf.mxu0
  %1423 = vmatprep.mubr.bf16.mxu0 %v537
  %1424 = vmatmul.mubr.bf16.gmra.mxu0 %v536
  %v1425 = vpop.f32.mrf.mxu0
  %v1426 = vadd.f32 %v1329, %v1425
  %v1427 = vpop.f32.mrf.mxu0
  %v1428 = vpop.f32.mrf.mxu0
  %v1429 = vadd.f32 %v1332, %v1428
  %v1430 = vpop.f32.mrf.mxu0
  %1431 = vmatprep.mubr.bf16.mxu0 %v546
  %1432 = vmatmul.mubr.bf16.gmra.mxu0 %v545
  %v1433 = vpop.f32.mrf.mxu0
  %v1434 = vadd.f32 %v1337, %v1433
  %v1435 = vpop.f32.mrf.mxu0
  %v1436 = vpop.f32.mrf.mxu0
  %v1437 = vadd.f32 %v1340, %v1436
  %v1438 = vpop.f32.mrf.mxu0
  %1439 = vdwg.mxu0
  %1440 = vmatprep.subr.bf16.mxu0 0
  %1441 = vmatpush1.bf16.msra.mxu0 %v979
  %1442 = vmatprep.subr.bf16.mxu0 0
  %1443 = vmatpush1.bf16.msra.mxu0 %v978
  %1444 = vmatprep.subr.bf16.mxu0 0
  %1445 = vmatpush1.bf16.msra.mxu0 %v977
  %1446 = vmatprep.subr.bf16.mxu0 0
  %1447 = vmatpush1.bf16.msra.mxu0 %v976
  %1448 = vmatprep.subr.bf16.mxu0 0
  %1449 = vmatpush1.bf16.msra.mxu0 %v975
  %1450 = vmatprep.subr.bf16.mxu0 0
  %1451 = vmatpush1.bf16.msra.mxu0 %v974
  %1452 = vmatprep.subr.bf16.mxu0 0
  %1453 = vmatpush1.bf16.msra.mxu0 %v973
  %1454 = vmatprep.subr.bf16.mxu0 0
  %1455 = vmatpush1.bf16.msra.mxu0 %v972
  %1456 = vmatprep.subr.bf16.mxu0 0
  %1457 = vmatpush2.bf16.msra.mxu0 0
  %1458 = vmatprep.subr.bf16.mxu0 0
  %1459 = vmatpush2.bf16.msra.mxu0 0
  %1460 = vmatprep.subr.bf16.mxu0 0
  %1461 = vmatpush2.bf16.msra.mxu0 0
  %1462 = vmatprep.subr.bf16.mxu0 0
  %1463 = vmatpush2.bf16.msra.mxu0 0
  %1464 = vmatprep.subr.bf16.mxu0 0
  %1465 = vmatpush2.bf16.msra.mxu0 0
  %1466 = vmatprep.subr.bf16.mxu0 0
  %1467 = vmatpush2.bf16.msra.mxu0 0
  %1468 = vmatprep.subr.bf16.mxu0 0
  %1469 = vmatpush2.bf16.msra.mxu0 0
  %1470 = vmatprep.subr.bf16.mxu0 0
  %1471 = vmatpush2.bf16.msra.mxu0 0
  %1472 = vmatprep.mubr.bf16.mxu0 0
  %1473 = vmatmul.mubr.bf16.gmra.mxu0 %v484
  %v1474 = vpop.f32.mrf.mxu0
  %v1475 = vadd.f32 %v1378, %v1474
  %v1476 = vpop.f32.mrf.mxu0
  %v1477 = vpop.f32.mrf.mxu0
  %v1478 = vadd.f32 %v1381, %v1477
  %v1479 = vpop.f32.mrf.mxu0
  %1480 = vmatprep.mubr.bf16.mxu0 0
  %1481 = vmatmul.mubr.bf16.gmra.mxu0 %v493
  %v1482 = vpop.f32.mrf.mxu0
  %v1483 = vadd.f32 %v1386, %v1482
  %v1484 = vpop.f32.mrf.mxu0
  %v1485 = vpop.f32.mrf.mxu0
  %v1486 = vadd.f32 %v1389, %v1485
  %v1487 = vpop.f32.mrf.mxu0
  %1488 = vmatprep.mubr.bf16.mxu0 0
  %1489 = vmatmul.mubr.bf16.gmra.mxu0 %v502
  %v1490 = vpop.f32.mrf.mxu0
  %v1491 = vadd.f32 %v1394, %v1490
  %v1492 = vpop.f32.mrf.mxu0
  %v1493 = vpop.f32.mrf.mxu0
  %v1494 = vadd.f32 %v1397, %v1493
  %v1495 = vpop.f32.mrf.mxu0
  %1496 = vmatprep.mubr.bf16.mxu0 0
  %1497 = vmatmul.mubr.bf16.gmra.mxu0 %v511
  %v1498 = vpop.f32.mrf.mxu0
  %v1499 = vadd.f32 %v1402, %v1498
  %v1500 = vpop.f32.mrf.mxu0
  %v1501 = vpop.f32.mrf.mxu0
  %v1502 = vadd.f32 %v1405, %v1501
  %v1503 = vpop.f32.mrf.mxu0
  %1504 = vmatprep.mubr.bf16.mxu0 0
  %1505 = vmatmul.mubr.bf16.gmra.mxu0 %v520
  %v1506 = vpop.f32.mrf.mxu0
  %v1507 = vadd.f32 %v1410, %v1506
  %v1508 = vpop.f32.mrf.mxu0
  %v1509 = vpop.f32.mrf.mxu0
  %v1510 = vadd.f32 %v1413, %v1509
  %v1511 = vpop.f32.mrf.mxu0
  %1512 = vmatprep.mubr.bf16.mxu0 0
  %1513 = vmatmul.mubr.bf16.gmra.mxu0 %v529
  %v1514 = vpop.f32.mrf.mxu0
  %v1515 = vadd.f32 %v1418, %v1514
  %v1516 = vpop.f32.mrf.mxu0
  %v1517 = vpop.f32.mrf.mxu0
  %v1518 = vadd.f32 %v1421, %v1517
  %v1519 = vpop.f32.mrf.mxu0
  %1520 = vmatprep.mubr.bf16.mxu0 0
  %1521 = vmatmul.mubr.bf16.gmra.mxu0 %v538
  %v1522 = vpop.f32.mrf.mxu0
  %v1523 = vadd.f32 %v1426, %v1522
  %v1524 = vpop.f32.mrf.mxu0
  %v1525 = vpop.f32.mrf.mxu0
  %v1526 = vadd.f32 %v1429, %v1525
  %v1527 = vpop.f32.mrf.mxu0
  %1528 = vmatprep.mubr.bf16.mxu0 0
  %1529 = vmatmul.mubr.bf16.gmra.mxu0 %v547
  %v1530 = vpop.f32.mrf.mxu0
  %v1531 = vadd.f32 %v1434, %v1530
  %v1532 = vpop.f32.mrf.mxu0
  %v1533 = vpop.f32.mrf.mxu0
  %v1534 = vadd.f32 %v1437, %v1533
  %v1535 = vpop.f32.mrf.mxu0
  %1536 = vdwg.mxu0
  %v1537 = vadd.f32 %v1475, %v1478
  %v1538 = vadd.f32 %v1537, %v1483
  %v1539 = vadd.f32 %v1538, %v1486
  %v1540 = vadd.f32 %v1539, %v1491
  %v1541 = vadd.f32 %v1540, %v1494
  %v1542 = vadd.f32 %v1541, %v1499
  %v1543 = vadd.f32 %v1542, %v1502
  %v1544 = vadd.f32 %v1543, %v1507
  %v1545 = vadd.f32 %v1544, %v1510
  %v1546 = vadd.f32 %v1545, %v1515
  %v1547 = vadd.f32 %v1546, %v1518
  %v1548 = vadd.f32 %v1547, %v1523
  %v1549 = vadd.f32 %v1548, %v1526
  %v1550 = vadd.f32 %v1549, %v1531
  %v1551 = vadd.f32 %v1550, %v1534
  %v1552 = vrot.slane %v1551, 4
  %v1553 = vadd.f32 %v1551, %v1552
  %v1554 = vrot.slane %v1553, 2
  %v1555 = vadd.f32 %v1553, %v1554
  %v1556 = vrot.slane %v1555, 1
  %v1557 = vadd.f32 %v1555, %v1556
  %v1558 = vrcp.pop 128.0
  %v1559 = vmul.f32 %v1557, %v1558
  %v1560 = vsub.f32 %v1475, %v1559
  %v1561 = vsub.f32 %v1478, %v1559
  %v1562 = vsub.f32 %v1483, %v1559
  %v1563 = vsub.f32 %v1486, %v1559
  %v1564 = vsub.f32 %v1491, %v1559
  %v1565 = vsub.f32 %v1494, %v1559
  %v1566 = vsub.f32 %v1499, %v1559
  %v1567 = vsub.f32 %v1502, %v1559
  %v1568 = vsub.f32 %v1507, %v1559
  %v1569 = vsub.f32 %v1510, %v1559
  %v1570 = vsub.f32 %v1515, %v1559
  %v1571 = vsub.f32 %v1518, %v1559
  %v1572 = vsub.f32 %v1523, %v1559
  %v1573 = vsub.f32 %v1526, %v1559
  %v1574 = vsub.f32 %v1531, %v1559
  %v1575 = vsub.f32 %v1534, %v1559
  %v1576 = vmul.f32 %v1560, %v1560
  %v1577 = vmul.f32 %v1561, %v1561
  %v1578 = vmul.f32 %v1562, %v1562
  %v1579 = vmul.f32 %v1563, %v1563
  %v1580 = vmul.f32 %v1564, %v1564
  %v1581 = vmul.f32 %v1565, %v1565
  %v1582 = vmul.f32 %v1566, %v1566
  %v1583 = vmul.f32 %v1567, %v1567
  %v1584 = vmul.f32 %v1568, %v1568
  %v1585 = vmul.f32 %v1569, %v1569
  %v1586 = vmul.f32 %v1570, %v1570
  %v1587 = vmul.f32 %v1571, %v1571
  %v1588 = vmul.f32 %v1572, %v1572
  %v1589 = vmul.f32 %v1573, %v1573
  %v1590 = vmul.f32 %v1574, %v1574
  %v1591 = vmul.f32 %v1575, %v1575
  %v1592 = vadd.f32 %v1576, %v1577
  %v1593 = vadd.f32 %v1592, %v1578
  %v1594 = vadd.f32 %v1593, %v1579
  %v1595 = vadd.f32 %v1594, %v1580
  %v1596 = vadd.f32 %v1595, %v1581
  %v1597 = vadd.f32 %v1596, %v1582
  %v1598 = vadd.f32 %v1597, %v1583
  %v1599 = vadd.f32 %v1598, %v1584
  %v1600 = vadd.f32 %v1599, %v1585
  %v1601 = vadd.f32 %v1600, %v1586
  %v1602 = vadd.f32 %v1601, %v1587
  %v1603 = vadd.f32 %v1602, %v1588
  %v1604 = vadd.f32 %v1603, %v1589
  %v1605 = vadd.f32 %v1604, %v1590
  %v1606 = vadd.f32 %v1605, %v1591
  %v1607 = vrot.slane %v1606, 4
  %v1608 = vadd.f32 %v1606, %v1607
  %v1609 = vrot.slane %v1608, 2
  %v1610 = vadd.f32 %v1608, %v1609
  %v1611 = vrot.slane %v1610, 1
  %v1612 = vadd.f32 %v1610, %v1611
  %v1613 = vmul.f32 %v1612, %v1558
  %v1614 = vadd.f32 %v1613, 1e-05
  %v1615 = vrsqrt.pop %v1614
  %v1616 = vmul.f32 %v1560, %v1615
  %v1617 = vmul.f32 %v1561, %v1615
  %v1618 = vmul.f32 %v1562, %v1615
  %v1619 = vmul.f32 %v1563, %v1615
  %v1620 = vmul.f32 %v1564, %v1615
  %v1621 = vmul.f32 %v1565, %v1615
  %v1622 = vmul.f32 %v1566, %v1615
  %v1623 = vmul.f32 %v1567, %v1615
  %v1624 = vmul.f32 %v1568, %v1615
  %v1625 = vmul.f32 %v1569, %v1615
  %v1626 = vmul.f32 %v1570, %v1615
  %v1627 = vmul.f32 %v1571, %v1615
  %v1628 = vmul.f32 %v1572, %v1615
  %v1629 = vmul.f32 %v1573, %v1615
  %v1630 = vmul.f32 %v1574, %v1615
  %v1631 = vmul.f32 %v1575, %v1615
  %v1632 = vld [vmem:[%s3] sm:$0x1]
  %v1634 = vlaneseq
  %v1635 = vshrl.u32 %v1634, 7
  %v1636 = vsub.s32 0, %v1635
  %v1637 = vrot.slane %v1632, %v1636
  %v1639 = vmul.f32 %v1616, %v1637
  %v1640 = vmul.f32 %v1617, %v1637
  %v1641 = vmul.f32 %v1618, %v1637
  %v1642 = vmul.f32 %v1619, %v1637
  %v1643 = vmul.f32 %v1620, %v1637
  %v1644 = vmul.f32 %v1621, %v1637
  %v1645 = vmul.f32 %v1622, %v1637
  %v1646 = vmul.f32 %v1623, %v1637
  %v1647 = vmul.f32 %v1624, %v1637
  %v1648 = vmul.f32 %v1625, %v1637
  %v1649 = vmul.f32 %v1626, %v1637
  %v1650 = vmul.f32 %v1627, %v1637
  %v1651 = vmul.f32 %v1628, %v1637
  %v1652 = vmul.f32 %v1629, %v1637
  %v1653 = vmul.f32 %v1630, %v1637
  %v1654 = vmul.f32 %v1631, %v1637
  %v1655 = vld [vmem:[%s4] sm:$0x1]
  %v1657 = vlaneseq
  %v1658 = vshrl.u32 %v1657, 7
  %v1659 = vsub.s32 0, %v1658
  %v1660 = vrot.slane %v1655, %v1659
  %v1662 = vadd.f32 %v1639, %v1660
  %v1663 = vadd.f32 %v1640, %v1660
  %v1664 = vadd.f32 %v1641, %v1660
  %v1665 = vadd.f32 %v1642, %v1660
  %v1666 = vadd.f32 %v1643, %v1660
  %v1667 = vadd.f32 %v1644, %v1660
  %v1668 = vadd.f32 %v1645, %v1660
  %v1669 = vadd.f32 %v1646, %v1660
  %v1670 = vadd.f32 %v1647, %v1660
  %v1671 = vadd.f32 %v1648, %v1660
  %v1672 = vadd.f32 %v1649, %v1660
  %v1673 = vadd.f32 %v1650, %v1660
  %v1674 = vadd.f32 %v1651, %v1660
  %v1675 = vadd.f32 %v1652, %v1660
  %v1676 = vadd.f32 %v1653, %v1660
  %v1677 = vadd.f32 %v1654, %v1660
  %v1678 = vmax.f32 %v1662, 0.0
  %v1679 = vmax.f32 %v1663, 0.0
  %v1680 = vmax.f32 %v1664, 0.0
  %v1681 = vmax.f32 %v1665, 0.0
  %v1682 = vmax.f32 %v1666, 0.0
  %v1683 = vmax.f32 %v1667, 0.0
  %v1684 = vmax.f32 %v1668, 0.0
  %v1685 = vmax.f32 %v1669, 0.0
  %v1686 = vmax.f32 %v1670, 0.0
  %v1687 = vmax.f32 %v1671, 0.0
  %v1688 = vmax.f32 %v1672, 0.0
  %v1689 = vmax.f32 %v1673, 0.0
  %v1690 = vmax.f32 %v1674, 0.0
  %v1691 = vmax.f32 %v1675, 0.0
  %v1692 = vmax.f32 %v1676, 0.0
  %v1693 = vmax.f32 %v1677, 0.0
  %v1694 = vmax.f32 %v1678, %v1682
  %v1695 = vmax.f32 %v1679, %v1683
  %v1696 = vmax.f32 %v1680, %v1684
  %v1697 = vmax.f32 %v1681, %v1685
  %v1698 = vmax.f32 %v1686, %v1690
  %v1699 = vmax.f32 %v1687, %v1691
  %v1700 = vmax.f32 %v1688, %v1692
  %v1701 = vmax.f32 %v1689, %v1693
  %v1702 = vmax.f32 %v1694, %v1698
  %v1703 = vmax.f32 %v1695, %v1699
  %v1704 = vmax.f32 %v1696, %v1700
  %v1705 = vmax.f32 %v1697, %v1701
  %v1706 = vpack.c.bf16 %v1703, %v1702
  %v1707 = vpack.c.bf16 %v1705, %v1704
  %v1710 = vunpack.c.l.b16 %v1706
  %v1711 = vunpack.c.h.b16 %v1706
  %v1712 = vunpack.c.l.b16 %v1707
  %v1713 = vunpack.c.h.b16 %v1707
  %v1714 = vpack.c.b16 %v1710, %v1710
  %v1715 = vpack.c.b16 %v1711, %v1711
  %v1716 = vpack.c.b16 %v1712, %v1712
  %v1717 = vpack.c.b16 %v1713, %v1713
  %1722 = vst [vmem:[%s5] sm:$0xf] %v1714
  %1723 = vst [vmem:[%s5 + $0x4] sm:$0xf] %v1715
  %1724 = vst [vmem:[%s5 + $0x8] sm:$0xf] %v1716
  %1725 = vst [vmem:[%s5 + $0xc] sm:$0xf] %v1717
  // Predicated region
  $region22: #{toy_conv_forward.4} parent=0 // pred_check
    _
  $region23: #{toy_conv_forward.4} parent=0 // pred_check_branch
    %1727 = sbr.rel (0) target = $region25
  $region24: #{toy_conv_forward.4} parent=0 // pred_region
    _
  $region25: #{toy_conv_forward.4} parent=0 // pred_fallthru
    _
  // Predicated region
  $region26: #{toy_conv_forward.4} parent=0 // pred_check
    _
  $region27: #{toy_conv_forward.4} parent=0 // pred_check_branch
    %1729 = sbr.rel (0) target = $region29
  $region28: #{toy_conv_forward.4} parent=0 // pred_region
    _
  $region29: #{toy_conv_forward.4} parent=0 // pred_fallthru
    _

// kernel: toy_conv_forward.5
$region0: #{toy_conv_forward.5}
  #allocation0 [shape = 'u32[]', space=smem, size = 0x4, offset = 0x4, fixed_abs, tag = 'smem constant byte address 0x4 - core index']
  #allocation1 [shape = 'u32[144,128]{1,0:T(1,128)}', space=vmem, size = 0x12000, scoped, tag = 'internal scratch']
  %s0 = inlined_call_operand.vmem [shape: bf16[2,2048], index: 0, kind: input, shape index: {}]
  %s1 = inlined_call_operand.vmem [shape: bf16[2048,128], index: 1, kind: input, shape index: {}]
  %s2 = inlined_call_operand.vmem [shape: f32[1,128], index: 2, kind: input, shape index: {}]
  %s3 = inlined_call_operand.hbm [shape: f32[2,128], index: 3, kind: output, shape index: {}]
  %s4 = sld [smem:[#allocation0]]
  $region22: #{toy_conv_forward.5} parent=0
    _
  %s6 = ssub.s32 1, %s4
  %s7 = scalar_select 0, %s6, %s4
  $region1: #{toy_conv_forward.5} parent=0
    #allocation2 [shape = 'u8[1024]{0}', space=vmem, size = 0x400, scoped, tag = 'output window, operand 0, single buffered']
    #allocation3 [shape = 's32[1]{0}', space=sflag, size = 0x4, scoped, tag = 'scoped memory for toy_conv_forward.5']
    %8 = vsyncpa [#allocation3], 0
    // Predicated region
    $region2: #{toy_conv_forward.5} parent=1 // pred_check
      _
    $region3: #{toy_conv_forward.5} parent=1 // pred_check_branch
      %10 = sbr.rel (0) target = $region5
    $region4: #{toy_conv_forward.5} parent=1 // pred_region
      _
    $region5: #{toy_conv_forward.5} parent=1 // pred_fallthru
      _
    // Predicated region
    $region6: #{toy_conv_forward.5} parent=1 // pred_check
      _
    $region7: #{toy_conv_forward.5} parent=1 // pred_check_branch
      %12 = sbr.rel (0) target = $region9
    $region8: #{toy_conv_forward.5} parent=1 // pred_region
      _
    $region9: #{toy_conv_forward.5} parent=1 // pred_fallthru
      _
    // Predicated region
    $region10: #{toy_conv_forward.5} parent=1 // pred_check
      _
    $region11: #{toy_conv_forward.5} parent=1 // pred_check_branch
      %14 = sbr.rel (0) target = $region13
    $region12: #{toy_conv_forward.5} parent=1 // pred_region
      _
    $region13: #{toy_conv_forward.5} parent=1 // pred_fallthru
      _
    %v16 = vld [vmem:[%s0] sm:$0xff]
    %v17 = vld [vmem:[%s0 + $0x8] sm:$0xff]
    %v18 = vld [vmem:[%s1] sm:$0xf]
    %v19 = vld [vmem:[%s1 + $0x4] sm:$0xf]
    %v20 = vld [vmem:[%s1 + $0x8] sm:$0xf]
    %v21 = vld [vmem:[%s1 + $0xc] sm:$0xf]
    %v22 = vld [vmem:[%s1 + $0x10] sm:$0xf]
    %v23 = vld [vmem:[%s1 + $0x14] sm:$0xf]
    %v24 = vld [vmem:[%s1 + $0x18] sm:$0xf]
    %v25 = vld [vmem:[%s1 + $0x1c] sm:$0xf]
    %v26 = vld [vmem:[%s1 + $0x20] sm:$0xf]
    %v27 = vld [vmem:[%s1 + $0x24] sm:$0xf]
    %v28 = vld [vmem:[%s1 + $0x28] sm:$0xf]
    %v29 = vld [vmem:[%s1 + $0x2c] sm:$0xf]
    %v30 = vld [vmem:[%s1 + $0x30] sm:$0xf]
    %v31 = vld [vmem:[%s1 + $0x34] sm:$0xf]
    %v32 = vld [vmem:[%s1 + $0x38] sm:$0xf]
    %v33 = vld [vmem:[%s1 + $0x3c] sm:$0xf]
    %v34 = vld [vmem:[%s1 + $0x40] sm:$0xf]
    %v35 = vld [vmem:[%s1 + $0x44] sm:$0xf]
    %v36 = vld [vmem:[%s1 + $0x48] sm:$0xf]
    %v37 = vld [vmem:[%s1 + $0x4c] sm:$0xf]
    %v38 = vld [vmem:[%s1 + $0x50] sm:$0xf]
    %v39 = vld [vmem:[%s1 + $0x54] sm:$0xf]
    %v40 = vld [vmem:[%s1 + $0x58] sm:$0xf]
    %v41 = vld [vmem:[%s1 + $0x5c] sm:$0xf]
    %v42 = vld [vmem:[%s1 + $0x60] sm:$0xf]
    %v43 = vld [vmem:[%s1 + $0x64] sm:$0xf]
    %v44 = vld [vmem:[%s1 + $0x68] sm:$0xf]
    %v45 = vld [vmem:[%s1 + $0x6c] sm:$0xf]
    %v46 = vld [vmem:[%s1 + $0x70] sm:$0xf]
    %v47 = vld [vmem:[%s1 + $0x74] sm:$0xf]
    %v48 = vld [vmem:[%s1 + $0x78] sm:$0xf]
    %v49 = vld [vmem:[%s1 + $0x7c] sm:$0xf]
    %v50 = vld [vmem:[%s1 + $0x80] sm:$0xf]
    %v51 = vld [vmem:[%s1 + $0x84] sm:$0xf]
    %v52 = vld [vmem:[%s1 + $0x88] sm:$0xf]
    %v53 = vld [vmem:[%s1 + $0x8c] sm:$0xf]
    %v54 = vld [vmem:[%s1 + $0x90] sm:$0xf]
    %v55 = vld [vmem:[%s1 + $0x94] sm:$0xf]
    %v56 = vld [vmem:[%s1 + $0x98] sm:$0xf]
    %v57 = vld [vmem:[%s1 + $0x9c] sm:$0xf]
    %v58 = vld [vmem:[%s1 + $0xa0] sm:$0xf]
    %v59 = vld [vmem:[%s1 + $0xa4] sm:$0xf]
    %v60 = vld [vmem:[%s1 + $0xa8] sm:$0xf]
    %v61 = vld [vmem:[%s1 + $0xac] sm:$0xf]
    %v62 = vld [vmem:[%s1 + $0xb0] sm:$0xf]
    %v63 = vld [vmem:[%s1 + $0xb4] sm:$0xf]
    %v64 = vld [vmem:[%s1 + $0xb8] sm:$0xf]
    %v65 = vld [vmem:[%s1 + $0xbc] sm:$0xf]
    %v66 = vld [vmem:[%s1 + $0xc0] sm:$0xf]
    %v67 = vld [vmem:[%s1 + $0xc4] sm:$0xf]
    %v68 = vld [vmem:[%s1 + $0xc8] sm:$0xf]
    %v69 = vld [vmem:[%s1 + $0xcc] sm:$0xf]
    %v70 = vld [vmem:[%s1 + $0xd0] sm:$0xf]
    %v71 = vld [vmem:[%s1 + $0xd4] sm:$0xf]
    %v72 = vld [vmem:[%s1 + $0xd8] sm:$0xf]
    %v73 = vld [vmem:[%s1 + $0xdc] sm:$0xf]
    %v74 = vld [vmem:[%s1 + $0xe0] sm:$0xf]
    %v75 = vld [vmem:[%s1 + $0xe4] sm:$0xf]
    %v76 = vld [vmem:[%s1 + $0xe8] sm:$0xf]
    %v77 = vld [vmem:[%s1 + $0xec] sm:$0xf]
    %v78 = vld [vmem:[%s1 + $0xf0] sm:$0xf]
    %v79 = vld [vmem:[%s1 + $0xf4] sm:$0xf]
    %v80 = vld [vmem:[%s1 + $0xf8] sm:$0xf]
    %v81 = vld [vmem:[%s1 + $0xfc] sm:$0xf]
    %v82 = vld [vmem:[%s1 + $0x100] sm:$0xf]
    %v83 = vld [vmem:[%s1 + $0x104] sm:$0xf]
    %v84 = vld [vmem:[%s1 + $0x108] sm:$0xf]
    %v85 = vld [vmem:[%s1 + $0x10c] sm:$0xf]
    %v86 = vld [vmem:[%s1 + $0x110] sm:$0xf]
    %v87 = vld [vmem:[%s1 + $0x114] sm:$0xf]
    %v88 = vld [vmem:[%s1 + $0x118] sm:$0xf]
    %v89 = vld [vmem:[%s1 + $0x11c] sm:$0xf]
    %v90 = vld [vmem:[%s1 + $0x120] sm:$0xf]
    %v91 = vld [vmem:[%s1 + $0x124] sm:$0xf]
    %v92 = vld [vmem:[%s1 + $0x128] sm:$0xf]
    %v93 = vld [vmem:[%s1 + $0x12c] sm:$0xf]
    %v94 = vld [vmem:[%s1 + $0x130] sm:$0xf]
    %v95 = vld [vmem:[%s1 + $0x134] sm:$0xf]
    %v96 = vld [vmem:[%s1 + $0x138] sm:$0xf]
    %v97 = vld [vmem:[%s1 + $0x13c] sm:$0xf]
    %v98 = vld [vmem:[%s1 + $0x140] sm:$0xf]
    %v99 = vld [vmem:[%s1 + $0x144] sm:$0xf]
    %v100 = vld [vmem:[%s1 + $0x148] sm:$0xf]
    %v101 = vld [vmem:[%s1 + $0x14c] sm:$0xf]
    %v102 = vld [vmem:[%s1 + $0x150] sm:$0xf]
    %v103 = vld [vmem:[%s1 + $0x154] sm:$0xf]
    %v104 = vld [vmem:[%s1 + $0x158] sm:$0xf]
    %v105 = vld [vmem:[%s1 + $0x15c] sm:$0xf]
    %v106 = vld [vmem:[%s1 + $0x160] sm:$0xf]
    %v107 = vld [vmem:[%s1 + $0x164] sm:$0xf]
    %v108 = vld [vmem:[%s1 + $0x168] sm:$0xf]
    %v109 = vld [vmem:[%s1 + $0x16c] sm:$0xf]
    %v110 = vld [vmem:[%s1 + $0x170] sm:$0xf]
    %v111 = vld [vmem:[%s1 + $0x174] sm:$0xf]
    %v112 = vld [vmem:[%s1 + $0x178] sm:$0xf]
    %v113 = vld [vmem:[%s1 + $0x17c] sm:$0xf]
    %v114 = vld [vmem:[%s1 + $0x180] sm:$0xf]
    %v115 = vld [vmem:[%s1 + $0x184] sm:$0xf]
    %v116 = vld [vmem:[%s1 + $0x188] sm:$0xf]
    %v117 = vld [vmem:[%s1 + $0x18c] sm:$0xf]
    %v118 = vld [vmem:[%s1 + $0x190] sm:$0xf]
    %v119 = vld [vmem:[%s1 + $0x194] sm:$0xf]
    %v120 = vld [vmem:[%s1 + $0x198] sm:$0xf]
    %v121 = vld [vmem:[%s1 + $0x19c] sm:$0xf]
    %v122 = vld [vmem:[%s1 + $0x1a0] sm:$0xf]
    %v123 = vld [vmem:[%s1 + $0x1a4] sm:$0xf]
    %v124 = vld [vmem:[%s1 + $0x1a8] sm:$0xf]
    %v125 = vld [vmem:[%s1 + $0x1ac] sm:$0xf]
    %v126 = vld [vmem:[%s1 + $0x1b0] sm:$0xf]
    %v127 = vld [vmem:[%s1 + $0x1b4] sm:$0xf]
    %v128 = vld [vmem:[%s1 + $0x1b8] sm:$0xf]
    %v129 = vld [vmem:[%s1 + $0x1bc] sm:$0xf]
    %v130 = vld [vmem:[%s1 + $0x1c0] sm:$0xf]
    %v131 = vld [vmem:[%s1 + $0x1c4] sm:$0xf]
    %v132 = vld [vmem:[%s1 + $0x1c8] sm:$0xf]
    %v133 = vld [vmem:[%s1 + $0x1cc] sm:$0xf]
    %v134 = vld [vmem:[%s1 + $0x1d0] sm:$0xf]
    %v135 = vld [vmem:[%s1 + $0x1d4] sm:$0xf]
    %v136 = vld [vmem:[%s1 + $0x1d8] sm:$0xf]
    %v137 = vld [vmem:[%s1 + $0x1dc] sm:$0xf]
    %v138 = vld [vmem:[%s1 + $0x1e0] sm:$0xf]
    %v139 = vld [vmem:[%s1 + $0x1e4] sm:$0xf]
    %v140 = vld [vmem:[%s1 + $0x1e8] sm:$0xf]
    %v141 = vld [vmem:[%s1 + $0x1ec] sm:$0xf]
    %v142 = vld [vmem:[%s1 + $0x1f0] sm:$0xf]
    %v143 = vld [vmem:[%s1 + $0x1f4] sm:$0xf]
    %v144 = vld [vmem:[%s1 + $0x1f8] sm:$0xf]
    %v145 = vld [vmem:[%s1 + $0x1fc] sm:$0xf]
    %v146 = vld [vmem:[%s1 + $0x200] sm:$0xf]
    %v147 = vld [vmem:[%s1 + $0x204] sm:$0xf]
    %v148 = vld [vmem:[%s1 + $0x208] sm:$0xf]
    %v149 = vld [vmem:[%s1 + $0x20c] sm:$0xf]
    %v150 = vld [vmem:[%s1 + $0x210] sm:$0xf]
    %v151 = vld [vmem:[%s1 + $0x214] sm:$0xf]
    %v152 = vld [vmem:[%s1 + $0x218] sm:$0xf]
    %v153 = vld [vmem:[%s1 + $0x21c] sm:$0xf]
    %v154 = vld [vmem:[%s1 + $0x220] sm:$0xf]
    %v155 = vld [vmem:[%s1 + $0x224] sm:$0xf]
    %v156 = vld [vmem:[%s1 + $0x228] sm:$0xf]
    %v157 = vld [vmem:[%s1 + $0x22c] sm:$0xf]
    %v158 = vld [vmem:[%s1 + $0x230] sm:$0xf]
    %v159 = vld [vmem:[%s1 + $0x234] sm:$0xf]
    %v160 = vld [vmem:[%s1 + $0x238] sm:$0xf]
    %v161 = vld [vmem:[%s1 + $0x23c] sm:$0xf]
    %v162 = vld [vmem:[%s1 + $0x240] sm:$0xf]
    %v163 = vld [vmem:[%s1 + $0x244] sm:$0xf]
    %v164 = vld [vmem:[%s1 + $0x248] sm:$0xf]
    %v165 = vld [vmem:[%s1 + $0x24c] sm:$0xf]
    %v166 = vld [vmem:[%s1 + $0x250] sm:$0xf]
    %v167 = vld [vmem:[%s1 + $0x254] sm:$0xf]
    %v168 = vld [vmem:[%s1 + $0x258] sm:$0xf]
    %v169 = vld [vmem:[%s1 + $0x25c] sm:$0xf]
    %v170 = vld [vmem:[%s1 + $0x260] sm:$0xf]
    %v171 = vld [vmem:[%s1 + $0x264] sm:$0xf]
    %v172 = vld [vmem:[%s1 + $0x268] sm:$0xf]
    %v173 = vld [vmem:[%s1 + $0x26c] sm:$0xf]
    %v174 = vld [vmem:[%s1 + $0x270] sm:$0xf]
    %v175 = vld [vmem:[%s1 + $0x274] sm:$0xf]
    %v176 = vld [vmem:[%s1 + $0x278] sm:$0xf]
    %v177 = vld [vmem:[%s1 + $0x27c] sm:$0xf]
    %v178 = vld [vmem:[%s1 + $0x280] sm:$0xf]
    %v179 = vld [vmem:[%s1 + $0x284] sm:$0xf]
    %v180 = vld [vmem:[%s1 + $0x288] sm:$0xf]
    %v181 = vld [vmem:[%s1 + $0x28c] sm:$0xf]
    %v182 = vld [vmem:[%s1 + $0x290] sm:$0xf]
    %v183 = vld [vmem:[%s1 + $0x294] sm:$0xf]
    %v184 = vld [vmem:[%s1 + $0x298] sm:$0xf]
    %v185 = vld [vmem:[%s1 + $0x29c] sm:$0xf]
    %v186 = vld [vmem:[%s1 + $0x2a0] sm:$0xf]
    %v187 = vld [vmem:[%s1 + $0x2a4] sm:$0xf]
    %v188 = vld [vmem:[%s1 + $0x2a8] sm:$0xf]
    %v189 = vld [vmem:[%s1 + $0x2ac] sm:$0xf]
    %v190 = vld [vmem:[%s1 + $0x2b0] sm:$0xf]
    %v191 = vld [vmem:[%s1 + $0x2b4] sm:$0xf]
    %v192 = vld [vmem:[%s1 + $0x2b8] sm:$0xf]
    %v193 = vld [vmem:[%s1 + $0x2bc] sm:$0xf]
    %v194 = vld [vmem:[%s1 + $0x2c0] sm:$0xf]
    %v195 = vld [vmem:[%s1 + $0x2c4] sm:$0xf]
    %v196 = vld [vmem:[%s1 + $0x2c8] sm:$0xf]
    %v197 = vld [vmem:[%s1 + $0x2cc] sm:$0xf]
    %v198 = vld [vmem:[%s1 + $0x2d0] sm:$0xf]
    %v199 = vld [vmem:[%s1 + $0x2d4] sm:$0xf]
    %v200 = vld [vmem:[%s1 + $0x2d8] sm:$0xf]
    %v201 = vld [vmem:[%s1 + $0x2dc] sm:$0xf]
    %v202 = vld [vmem:[%s1 + $0x2e0] sm:$0xf]
    %v203 = vld [vmem:[%s1 + $0x2e4] sm:$0xf]
    %v204 = vld [vmem:[%s1 + $0x2e8] sm:$0xf]
    %v205 = vld [vmem:[%s1 + $0x2ec] sm:$0xf]
    %v206 = vld [vmem:[%s1 + $0x2f0] sm:$0xf]
    %v207 = vld [vmem:[%s1 + $0x2f4] sm:$0xf]
    %v208 = vld [vmem:[%s1 + $0x2f8] sm:$0xf]
    %v209 = vld [vmem:[%s1 + $0x2fc] sm:$0xf]
    %v210 = vld [vmem:[%s1 + $0x300] sm:$0xf]
    %v211 = vld [vmem:[%s1 + $0x304] sm:$0xf]
    %v212 = vld [vmem:[%s1 + $0x308] sm:$0xf]
    %v213 = vld [vmem:[%s1 + $0x30c] sm:$0xf]
    %v214 = vld [vmem:[%s1 + $0x310] sm:$0xf]
    %v215 = vld [vmem:[%s1 + $0x314] sm:$0xf]
    %v216 = vld [vmem:[%s1 + $0x318] sm:$0xf]
    %v217 = vld [vmem:[%s1 + $0x31c] sm:$0xf]
    %v218 = vld [vmem:[%s1 + $0x320] sm:$0xf]
    %v219 = vld [vmem:[%s1 + $0x324] sm:$0xf]
    %v220 = vld [vmem:[%s1 + $0x328] sm:$0xf]
    %v221 = vld [vmem:[%s1 + $0x32c] sm:$0xf]
    %v222 = vld [vmem:[%s1 + $0x330] sm:$0xf]
    %v223 = vld [vmem:[%s1 + $0x334] sm:$0xf]
    %v224 = vld [vmem:[%s1 + $0x338] sm:$0xf]
    %v225 = vld [vmem:[%s1 + $0x33c] sm:$0xf]
    %v226 = vld [vmem:[%s1 + $0x340] sm:$0xf]
    %v227 = vld [vmem:[%s1 + $0x344] sm:$0xf]
    %v228 = vld [vmem:[%s1 + $0x348] sm:$0xf]
    %v229 = vld [vmem:[%s1 + $0x34c] sm:$0xf]
    %v230 = vld [vmem:[%s1 + $0x350] sm:$0xf]
    %v231 = vld [vmem:[%s1 + $0x354] sm:$0xf]
    %v232 = vld [vmem:[%s1 + $0x358] sm:$0xf]
    %v233 = vld [vmem:[%s1 + $0x35c] sm:$0xf]
    %v234 = vld [vmem:[%s1 + $0x360] sm:$0xf]
    %v235 = vld [vmem:[%s1 + $0x364] sm:$0xf]
    %v236 = vld [vmem:[%s1 + $0x368] sm:$0xf]
    %v237 = vld [vmem:[%s1 + $0x36c] sm:$0xf]
    %v238 = vld [vmem:[%s1 + $0x370] sm:$0xf]
    %v239 = vld [vmem:[%s1 + $0x374] sm:$0xf]
    %v240 = vld [vmem:[%s1 + $0x378] sm:$0xf]
    %v241 = vld [vmem:[%s1 + $0x37c] sm:$0xf]
    %v242 = vld [vmem:[%s1 + $0x380] sm:$0xf]
    %v243 = vld [vmem:[%s1 + $0x384] sm:$0xf]
    %v244 = vld [vmem:[%s1 + $0x388] sm:$0xf]
    %v245 = vld [vmem:[%s1 + $0x38c] sm:$0xf]
    %v246 = vld [vmem:[%s1 + $0x390] sm:$0xf]
    %v247 = vld [vmem:[%s1 + $0x394] sm:$0xf]
    %v248 = vld [vmem:[%s1 + $0x398] sm:$0xf]
    %v249 = vld [vmem:[%s1 + $0x39c] sm:$0xf]
    %v250 = vld [vmem:[%s1 + $0x3a0] sm:$0xf]
    %v251 = vld [vmem:[%s1 + $0x3a4] sm:$0xf]
    %v252 = vld [vmem:[%s1 + $0x3a8] sm:$0xf]
    %v253 = vld [vmem:[%s1 + $0x3ac] sm:$0xf]
    %v254 = vld [vmem:[%s1 + $0x3b0] sm:$0xf]
    %v255 = vld [vmem:[%s1 + $0x3b4] sm:$0xf]
    %v256 = vld [vmem:[%s1 + $0x3b8] sm:$0xf]
    %v257 = vld [vmem:[%s1 + $0x3bc] sm:$0xf]
    %v258 = vld [vmem:[%s1 + $0x3c0] sm:$0xf]
    %v259 = vld [vmem:[%s1 + $0x3c4] sm:$0xf]
    %v260 = vld [vmem:[%s1 + $0x3c8] sm:$0xf]
    %v261 = vld [vmem:[%s1 + $0x3cc] sm:$0xf]
    %v262 = vld [vmem:[%s1 + $0x3d0] sm:$0xf]
    %v263 = vld [vmem:[%s1 + $0x3d4] sm:$0xf]
    %v264 = vld [vmem:[%s1 + $0x3d8] sm:$0xf]
    %v265 = vld [vmem:[%s1 + $0x3dc] sm:$0xf]
    %v266 = vld [vmem:[%s1 + $0x3e0] sm:$0xf]
    %v267 = vld [vmem:[%s1 + $0x3e4] sm:$0xf]
    %v268 = vld [vmem:[%s1 + $0x3e8] sm:$0xf]
    %v269 = vld [vmem:[%s1 + $0x3ec] sm:$0xf]
    %v270 = vld [vmem:[%s1 + $0x3f0] sm:$0xf]
    %v271 = vld [vmem:[%s1 + $0x3f4] sm:$0xf]
    %v272 = vld [vmem:[%s1 + $0x3f8] sm:$0xf]
    %v273 = vld [vmem:[%s1 + $0x3fc] sm:$0xf]
    %v274 = vld [vmem:[%s2] sm:$0x1]
    %v276 = vlaneseq
    %v277 = vshrl.u32 %v276, 7
    %v278 = vsub.s32 0, %v277
    %v279 = vrot.slane %v274, %v278
    %v283 = vcombine.high %v16, %v16
    %v285 = vunpack.c.l.s4 1966171168
    %v286 = vunpack.c.0.s8 %v285
    %v287 = vlaneseq
    %v288 = vshrl.u32 %v287, 7
    %v289 = vsub.s32 %v286, %v288
    %v290 = vrot.slane %v16, %v289
    %v292 = vunpack.c.l.s4 1966171168
    %v293 = vunpack.c.0.s8 %v292
    %v294 = vlaneseq
    %v295 = vshrl.u32 %v294, 7
    %v296 = vsub.s32 %v293, %v295
    %v297 = vrot.slane %v283, %v296
    %v298 = vcombine.high %v290, %v290
    %v299 = vcombine.high %v297, %v297
    %v301 = vunpack.c.l.s4 1966171168
    %v302 = vunpack.c.0.s8 %v301
    %v303 = vlaneseq
    %v304 = vshrl.u32 %v303, 7
    %v305 = vsub.s32 %v302, %v304
    %v306 = vrot.slane %v290, %v305
    %v308 = vunpack.c.l.s4 1966171168
    %v309 = vunpack.c.0.s8 %v308
    %v310 = vlaneseq
    %v311 = vshrl.u32 %v310, 7
    %v312 = vsub.s32 %v309, %v311
    %v313 = vrot.slane %v297, %v312
    %v315 = vunpack.c.l.s4 1966171168
    %v316 = vunpack.c.0.s8 %v315
    %v317 = vlaneseq
    %v318 = vshrl.u32 %v317, 7
    %v319 = vsub.s32 %v316, %v318
    %v320 = vrot.slane %v298, %v319
    %v322 = vunpack.c.l.s4 1966171168
    %v323 = vunpack.c.0.s8 %v322
    %v324 = vlaneseq
    %v325 = vshrl.u32 %v324, 7
    %v326 = vsub.s32 %v323, %v325
    %v327 = vrot.slane %v299, %v326
    %v328 = vcombine.high %v306, %v306
    %v329 = vcombine.high %v313, %v313
    %v330 = vcombine.high %v320, %v320
    %v331 = vcombine.high %v327, %v327
    %v332 = vcombine.high %v17, %v17
    %v334 = vunpack.c.l.s4 1966171168
    %v335 = vunpack.c.0.s8 %v334
    %v336 = vlaneseq
    %v337 = vshrl.u32 %v336, 7
    %v338 = vsub.s32 %v335, %v337
    %v339 = vrot.slane %v17, %v338
    %v341 = vunpack.c.l.s4 1966171168
    %v342 = vunpack.c.0.s8 %v341
    %v343 = vlaneseq
    %v344 = vshrl.u32 %v343, 7
    %v345 = vsub.s32 %v342, %v344
    %v346 = vrot.slane %v332, %v345
    %v347 = vcombine.high %v339, %v339
    %v348 = vcombine.high %v346, %v346
    %v350 = vunpack.c.l.s4 1966171168
    %v351 = vunpack.c.0.s8 %v350
    %v352 = vlaneseq
    %v353 = vshrl.u32 %v352, 7
    %v354 = vsub.s32 %v351, %v353
    %v355 = vrot.slane %v339, %v354
    %v357 = vunpack.c.l.s4 1966171168
    %v358 = vunpack.c.0.s8 %v357
    %v359 = vlaneseq
    %v360 = vshrl.u32 %v359, 7
    %v361 = vsub.s32 %v358, %v360
    %v362 = vrot.slane %v346, %v361
    %v364 = vunpack.c.l.s4 1966171168
    %v365 = vunpack.c.0.s8 %v364
    %v366 = vlaneseq
    %v367 = vshrl.u32 %v366, 7
    %v368 = vsub.s32 %v365, %v367
    %v369 = vrot.slane %v347, %v368
    %v371 = vunpack.c.l.s4 1966171168
    %v372 = vunpack.c.0.s8 %v371
    %v373 = vlaneseq
    %v374 = vshrl.u32 %v373, 7
    %v375 = vsub.s32 %v372, %v374
    %v376 = vrot.slane %v348, %v375
    %v377 = vcombine.high %v355, %v355
    %v378 = vcombine.high %v362, %v362
    %v379 = vcombine.high %v369, %v369
    %v380 = vcombine.high %v376, %v376
    %v653 = vunpack.c.l.b16 %v18
    %v654 = vunpack.c.l.b16 %v19
    %v655 = vunpack.c.l.b16 %v20
    %v656 = vunpack.c.l.b16 %v21
    %v657 = vunpack.c.l.b16 %v22
    %v658 = vunpack.c.l.b16 %v23
    %v659 = vunpack.c.l.b16 %v24
    %v660 = vunpack.c.l.b16 %v25
    %v661 = vunpack.c.l.b16 %v26
    %v662 = vunpack.c.l.b16 %v27
    %v663 = vunpack.c.l.b16 %v28
    %v664 = vunpack.c.l.b16 %v29
    %v665 = vunpack.c.l.b16 %v30
    %v666 = vunpack.c.l.b16 %v31
    %v667 = vunpack.c.l.b16 %v32
    %v668 = vunpack.c.l.b16 %v33
    %v669 = vunpack.c.l.b16 %v34
    %v670 = vunpack.c.l.b16 %v35
    %v671 = vunpack.c.l.b16 %v36
    %v672 = vunpack.c.l.b16 %v37
    %v673 = vunpack.c.l.b16 %v38
    %v674 = vunpack.c.l.b16 %v39
    %v675 = vunpack.c.l.b16 %v40
    %v676 = vunpack.c.l.b16 %v41
    %v677 = vunpack.c.l.b16 %v42
    %v678 = vunpack.c.l.b16 %v43
    %v679 = vunpack.c.l.b16 %v44
    %v680 = vunpack.c.l.b16 %v45
    %v681 = vunpack.c.l.b16 %v46
    %v682 = vunpack.c.l.b16 %v47
    %v683 = vunpack.c.l.b16 %v48
    %v684 = vunpack.c.l.b16 %v49
    %v685 = vunpack.c.l.b16 %v50
    %v686 = vunpack.c.l.b16 %v51
    %v687 = vunpack.c.l.b16 %v52
    %v688 = vunpack.c.l.b16 %v53
    %v689 = vunpack.c.l.b16 %v54
    %v690 = vunpack.c.l.b16 %v55
    %v691 = vunpack.c.l.b16 %v56
    %v692 = vunpack.c.l.b16 %v57
    %v693 = vunpack.c.l.b16 %v58
    %v694 = vunpack.c.l.b16 %v59
    %v695 = vunpack.c.l.b16 %v60
    %v696 = vunpack.c.l.b16 %v61
    %v697 = vunpack.c.l.b16 %v62
    %v698 = vunpack.c.l.b16 %v63
    %v699 = vunpack.c.l.b16 %v64
    %v700 = vunpack.c.l.b16 %v65
    %v701 = vunpack.c.l.b16 %v66
    %v702 = vunpack.c.l.b16 %v67
    %v703 = vunpack.c.l.b16 %v68
    %v704 = vunpack.c.l.b16 %v69
    %v705 = vunpack.c.l.b16 %v70
    %v706 = vunpack.c.l.b16 %v71
    %v707 = vunpack.c.l.b16 %v72
    %v708 = vunpack.c.l.b16 %v73
    %v709 = vunpack.c.l.b16 %v74
    %v710 = vunpack.c.l.b16 %v75
    %v711 = vunpack.c.l.b16 %v76
    %v712 = vunpack.c.l.b16 %v77
    %v713 = vunpack.c.l.b16 %v78
    %v714 = vunpack.c.l.b16 %v79
    %v715 = vunpack.c.l.b16 %v80
    %v716 = vunpack.c.l.b16 %v81
    %v717 = vunpack.c.l.b16 %v82
    %v718 = vunpack.c.l.b16 %v83
    %v719 = vunpack.c.l.b16 %v84
    %v720 = vunpack.c.l.b16 %v85
    %v721 = vunpack.c.l.b16 %v86
    %v722 = vunpack.c.l.b16 %v87
    %v723 = vunpack.c.l.b16 %v88
    %v724 = vunpack.c.l.b16 %v89
    %v725 = vunpack.c.l.b16 %v90
    %v726 = vunpack.c.l.b16 %v91
    %v727 = vunpack.c.l.b16 %v92
    %v728 = vunpack.c.l.b16 %v93
    %v729 = vunpack.c.l.b16 %v94
    %v730 = vunpack.c.l.b16 %v95
    %v731 = vunpack.c.l.b16 %v96
    %v732 = vunpack.c.l.b16 %v97
    %v733 = vunpack.c.l.b16 %v98
    %v734 = vunpack.c.l.b16 %v99
    %v735 = vunpack.c.l.b16 %v100
    %v736 = vunpack.c.l.b16 %v101
    %v737 = vunpack.c.l.b16 %v102
    %v738 = vunpack.c.l.b16 %v103
    %v739 = vunpack.c.l.b16 %v104
    %v740 = vunpack.c.l.b16 %v105
    %v741 = vunpack.c.l.b16 %v106
    %v742 = vunpack.c.l.b16 %v107
    %v743 = vunpack.c.l.b16 %v108
    %v744 = vunpack.c.l.b16 %v109
    %v745 = vunpack.c.l.b16 %v110
    %v746 = vunpack.c.l.b16 %v111
    %v747 = vunpack.c.l.b16 %v112
    %v748 = vunpack.c.l.b16 %v113
    %v749 = vunpack.c.l.b16 %v114
    %v750 = vunpack.c.l.b16 %v115
    %v751 = vunpack.c.l.b16 %v116
    %v752 = vunpack.c.l.b16 %v117
    %v753 = vunpack.c.l.b16 %v118
    %v754 = vunpack.c.l.b16 %v119
    %v755 = vunpack.c.l.b16 %v120
    %v756 = vunpack.c.l.b16 %v121
    %v757 = vunpack.c.l.b16 %v122
    %v758 = vunpack.c.l.b16 %v123
    %v759 = vunpack.c.l.b16 %v124
    %v760 = vunpack.c.l.b16 %v125
    %v761 = vunpack.c.l.b16 %v126
    %v762 = vunpack.c.l.b16 %v127
    %v763 = vunpack.c.l.b16 %v128
    %v764 = vunpack.c.l.b16 %v129
    %v765 = vunpack.c.l.b16 %v130
    %v766 = vunpack.c.l.b16 %v131
    %v767 = vunpack.c.l.b16 %v132
    %v768 = vunpack.c.l.b16 %v133
    %v769 = vunpack.c.l.b16 %v134
    %v770 = vunpack.c.l.b16 %v135
    %v771 = vunpack.c.l.b16 %v136
    %v772 = vunpack.c.l.b16 %v137
    %v773 = vunpack.c.l.b16 %v138
    %v774 = vunpack.c.l.b16 %v139
    %v775 = vunpack.c.l.b16 %v140
    %v776 = vunpack.c.l.b16 %v141
    %v777 = vunpack.c.l.b16 %v142
    %v778 = vunpack.c.l.b16 %v143
    %v779 = vunpack.c.l.b16 %v144
    %v780 = vunpack.c.l.b16 %v145
    %v781 = vunpack.c.l.b16 %v146
    %v782 = vunpack.c.l.b16 %v147
    %v783 = vunpack.c.l.b16 %v148
    %v784 = vunpack.c.l.b16 %v149
    %v785 = vunpack.c.l.b16 %v150
    %v786 = vunpack.c.l.b16 %v151
    %v787 = vunpack.c.l.b16 %v152
    %v788 = vunpack.c.l.b16 %v153
    %v789 = vunpack.c.l.b16 %v154
    %v790 = vunpack.c.l.b16 %v155
    %v791 = vunpack.c.l.b16 %v156
    %v792 = vunpack.c.l.b16 %v157
    %v793 = vunpack.c.l.b16 %v158
    %v794 = vunpack.c.l.b16 %v159
    %v795 = vunpack.c.l.b16 %v160
    %v796 = vunpack.c.l.b16 %v161
    %v797 = vunpack.c.l.b16 %v162
    %v798 = vunpack.c.l.b16 %v163
    %v799 = vunpack.c.l.b16 %v164
    %v800 = vunpack.c.l.b16 %v165
    %v801 = vunpack.c.l.b16 %v166
    %v802 = vunpack.c.l.b16 %v167
    %v803 = vunpack.c.l.b16 %v168
    %v804 = vunpack.c.l.b16 %v169
    %v805 = vunpack.c.l.b16 %v170
    %v806 = vunpack.c.l.b16 %v171
    %v807 = vunpack.c.l.b16 %v172
    %v808 = vunpack.c.l.b16 %v173
    %v809 = vunpack.c.l.b16 %v174
    %v810 = vunpack.c.l.b16 %v175
    %v811 = vunpack.c.l.b16 %v176
    %v812 = vunpack.c.l.b16 %v177
    %v813 = vunpack.c.l.b16 %v178
    %v814 = vunpack.c.l.b16 %v179
    %v815 = vunpack.c.l.b16 %v180
    %v816 = vunpack.c.l.b16 %v181
    %v817 = vunpack.c.l.b16 %v182
    %v818 = vunpack.c.l.b16 %v183
    %v819 = vunpack.c.l.b16 %v184
    %v820 = vunpack.c.l.b16 %v185
    %v821 = vunpack.c.l.b16 %v186
    %v822 = vunpack.c.l.b16 %v187
    %v823 = vunpack.c.l.b16 %v188
    %v824 = vunpack.c.l.b16 %v189
    %v825 = vunpack.c.l.b16 %v190
    %v826 = vunpack.c.l.b16 %v191
    %v827 = vunpack.c.l.b16 %v192
    %v828 = vunpack.c.l.b16 %v193
    %v829 = vunpack.c.l.b16 %v194
    %v830 = vunpack.c.l.b16 %v195
    %v831 = vunpack.c.l.b16 %v196
    %v832 = vunpack.c.l.b16 %v197
    %v833 = vunpack.c.l.b16 %v198
    %v834 = vunpack.c.l.b16 %v199
    %v835 = vunpack.c.l.b16 %v200
    %v836 = vunpack.c.l.b16 %v201
    %v837 = vunpack.c.l.b16 %v202
    %v838 = vunpack.c.l.b16 %v203
    %v839 = vunpack.c.l.b16 %v204
    %v840 = vunpack.c.l.b16 %v205
    %v841 = vunpack.c.l.b16 %v206
    %v842 = vunpack.c.l.b16 %v207
    %v843 = vunpack.c.l.b16 %v208
    %v844 = vunpack.c.l.b16 %v209
    %v845 = vunpack.c.l.b16 %v210
    %v846 = vunpack.c.l.b16 %v211
    %v847 = vunpack.c.l.b16 %v212
    %v848 = vunpack.c.l.b16 %v213
    %v849 = vunpack.c.l.b16 %v214
    %v850 = vunpack.c.l.b16 %v215
    %v851 = vunpack.c.l.b16 %v216
    %v852 = vunpack.c.l.b16 %v217
    %v853 = vunpack.c.l.b16 %v218
    %v854 = vunpack.c.l.b16 %v219
    %v855 = vunpack.c.l.b16 %v220
    %v856 = vunpack.c.l.b16 %v221
    %v857 = vunpack.c.l.b16 %v222
    %v858 = vunpack.c.l.b16 %v223
    %v859 = vunpack.c.l.b16 %v224
    %v860 = vunpack.c.l.b16 %v225
    %v861 = vunpack.c.l.b16 %v226
    %v862 = vunpack.c.l.b16 %v227
    %v863 = vunpack.c.l.b16 %v228
    %v864 = vunpack.c.l.b16 %v229
    %v865 = vunpack.c.l.b16 %v230
    %v866 = vunpack.c.l.b16 %v231
    %v867 = vunpack.c.l.b16 %v232
    %v868 = vunpack.c.l.b16 %v233
    %v869 = vunpack.c.l.b16 %v234
    %v870 = vunpack.c.l.b16 %v235
    %v871 = vunpack.c.l.b16 %v236
    %v872 = vunpack.c.l.b16 %v237
    %v873 = vunpack.c.l.b16 %v238
    %v874 = vunpack.c.l.b16 %v239
    %v875 = vunpack.c.l.b16 %v240
    %v876 = vunpack.c.l.b16 %v241
    %v877 = vunpack.c.l.b16 %v242
    %v878 = vunpack.c.l.b16 %v243
    %v879 = vunpack.c.l.b16 %v244
    %v880 = vunpack.c.l.b16 %v245
    %v881 = vunpack.c.l.b16 %v246
    %v882 = vunpack.c.l.b16 %v247
    %v883 = vunpack.c.l.b16 %v248
    %v884 = vunpack.c.l.b16 %v249
    %v885 = vunpack.c.l.b16 %v250
    %v886 = vunpack.c.l.b16 %v251
    %v887 = vunpack.c.l.b16 %v252
    %v888 = vunpack.c.l.b16 %v253
    %v889 = vunpack.c.l.b16 %v254
    %v890 = vunpack.c.l.b16 %v255
    %v891 = vunpack.c.l.b16 %v256
    %v892 = vunpack.c.l.b16 %v257
    %v893 = vunpack.c.l.b16 %v258
    %v894 = vunpack.c.l.b16 %v259
    %v895 = vunpack.c.l.b16 %v260
    %v896 = vunpack.c.l.b16 %v261
    %v897 = vunpack.c.l.b16 %v262
    %v898 = vunpack.c.l.b16 %v263
    %v899 = vunpack.c.l.b16 %v264
    %v900 = vunpack.c.l.b16 %v265
    %v901 = vunpack.c.l.b16 %v266
    %v902 = vunpack.c.l.b16 %v267
    %v903 = vunpack.c.l.b16 %v268
    %v904 = vunpack.c.l.b16 %v269
    %v905 = vunpack.c.l.b16 %v270
    %v906 = vunpack.c.l.b16 %v271
    %v907 = vunpack.c.l.b16 %v272
    %v908 = vunpack.c.l.b16 %v273
    %v909 = vpack.c.b16 %v654, %v653
    %v910 = vpack.c.b16 %v656, %v655
    %v911 = vpack.c.b16 %v658, %v657
    %v912 = vpack.c.b16 %v660, %v659
    %v913 = vpack.c.b16 %v662, %v661
    %v914 = vpack.c.b16 %v664, %v663
    %v915 = vpack.c.b16 %v666, %v665
    %v916 = vpack.c.b16 %v668, %v667
    %v917 = vpack.c.b16 %v670, %v669
    %v918 = vpack.c.b16 %v672, %v671
    %v919 = vpack.c.b16 %v674, %v673
    %v920 = vpack.c.b16 %v676, %v675
    %v921 = vpack.c.b16 %v678, %v677
    %v922 = vpack.c.b16 %v680, %v679
    %v923 = vpack.c.b16 %v682, %v681
    %v924 = vpack.c.b16 %v684, %v683
    %v925 = vpack.c.b16 %v686, %v685
    %v926 = vpack.c.b16 %v688, %v687
    %v927 = vpack.c.b16 %v690, %v689
    %v928 = vpack.c.b16 %v692, %v691
    %v929 = vpack.c.b16 %v694, %v693
    %v930 = vpack.c.b16 %v696, %v695
    %v931 = vpack.c.b16 %v698, %v697
    %v932 = vpack.c.b16 %v700, %v699
    %v933 = vpack.c.b16 %v702, %v701
    %v934 = vpack.c.b16 %v704, %v703
    %v935 = vpack.c.b16 %v706, %v705
    %v936 = vpack.c.b16 %v708, %v707
    %v937 = vpack.c.b16 %v710, %v709
    %v938 = vpack.c.b16 %v712, %v711
    %v939 = vpack.c.b16 %v714, %v713
    %v940 = vpack.c.b16 %v716, %v715
    %v941 = vpack.c.b16 %v718, %v717
    %v942 = vpack.c.b16 %v720, %v719
    %v943 = vpack.c.b16 %v722, %v721
    %v944 = vpack.c.b16 %v724, %v723
    %v945 = vpack.c.b16 %v726, %v725
    %v946 = vpack.c.b16 %v728, %v727
    %v947 = vpack.c.b16 %v730, %v729
    %v948 = vpack.c.b16 %v732, %v731
    %v949 = vpack.c.b16 %v734, %v733
    %v950 = vpack.c.b16 %v736, %v735
    %v951 = vpack.c.b16 %v738, %v737
    %v952 = vpack.c.b16 %v740, %v739
    %v953 = vpack.c.b16 %v742, %v741
    %v954 = vpack.c.b16 %v744, %v743
    %v955 = vpack.c.b16 %v746, %v745
    %v956 = vpack.c.b16 %v748, %v747
    %v957 = vpack.c.b16 %v750, %v749
    %v958 = vpack.c.b16 %v752, %v751
    %v959 = vpack.c.b16 %v754, %v753
    %v960 = vpack.c.b16 %v756, %v755
    %v961 = vpack.c.b16 %v758, %v757
    %v962 = vpack.c.b16 %v760, %v759
    %v963 = vpack.c.b16 %v762, %v761
    %v964 = vpack.c.b16 %v764, %v763
    %v965 = vpack.c.b16 %v766, %v765
    %v966 = vpack.c.b16 %v768, %v767
    %v967 = vpack.c.b16 %v770, %v769
    %v968 = vpack.c.b16 %v772, %v771
    %v969 = vpack.c.b16 %v774, %v773
    %v970 = vpack.c.b16 %v776, %v775
    %v971 = vpack.c.b16 %v778, %v777
    %v972 = vpack.c.b16 %v780, %v779
    %v973 = vpack.c.b16 %v782, %v781
    %v974 = vpack.c.b16 %v784, %v783
    %v975 = vpack.c.b16 %v786, %v785
    %v976 = vpack.c.b16 %v788, %v787
    %v977 = vpack.c.b16 %v790, %v789
    %v978 = vpack.c.b16 %v792, %v791
    %v979 = vpack.c.b16 %v794, %v793
    %v980 = vpack.c.b16 %v796, %v795
    %v981 = vpack.c.b16 %v798, %v797
    %v982 = vpack.c.b16 %v800, %v799
    %v983 = vpack.c.b16 %v802, %v801
    %v984 = vpack.c.b16 %v804, %v803
    %v985 = vpack.c.b16 %v806, %v805
    %v986 = vpack.c.b16 %v808, %v807
    %v987 = vpack.c.b16 %v810, %v809
    %v988 = vpack.c.b16 %v812, %v811
    %v989 = vpack.c.b16 %v814, %v813
    %v990 = vpack.c.b16 %v816, %v815
    %v991 = vpack.c.b16 %v818, %v817
    %v992 = vpack.c.b16 %v820, %v819
    %v993 = vpack.c.b16 %v822, %v821
    %v994 = vpack.c.b16 %v824, %v823
    %v995 = vpack.c.b16 %v826, %v825
    %v996 = vpack.c.b16 %v828, %v827
    %v997 = vpack.c.b16 %v830, %v829
    %v998 = vpack.c.b16 %v832, %v831
    %v999 = vpack.c.b16 %v834, %v833
    %v1000 = vpack.c.b16 %v836, %v835
    %v1001 = vpack.c.b16 %v838, %v837
    %v1002 = vpack.c.b16 %v840, %v839
    %v1003 = vpack.c.b16 %v842, %v841
    %v1004 = vpack.c.b16 %v844, %v843
    %v1005 = vpack.c.b16 %v846, %v845
    %v1006 = vpack.c.b16 %v848, %v847
    %v1007 = vpack.c.b16 %v850, %v849
    %v1008 = vpack.c.b16 %v852, %v851
    %v1009 = vpack.c.b16 %v854, %v853
    %v1010 = vpack.c.b16 %v856, %v855
    %v1011 = vpack.c.b16 %v858, %v857
    %v1012 = vpack.c.b16 %v860, %v859
    %v1013 = vpack.c.b16 %v862, %v861
    %v1014 = vpack.c.b16 %v864, %v863
    %v1015 = vpack.c.b16 %v866, %v865
    %v1016 = vpack.c.b16 %v868, %v867
    %v1017 = vpack.c.b16 %v870, %v869
    %v1018 = vpack.c.b16 %v872, %v871
    %v1019 = vpack.c.b16 %v874, %v873
    %v1020 = vpack.c.b16 %v876, %v875
    %v1021 = vpack.c.b16 %v878, %v877
    %v1022 = vpack.c.b16 %v880, %v879
    %v1023 = vpack.c.b16 %v882, %v881
    %v1024 = vpack.c.b16 %v884, %v883
    %v1025 = vpack.c.b16 %v886, %v885
    %v1026 = vpack.c.b16 %v888, %v887
    %v1027 = vpack.c.b16 %v890, %v889
    %v1028 = vpack.c.b16 %v892, %v891
    %v1029 = vpack.c.b16 %v894, %v893
    %v1030 = vpack.c.b16 %v896, %v895
    %v1031 = vpack.c.b16 %v898, %v897
    %v1032 = vpack.c.b16 %v900, %v899
    %v1033 = vpack.c.b16 %v902, %v901
    %v1034 = vpack.c.b16 %v904, %v903
    %v1035 = vpack.c.b16 %v906, %v905
    %v1036 = vpack.c.b16 %v908, %v907
    %1165 = vmatprep.subr.bf16.mxu0 0
    %1166 = vmatpush1.bf16.msra.mxu0 %v916
    %1167 = vmatprep.subr.bf16.mxu0 0
    %1168 = vmatpush1.bf16.msra.mxu0 %v915
    %1169 = vmatprep.subr.bf16.mxu0 0
    %1170 = vmatpush1.bf16.msra.mxu0 %v914
    %1171 = vmatprep.subr.bf16.mxu0 0
    %1172 = vmatpush1.bf16.msra.mxu0 %v913
    %1173 = vmatprep.subr.bf16.mxu0 0
    %1174 = vmatpush1.bf16.msra.mxu0 %v912
    %1175 = vmatprep.subr.bf16.mxu0 0
    %1176 = vmatpush1.bf16.msra.mxu0 %v911
    %1177 = vmatprep.subr.bf16.mxu0 0
    %1178 = vmatpush1.bf16.msra.mxu0 %v910
    %1179 = vmatprep.subr.bf16.mxu0 0
    %1180 = vmatpush1.bf16.msra.mxu0 %v909
    %1181 = vmatprep.subr.bf16.mxu0 0
    %1182 = vmatpush2.bf16.msra.mxu0 %v924
    %1183 = vmatprep.subr.bf16.mxu0 0
    %1184 = vmatpush2.bf16.msra.mxu0 %v923
    %1185 = vmatprep.subr.bf16.mxu0 0
    %1186 = vmatpush2.bf16.msra.mxu0 %v922
    %1187 = vmatprep.subr.bf16.mxu0 0
    %1188 = vmatpush2.bf16.msra.mxu0 %v921
    %1189 = vmatprep.subr.bf16.mxu0 0
    %1190 = vmatpush2.bf16.msra.mxu0 %v920
    %1191 = vmatprep.subr.bf16.mxu0 0
    %1192 = vmatpush2.bf16.msra.mxu0 %v919
    %1193 = vmatprep.subr.bf16.mxu0 0
    %1194 = vmatpush2.bf16.msra.mxu0 %v918
    %1195 = vmatprep.subr.bf16.mxu0 0
    %1196 = vmatpush2.bf16.msra.mxu0 %v917
    %1197 = vmatprep.mubr.bf16.mxu0 %v320
    %1198 = vmatmul.mubr.bf16.gmra.mxu0 %v306
    %v1199 = vpop.f32.mrf.mxu0
    %v1200 = vadd.f32 %v279, %v1199
    %v1201 = vpop.f32.mrf.mxu0
    %v1202 = vpop.f32.mrf.mxu0
    %v1203 = vpop.f32.mrf.mxu0
    %1204 = vdwg.mxu0
    %1205 = vmatprep.subr.bf16.mxu0 0
    %1206 = vmatpush1.bf16.msra.mxu0 %v932
    %1207 = vmatprep.subr.bf16.mxu0 0
    %1208 = vmatpush1.bf16.msra.mxu0 %v931
    %1209 = vmatprep.subr.bf16.mxu0 0
    %1210 = vmatpush1.bf16.msra.mxu0 %v930
    %1211 = vmatprep.subr.bf16.mxu0 0
    %1212 = vmatpush1.bf16.msra.mxu0 %v929
    %1213 = vmatprep.subr.bf16.mxu0 0
    %1214 = vmatpush1.bf16.msra.mxu0 %v928
    %1215 = vmatprep.subr.bf16.mxu0 0
    %1216 = vmatpush1.bf16.msra.mxu0 %v927
    %1217 = vmatprep.subr.bf16.mxu0 0
    %1218 = vmatpush1.bf16.msra.mxu0 %v926
    %1219 = vmatprep.subr.bf16.mxu0 0
    %1220 = vmatpush1.bf16.msra.mxu0 %v925
    %1221 = vmatprep.subr.bf16.mxu0 0
    %1222 = vmatpush2.bf16.msra.mxu0 %v940
    %1223 = vmatprep.subr.bf16.mxu0 0
    %1224 = vmatpush2.bf16.msra.mxu0 %v939
    %1225 = vmatprep.subr.bf16.mxu0 0
    %1226 = vmatpush2.bf16.msra.mxu0 %v938
    %1227 = vmatprep.subr.bf16.mxu0 0
    %1228 = vmatpush2.bf16.msra.mxu0 %v937
    %1229 = vmatprep.subr.bf16.mxu0 0
    %1230 = vmatpush2.bf16.msra.mxu0 %v936
    %1231 = vmatprep.subr.bf16.mxu0 0
    %1232 = vmatpush2.bf16.msra.mxu0 %v935
    %1233 = vmatprep.subr.bf16.mxu0 0
    %1234 = vmatpush2.bf16.msra.mxu0 %v934
    %1235 = vmatprep.subr.bf16.mxu0 0
    %1236 = vmatpush2.bf16.msra.mxu0 %v933
    %1237 = vmatprep.mubr.bf16.mxu0 %v330
    %1238 = vmatmul.mubr.bf16.gmra.mxu0 %v328
    %v1239 = vpop.f32.mrf.mxu0
    %v1240 = vadd.f32 %v1200, %v1239
    %v1241 = vpop.f32.mrf.mxu0
    %v1242 = vpop.f32.mrf.mxu0
    %v1243 = vpop.f32.mrf.mxu0
    %1244 = vdwg.mxu0
    %1245 = vmatprep.subr.bf16.mxu0 0
    %1246 = vmatpush1.bf16.msra.mxu0 %v948
    %1247 = vmatprep.subr.bf16.mxu0 0
    %1248 = vmatpush1.bf16.msra.mxu0 %v947
    %1249 = vmatprep.subr.bf16.mxu0 0
    %1250 = vmatpush1.bf16.msra.mxu0 %v946
    %1251 = vmatprep.subr.bf16.mxu0 0
    %1252 = vmatpush1.bf16.msra.mxu0 %v945
    %1253 = vmatprep.subr.bf16.mxu0 0
    %1254 = vmatpush1.bf16.msra.mxu0 %v944
    %1255 = vmatprep.subr.bf16.mxu0 0
    %1256 = vmatpush1.bf16.msra.mxu0 %v943
    %1257 = vmatprep.subr.bf16.mxu0 0
    %1258 = vmatpush1.bf16.msra.mxu0 %v942
    %1259 = vmatprep.subr.bf16.mxu0 0
    %1260 = vmatpush1.bf16.msra.mxu0 %v941
    %1261 = vmatprep.subr.bf16.mxu0 0
    %1262 = vmatpush2.bf16.msra.mxu0 %v956
    %1263 = vmatprep.subr.bf16.mxu0 0
    %1264 = vmatpush2.bf16.msra.mxu0 %v955
    %1265 = vmatprep.subr.bf16.mxu0 0
    %1266 = vmatpush2.bf16.msra.mxu0 %v954
    %1267 = vmatprep.subr.bf16.mxu0 0
    %1268 = vmatpush2.bf16.msra.mxu0 %v953
    %1269 = vmatprep.subr.bf16.mxu0 0
    %1270 = vmatpush2.bf16.msra.mxu0 %v952
    %1271 = vmatprep.subr.bf16.mxu0 0
    %1272 = vmatpush2.bf16.msra.mxu0 %v951
    %1273 = vmatprep.subr.bf16.mxu0 0
    %1274 = vmatpush2.bf16.msra.mxu0 %v950
    %1275 = vmatprep.subr.bf16.mxu0 0
    %1276 = vmatpush2.bf16.msra.mxu0 %v949
    %1277 = vmatprep.mubr.bf16.mxu0 %v327
    %1278 = vmatmul.mubr.bf16.gmra.mxu0 %v313
    %v1279 = vpop.f32.mrf.mxu0
    %v1280 = vadd.f32 %v1240, %v1279
    %v1281 = vpop.f32.mrf.mxu0
    %v1282 = vpop.f32.mrf.mxu0
    %v1283 = vpop.f32.mrf.mxu0
    %1284 = vdwg.mxu0
    %1285 = vmatprep.subr.bf16.mxu0 0
    %1286 = vmatpush1.bf16.msra.mxu0 %v964
    %1287 = vmatprep.subr.bf16.mxu0 0
    %1288 = vmatpush1.bf16.msra.mxu0 %v963
    %1289 = vmatprep.subr.bf16.mxu0 0
    %1290 = vmatpush1.bf16.msra.mxu0 %v962
    %1291 = vmatprep.subr.bf16.mxu0 0
    %1292 = vmatpush1.bf16.msra.mxu0 %v961
    %1293 = vmatprep.subr.bf16.mxu0 0
    %1294 = vmatpush1.bf16.msra.mxu0 %v960
    %1295 = vmatprep.subr.bf16.mxu0 0
    %1296 = vmatpush1.bf16.msra.mxu0 %v959
    %1297 = vmatprep.subr.bf16.mxu0 0
    %1298 = vmatpush1.bf16.msra.mxu0 %v958
    %1299 = vmatprep.subr.bf16.mxu0 0
    %1300 = vmatpush1.bf16.msra.mxu0 %v957
    %1301 = vmatprep.subr.bf16.mxu0 0
    %1302 = vmatpush2.bf16.msra.mxu0 %v972
    %1303 = vmatprep.subr.bf16.mxu0 0
    %1304 = vmatpush2.bf16.msra.mxu0 %v971
    %1305 = vmatprep.subr.bf16.mxu0 0
    %1306 = vmatpush2.bf16.msra.mxu0 %v970
    %1307 = vmatprep.subr.bf16.mxu0 0
    %1308 = vmatpush2.bf16.msra.mxu0 %v969
    %1309 = vmatprep.subr.bf16.mxu0 0
    %1310 = vmatpush2.bf16.msra.mxu0 %v968
    %1311 = vmatprep.subr.bf16.mxu0 0
    %1312 = vmatpush2.bf16.msra.mxu0 %v967
    %1313 = vmatprep.subr.bf16.mxu0 0
    %1314 = vmatpush2.bf16.msra.mxu0 %v966
    %1315 = vmatprep.subr.bf16.mxu0 0
    %1316 = vmatpush2.bf16.msra.mxu0 %v965
    %1317 = vmatprep.mubr.bf16.mxu0 %v331
    %1318 = vmatmul.mubr.bf16.gmra.mxu0 %v329
    %v1319 = vpop.f32.mrf.mxu0
    %v1320 = vadd.f32 %v1280, %v1319
    %v1321 = vpop.f32.mrf.mxu0
    %v1322 = vpop.f32.mrf.mxu0
    %v1323 = vpop.f32.mrf.mxu0
    %1324 = vdwg.mxu0
    %1325 = vmatprep.subr.bf16.mxu0 0
    %1326 = vmatpush1.bf16.msra.mxu0 %v980
    %1327 = vmatprep.subr.bf16.mxu0 0
    %1328 = vmatpush1.bf16.msra.mxu0 %v979
    %1329 = vmatprep.subr.bf16.mxu0 0
    %1330 = vmatpush1.bf16.msra.mxu0 %v978
    %1331 = vmatprep.subr.bf16.mxu0 0
    %1332 = vmatpush1.bf16.msra.mxu0 %v977
    %1333 = vmatprep.subr.bf16.mxu0 0
    %1334 = vmatpush1.bf16.msra.mxu0 %v976
    %1335 = vmatprep.subr.bf16.mxu0 0
    %1336 = vmatpush1.bf16.msra.mxu0 %v975
    %1337 = vmatprep.subr.bf16.mxu0 0
    %1338 = vmatpush1.bf16.msra.mxu0 %v974
    %1339 = vmatprep.subr.bf16.mxu0 0
    %1340 = vmatpush1.bf16.msra.mxu0 %v973
    %1341 = vmatprep.subr.bf16.mxu0 0
    %1342 = vmatpush2.bf16.msra.mxu0 %v988
    %1343 = vmatprep.subr.bf16.mxu0 0
    %1344 = vmatpush2.bf16.msra.mxu0 %v987
    %1345 = vmatprep.subr.bf16.mxu0 0
    %1346 = vmatpush2.bf16.msra.mxu0 %v986
    %1347 = vmatprep.subr.bf16.mxu0 0
    %1348 = vmatpush2.bf16.msra.mxu0 %v985
    %1349 = vmatprep.subr.bf16.mxu0 0
    %1350 = vmatpush2.bf16.msra.mxu0 %v984
    %1351 = vmatprep.subr.bf16.mxu0 0
    %1352 = vmatpush2.bf16.msra.mxu0 %v983
    %1353 = vmatprep.subr.bf16.mxu0 0
    %1354 = vmatpush2.bf16.msra.mxu0 %v982
    %1355 = vmatprep.subr.bf16.mxu0 0
    %1356 = vmatpush2.bf16.msra.mxu0 %v981
    %1357 = vmatprep.mubr.bf16.mxu0 %v369
    %1358 = vmatmul.mubr.bf16.gmra.mxu0 %v355
    %v1359 = vpop.f32.mrf.mxu0
    %v1360 = vadd.f32 %v1320, %v1359
    %v1361 = vpop.f32.mrf.mxu0
    %v1362 = vpop.f32.mrf.mxu0
    %v1363 = vpop.f32.mrf.mxu0
    %1364 = vdwg.mxu0
    %1365 = vmatprep.subr.bf16.mxu0 0
    %1366 = vmatpush1.bf16.msra.mxu0 %v996
    %1367 = vmatprep.subr.bf16.mxu0 0
    %1368 = vmatpush1.bf16.msra.mxu0 %v995
    %1369 = vmatprep.subr.bf16.mxu0 0
    %1370 = vmatpush1.bf16.msra.mxu0 %v994
    %1371 = vmatprep.subr.bf16.mxu0 0
    %1372 = vmatpush1.bf16.msra.mxu0 %v993
    %1373 = vmatprep.subr.bf16.mxu0 0
    %1374 = vmatpush1.bf16.msra.mxu0 %v992
    %1375 = vmatprep.subr.bf16.mxu0 0
    %1376 = vmatpush1.bf16.msra.mxu0 %v991
    %1377 = vmatprep.subr.bf16.mxu0 0
    %1378 = vmatpush1.bf16.msra.mxu0 %v990
    %1379 = vmatprep.subr.bf16.mxu0 0
    %1380 = vmatpush1.bf16.msra.mxu0 %v989
    %1381 = vmatprep.subr.bf16.mxu0 0
    %1382 = vmatpush2.bf16.msra.mxu0 %v1004
    %1383 = vmatprep.subr.bf16.mxu0 0
    %1384 = vmatpush2.bf16.msra.mxu0 %v1003
    %1385 = vmatprep.subr.bf16.mxu0 0
    %1386 = vmatpush2.bf16.msra.mxu0 %v1002
    %1387 = vmatprep.subr.bf16.mxu0 0
    %1388 = vmatpush2.bf16.msra.mxu0 %v1001
    %1389 = vmatprep.subr.bf16.mxu0 0
    %1390 = vmatpush2.bf16.msra.mxu0 %v1000
    %1391 = vmatprep.subr.bf16.mxu0 0
    %1392 = vmatpush2.bf16.msra.mxu0 %v999
    %1393 = vmatprep.subr.bf16.mxu0 0
    %1394 = vmatpush2.bf16.msra.mxu0 %v998
    %1395 = vmatprep.subr.bf16.mxu0 0
    %1396 = vmatpush2.bf16.msra.mxu0 %v997
    %1397 = vmatprep.mubr.bf16.mxu0 %v379
    %1398 = vmatmul.mubr.bf16.gmra.mxu0 %v377
    %v1399 = vpop.f32.mrf.mxu0
    %v1400 = vadd.f32 %v1360, %v1399
    %v1401 = vpop.f32.mrf.mxu0
    %v1402 = vpop.f32.mrf.mxu0
    %v1403 = vpop.f32.mrf.mxu0
    %1404 = vdwg.mxu0
    %1405 = vmatprep.subr.bf16.mxu0 0
    %1406 = vmatpush1.bf16.msra.mxu0 %v1012
    %1407 = vmatprep.subr.bf16.mxu0 0
    %1408 = vmatpush1.bf16.msra.mxu0 %v1011
    %1409 = vmatprep.subr.bf16.mxu0 0
    %1410 = vmatpush1.bf16.msra.mxu0 %v1010
    %1411 = vmatprep.subr.bf16.mxu0 0
    %1412 = vmatpush1.bf16.msra.mxu0 %v1009
    %1413 = vmatprep.subr.bf16.mxu0 0
    %1414 = vmatpush1.bf16.msra.mxu0 %v1008
    %1415 = vmatprep.subr.bf16.mxu0 0
    %1416 = vmatpush1.bf16.msra.mxu0 %v1007
    %1417 = vmatprep.subr.bf16.mxu0 0
    %1418 = vmatpush1.bf16.msra.mxu0 %v1006
    %1419 = vmatprep.subr.bf16.mxu0 0
    %1420 = vmatpush1.bf16.msra.mxu0 %v1005
    %1421 = vmatprep.subr.bf16.mxu0 0
    %1422 = vmatpush2.bf16.msra.mxu0 %v1020
    %1423 = vmatprep.subr.bf16.mxu0 0
    %1424 = vmatpush2.bf16.msra.mxu0 %v1019
    %1425 = vmatprep.subr.bf16.mxu0 0
    %1426 = vmatpush2.bf16.msra.mxu0 %v1018
    %1427 = vmatprep.subr.bf16.mxu0 0
    %1428 = vmatpush2.bf16.msra.mxu0 %v1017
    %1429 = vmatprep.subr.bf16.mxu0 0
    %1430 = vmatpush2.bf16.msra.mxu0 %v1016
    %1431 = vmatprep.subr.bf16.mxu0 0
    %1432 = vmatpush2.bf16.msra.mxu0 %v1015
    %1433 = vmatprep.subr.bf16.mxu0 0
    %1434 = vmatpush2.bf16.msra.mxu0 %v1014
    %1435 = vmatprep.subr.bf16.mxu0 0
    %1436 = vmatpush2.bf16.msra.mxu0 %v1013
    %1437 = vmatprep.mubr.bf16.mxu0 %v376
    %1438 = vmatmul.mubr.bf16.gmra.mxu0 %v362
    %v1439 = vpop.f32.mrf.mxu0
    %v1440 = vadd.f32 %v1400, %v1439
    %v1441 = vpop.f32.mrf.mxu0
    %v1442 = vpop.f32.mrf.mxu0
    %v1443 = vpop.f32.mrf.mxu0
    %1444 = vdwg.mxu0
    %1445 = vmatprep.subr.bf16.mxu0 0
    %1446 = vmatpush1.bf16.msra.mxu0 %v1028
    %1447 = vmatprep.subr.bf16.mxu0 0
    %1448 = vmatpush1.bf16.msra.mxu0 %v1027
    %1449 = vmatprep.subr.bf16.mxu0 0
    %1450 = vmatpush1.bf16.msra.mxu0 %v1026
    %1451 = vmatprep.subr.bf16.mxu0 0
    %1452 = vmatpush1.bf16.msra.mxu0 %v1025
    %1453 = vmatprep.subr.bf16.mxu0 0
    %1454 = vmatpush1.bf16.msra.mxu0 %v1024
    %1455 = vmatprep.subr.bf16.mxu0 0
    %1456 = vmatpush1.bf16.msra.mxu0 %v1023
    %1457 = vmatprep.subr.bf16.mxu0 0
    %1458 = vmatpush1.bf16.msra.mxu0 %v1022
    %1459 = vmatprep.subr.bf16.mxu0 0
    %1460 = vmatpush1.bf16.msra.mxu0 %v1021
    %1461 = vmatprep.subr.bf16.mxu0 0
    %1462 = vmatpush2.bf16.msra.mxu0 %v1036
    %1463 = vmatprep.subr.bf16.mxu0 0
    %1464 = vmatpush2.bf16.msra.mxu0 %v1035
    %1465 = vmatprep.subr.bf16.mxu0 0
    %1466 = vmatpush2.bf16.msra.mxu0 %v1034
    %1467 = vmatprep.subr.bf16.mxu0 0
    %1468 = vmatpush2.bf16.msra.mxu0 %v1033
    %1469 = vmatprep.subr.bf16.mxu0 0
    %1470 = vmatpush2.bf16.msra.mxu0 %v1032
    %1471 = vmatprep.subr.bf16.mxu0 0
    %1472 = vmatpush2.bf16.msra.mxu0 %v1031
    %1473 = vmatprep.subr.bf16.mxu0 0
    %1474 = vmatpush2.bf16.msra.mxu0 %v1030
    %1475 = vmatprep.subr.bf16.mxu0 0
    %1476 = vmatpush2.bf16.msra.mxu0 %v1029
    %1477 = vmatprep.mubr.bf16.mxu0 %v380
    %1478 = vmatmul.mubr.bf16.gmra.mxu0 %v378
    %v1479 = vpop.f32.mrf.mxu0
    %v1480 = vadd.f32 %v1440, %v1479
    %v1481 = vpop.f32.mrf.mxu0
    %v1482 = vpop.f32.mrf.mxu0
    %v1483 = vpop.f32.mrf.mxu0
    %1484 = vdwg.mxu0
    %1485 = vst [vmem:[#allocation2] sm:$0x3] %v1480
    // Predicated region
    $region14: #{toy_conv_forward.5} parent=1 // pred_check
      _
    $region15: #{toy_conv_forward.5} parent=1 // pred_check_branch
      %1487 = sbr.rel (0) target = $region17
    $region16: #{toy_conv_forward.5} parent=1 // pred_region
      %s1489 = ssub.s32 32, 32
      %1490 = vsyncadd [#allocation3], %s1489
      %s1492 = sshll.u32 [#allocation2], 4
      %s1493 = int_to_ptr.vmem [resolvable:$true] %s1492
      %1495 = dma.vmem_to_hbm [thread:$0]  %s1493, 32, %s3, [#allocation3]
    $region17: #{toy_conv_forward.5} parent=1 // pred_fallthru
      _
    // Predicated region
    $region18: #{toy_conv_forward.5} parent=1 // pred_check
      _
    $region19: #{toy_conv_forward.5} parent=1 // pred_check_branch
      %1497 = sbr.rel (0) target = $region21
    $region20: #{toy_conv_forward.5} parent=1 // pred_region
      %1498 = dma.done [#allocation3], 32
    $region21: #{toy_conv_forward.5} parent=1 // pred_fallthru
      _
    %1499 = vsyncpa [#allocation3], 1

</llo_original>
